<compile_context>
chip_gen: v7x
topology: tpu7x:2x2x1
jax: 0.10.0
libtpu: 0.0.40
codegen_flags: <defaults>
</compile_context>

<pallas_src>
import jax
import jax.numpy as jnp
from jax.experimental import pallas as pl
from jax.experimental.pallas import tpu as pltpu

HIDDEN = 300
N_HIDDEN_LAYERS = 6  # Linear(in,300) + 5x Linear(300,300), each followed by ReLU


def _mlp_kernel(x_ref,
                w0_ref, b0_ref, w1_ref, b1_ref, w2_ref, b2_ref,
                w3_ref, b3_ref, w4_ref, b4_ref, w5_ref, b5_ref,
                w6_ref, b6_ref,
                o_ref):
    """Full MLP forward for one batch tile, entirely VMEM-resident."""

    def linear(h_bf16, w_ref, b_ref):
        # bf16 x bf16 operands, f32 accumulation on the MXU; bias-add in f32.
        z = jnp.dot(h_bf16, w_ref[...], preferred_element_type=jnp.float32)
        return z + b_ref[...]            # (1, d_out) f32 bias broadcasts over rows

    def relu_bf16(z_f32):
        # ReLU in f32 (safe on v5e: no bf16 VPU), then carry the activation
        # packed as bf16 to halve vreg pressure and load/store traffic.
        return jnp.maximum(z_f32, 0.0).astype(jnp.bfloat16)

    h = x_ref[...]                       # (tile, in_size) bf16
    h = relu_bf16(linear(h, w0_ref, b0_ref))
    h = relu_bf16(linear(h, w1_ref, b1_ref))
    h = relu_bf16(linear(h, w2_ref, b2_ref))
    h = relu_bf16(linear(h, w3_ref, b3_ref))
    h = relu_bf16(linear(h, w4_ref, b4_ref))
    h = relu_bf16(linear(h, w5_ref, b5_ref))

    # Final Linear + exact Sigmoid (exp on EUP; exact reciprocal — tiny tensor,
    # zero perf cost, keeps outputs strictly within [0, 1]).
    z = linear(h, w6_ref, b6_ref)        # (tile, out_p) f32
    o_ref[...] = (1.0 / (1.0 + jnp.exp(-z))).astype(o_ref.dtype)


def _round_up(n, m):
    return (n + m - 1) // m * m


def _pad2(a, rows, cols):
    r, c = a.shape
    return jnp.pad(a, ((0, rows - r), (0, cols - c)))


def neuralnet5_forward(x, params, *, batch_tile=512):
    """Forward pass of NeuralNet_5.

    x:          (batch, in_size) float array.
    params:     list of 7 (W, b) pairs with W of shape (in_features, out_features)
                (the transpose of PyTorch's nn.Linear weight) and b (out_features,).
    batch_tile: max rows per grid step; should be a multiple of 256.
    """
    batch, in_size = x.shape
    out_size = params[-1][0].shape[1]

    # ---- feature dims: hidden/output lane-padded, input left as-is ------------
    hid_p = _round_up(HIDDEN, 128)          # 300 -> 384 (3x128; NOT 512)
    out_p = _round_up(out_size, 128)        # lane-dense, unmasked output stores

    # ---- batch tiling ----------------------------------------------------------
    if batch <= 256:
        tile = _round_up(batch, 8)          # one small 8-aligned tile
    else:
        # Multiple-of-256 tile, capped at batch_tile, sized so the grid has
        # >= 4 steps when the batch allows (2 per v7x TensorCore) for megacore
        # sharding and x/out DMA <-> compute overlap.
        tile = min(batch_tile,
                   max(256, _round_up(_round_up(batch, 256) // 4, 256)))
    batch_p = _round_up(batch, tile)
    grid = (batch_p // tile,)

    # ---- host-side prep: pad batch rows only, cast x to bf16 -------------------
    x_pad = jnp.pad(x, ((0, batch_p - batch), (0, 0))).astype(jnp.bfloat16)

    dims = [in_size] + [hid_p] * N_HIDDEN_LAYERS + [out_p]
    flat_params = []
    in_specs = [pl.BlockSpec((tile, in_size), lambda i: (i, 0))]
    for li, (w, b) in enumerate(params):
        d_in, d_out = dims[li], dims[li + 1]
        w_pad = _pad2(w.astype(jnp.float32), d_in, d_out).astype(jnp.bfloat16)
        b_pad = _pad2(b.reshape(1, -1).astype(jnp.float32), 1, d_out)
        flat_params += [w_pad, b_pad]
        # Constant index_map -> same VMEM block every grid step (no re-fetch).
        in_specs.append(pl.BlockSpec((d_in, d_out), lambda i: (0, 0)))
        in_specs.append(pl.BlockSpec((1, d_out), lambda i: (0, 0)))

    out_specs = pl.BlockSpec((tile, out_p), lambda i: (i, 0))

    # Advisory cost estimate for the XLA scheduler (exp + reciprocal per output).
    flops = 2 * batch_p * (in_size * hid_p
                           + (N_HIDDEN_LAYERS - 1) * hid_p * hid_p
                           + hid_p * out_p)
    bytes_accessed = (x_pad.size * x_pad.dtype.itemsize
                      + sum(a.size * a.dtype.itemsize for a in flat_params)
                      + batch_p * out_p * 4)
    cost = pl.CostEstimate(flops=flops,
                           transcendentals=2 * batch_p * out_p,
                           bytes_accessed=bytes_accessed)

    y_pad = pl.pallas_call(
        _mlp_kernel,
        out_shape=jax.ShapeDtypeStruct((batch_p, out_p), jnp.float32),
        grid_spec=pltpu.PrefetchScalarGridSpec(
            num_scalar_prefetch=0,
            grid=grid,
            in_specs=in_specs,
            out_specs=out_specs,
        ),
        compiler_params=pltpu.CompilerParams(
            dimension_semantics=("parallel",),
            vmem_limit_bytes=32 * 1024 * 1024,
        ),
        cost_estimate=cost,
    )(x_pad, *flat_params)

    # Padded output columns hold sigmoid(0)=0.5; slice off padding before use.
    return y_pad[:batch, :out_size]


def init_params(key, in_size, out_size):
    """Deterministic synthetic init matching nn.Linear shapes.

    PyTorch stores weight as (out, in); we store the transpose (in, out).
    """
    dims = [in_size] + [HIDDEN] * N_HIDDEN_LAYERS + [out_size]
    params = []
    for i in range(len(dims) - 1):
        fan_in, fan_out = dims[i], dims[i + 1]
        key, kw, kb = jax.random.split(key, 3)
        bound = 1.0 / jnp.sqrt(fan_in)
        w = jax.random.uniform(kw, (fan_in, fan_out), jnp.float32, -bound, bound)
        b = jax.random.uniform(kb, (fan_out,), jnp.float32, -bound, bound)
        params.append((w, b))
    return params


def reference_forward(x, params):
    """Plain-JAX reference with the same bf16-operand / f32-accumulate recipe."""
    h = x.astype(jnp.float32)
    for (w, b) in params[:-1]:
        z = jnp.dot(h.astype(jnp.bfloat16), w.astype(jnp.bfloat16),
                    preferred_element_type=jnp.float32) + b
        h = jnp.maximum(z, 0.0)
    w, b = params[-1]
    z = jnp.dot(h.astype(jnp.bfloat16), w.astype(jnp.bfloat16),
                preferred_element_type=jnp.float32) + b
    return 1.0 / (1.0 + jnp.exp(-z))


if __name__ == "__main__":
    # TODO(synk): training pieces (loss_fn, Adam optimizer, step) are not part of
    # the forward pass and are intentionally not implemented in the kernel.
    key = jax.random.PRNGKey(0)
    # batch=500 pads to 512 -> two 256-row tiles: exercises the padded,
    # multi-step, megacore-parallel grid while staying small.
    batch, in_size, out_size = 500, 32, 4

    key, kx = jax.random.split(key)
    x = jax.random.normal(kx, (batch, in_size), jnp.float32)
    params = init_params(key, in_size, out_size)

    y = jax.block_until_ready(neuralnet5_forward(x, params))
    y_ref = reference_forward(x, params)

    assert y.shape == (batch, out_size)
    assert bool(jnp.all(jnp.isfinite(y)))
    assert bool(jnp.all(y >= 0.0)) and bool(jnp.all(y <= 1.0))
    max_err = float(jnp.max(jnp.abs(y - y_ref)))
    assert jnp.allclose(y, y_ref, atol=5e-3, rtol=5e-3), f"mismatch: {max_err}"

    print("KERNEL_OK")
</pallas_src>

<mosaic_0001>
module attributes {stable_mosaic.version = 11 : i64} {
  func.func @_mlp_kernel(%arg0: i32, %arg1: memref<256x32xbf16, #tpu.memory_space<vmem>>, %arg2: memref<32x384xbf16, #tpu.memory_space<vmem>>, %arg3: memref<1x384xf32, #tpu.memory_space<vmem>>, %arg4: memref<384x384xbf16, #tpu.memory_space<vmem>>, %arg5: memref<1x384xf32, #tpu.memory_space<vmem>>, %arg6: memref<384x384xbf16, #tpu.memory_space<vmem>>, %arg7: memref<1x384xf32, #tpu.memory_space<vmem>>, %arg8: memref<384x384xbf16, #tpu.memory_space<vmem>>, %arg9: memref<1x384xf32, #tpu.memory_space<vmem>>, %arg10: memref<384x384xbf16, #tpu.memory_space<vmem>>, %arg11: memref<1x384xf32, #tpu.memory_space<vmem>>, %arg12: memref<384x384xbf16, #tpu.memory_space<vmem>>, %arg13: memref<1x384xf32, #tpu.memory_space<vmem>>, %arg14: memref<384x128xbf16, #tpu.memory_space<vmem>>, %arg15: memref<1x128xf32, #tpu.memory_space<vmem>>, %arg16: memref<256x128xf32, #tpu.memory_space<vmem>>) attributes {dimension_semantics = [#tpu.dimension_semantics<parallel>], iteration_bounds = array<i64: 2>, scalar_prefetch = 0 : i64, scratch_operands = 0 : i64, tpu.core_type = #tpu.core_type<tc>, window_params = [{transform_indices = @transform_0, window_bounds = array<i64: 256, 32>}, {pipeline_mode = #tpu.pipeline_mode<synchronous>, transform_indices = @transform_1, window_bounds = array<i64: 32, 384>}, {pipeline_mode = #tpu.pipeline_mode<synchronous>, transform_indices = @transform_2, window_bounds = array<i64: 1, 384>}, {pipeline_mode = #tpu.pipeline_mode<synchronous>, transform_indices = @transform_3, window_bounds = array<i64: 384, 384>}, {pipeline_mode = #tpu.pipeline_mode<synchronous>, transform_indices = @transform_4, window_bounds = array<i64: 1, 384>}, {pipeline_mode = #tpu.pipeline_mode<synchronous>, transform_indices = @transform_5, window_bounds = array<i64: 384, 384>}, {pipeline_mode = #tpu.pipeline_mode<synchronous>, transform_indices = @transform_6, window_bounds = array<i64: 1, 384>}, {pipeline_mode = #tpu.pipeline_mode<synchronous>, transform_indices = @transform_7, window_bounds = array<i64: 384, 384>}, {pipeline_mode = #tpu.pipeline_mode<synchronous>, transform_indices = @transform_8, window_bounds = array<i64: 1, 384>}, {pipeline_mode = #tpu.pipeline_mode<synchronous>, transform_indices = @transform_9, window_bounds = array<i64: 384, 384>}, {pipeline_mode = #tpu.pipeline_mode<synchronous>, transform_indices = @transform_10, window_bounds = array<i64: 1, 384>}, {pipeline_mode = #tpu.pipeline_mode<synchronous>, transform_indices = @transform_11, window_bounds = array<i64: 384, 384>}, {pipeline_mode = #tpu.pipeline_mode<synchronous>, transform_indices = @transform_12, window_bounds = array<i64: 1, 384>}, {pipeline_mode = #tpu.pipeline_mode<synchronous>, transform_indices = @transform_13, window_bounds = array<i64: 384, 128>}, {pipeline_mode = #tpu.pipeline_mode<synchronous>, transform_indices = @transform_14, window_bounds = array<i64: 1, 128>}, {transform_indices = @transform_15, window_bounds = array<i64: 256, 128>}]} {
    %c0 = arith.constant 0 : index
    %c0_0 = arith.constant 0 : index
    %0 = vector.load %arg1[%c0, %c0_0] : memref<256x32xbf16, #tpu.memory_space<vmem>>, vector<256x32xbf16>
    %c0_1 = arith.constant 0 : index
    %c0_2 = arith.constant 0 : index
    %1 = vector.load %arg2[%c0_1, %c0_2] : memref<32x384xbf16, #tpu.memory_space<vmem>>, vector<32x384xbf16>
    %cst = arith.constant dense<0.000000e+00> : vector<256x384xf32>
    %2 = tpu.matmul %0, %1, %cst {dimension_numbers = #tpu.dot_dimension_numbers<[1], [0], [0], [1], [0, 0, 1, 1], [], []>} : vector<256x32xbf16>, vector<32x384xbf16>, vector<256x384xf32> -> vector<256x384xf32>
    %c0_3 = arith.constant 0 : index
    %c0_4 = arith.constant 0 : index
    %3 = vector.load %arg3[%c0_3, %c0_4] : memref<1x384xf32, #tpu.memory_space<vmem>>, vector<1x384xf32>
    %4 = vector.broadcast %3 : vector<1x384xf32> to vector<256x384xf32>
    %5 = arith.addf %2, %4 : vector<256x384xf32>
    %cst_5 = arith.constant 0.000000e+00 : f32
    %6 = vector.broadcast %cst_5 : f32 to vector<256x384xf32>
    %7 = arith.maximumf %5, %6 : vector<256x384xf32>
    %8 = arith.truncf %7 : vector<256x384xf32> to vector<256x384xbf16>
    %c0_6 = arith.constant 0 : index
    %c0_7 = arith.constant 0 : index
    %9 = vector.load %arg4[%c0_6, %c0_7] : memref<384x384xbf16, #tpu.memory_space<vmem>>, vector<384x384xbf16>
    %cst_8 = arith.constant dense<0.000000e+00> : vector<256x384xf32>
    %10 = tpu.matmul %8, %9, %cst_8 {dimension_numbers = #tpu.dot_dimension_numbers<[1], [0], [0], [1], [0, 0, 1, 1], [], []>} : vector<256x384xbf16>, vector<384x384xbf16>, vector<256x384xf32> -> vector<256x384xf32>
    %c0_9 = arith.constant 0 : index
    %c0_10 = arith.constant 0 : index
    %11 = vector.load %arg5[%c0_9, %c0_10] : memref<1x384xf32, #tpu.memory_space<vmem>>, vector<1x384xf32>
    %12 = vector.broadcast %11 : vector<1x384xf32> to vector<256x384xf32>
    %13 = arith.addf %10, %12 : vector<256x384xf32>
    %cst_11 = arith.constant 0.000000e+00 : f32
    %14 = vector.broadcast %cst_11 : f32 to vector<256x384xf32>
    %15 = arith.maximumf %13, %14 : vector<256x384xf32>
    %16 = arith.truncf %15 : vector<256x384xf32> to vector<256x384xbf16>
    %c0_12 = arith.constant 0 : index
    %c0_13 = arith.constant 0 : index
    %17 = vector.load %arg6[%c0_12, %c0_13] : memref<384x384xbf16, #tpu.memory_space<vmem>>, vector<384x384xbf16>
    %cst_14 = arith.constant dense<0.000000e+00> : vector<256x384xf32>
    %18 = tpu.matmul %16, %17, %cst_14 {dimension_numbers = #tpu.dot_dimension_numbers<[1], [0], [0], [1], [0, 0, 1, 1], [], []>} : vector<256x384xbf16>, vector<384x384xbf16>, vector<256x384xf32> -> vector<256x384xf32>
    %c0_15 = arith.constant 0 : index
    %c0_16 = arith.constant 0 : index
    %19 = vector.load %arg7[%c0_15, %c0_16] : memref<1x384xf32, #tpu.memory_space<vmem>>, vector<1x384xf32>
    %20 = vector.broadcast %19 : vector<1x384xf32> to vector<256x384xf32>
    %21 = arith.addf %18, %20 : vector<256x384xf32>
    %cst_17 = arith.constant 0.000000e+00 : f32
    %22 = vector.broadcast %cst_17 : f32 to vector<256x384xf32>
    %23 = arith.maximumf %21, %22 : vector<256x384xf32>
    %24 = arith.truncf %23 : vector<256x384xf32> to vector<256x384xbf16>
    %c0_18 = arith.constant 0 : index
    %c0_19 = arith.constant 0 : index
    %25 = vector.load %arg8[%c0_18, %c0_19] : memref<384x384xbf16, #tpu.memory_space<vmem>>, vector<384x384xbf16>
    %cst_20 = arith.constant dense<0.000000e+00> : vector<256x384xf32>
    %26 = tpu.matmul %24, %25, %cst_20 {dimension_numbers = #tpu.dot_dimension_numbers<[1], [0], [0], [1], [0, 0, 1, 1], [], []>} : vector<256x384xbf16>, vector<384x384xbf16>, vector<256x384xf32> -> vector<256x384xf32>
    %c0_21 = arith.constant 0 : index
    %c0_22 = arith.constant 0 : index
    %27 = vector.load %arg9[%c0_21, %c0_22] : memref<1x384xf32, #tpu.memory_space<vmem>>, vector<1x384xf32>
    %28 = vector.broadcast %27 : vector<1x384xf32> to vector<256x384xf32>
    %29 = arith.addf %26, %28 : vector<256x384xf32>
    %cst_23 = arith.constant 0.000000e+00 : f32
    %30 = vector.broadcast %cst_23 : f32 to vector<256x384xf32>
    %31 = arith.maximumf %29, %30 : vector<256x384xf32>
    %32 = arith.truncf %31 : vector<256x384xf32> to vector<256x384xbf16>
    %c0_24 = arith.constant 0 : index
    %c0_25 = arith.constant 0 : index
    %33 = vector.load %arg10[%c0_24, %c0_25] : memref<384x384xbf16, #tpu.memory_space<vmem>>, vector<384x384xbf16>
    %cst_26 = arith.constant dense<0.000000e+00> : vector<256x384xf32>
    %34 = tpu.matmul %32, %33, %cst_26 {dimension_numbers = #tpu.dot_dimension_numbers<[1], [0], [0], [1], [0, 0, 1, 1], [], []>} : vector<256x384xbf16>, vector<384x384xbf16>, vector<256x384xf32> -> vector<256x384xf32>
    %c0_27 = arith.constant 0 : index
    %c0_28 = arith.constant 0 : index
    %35 = vector.load %arg11[%c0_27, %c0_28] : memref<1x384xf32, #tpu.memory_space<vmem>>, vector<1x384xf32>
    %36 = vector.broadcast %35 : vector<1x384xf32> to vector<256x384xf32>
    %37 = arith.addf %34, %36 : vector<256x384xf32>
    %cst_29 = arith.constant 0.000000e+00 : f32
    %38 = vector.broadcast %cst_29 : f32 to vector<256x384xf32>
    %39 = arith.maximumf %37, %38 : vector<256x384xf32>
    %40 = arith.truncf %39 : vector<256x384xf32> to vector<256x384xbf16>
    %c0_30 = arith.constant 0 : index
    %c0_31 = arith.constant 0 : index
    %41 = vector.load %arg12[%c0_30, %c0_31] : memref<384x384xbf16, #tpu.memory_space<vmem>>, vector<384x384xbf16>
    %cst_32 = arith.constant dense<0.000000e+00> : vector<256x384xf32>
    %42 = tpu.matmul %40, %41, %cst_32 {dimension_numbers = #tpu.dot_dimension_numbers<[1], [0], [0], [1], [0, 0, 1, 1], [], []>} : vector<256x384xbf16>, vector<384x384xbf16>, vector<256x384xf32> -> vector<256x384xf32>
    %c0_33 = arith.constant 0 : index
    %c0_34 = arith.constant 0 : index
    %43 = vector.load %arg13[%c0_33, %c0_34] : memref<1x384xf32, #tpu.memory_space<vmem>>, vector<1x384xf32>
    %44 = vector.broadcast %43 : vector<1x384xf32> to vector<256x384xf32>
    %45 = arith.addf %42, %44 : vector<256x384xf32>
    %cst_35 = arith.constant 0.000000e+00 : f32
    %46 = vector.broadcast %cst_35 : f32 to vector<256x384xf32>
    %47 = arith.maximumf %45, %46 : vector<256x384xf32>
    %48 = arith.truncf %47 : vector<256x384xf32> to vector<256x384xbf16>
    %c0_36 = arith.constant 0 : index
    %c0_37 = arith.constant 0 : index
    %49 = vector.load %arg14[%c0_36, %c0_37] : memref<384x128xbf16, #tpu.memory_space<vmem>>, vector<384x128xbf16>
    %cst_38 = arith.constant dense<0.000000e+00> : vector<256x128xf32>
    %50 = tpu.matmul %48, %49, %cst_38 {dimension_numbers = #tpu.dot_dimension_numbers<[1], [0], [0], [1], [0, 0, 1, 1], [], []>} : vector<256x384xbf16>, vector<384x128xbf16>, vector<256x128xf32> -> vector<256x128xf32>
    %c0_39 = arith.constant 0 : index
    %c0_40 = arith.constant 0 : index
    %51 = vector.load %arg15[%c0_39, %c0_40] : memref<1x128xf32, #tpu.memory_space<vmem>>, vector<1x128xf32>
    %52 = vector.broadcast %51 : vector<1x128xf32> to vector<256x128xf32>
    %53 = arith.addf %50, %52 : vector<256x128xf32>
    %cst_41 = arith.constant 0.000000e+00 : f32
    %54 = vector.broadcast %cst_41 : f32 to vector<256x128xf32>
    %55 = arith.subf %54, %53 : vector<256x128xf32>
    %56 = math.exp %55 : vector<256x128xf32>
    %cst_42 = arith.constant 1.000000e+00 : f32
    %57 = vector.broadcast %cst_42 : f32 to vector<256x128xf32>
    %58 = arith.addf %57, %56 : vector<256x128xf32>
    %cst_43 = arith.constant 1.000000e+00 : f32
    %59 = vector.broadcast %cst_43 : f32 to vector<256x128xf32>
    %60 = arith.divf %59, %58 : vector<256x128xf32>
    %c0_44 = arith.constant 0 : index
    %c0_45 = arith.constant 0 : index
    %61 = vector.load %arg16[%c0_44, %c0_45] : memref<256x128xf32, #tpu.memory_space<vmem>>, vector<256x128xf32>
    tpu.vector_store %arg16[%c0_44, %c0_45], %60 {strides = array<i32>} : memref<256x128xf32, #tpu.memory_space<vmem>>, vector<256x128xf32>,
    return
  }
  func.func @transform_0(%arg0: i32) -> (i32, i32) {
    %c0_i32 = arith.constant 0 : i32
    %c0_i32_0 = arith.constant 0 : i32
    return %arg0, %c0_i32 : i32, i32
  }
  func.func @transform_1(%arg0: i32) -> (i32, i32) {
    %c0_i32 = arith.constant 0 : i32
    %c0_i32_0 = arith.constant 0 : i32
    %c0_i32_1 = arith.constant 0 : i32
    return %c0_i32, %c0_i32_0 : i32, i32
  }
  func.func @transform_2(%arg0: i32) -> (i32, i32) {
    %c0_i32 = arith.constant 0 : i32
    %c0_i32_0 = arith.constant 0 : i32
    %c0_i32_1 = arith.constant 0 : i32
    return %c0_i32, %c0_i32_0 : i32, i32
  }
  func.func @transform_3(%arg0: i32) -> (i32, i32) {
    %c0_i32 = arith.constant 0 : i32
    %c0_i32_0 = arith.constant 0 : i32
    %c0_i32_1 = arith.constant 0 : i32
    return %c0_i32, %c0_i32_0 : i32, i32
  }
  func.func @transform_4(%arg0: i32) -> (i32, i32) {
    %c0_i32 = arith.constant 0 : i32
    %c0_i32_0 = arith.constant 0 : i32
    %c0_i32_1 = arith.constant 0 : i32
    return %c0_i32, %c0_i32_0 : i32, i32
  }
  func.func @transform_5(%arg0: i32) -> (i32, i32) {
    %c0_i32 = arith.constant 0 : i32
    %c0_i32_0 = arith.constant 0 : i32
    %c0_i32_1 = arith.constant 0 : i32
    return %c0_i32, %c0_i32_0 : i32, i32
  }
  func.func @transform_6(%arg0: i32) -> (i32, i32) {
    %c0_i32 = arith.constant 0 : i32
    %c0_i32_0 = arith.constant 0 : i32
    %c0_i32_1 = arith.constant 0 : i32
    return %c0_i32, %c0_i32_0 : i32, i32
  }
  func.func @transform_7(%arg0: i32) -> (i32, i32) {
    %c0_i32 = arith.constant 0 : i32
    %c0_i32_0 = arith.constant 0 : i32
    %c0_i32_1 = arith.constant 0 : i32
    return %c0_i32, %c0_i32_0 : i32, i32
  }
  func.func @transform_8(%arg0: i32) -> (i32, i32) {
    %c0_i32 = arith.constant 0 : i32
    %c0_i32_0 = arith.constant 0 : i32
    %c0_i32_1 = arith.constant 0 : i32
    return %c0_i32, %c0_i32_0 : i32, i32
  }
  func.func @transform_9(%arg0: i32) -> (i32, i32) {
    %c0_i32 = arith.constant 0 : i32
    %c0_i32_0 = arith.constant 0 : i32
    %c0_i32_1 = arith.constant 0 : i32
    return %c0_i32, %c0_i32_0 : i32, i32
  }
  func.func @transform_10(%arg0: i32) -> (i32, i32) {
    %c0_i32 = arith.constant 0 : i32
    %c0_i32_0 = arith.constant 0 : i32
    %c0_i32_1 = arith.constant 0 : i32
    return %c0_i32, %c0_i32_0 : i32, i32
  }
  func.func @transform_11(%arg0: i32) -> (i32, i32) {
    %c0_i32 = arith.constant 0 : i32
    %c0_i32_0 = arith.constant 0 : i32
    %c0_i32_1 = arith.constant 0 : i32
    return %c0_i32, %c0_i32_0 : i32, i32
  }
  func.func @transform_12(%arg0: i32) -> (i32, i32) {
    %c0_i32 = arith.constant 0 : i32
    %c0_i32_0 = arith.constant 0 : i32
    %c0_i32_1 = arith.constant 0 : i32
    return %c0_i32, %c0_i32_0 : i32, i32
  }
  func.func @transform_13(%arg0: i32) -> (i32, i32) {
    %c0_i32 = arith.constant 0 : i32
    %c0_i32_0 = arith.constant 0 : i32
    %c0_i32_1 = arith.constant 0 : i32
    return %c0_i32, %c0_i32_0 : i32, i32
  }
  func.func @transform_14(%arg0: i32) -> (i32, i32) {
    %c0_i32 = arith.constant 0 : i32
    %c0_i32_0 = arith.constant 0 : i32
    %c0_i32_1 = arith.constant 0 : i32
    return %c0_i32, %c0_i32_0 : i32, i32
  }
  func.func @transform_15(%arg0: i32) -> (i32, i32) {
    %c0_i32 = arith.constant 0 : i32
    %c0_i32_0 = arith.constant 0 : i32
    return %arg0, %c0_i32 : i32, i32
  }
}

</mosaic_0001>

<llo_original>
// kernel: tpu_custom_call.1
$region0: #{tpu_custom_call.1}
  #allocation0 [shape = 'u32[]', space=smem, size = 0x4, offset = 0x4, fixed_abs, tag = 'smem constant byte address 0x4 - core index']
  #allocation1 [shape = 'u32[144,128]{1,0:T(1,128)}', space=vmem, size = 0x12000, scoped, tag = 'internal scratch']
  %s0 = inlined_call_operand.vmem [shape: bf16[512,32], index: 0, kind: input, shape index: {}]
  %s1 = inlined_call_operand.vmem [shape: bf16[32,384], index: 1, kind: input, shape index: {}]
  %s2 = inlined_call_operand.vmem [shape: f32[1,384], index: 2, kind: input, shape index: {}]
  %s3 = inlined_call_operand.hbm [shape: bf16[384,384], index: 3, kind: input, shape index: {}]
  %s4 = inlined_call_operand.vmem [shape: f32[1,384], index: 4, kind: input, shape index: {}]
  %s5 = inlined_call_operand.hbm [shape: bf16[384,384], index: 5, kind: input, shape index: {}]
  %s6 = inlined_call_operand.vmem [shape: f32[1,384], index: 6, kind: input, shape index: {}]
  %s7 = inlined_call_operand.hbm [shape: bf16[384,384], index: 7, kind: input, shape index: {}]
  %s8 = inlined_call_operand.vmem [shape: f32[1,384], index: 8, kind: input, shape index: {}]
  %s9 = inlined_call_operand.hbm [shape: bf16[384,384], index: 9, kind: input, shape index: {}]
  %s10 = inlined_call_operand.vmem [shape: f32[1,384], index: 10, kind: input, shape index: {}]
  %s11 = inlined_call_operand.hbm [shape: bf16[384,384], index: 11, kind: input, shape index: {}]
  %s12 = inlined_call_operand.vmem [shape: f32[1,384], index: 12, kind: input, shape index: {}]
  %s13 = inlined_call_operand.vmem [shape: bf16[384,128], index: 13, kind: input, shape index: {}]
  %s14 = inlined_call_operand.vmem [shape: f32[1,128], index: 14, kind: input, shape index: {}]
  %s15 = inlined_call_operand.hbm [shape: f32[512,128], index: 15, kind: output, shape index: {}]
  %s16 = sld [smem:[#allocation0]]
  $region113: #{tpu_custom_call.1} parent=0
    _
  %s18 = ssub.s32 1, %s16
  %s19 = scalar_select 0, %s18, %s16
  $region1: #{tpu_custom_call.1} parent=0
    #allocation2 [shape = 'u8[294912]{0}', space=vmem, size = 0x48000, scoped, tag = 'input window, operand 3, single buffered']
    #allocation3 [shape = 's32[2]{0}', space=sflag, size = 0x8, scoped, tag = 'scoped memory for tpu_custom_call.1']
    #allocation4 [shape = 's32[2]{0}', space=sflag, size = 0x8, scoped, tag = 'scoped memory for tpu_custom_call.1']
    #allocation5 [shape = 'u8[294912]{0}', space=vmem, size = 0x48000, scoped, tag = 'input window, operand 5, single buffered']
    #allocation6 [shape = 's32[1]{0}', space=sflag, size = 0x4, scoped, tag = 'scoped memory for tpu_custom_call.1']
    #allocation7 [shape = 'u8[294912]{0}', space=vmem, size = 0x48000, scoped, tag = 'input window, operand 7, single buffered']
    #allocation8 [shape = 'u8[294912]{0}', space=vmem, size = 0x48000, scoped, tag = 'input window, operand 9, single buffered']
    #allocation9 [shape = 's32[1]{0}', space=sflag, size = 0x4, scoped, tag = 'scoped memory for tpu_custom_call.1']
    #allocation10 [shape = 'u8[294912]{0}', space=vmem, size = 0x48000, scoped, tag = 'input window, operand 11, single buffered']
    #allocation11 [shape = 'u8[262144]{0}', space=vmem, size = 0x40000, scoped, tag = 'output window, operand 0']
    %20 = vsyncpa [#allocation3], 0
    %21 = vsyncpa [#allocation6], 0
    %22 = vsyncpa [#allocation9], 0
    %23 = vsyncpa [#allocation4], 0
    %s24 = scalar_lea.sflag [#allocation4], 1
    %25 = vsyncpa %s24, 0
    loop: start=0, step=1, limit=4
    $region2: #{tpu_custom_call.1} parent=1 // loop_pre_header
      _
    $region3: #{tpu_custom_call.1} parent=1 // loop_header
      %s27 = sphi 0, %s31
      %p28 = scmp.ge.s32.totalorder %s27, 4
      %s37 = sphi 0, %s39
      %s40 = sphi 0, %s37
      %s41 = sphi 0, %s40
      %s57 = sphi 0, %s41
      %s61 = sphi 0, %s61
      %s63 = sphi 0, %s61
      %s64 = sphi 0, %s63
      %s78 = sphi 0, %s64
      %s82 = sphi 0, %s82
      %s84 = sphi 0, %s82
      %s85 = sphi 0, %s84
      %s99 = sphi 0, %s85
      %s103 = sphi 0, %s103
      %s105 = sphi 0, %s103
      %s106 = sphi 0, %s105
      %s120 = sphi 0, %s106
      %s124 = sphi 0, %s124
      %s126 = sphi 0, %s124
      %s127 = sphi 0, %s126
      %s141 = sphi 0, %s127
      %s145 = sphi 0, %s145
      %s147 = sphi 0, %s145
      %s148 = sphi 0, %s147
      %s162 = sphi 0, %s148
      %s166 = sphi 0, %s166
      %s168 = sphi 0, %s166
      %s169 = sphi 0, %s168
      %s183 = sphi 0, %s169
      %s187 = sphi 0, %s187
      %s189 = sphi 0, %s187
      %s190 = sphi 0, %s189
      %s204 = sphi 0, %s190
      %s208 = sphi 0, %s208
      %s210 = sphi 0, %s208
      %s211 = sphi 0, %s210
      %s225 = sphi 0, %s211
      %s229 = sphi 0, %s229
      %s231 = sphi 0, %s229
      %s232 = sphi 0, %s231
      %s246 = sphi 0, %s232
      %s250 = sphi 0, %s250
      %s252 = sphi 0, %s250
      %s253 = sphi 0, %s252
      %s267 = sphi 0, %s253
      %s271 = sphi 0, %s271
      %s273 = sphi 0, %s271
      %s274 = sphi 0, %s273
      %s288 = sphi 0, %s274
      %s292 = sphi 0, %s292
      %s294 = sphi 0, %s292
      %s295 = sphi 0, %s294
      %s309 = sphi 0, %s295
      %s313 = sphi 0, %s313
      %s315 = sphi 0, %s313
      %s316 = sphi 0, %s315
      %s330 = sphi 0, %s316
      %s334 = sphi 0, %s334
      %s336 = sphi 0, %s334
      %s337 = sphi 0, %s336
      %s351 = sphi 0, %s337
      %s357 = sphi 0, %s359
      %s360 = sphi 0, %s357
      %s361 = sphi 0, %s360
      %s377 = sphi 0, %s361
    $region4: #{tpu_custom_call.1} parent=1 // loop_header_branch
      %30 = sbr.rel (%p28) target = $region8
    $region5: #{tpu_custom_call.1} parent=1 // loop_body
      %s32 = ssub.s32 %s27, 1
      %s33 = ssub.s32 %s27, 2
      %s34 = sadd.s32 %s27, 1
      %s35 = ssub.s32 %s27, %s34
      %p36 = scmp.eq.s32.totalorder %s35, 0
      %s38 = sadd.s32 %s37, 1
      %s39 = scalar_select %p36, %s37, %s38
      %p42 = pneg %p36
      %p43 = scmp.eq.s32.totalorder %s27, 1
      %p44 = por %p42, %p43
      %p45 = scmp.ne.s32.totalorder %s37, %s40
      %p46 = scmp.eq.s32.totalorder %s27, 0
      %p47 = por %p45, %p46
      %p48 = scmp.ne.s32.totalorder %s37, %s40
      %p49 = scmp.eq.s32.totalorder %s32, 1
      %p50 = por %p48, %p49
      %p51 = scmp.ne.s32.totalorder %s40, %s41
      %p52 = scmp.eq.s32.totalorder %s32, 0
      %p53 = por %p51, %p52
      %p54 = scmp.ne.s32.totalorder %s40, %s41
      %p55 = scmp.eq.s32.totalorder %s33, 1
      %p56 = por %p54, %p55
      %p58 = scmp.ne.s32.totalorder %s41, %s57
      %p59 = scmp.eq.s32.totalorder %s33, 0
      %p60 = por %p58, %p59
      %s62 = sadd.s32 %s61, 1
      %p65 = scmp.eq.s32.totalorder %s27, 1
      %p66 = scmp.ne.s32.totalorder %s61, %s63
      %p67 = scmp.eq.s32.totalorder %s27, 0
      %p68 = por %p66, %p67
      %p69 = scmp.ne.s32.totalorder %s61, %s63
      %p70 = scmp.eq.s32.totalorder %s32, 1
      %p71 = por %p69, %p70
      %p72 = scmp.ne.s32.totalorder %s63, %s64
      %p73 = scmp.eq.s32.totalorder %s32, 0
      %p74 = por %p72, %p73
      %p75 = scmp.ne.s32.totalorder %s63, %s64
      %p76 = scmp.eq.s32.totalorder %s33, 1
      %p77 = por %p75, %p76
      %p79 = scmp.ne.s32.totalorder %s64, %s78
      %p80 = scmp.eq.s32.totalorder %s33, 0
      %p81 = por %p79, %p80
      %s83 = sadd.s32 %s82, 1
      %p86 = scmp.eq.s32.totalorder %s27, 1
      %p87 = scmp.ne.s32.totalorder %s82, %s84
      %p88 = scmp.eq.s32.totalorder %s27, 0
      %p89 = por %p87, %p88
      %p90 = scmp.ne.s32.totalorder %s82, %s84
      %p91 = scmp.eq.s32.totalorder %s32, 1
      %p92 = por %p90, %p91
      %p93 = scmp.ne.s32.totalorder %s84, %s85
      %p94 = scmp.eq.s32.totalorder %s32, 0
      %p95 = por %p93, %p94
      %p96 = scmp.ne.s32.totalorder %s84, %s85
      %p97 = scmp.eq.s32.totalorder %s33, 1
      %p98 = por %p96, %p97
      %p100 = scmp.ne.s32.totalorder %s85, %s99
      %p101 = scmp.eq.s32.totalorder %s33, 0
      %p102 = por %p100, %p101
      %s104 = sadd.s32 %s103, 1
      %p107 = scmp.eq.s32.totalorder %s27, 1
      %p108 = scmp.ne.s32.totalorder %s103, %s105
      %p109 = scmp.eq.s32.totalorder %s27, 0
      %p110 = por %p108, %p109
      %p111 = scmp.ne.s32.totalorder %s103, %s105
      %p112 = scmp.eq.s32.totalorder %s32, 1
      %p113 = por %p111, %p112
      %p114 = scmp.ne.s32.totalorder %s105, %s106
      %p115 = scmp.eq.s32.totalorder %s32, 0
      %p116 = por %p114, %p115
      %p117 = scmp.ne.s32.totalorder %s105, %s106
      %p118 = scmp.eq.s32.totalorder %s33, 1
      %p119 = por %p117, %p118
      %p121 = scmp.ne.s32.totalorder %s106, %s120
      %p122 = scmp.eq.s32.totalorder %s33, 0
      %p123 = por %p121, %p122
      %s125 = sadd.s32 %s124, 1
      %p128 = scmp.eq.s32.totalorder %s27, 1
      %p129 = scmp.ne.s32.totalorder %s124, %s126
      %p130 = scmp.eq.s32.totalorder %s27, 0
      %p131 = por %p129, %p130
      %p132 = scmp.ne.s32.totalorder %s124, %s126
      %p133 = scmp.eq.s32.totalorder %s32, 1
      %p134 = por %p132, %p133
      %p135 = scmp.ne.s32.totalorder %s126, %s127
      %p136 = scmp.eq.s32.totalorder %s32, 0
      %p137 = por %p135, %p136
      %p138 = scmp.ne.s32.totalorder %s126, %s127
      %p139 = scmp.eq.s32.totalorder %s33, 1
      %p140 = por %p138, %p139
      %p142 = scmp.ne.s32.totalorder %s127, %s141
      %p143 = scmp.eq.s32.totalorder %s33, 0
      %p144 = por %p142, %p143
      %s146 = sadd.s32 %s145, 1
      %p149 = scmp.eq.s32.totalorder %s27, 1
      %p150 = scmp.ne.s32.totalorder %s145, %s147
      %p151 = scmp.eq.s32.totalorder %s27, 0
      %p152 = por %p150, %p151
      %p153 = scmp.ne.s32.totalorder %s145, %s147
      %p154 = scmp.eq.s32.totalorder %s32, 1
      %p155 = por %p153, %p154
      %p156 = scmp.ne.s32.totalorder %s147, %s148
      %p157 = scmp.eq.s32.totalorder %s32, 0
      %p158 = por %p156, %p157
      %p159 = scmp.ne.s32.totalorder %s147, %s148
      %p160 = scmp.eq.s32.totalorder %s33, 1
      %p161 = por %p159, %p160
      %p163 = scmp.ne.s32.totalorder %s148, %s162
      %p164 = scmp.eq.s32.totalorder %s33, 0
      %p165 = por %p163, %p164
      %s167 = sadd.s32 %s166, 1
      %p170 = scmp.eq.s32.totalorder %s27, 1
      %p171 = scmp.ne.s32.totalorder %s166, %s168
      %p172 = scmp.eq.s32.totalorder %s27, 0
      %p173 = por %p171, %p172
      %p174 = scmp.ne.s32.totalorder %s166, %s168
      %p175 = scmp.eq.s32.totalorder %s32, 1
      %p176 = por %p174, %p175
      %p177 = scmp.ne.s32.totalorder %s168, %s169
      %p178 = scmp.eq.s32.totalorder %s32, 0
      %p179 = por %p177, %p178
      %p180 = scmp.ne.s32.totalorder %s168, %s169
      %p181 = scmp.eq.s32.totalorder %s33, 1
      %p182 = por %p180, %p181
      %p184 = scmp.ne.s32.totalorder %s169, %s183
      %p185 = scmp.eq.s32.totalorder %s33, 0
      %p186 = por %p184, %p185
      %s188 = sadd.s32 %s187, 1
      %p191 = scmp.eq.s32.totalorder %s27, 1
      %p192 = scmp.ne.s32.totalorder %s187, %s189
      %p193 = scmp.eq.s32.totalorder %s27, 0
      %p194 = por %p192, %p193
      %p195 = scmp.ne.s32.totalorder %s187, %s189
      %p196 = scmp.eq.s32.totalorder %s32, 1
      %p197 = por %p195, %p196
      %p198 = scmp.ne.s32.totalorder %s189, %s190
      %p199 = scmp.eq.s32.totalorder %s32, 0
      %p200 = por %p198, %p199
      %p201 = scmp.ne.s32.totalorder %s189, %s190
      %p202 = scmp.eq.s32.totalorder %s33, 1
      %p203 = por %p201, %p202
      %p205 = scmp.ne.s32.totalorder %s190, %s204
      %p206 = scmp.eq.s32.totalorder %s33, 0
      %p207 = por %p205, %p206
      %s209 = sadd.s32 %s208, 1
      %p212 = scmp.eq.s32.totalorder %s27, 1
      %p213 = scmp.ne.s32.totalorder %s208, %s210
      %p214 = scmp.eq.s32.totalorder %s27, 0
      %p215 = por %p213, %p214
      %p216 = scmp.ne.s32.totalorder %s208, %s210
      %p217 = scmp.eq.s32.totalorder %s32, 1
      %p218 = por %p216, %p217
      %p219 = scmp.ne.s32.totalorder %s210, %s211
      %p220 = scmp.eq.s32.totalorder %s32, 0
      %p221 = por %p219, %p220
      %p222 = scmp.ne.s32.totalorder %s210, %s211
      %p223 = scmp.eq.s32.totalorder %s33, 1
      %p224 = por %p222, %p223
      %p226 = scmp.ne.s32.totalorder %s211, %s225
      %p227 = scmp.eq.s32.totalorder %s33, 0
      %p228 = por %p226, %p227
      %s230 = sadd.s32 %s229, 1
      %p233 = scmp.eq.s32.totalorder %s27, 1
      %p234 = scmp.ne.s32.totalorder %s229, %s231
      %p235 = scmp.eq.s32.totalorder %s27, 0
      %p236 = por %p234, %p235
      %p237 = scmp.ne.s32.totalorder %s229, %s231
      %p238 = scmp.eq.s32.totalorder %s32, 1
      %p239 = por %p237, %p238
      %p240 = scmp.ne.s32.totalorder %s231, %s232
      %p241 = scmp.eq.s32.totalorder %s32, 0
      %p242 = por %p240, %p241
      %p243 = scmp.ne.s32.totalorder %s231, %s232
      %p244 = scmp.eq.s32.totalorder %s33, 1
      %p245 = por %p243, %p244
      %p247 = scmp.ne.s32.totalorder %s232, %s246
      %p248 = scmp.eq.s32.totalorder %s33, 0
      %p249 = por %p247, %p248
      %s251 = sadd.s32 %s250, 1
      %p254 = scmp.eq.s32.totalorder %s27, 1
      %p255 = scmp.ne.s32.totalorder %s250, %s252
      %p256 = scmp.eq.s32.totalorder %s27, 0
      %p257 = por %p255, %p256
      %p258 = scmp.ne.s32.totalorder %s250, %s252
      %p259 = scmp.eq.s32.totalorder %s32, 1
      %p260 = por %p258, %p259
      %p261 = scmp.ne.s32.totalorder %s252, %s253
      %p262 = scmp.eq.s32.totalorder %s32, 0
      %p263 = por %p261, %p262
      %p264 = scmp.ne.s32.totalorder %s252, %s253
      %p265 = scmp.eq.s32.totalorder %s33, 1
      %p266 = por %p264, %p265
      %p268 = scmp.ne.s32.totalorder %s253, %s267
      %p269 = scmp.eq.s32.totalorder %s33, 0
      %p270 = por %p268, %p269
      %s272 = sadd.s32 %s271, 1
      %p275 = scmp.eq.s32.totalorder %s27, 1
      %p276 = scmp.ne.s32.totalorder %s271, %s273
      %p277 = scmp.eq.s32.totalorder %s27, 0
      %p278 = por %p276, %p277
      %p279 = scmp.ne.s32.totalorder %s271, %s273
      %p280 = scmp.eq.s32.totalorder %s32, 1
      %p281 = por %p279, %p280
      %p282 = scmp.ne.s32.totalorder %s273, %s274
      %p283 = scmp.eq.s32.totalorder %s32, 0
      %p284 = por %p282, %p283
      %p285 = scmp.ne.s32.totalorder %s273, %s274
      %p286 = scmp.eq.s32.totalorder %s33, 1
      %p287 = por %p285, %p286
      %p289 = scmp.ne.s32.totalorder %s274, %s288
      %p290 = scmp.eq.s32.totalorder %s33, 0
      %p291 = por %p289, %p290
      %s293 = sadd.s32 %s292, 1
      %p296 = scmp.eq.s32.totalorder %s27, 1
      %p297 = scmp.ne.s32.totalorder %s292, %s294
      %p298 = scmp.eq.s32.totalorder %s27, 0
      %p299 = por %p297, %p298
      %p300 = scmp.ne.s32.totalorder %s292, %s294
      %p301 = scmp.eq.s32.totalorder %s32, 1
      %p302 = por %p300, %p301
      %p303 = scmp.ne.s32.totalorder %s294, %s295
      %p304 = scmp.eq.s32.totalorder %s32, 0
      %p305 = por %p303, %p304
      %p306 = scmp.ne.s32.totalorder %s294, %s295
      %p307 = scmp.eq.s32.totalorder %s33, 1
      %p308 = por %p306, %p307
      %p310 = scmp.ne.s32.totalorder %s295, %s309
      %p311 = scmp.eq.s32.totalorder %s33, 0
      %p312 = por %p310, %p311
      %s314 = sadd.s32 %s313, 1
      %p317 = scmp.eq.s32.totalorder %s27, 1
      %p318 = scmp.ne.s32.totalorder %s313, %s315
      %p319 = scmp.eq.s32.totalorder %s27, 0
      %p320 = por %p318, %p319
      %p321 = scmp.ne.s32.totalorder %s313, %s315
      %p322 = scmp.eq.s32.totalorder %s32, 1
      %p323 = por %p321, %p322
      %p324 = scmp.ne.s32.totalorder %s315, %s316
      %p325 = scmp.eq.s32.totalorder %s32, 0
      %p326 = por %p324, %p325
      %p327 = scmp.ne.s32.totalorder %s315, %s316
      %p328 = scmp.eq.s32.totalorder %s33, 1
      %p329 = por %p327, %p328
      %p331 = scmp.ne.s32.totalorder %s316, %s330
      %p332 = scmp.eq.s32.totalorder %s33, 0
      %p333 = por %p331, %p332
      %s335 = sadd.s32 %s334, 1
      %p338 = scmp.eq.s32.totalorder %s27, 1
      %p339 = scmp.ne.s32.totalorder %s334, %s336
      %p340 = scmp.eq.s32.totalorder %s27, 0
      %p341 = por %p339, %p340
      %p342 = scmp.ne.s32.totalorder %s334, %s336
      %p343 = scmp.eq.s32.totalorder %s32, 1
      %p344 = por %p342, %p343
      %p345 = scmp.ne.s32.totalorder %s336, %s337
      %p346 = scmp.eq.s32.totalorder %s32, 0
      %p347 = por %p345, %p346
      %p348 = scmp.ne.s32.totalorder %s336, %s337
      %p349 = scmp.eq.s32.totalorder %s33, 1
      %p350 = por %p348, %p349
      %p352 = scmp.ne.s32.totalorder %s337, %s351
      %p353 = scmp.eq.s32.totalorder %s33, 0
      %p354 = por %p352, %p353
      %s355 = ssub.s32 %s27, %s34
      %p356 = scmp.eq.s32.totalorder %s355, 0
      %s358 = sadd.s32 %s357, 1
      %s359 = scalar_select %p356, %s357, %s358
      %p362 = pneg %p356
      %p363 = scmp.eq.s32.totalorder %s27, 1
      %p364 = por %p362, %p363
      %p365 = scmp.ne.s32.totalorder %s357, %s360
      %p366 = scmp.eq.s32.totalorder %s27, 0
      %p367 = por %p365, %p366
      %p368 = scmp.ne.s32.totalorder %s357, %s360
      %p369 = scmp.eq.s32.totalorder %s32, 1
      %p370 = por %p368, %p369
      %p371 = scmp.ne.s32.totalorder %s360, %s361
      %p372 = scmp.eq.s32.totalorder %s32, 0
      %p373 = por %p371, %p372
      %p374 = scmp.ne.s32.totalorder %s360, %s361
      %p375 = scmp.eq.s32.totalorder %s33, 1
      %p376 = por %p374, %p375
      %p378 = scmp.ne.s32.totalorder %s361, %s377
      %p379 = scmp.eq.s32.totalorder %s33, 0
      %p380 = por %p378, %p379
      %p381 = scmp.le.s32.totalorder 1, %s27
      %p382 = scmp.lt.s32.totalorder %s27, 3
      %p383 = pnand %p381, %p382
      %p384 = pneg %p383
      // Predicated region
      $region9: #{tpu_custom_call.1} parent=5 // pred_check
        _
      $region10: #{tpu_custom_call.1} parent=5 // pred_check_branch
        %386 = sbr.rel (%p383) target = $region12
      $region11: #{tpu_custom_call.1} parent=5 // pred_region
        %s387 = ssub.s32 %s27, 1
        // Predicated region
        $region13: #{tpu_custom_call.1} parent=11 // pred_check
          %p388 = pneg %p74
        $region14: #{tpu_custom_call.1} parent=11 // pred_check_branch
          %390 = sbr.rel (%p388) target = $region16
        $region15: #{tpu_custom_call.1} parent=11 // pred_region
          _
        $region16: #{tpu_custom_call.1} parent=11 // pred_fallthru
          _
        // Predicated region
        $region17: #{tpu_custom_call.1} parent=11 // pred_check
          %p391 = pneg %p95
        $region18: #{tpu_custom_call.1} parent=11 // pred_check_branch
          %393 = sbr.rel (%p391) target = $region20
        $region19: #{tpu_custom_call.1} parent=11 // pred_region
          _
        $region20: #{tpu_custom_call.1} parent=11 // pred_fallthru
          _
        // Predicated region
        $region21: #{tpu_custom_call.1} parent=11 // pred_check
          %p394 = pneg %p116
        $region22: #{tpu_custom_call.1} parent=11 // pred_check_branch
          %396 = sbr.rel (%p394) target = $region24
        $region23: #{tpu_custom_call.1} parent=11 // pred_region
          %s398 = ssub.s32 9216, 9216
          %399 = vsyncadd [#allocation3], %s398
          %s400 = sshll.u32 [#allocation2], 4
          %s401 = int_to_ptr.vmem [resolvable:$true] %s400
          %406 = dma.hbm_to_vmem [thread:$0]  %s3, 9216, %s401, [#allocation3], 192, 192, 12
        $region24: #{tpu_custom_call.1} parent=11 // pred_fallthru
          _
        // Predicated region
        $region25: #{tpu_custom_call.1} parent=11 // pred_check
          %p407 = pneg %p137
        $region26: #{tpu_custom_call.1} parent=11 // pred_check_branch
          %409 = sbr.rel (%p407) target = $region28
        $region27: #{tpu_custom_call.1} parent=11 // pred_region
          _
        $region28: #{tpu_custom_call.1} parent=11 // pred_fallthru
          _
        // Predicated region
        $region29: #{tpu_custom_call.1} parent=11 // pred_check
          %p410 = pneg %p158
        $region30: #{tpu_custom_call.1} parent=11 // pred_check_branch
          %412 = sbr.rel (%p410) target = $region32
        $region31: #{tpu_custom_call.1} parent=11 // pred_region
          %s414 = ssub.s32 9216, 9216
          %415 = vsyncadd [#allocation6], %s414
          %s416 = sshll.u32 [#allocation5], 4
          %s417 = int_to_ptr.vmem [resolvable:$true] %s416
          %422 = dma.hbm_to_vmem [thread:$0]  %s5, 9216, %s417, [#allocation6], 192, 192, 12
        $region32: #{tpu_custom_call.1} parent=11 // pred_fallthru
          _
        // Predicated region
        $region33: #{tpu_custom_call.1} parent=11 // pred_check
          %p423 = pneg %p179
        $region34: #{tpu_custom_call.1} parent=11 // pred_check_branch
          %425 = sbr.rel (%p423) target = $region36
        $region35: #{tpu_custom_call.1} parent=11 // pred_region
          _
        $region36: #{tpu_custom_call.1} parent=11 // pred_fallthru
          _
        // Predicated region
        $region37: #{tpu_custom_call.1} parent=11 // pred_check
          %p426 = pneg %p200
        $region38: #{tpu_custom_call.1} parent=11 // pred_check_branch
          %428 = sbr.rel (%p426) target = $region40
        $region39: #{tpu_custom_call.1} parent=11 // pred_region
          %s430 = ssub.s32 9216, 9216
          %431 = vsyncadd [#allocation6], %s430
          %s432 = sshll.u32 [#allocation7], 4
          %s433 = int_to_ptr.vmem [resolvable:$true] %s432
          %438 = dma.hbm_to_vmem [thread:$0]  %s7, 9216, %s433, [#allocation6], 192, 192, 12
        $region40: #{tpu_custom_call.1} parent=11 // pred_fallthru
          _
        // Predicated region
        $region41: #{tpu_custom_call.1} parent=11 // pred_check
          %p439 = pneg %p221
        $region42: #{tpu_custom_call.1} parent=11 // pred_check_branch
          %441 = sbr.rel (%p439) target = $region44
        $region43: #{tpu_custom_call.1} parent=11 // pred_region
          _
        $region44: #{tpu_custom_call.1} parent=11 // pred_fallthru
          _
        // Predicated region
        $region45: #{tpu_custom_call.1} parent=11 // pred_check
          %p442 = pneg %p242
        $region46: #{tpu_custom_call.1} parent=11 // pred_check_branch
          %444 = sbr.rel (%p442) target = $region48
        $region47: #{tpu_custom_call.1} parent=11 // pred_region
          %s446 = ssub.s32 9216, 9216
          %447 = vsyncadd [#allocation9], %s446
          %s448 = sshll.u32 [#allocation8], 4
          %s449 = int_to_ptr.vmem [resolvable:$true] %s448
          %454 = dma.hbm_to_vmem [thread:$0]  %s9, 9216, %s449, [#allocation9], 192, 192, 12
        $region48: #{tpu_custom_call.1} parent=11 // pred_fallthru
          _
        // Predicated region
        $region49: #{tpu_custom_call.1} parent=11 // pred_check
          %p455 = pneg %p263
        $region50: #{tpu_custom_call.1} parent=11 // pred_check_branch
          %457 = sbr.rel (%p455) target = $region52
        $region51: #{tpu_custom_call.1} parent=11 // pred_region
          _
        $region52: #{tpu_custom_call.1} parent=11 // pred_fallthru
          _
        // Predicated region
        $region53: #{tpu_custom_call.1} parent=11 // pred_check
          %p458 = pneg %p284
        $region54: #{tpu_custom_call.1} parent=11 // pred_check_branch
          %460 = sbr.rel (%p458) target = $region56
        $region55: #{tpu_custom_call.1} parent=11 // pred_region
          %s462 = ssub.s32 9216, 9216
          %463 = vsyncadd [#allocation9], %s462
          %s464 = sshll.u32 [#allocation10], 4
          %s465 = int_to_ptr.vmem [resolvable:$true] %s464
          %470 = dma.hbm_to_vmem [thread:$0]  %s11, 9216, %s465, [#allocation9], 192, 192, 12
        $region56: #{tpu_custom_call.1} parent=11 // pred_fallthru
          _
        // Predicated region
        $region57: #{tpu_custom_call.1} parent=11 // pred_check
          %p471 = pneg %p305
        $region58: #{tpu_custom_call.1} parent=11 // pred_check_branch
          %473 = sbr.rel (%p471) target = $region60
        $region59: #{tpu_custom_call.1} parent=11 // pred_region
          _
        $region60: #{tpu_custom_call.1} parent=11 // pred_fallthru
          _
        // Predicated region
        $region61: #{tpu_custom_call.1} parent=11 // pred_check
          %p474 = pneg %p326
        $region62: #{tpu_custom_call.1} parent=11 // pred_check_branch
          %476 = sbr.rel (%p474) target = $region64
        $region63: #{tpu_custom_call.1} parent=11 // pred_region
          _
        $region64: #{tpu_custom_call.1} parent=11 // pred_fallthru
          _
        // Predicated region
        $region65: #{tpu_custom_call.1} parent=11 // pred_check
          %p477 = pneg %p347
        $region66: #{tpu_custom_call.1} parent=11 // pred_check_branch
          %479 = sbr.rel (%p477) target = $region68
        $region67: #{tpu_custom_call.1} parent=11 // pred_region
          _
        $region68: #{tpu_custom_call.1} parent=11 // pred_fallthru
          _
      $region12: #{tpu_custom_call.1} parent=5 // pred_fallthru
        _
      %p480 = scmp.lt.s32.totalorder %s27, 2
      // Predicated region
      $region69: #{tpu_custom_call.1} parent=5 // pred_check
        %p481 = pneg %p480
      $region70: #{tpu_custom_call.1} parent=5 // pred_check_branch
        %483 = sbr.rel (%p481) target = $region72
      $region71: #{tpu_custom_call.1} parent=5 // pred_region
        // Predicated region
        $region73: #{tpu_custom_call.1} parent=71 // pred_check
          %p484 = pneg %p47
        $region74: #{tpu_custom_call.1} parent=71 // pred_check_branch
          %486 = sbr.rel (%p484) target = $region76
        $region75: #{tpu_custom_call.1} parent=71 // pred_region
          %s487 = smul.u32 32, %s27
          %p488 = scmp.lt.s32.totalorder %s487, 63
          %s489 = scalar_select %p488, %s487, 63
          %s490 = smul.addr %s489, 4
          %s491 = scalar_lea.vmem %s0, %s490
          %s492 = smul.u32 32, %s27
        $region76: #{tpu_custom_call.1} parent=71 // pred_fallthru
          _
      $region72: #{tpu_custom_call.1} parent=5 // pred_fallthru
        _
      %p493 = scmp.le.s32.totalorder 1, %s27
      %p494 = scmp.lt.s32.totalorder %s27, 3
      %p495 = pnand %p493, %p494
      %p496 = pneg %p495
      // Predicated region
      $region77: #{tpu_custom_call.1} parent=5 // pred_check
        _
      $region78: #{tpu_custom_call.1} parent=5 // pred_check_branch
        %498 = sbr.rel (%p495) target = $region80
      $region79: #{tpu_custom_call.1} parent=5 // pred_region
        %s499 = ssub.s32 %s27, 1
        // Predicated region
        $region81: #{tpu_custom_call.1} parent=79 // pred_check
          %p500 = pneg %p116
        $region82: #{tpu_custom_call.1} parent=79 // pred_check_branch
          %502 = sbr.rel (%p500) target = $region84
        $region83: #{tpu_custom_call.1} parent=79 // pred_region
          %503 = dma.done [#allocation3], 9216
        $region84: #{tpu_custom_call.1} parent=79 // pred_fallthru
          _
        // Predicated region
        $region85: #{tpu_custom_call.1} parent=79 // pred_check
          %p504 = pneg %p158
        $region86: #{tpu_custom_call.1} parent=79 // pred_check_branch
          %506 = sbr.rel (%p504) target = $region88
        $region87: #{tpu_custom_call.1} parent=79 // pred_region
          %507 = dma.done [#allocation6], 9216
        $region88: #{tpu_custom_call.1} parent=79 // pred_fallthru
          _
        // Predicated region
        $region89: #{tpu_custom_call.1} parent=79 // pred_check
          %p508 = pneg %p200
        $region90: #{tpu_custom_call.1} parent=79 // pred_check_branch
          %510 = sbr.rel (%p508) target = $region92
        $region91: #{tpu_custom_call.1} parent=79 // pred_region
          %511 = dma.done [#allocation6], 9216
        $region92: #{tpu_custom_call.1} parent=79 // pred_fallthru
          _
        // Predicated region
        $region93: #{tpu_custom_call.1} parent=79 // pred_check
          %p512 = pneg %p242
        $region94: #{tpu_custom_call.1} parent=79 // pred_check_branch
          %514 = sbr.rel (%p512) target = $region96
        $region95: #{tpu_custom_call.1} parent=79 // pred_region
          %515 = dma.done [#allocation9], 9216
        $region96: #{tpu_custom_call.1} parent=79 // pred_fallthru
          _
        // Predicated region
        $region97: #{tpu_custom_call.1} parent=79 // pred_check
          %p516 = pneg %p284
        $region98: #{tpu_custom_call.1} parent=79 // pred_check_branch
          %518 = sbr.rel (%p516) target = $region100
        $region99: #{tpu_custom_call.1} parent=79 // pred_region
          %519 = dma.done [#allocation9], 9216
        $region100: #{tpu_custom_call.1} parent=79 // pred_fallthru
          _
        %s520 = smul.u32 32, %s32
        %p521 = scmp.lt.s32.totalorder %s520, 63
        %s522 = scalar_select %p521, %s520, 63
        %s523 = smul.addr %s522, 4
        %s524 = scalar_lea.vmem %s0, %s523
        %p525 = pneg %p53
        %p526 = pneg %p50
        %p527 = pneg %p74
        %p528 = pneg %p71
        %p529 = pneg %p95
        %p530 = pneg %p92
        %p531 = pneg %p116
        %p532 = pneg %p113
        %p533 = pneg %p137
        %p534 = pneg %p134
        %p535 = pneg %p158
        %p536 = pneg %p155
        %p537 = pneg %p179
        %p538 = pneg %p176
        %p539 = pneg %p200
        %p540 = pneg %p197
        %p541 = pneg %p221
        %p542 = pneg %p218
        %p543 = pneg %p242
        %p544 = pneg %p239
        %p545 = pneg %p263
        %p546 = pneg %p260
        %p547 = pneg %p284
        %p548 = pneg %p281
        %p549 = pneg %p305
        %p550 = pneg %p302
        %p551 = pneg %p326
        %p552 = pneg %p323
        %p553 = pneg %p347
        %p554 = pneg %p344
        %p555 = pneg %p373
        %p556 = pneg %p370
        %s557 = sand.u32 %s360, 1
        %s558 = scalar_lea.sflag [#allocation4], %s557
        %s559 = sand.u32 %s360, 1
        %s560 = smul.addr %s559, 256
        %s561 = scalar_lea.vmem [#allocation11], %s560
        %s562 = smul.u32 32, %s32
        %p563 = scmp.lt.s32.totalorder %s562, 63
        %s564 = scalar_select %p563, %s562, 63
        %s565 = smul.addr %s564, 4
        %s566 = scalar_lea.vmem %s0, %s565
        %s567 = smul.u32 32, %s32
        %s568 = smul.u32 32, %s32
        %v570 = vld [vmem:[%s566] sm:$0xf]
        %v571 = vld [vmem:[%s566 + $0x4] sm:$0xf]
        %v572 = vld [vmem:[%s566 + $0x8] sm:$0xf]
        %v573 = vld [vmem:[%s566 + $0xc] sm:$0xf]
        %v574 = vld [vmem:[%s566 + $0x10] sm:$0xf]
        %v575 = vld [vmem:[%s566 + $0x14] sm:$0xf]
        %v576 = vld [vmem:[%s566 + $0x18] sm:$0xf]
        %v577 = vld [vmem:[%s566 + $0x1c] sm:$0xf]
        %v578 = vld [vmem:[%s566 + $0x20] sm:$0xf]
        %v579 = vld [vmem:[%s566 + $0x24] sm:$0xf]
        %v580 = vld [vmem:[%s566 + $0x28] sm:$0xf]
        %v581 = vld [vmem:[%s566 + $0x2c] sm:$0xf]
        %v582 = vld [vmem:[%s566 + $0x30] sm:$0xf]
        %v583 = vld [vmem:[%s566 + $0x34] sm:$0xf]
        %v584 = vld [vmem:[%s566 + $0x38] sm:$0xf]
        %v585 = vld [vmem:[%s566 + $0x3c] sm:$0xf]
        %v586 = vld [vmem:[%s566 + $0x40] sm:$0xf]
        %v587 = vld [vmem:[%s566 + $0x44] sm:$0xf]
        %v588 = vld [vmem:[%s566 + $0x48] sm:$0xf]
        %v589 = vld [vmem:[%s566 + $0x4c] sm:$0xf]
        %v590 = vld [vmem:[%s566 + $0x50] sm:$0xf]
        %v591 = vld [vmem:[%s566 + $0x54] sm:$0xf]
        %v592 = vld [vmem:[%s566 + $0x58] sm:$0xf]
        %v593 = vld [vmem:[%s566 + $0x5c] sm:$0xf]
        %v594 = vld [vmem:[%s566 + $0x60] sm:$0xf]
        %v595 = vld [vmem:[%s566 + $0x64] sm:$0xf]
        %v596 = vld [vmem:[%s566 + $0x68] sm:$0xf]
        %v597 = vld [vmem:[%s566 + $0x6c] sm:$0xf]
        %v598 = vld [vmem:[%s566 + $0x70] sm:$0xf]
        %v599 = vld [vmem:[%s566 + $0x74] sm:$0xf]
        %v600 = vld [vmem:[%s566 + $0x78] sm:$0xf]
        %v601 = vld [vmem:[%s566 + $0x7c] sm:$0xf]
        %v602 = vld [vmem:[%s1] sm:$0xff]
        %v603 = vld [vmem:[%s1 + $0x8] sm:$0xf]
        %v604 = vld [vmem:[%s1 + $0xc] sm:$0xff]
        %v605 = vld [vmem:[%s1 + $0x14] sm:$0xf]
        %v606 = vld [vmem:[%s1 + $0x18] sm:$0xff]
        %v607 = vld [vmem:[%s1 + $0x20] sm:$0xf]
        %v608 = vld [vmem:[%s1 + $0x24] sm:$0xff]
        %v609 = vld [vmem:[%s1 + $0x2c] sm:$0xf]
        %v610 = vld [vmem:[%s2] sm:$0x7]
        %v612 = vlaneseq
        %v613 = vshrl.u32 %v612, 7
        %v614 = vsub.s32 0, %v613
        %v615 = vrot.slane %v610, %v614
        %v616 = vlaneseq
        %v617 = vshrl.u32 %v616, 7
        %v618 = vsub.s32 1, %v617
        %v619 = vrot.slane %v610, %v618
        %v620 = vlaneseq
        %v621 = vshrl.u32 %v620, 7
        %v622 = vsub.s32 2, %v621
        %v623 = vrot.slane %v610, %v622
        %v659 = vunpack.c.l.b16 %v570
        %v660 = vunpack.c.l.b16 %v571
        %v661 = vunpack.c.l.b16 %v572
        %v662 = vunpack.c.l.b16 %v573
        %v663 = vunpack.c.l.b16 %v574
        %v664 = vunpack.c.l.b16 %v575
        %v665 = vunpack.c.l.b16 %v576
        %v666 = vunpack.c.l.b16 %v577
        %v667 = vunpack.c.l.b16 %v578
        %v668 = vunpack.c.l.b16 %v579
        %v669 = vunpack.c.l.b16 %v580
        %v670 = vunpack.c.l.b16 %v581
        %v671 = vunpack.c.l.b16 %v582
        %v672 = vunpack.c.l.b16 %v583
        %v673 = vunpack.c.l.b16 %v584
        %v674 = vunpack.c.l.b16 %v585
        %v675 = vunpack.c.l.b16 %v586
        %v676 = vunpack.c.l.b16 %v587
        %v677 = vunpack.c.l.b16 %v588
        %v678 = vunpack.c.l.b16 %v589
        %v679 = vunpack.c.l.b16 %v590
        %v680 = vunpack.c.l.b16 %v591
        %v681 = vunpack.c.l.b16 %v592
        %v682 = vunpack.c.l.b16 %v593
        %v683 = vunpack.c.l.b16 %v594
        %v684 = vunpack.c.l.b16 %v595
        %v685 = vunpack.c.l.b16 %v596
        %v686 = vunpack.c.l.b16 %v597
        %v687 = vunpack.c.l.b16 %v598
        %v688 = vunpack.c.l.b16 %v599
        %v689 = vunpack.c.l.b16 %v600
        %v690 = vunpack.c.l.b16 %v601
        %v691 = vpack.c.b16 %v660, %v659
        %v692 = vpack.c.b16 %v662, %v661
        %v693 = vpack.c.b16 %v664, %v663
        %v694 = vpack.c.b16 %v666, %v665
        %v695 = vpack.c.b16 %v668, %v667
        %v696 = vpack.c.b16 %v670, %v669
        %v697 = vpack.c.b16 %v672, %v671
        %v698 = vpack.c.b16 %v674, %v673
        %v699 = vpack.c.b16 %v676, %v675
        %v700 = vpack.c.b16 %v678, %v677
        %v701 = vpack.c.b16 %v680, %v679
        %v702 = vpack.c.b16 %v682, %v681
        %v703 = vpack.c.b16 %v684, %v683
        %v704 = vpack.c.b16 %v686, %v685
        %v705 = vpack.c.b16 %v688, %v687
        %v706 = vpack.c.b16 %v690, %v689
        %v715 = vunpack.c.l.b16 %v602
        %v716 = vunpack.c.h.b16 %v602
        %v717 = vunpack.c.l.b16 %v603
        %v718 = vunpack.c.l.b16 %v604
        %v719 = vunpack.c.h.b16 %v604
        %v720 = vunpack.c.l.b16 %v605
        %v721 = vunpack.c.l.b16 %v606
        %v722 = vunpack.c.h.b16 %v606
        %v723 = vunpack.c.l.b16 %v607
        %v724 = vunpack.c.l.b16 %v608
        %v725 = vunpack.c.h.b16 %v608
        %v726 = vunpack.c.l.b16 %v609
        %v727 = vpack.c.b16 %v718, %v715
        %v728 = vpack.c.b16 %v719, %v716
        %v729 = vpack.c.b16 %v720, %v717
        %v730 = vpack.c.b16 %v724, %v721
        %v731 = vpack.c.b16 %v725, %v722
        %v732 = vpack.c.b16 %v726, %v723
        %vm739 = vcmask 261120
        %v741 = vsel %vm739, %v691, 0
        %v744 = vsel %vm739, %v692, 0
        %v747 = vsel %vm739, %v693, 0
        %v750 = vsel %vm739, %v694, 0
        %v753 = vsel %vm739, %v695, 0
        %v756 = vsel %vm739, %v696, 0
        %v759 = vsel %vm739, %v697, 0
        %v762 = vsel %vm739, %v698, 0
        %v765 = vsel %vm739, %v699, 0
        %v768 = vsel %vm739, %v700, 0
        %v771 = vsel %vm739, %v701, 0
        %v774 = vsel %vm739, %v702, 0
        %v777 = vsel %vm739, %v703, 0
        %v780 = vsel %vm739, %v704, 0
        %v783 = vsel %vm739, %v705, 0
        %v786 = vsel %vm739, %v706, 0
        %788 = vmatprep.subr.bf16.mxu0 %v728
        %789 = vmatpush1.bf16.msra.mxu0 %v727
        %790 = vmatprep.subr.bf16.mxu0 %v731
        %791 = vmatpush1.bf16.msra.mxu0 %v730
        %792 = vmatprep.subr.bf16.mxu0 0
        %793 = vmatpush1.bf16.msra.mxu0 0
        %794 = vmatprep.subr.bf16.mxu0 0
        %795 = vmatpush1.bf16.msra.mxu0 0
        %796 = vmatprep.subr.bf16.mxu0 0
        %797 = vmatpush1.bf16.msra.mxu0 0
        %798 = vmatprep.subr.bf16.mxu0 0
        %799 = vmatpush1.bf16.msra.mxu0 0
        %800 = vmatprep.subr.bf16.mxu0 0
        %801 = vmatpush1.bf16.msra.mxu0 0
        %802 = vmatprep.subr.bf16.mxu0 0
        %803 = vmatpush1.bf16.msra.mxu0 0
        %804 = vmatprep.subr.bf16.mxu0 0
        %805 = vmatpush1.bf16.msra.mxu0 0
        %806 = vmatprep.subr.bf16.mxu0 0
        %807 = vmatpush1.bf16.msra.mxu0 0
        %808 = vmatprep.subr.bf16.mxu0 0
        %809 = vmatpush1.bf16.msra.mxu0 0
        %810 = vmatprep.subr.bf16.mxu0 0
        %811 = vmatpush1.bf16.msra.mxu0 0
        %812 = vmatprep.subr.bf16.mxu0 0
        %813 = vmatpush1.bf16.msra.mxu0 0
        %814 = vmatprep.subr.bf16.mxu0 0
        %815 = vmatpush1.bf16.msra.mxu0 0
        %816 = vmatprep.subr.bf16.mxu0 0
        %817 = vmatpush1.bf16.msra.mxu0 0
        %818 = vmatprep.subr.bf16.mxu0 0
        %819 = vmatpush1.bf16.msra.mxu0 0
        %820 = vmatprep.mubr.bf16.mxu0 0
        %821 = vmatmul.mubr.bf16.gmra.mrb[0].mxu0 %v741
        %v822 = vpop.f32.mrb[0].mxu0
        %v823 = vadd.f32 %v615, %v822
        %v824 = vpop.f32.mrb[0].mxu0
        %v825 = vadd.f32 %v619, %v824
        %v826 = vpop.f32.mrb[0].mxu0
        %v827 = vadd.f32 %v615, %v826
        %v828 = vpop.f32.mrb[0].mxu0
        %v829 = vadd.f32 %v619, %v828
        %830 = vmatprep.mubr.bf16.mxu0 0
        %831 = vmatmul.mubr.bf16.gmra.mrb[0].mxu0 %v744
        %v832 = vpop.f32.mrb[0].mxu0
        %v833 = vadd.f32 %v615, %v832
        %v834 = vpop.f32.mrb[0].mxu0
        %v835 = vadd.f32 %v619, %v834
        %v836 = vpop.f32.mrb[0].mxu0
        %v837 = vadd.f32 %v615, %v836
        %v838 = vpop.f32.mrb[0].mxu0
        %v839 = vadd.f32 %v619, %v838
        %840 = vmatprep.mubr.bf16.mxu0 0
        %841 = vmatmul.mubr.bf16.gmra.mrb[0].mxu0 %v747
        %v842 = vpop.f32.mrb[0].mxu0
        %v843 = vadd.f32 %v615, %v842
        %v844 = vpop.f32.mrb[0].mxu0
        %v845 = vadd.f32 %v619, %v844
        %v846 = vpop.f32.mrb[0].mxu0
        %v847 = vadd.f32 %v615, %v846
        %v848 = vpop.f32.mrb[0].mxu0
        %v849 = vadd.f32 %v619, %v848
        %850 = vmatprep.mubr.bf16.mxu0 0
        %851 = vmatmul.mubr.bf16.gmra.mrb[0].mxu0 %v750
        %v852 = vpop.f32.mrb[0].mxu0
        %v853 = vadd.f32 %v615, %v852
        %v854 = vpop.f32.mrb[0].mxu0
        %v855 = vadd.f32 %v619, %v854
        %v856 = vpop.f32.mrb[0].mxu0
        %v857 = vadd.f32 %v615, %v856
        %v858 = vpop.f32.mrb[0].mxu0
        %v859 = vadd.f32 %v619, %v858
        %860 = vmatprep.mubr.bf16.mxu0 0
        %861 = vmatmul.mubr.bf16.gmra.mrb[0].mxu0 %v753
        %v862 = vpop.f32.mrb[0].mxu0
        %v863 = vadd.f32 %v615, %v862
        %v864 = vpop.f32.mrb[0].mxu0
        %v865 = vadd.f32 %v619, %v864
        %v866 = vpop.f32.mrb[0].mxu0
        %v867 = vadd.f32 %v615, %v866
        %v868 = vpop.f32.mrb[0].mxu0
        %v869 = vadd.f32 %v619, %v868
        %870 = vmatprep.mubr.bf16.mxu0 0
        %871 = vmatmul.mubr.bf16.gmra.mrb[0].mxu0 %v756
        %v872 = vpop.f32.mrb[0].mxu0
        %v873 = vadd.f32 %v615, %v872
        %v874 = vpop.f32.mrb[0].mxu0
        %v875 = vadd.f32 %v619, %v874
        %v876 = vpop.f32.mrb[0].mxu0
        %v877 = vadd.f32 %v615, %v876
        %v878 = vpop.f32.mrb[0].mxu0
        %v879 = vadd.f32 %v619, %v878
        %880 = vmatprep.mubr.bf16.mxu0 0
        %881 = vmatmul.mubr.bf16.gmra.mrb[0].mxu0 %v759
        %v882 = vpop.f32.mrb[0].mxu0
        %v883 = vadd.f32 %v615, %v882
        %v884 = vpop.f32.mrb[0].mxu0
        %v885 = vadd.f32 %v619, %v884
        %v886 = vpop.f32.mrb[0].mxu0
        %v887 = vadd.f32 %v615, %v886
        %v888 = vpop.f32.mrb[0].mxu0
        %v889 = vadd.f32 %v619, %v888
        %890 = vmatprep.mubr.bf16.mxu0 0
        %891 = vmatmul.mubr.bf16.gmra.mrb[0].mxu0 %v762
        %v892 = vpop.f32.mrb[0].mxu0
        %v893 = vadd.f32 %v615, %v892
        %v894 = vpop.f32.mrb[0].mxu0
        %v895 = vadd.f32 %v619, %v894
        %v896 = vpop.f32.mrb[0].mxu0
        %v897 = vadd.f32 %v615, %v896
        %v898 = vpop.f32.mrb[0].mxu0
        %v899 = vadd.f32 %v619, %v898
        %900 = vmatprep.mubr.bf16.mxu0 0
        %901 = vmatmul.mubr.bf16.gmra.mrb[0].mxu0 %v765
        %v902 = vpop.f32.mrb[0].mxu0
        %v903 = vadd.f32 %v615, %v902
        %v904 = vpop.f32.mrb[0].mxu0
        %v905 = vadd.f32 %v619, %v904
        %v906 = vpop.f32.mrb[0].mxu0
        %v907 = vadd.f32 %v615, %v906
        %v908 = vpop.f32.mrb[0].mxu0
        %v909 = vadd.f32 %v619, %v908
        %910 = vmatprep.mubr.bf16.mxu0 0
        %911 = vmatmul.mubr.bf16.gmra.mrb[0].mxu0 %v768
        %v912 = vpop.f32.mrb[0].mxu0
        %v913 = vadd.f32 %v615, %v912
        %v914 = vpop.f32.mrb[0].mxu0
        %v915 = vadd.f32 %v619, %v914
        %v916 = vpop.f32.mrb[0].mxu0
        %v917 = vadd.f32 %v615, %v916
        %v918 = vpop.f32.mrb[0].mxu0
        %v919 = vadd.f32 %v619, %v918
        %920 = vmatprep.mubr.bf16.mxu0 0
        %921 = vmatmul.mubr.bf16.gmra.mrb[0].mxu0 %v771
        %v922 = vpop.f32.mrb[0].mxu0
        %v923 = vadd.f32 %v615, %v922
        %v924 = vpop.f32.mrb[0].mxu0
        %v925 = vadd.f32 %v619, %v924
        %v926 = vpop.f32.mrb[0].mxu0
        %v927 = vadd.f32 %v615, %v926
        %v928 = vpop.f32.mrb[0].mxu0
        %v929 = vadd.f32 %v619, %v928
        %930 = vmatprep.mubr.bf16.mxu0 0
        %931 = vmatmul.mubr.bf16.gmra.mrb[0].mxu0 %v774
        %v932 = vpop.f32.mrb[0].mxu0
        %v933 = vadd.f32 %v615, %v932
        %v934 = vpop.f32.mrb[0].mxu0
        %v935 = vadd.f32 %v619, %v934
        %v936 = vpop.f32.mrb[0].mxu0
        %v937 = vadd.f32 %v615, %v936
        %v938 = vpop.f32.mrb[0].mxu0
        %v939 = vadd.f32 %v619, %v938
        %940 = vmatprep.mubr.bf16.mxu0 0
        %941 = vmatmul.mubr.bf16.gmra.mrb[0].mxu0 %v777
        %v942 = vpop.f32.mrb[0].mxu0
        %v943 = vadd.f32 %v615, %v942
        %v944 = vpop.f32.mrb[0].mxu0
        %v945 = vadd.f32 %v619, %v944
        %v946 = vpop.f32.mrb[0].mxu0
        %v947 = vadd.f32 %v615, %v946
        %v948 = vpop.f32.mrb[0].mxu0
        %v949 = vadd.f32 %v619, %v948
        %950 = vmatprep.mubr.bf16.mxu0 0
        %951 = vmatmul.mubr.bf16.gmra.mrb[0].mxu0 %v780
        %v952 = vpop.f32.mrb[0].mxu0
        %v953 = vadd.f32 %v615, %v952
        %v954 = vpop.f32.mrb[0].mxu0
        %v955 = vadd.f32 %v619, %v954
        %v956 = vpop.f32.mrb[0].mxu0
        %v957 = vadd.f32 %v615, %v956
        %v958 = vpop.f32.mrb[0].mxu0
        %v959 = vadd.f32 %v619, %v958
        %960 = vmatprep.mubr.bf16.mxu0 0
        %961 = vmatmul.mubr.bf16.gmra.mrb[0].mxu0 %v783
        %v962 = vpop.f32.mrb[0].mxu0
        %v963 = vadd.f32 %v615, %v962
        %v964 = vpop.f32.mrb[0].mxu0
        %v965 = vadd.f32 %v619, %v964
        %v966 = vpop.f32.mrb[0].mxu0
        %v967 = vadd.f32 %v615, %v966
        %v968 = vpop.f32.mrb[0].mxu0
        %v969 = vadd.f32 %v619, %v968
        %970 = vmatprep.mubr.bf16.mxu0 0
        %971 = vmatmul.mubr.bf16.gmra.mrb[0].mxu0 %v786
        %v972 = vpop.f32.mrb[0].mxu0
        %v973 = vadd.f32 %v615, %v972
        %v974 = vpop.f32.mrb[0].mxu0
        %v975 = vadd.f32 %v619, %v974
        %v976 = vpop.f32.mrb[0].mxu0
        %v977 = vadd.f32 %v615, %v976
        %v978 = vpop.f32.mrb[0].mxu0
        %v979 = vadd.f32 %v619, %v978
        %980 = vdwg.mxu0
        %981 = vmatprep.subr.bf16.mxu0 0
        %982 = vmatpush1.bf16.msra.mxu0 %v729
        %983 = vmatprep.subr.bf16.mxu0 0
        %984 = vmatpush1.bf16.msra.mxu0 %v732
        %985 = vmatprep.subr.bf16.mxu0 0
        %986 = vmatpush1.bf16.msra.mxu0 0
        %987 = vmatprep.subr.bf16.mxu0 0
        %988 = vmatpush1.bf16.msra.mxu0 0
        %989 = vmatprep.subr.bf16.mxu0 0
        %990 = vmatpush1.bf16.msra.mxu0 0
        %991 = vmatprep.subr.bf16.mxu0 0
        %992 = vmatpush1.bf16.msra.mxu0 0
        %993 = vmatprep.subr.bf16.mxu0 0
        %994 = vmatpush1.bf16.msra.mxu0 0
        %995 = vmatprep.subr.bf16.mxu0 0
        %996 = vmatpush1.bf16.msra.mxu0 0
        %997 = vmatprep.subr.bf16.mxu0 0
        %998 = vmatpush1.bf16.msra.mxu0 0
        %999 = vmatprep.subr.bf16.mxu0 0
        %1000 = vmatpush1.bf16.msra.mxu0 0
        %1001 = vmatprep.subr.bf16.mxu0 0
        %1002 = vmatpush1.bf16.msra.mxu0 0
        %1003 = vmatprep.subr.bf16.mxu0 0
        %1004 = vmatpush1.bf16.msra.mxu0 0
        %1005 = vmatprep.subr.bf16.mxu0 0
        %1006 = vmatpush1.bf16.msra.mxu0 0
        %1007 = vmatprep.subr.bf16.mxu0 0
        %1008 = vmatpush1.bf16.msra.mxu0 0
        %1009 = vmatprep.subr.bf16.mxu0 0
        %1010 = vmatpush1.bf16.msra.mxu0 0
        %1011 = vmatprep.subr.bf16.mxu0 0
        %1012 = vmatpush1.bf16.msra.mxu0 0
        %1013 = vmatprep.mubr.bf16.mxu0 0
        %1014 = vmatmul.mubr.bf16.gmra.mrb[0].mxu0 %v741
        %v1015 = vpop.f32.mrb[0].mxu0
        %v1016 = vadd.f32 %v623, %v1015
        %v1017 = vpop.f32.mrb[0].mxu0
        %v1018 = vpop.f32.mrb[0].mxu0
        %v1019 = vadd.f32 %v623, %v1018
        %v1020 = vpop.f32.mrb[0].mxu0
        %1021 = vmatprep.mubr.bf16.mxu0 0
        %1022 = vmatmul.mubr.bf16.gmra.mrb[0].mxu0 %v744
        %v1023 = vpop.f32.mrb[0].mxu0
        %v1024 = vadd.f32 %v623, %v1023
        %v1025 = vpop.f32.mrb[0].mxu0
        %v1026 = vpop.f32.mrb[0].mxu0
        %v1027 = vadd.f32 %v623, %v1026
        %v1028 = vpop.f32.mrb[0].mxu0
        %1029 = vmatprep.mubr.bf16.mxu0 0
        %1030 = vmatmul.mubr.bf16.gmra.mrb[0].mxu0 %v747
        %v1031 = vpop.f32.mrb[0].mxu0
        %v1032 = vadd.f32 %v623, %v1031
        %v1033 = vpop.f32.mrb[0].mxu0
        %v1034 = vpop.f32.mrb[0].mxu0
        %v1035 = vadd.f32 %v623, %v1034
        %v1036 = vpop.f32.mrb[0].mxu0
        %1037 = vmatprep.mubr.bf16.mxu0 0
        %1038 = vmatmul.mubr.bf16.gmra.mrb[0].mxu0 %v750
        %v1039 = vpop.f32.mrb[0].mxu0
        %v1040 = vadd.f32 %v623, %v1039
        %v1041 = vpop.f32.mrb[0].mxu0
        %v1042 = vpop.f32.mrb[0].mxu0
        %v1043 = vadd.f32 %v623, %v1042
        %v1044 = vpop.f32.mrb[0].mxu0
        %1045 = vmatprep.mubr.bf16.mxu0 0
        %1046 = vmatmul.mubr.bf16.gmra.mrb[0].mxu0 %v753
        %v1047 = vpop.f32.mrb[0].mxu0
        %v1048 = vadd.f32 %v623, %v1047
        %v1049 = vpop.f32.mrb[0].mxu0
        %v1050 = vpop.f32.mrb[0].mxu0
        %v1051 = vadd.f32 %v623, %v1050
        %v1052 = vpop.f32.mrb[0].mxu0
        %1053 = vmatprep.mubr.bf16.mxu0 0
        %1054 = vmatmul.mubr.bf16.gmra.mrb[0].mxu0 %v756
        %v1055 = vpop.f32.mrb[0].mxu0
        %v1056 = vadd.f32 %v623, %v1055
        %v1057 = vpop.f32.mrb[0].mxu0
        %v1058 = vpop.f32.mrb[0].mxu0
        %v1059 = vadd.f32 %v623, %v1058
        %v1060 = vpop.f32.mrb[0].mxu0
        %1061 = vmatprep.mubr.bf16.mxu0 0
        %1062 = vmatmul.mubr.bf16.gmra.mrb[0].mxu0 %v759
        %v1063 = vpop.f32.mrb[0].mxu0
        %v1064 = vadd.f32 %v623, %v1063
        %v1065 = vpop.f32.mrb[0].mxu0
        %v1066 = vpop.f32.mrb[0].mxu0
        %v1067 = vadd.f32 %v623, %v1066
        %v1068 = vpop.f32.mrb[0].mxu0
        %1069 = vmatprep.mubr.bf16.mxu0 0
        %1070 = vmatmul.mubr.bf16.gmra.mrb[0].mxu0 %v762
        %v1071 = vpop.f32.mrb[0].mxu0
        %v1072 = vadd.f32 %v623, %v1071
        %v1073 = vpop.f32.mrb[0].mxu0
        %v1074 = vpop.f32.mrb[0].mxu0
        %v1075 = vadd.f32 %v623, %v1074
        %v1076 = vpop.f32.mrb[0].mxu0
        %1077 = vmatprep.mubr.bf16.mxu0 0
        %1078 = vmatmul.mubr.bf16.gmra.mrb[0].mxu0 %v765
        %v1079 = vpop.f32.mrb[0].mxu0
        %v1080 = vadd.f32 %v623, %v1079
        %v1081 = vpop.f32.mrb[0].mxu0
        %v1082 = vpop.f32.mrb[0].mxu0
        %v1083 = vadd.f32 %v623, %v1082
        %v1084 = vpop.f32.mrb[0].mxu0
        %1085 = vmatprep.mubr.bf16.mxu0 0
        %1086 = vmatmul.mubr.bf16.gmra.mrb[0].mxu0 %v768
        %v1087 = vpop.f32.mrb[0].mxu0
        %v1088 = vadd.f32 %v623, %v1087
        %v1089 = vpop.f32.mrb[0].mxu0
        %v1090 = vpop.f32.mrb[0].mxu0
        %v1091 = vadd.f32 %v623, %v1090
        %v1092 = vpop.f32.mrb[0].mxu0
        %1093 = vmatprep.mubr.bf16.mxu0 0
        %1094 = vmatmul.mubr.bf16.gmra.mrb[0].mxu0 %v771
        %v1095 = vpop.f32.mrb[0].mxu0
        %v1096 = vadd.f32 %v623, %v1095
        %v1097 = vpop.f32.mrb[0].mxu0
        %v1098 = vpop.f32.mrb[0].mxu0
        %v1099 = vadd.f32 %v623, %v1098
        %v1100 = vpop.f32.mrb[0].mxu0
        %1101 = vmatprep.mubr.bf16.mxu0 0
        %1102 = vmatmul.mubr.bf16.gmra.mrb[0].mxu0 %v774
        %v1103 = vpop.f32.mrb[0].mxu0
        %v1104 = vadd.f32 %v623, %v1103
        %v1105 = vpop.f32.mrb[0].mxu0
        %v1106 = vpop.f32.mrb[0].mxu0
        %v1107 = vadd.f32 %v623, %v1106
        %v1108 = vpop.f32.mrb[0].mxu0
        %1109 = vmatprep.mubr.bf16.mxu0 0
        %1110 = vmatmul.mubr.bf16.gmra.mrb[0].mxu0 %v777
        %v1111 = vpop.f32.mrb[0].mxu0
        %v1112 = vadd.f32 %v623, %v1111
        %v1113 = vpop.f32.mrb[0].mxu0
        %v1114 = vpop.f32.mrb[0].mxu0
        %v1115 = vadd.f32 %v623, %v1114
        %v1116 = vpop.f32.mrb[0].mxu0
        %1117 = vmatprep.mubr.bf16.mxu0 0
        %1118 = vmatmul.mubr.bf16.gmra.mrb[0].mxu0 %v780
        %v1119 = vpop.f32.mrb[0].mxu0
        %v1120 = vadd.f32 %v623, %v1119
        %v1121 = vpop.f32.mrb[0].mxu0
        %v1122 = vpop.f32.mrb[0].mxu0
        %v1123 = vadd.f32 %v623, %v1122
        %v1124 = vpop.f32.mrb[0].mxu0
        %1125 = vmatprep.mubr.bf16.mxu0 0
        %1126 = vmatmul.mubr.bf16.gmra.mrb[0].mxu0 %v783
        %v1127 = vpop.f32.mrb[0].mxu0
        %v1128 = vadd.f32 %v623, %v1127
        %v1129 = vpop.f32.mrb[0].mxu0
        %v1130 = vpop.f32.mrb[0].mxu0
        %v1131 = vadd.f32 %v623, %v1130
        %v1132 = vpop.f32.mrb[0].mxu0
        %1133 = vmatprep.mubr.bf16.mxu0 0
        %1134 = vmatmul.mubr.bf16.gmra.mrb[0].mxu0 %v786
        %v1135 = vpop.f32.mrb[0].mxu0
        %v1136 = vadd.f32 %v623, %v1135
        %v1137 = vpop.f32.mrb[0].mxu0
        %v1138 = vpop.f32.mrb[0].mxu0
        %v1139 = vadd.f32 %v623, %v1138
        %v1140 = vpop.f32.mrb[0].mxu0
        %1141 = vdwg.mxu0
        %v1142 = vmax.f32 %v823, 0.0
        %v1143 = vmax.f32 %v825, 0.0
        %v1144 = vmax.f32 %v1016, 0.0
        %v1145 = vmax.f32 %v827, 0.0
        %v1146 = vmax.f32 %v829, 0.0
        %v1147 = vmax.f32 %v1019, 0.0
        %v1148 = vmax.f32 %v833, 0.0
        %v1149 = vmax.f32 %v835, 0.0
        %v1150 = vmax.f32 %v1024, 0.0
        %v1151 = vmax.f32 %v837, 0.0
        %v1152 = vmax.f32 %v839, 0.0
        %v1153 = vmax.f32 %v1027, 0.0
        %v1154 = vmax.f32 %v843, 0.0
        %v1155 = vmax.f32 %v845, 0.0
        %v1156 = vmax.f32 %v1032, 0.0
        %v1157 = vmax.f32 %v847, 0.0
        %v1158 = vmax.f32 %v849, 0.0
        %v1159 = vmax.f32 %v1035, 0.0
        %v1160 = vmax.f32 %v853, 0.0
        %v1161 = vmax.f32 %v855, 0.0
        %v1162 = vmax.f32 %v1040, 0.0
        %v1163 = vmax.f32 %v857, 0.0
        %v1164 = vmax.f32 %v859, 0.0
        %v1165 = vmax.f32 %v1043, 0.0
        %v1166 = vmax.f32 %v863, 0.0
        %v1167 = vmax.f32 %v865, 0.0
        %v1168 = vmax.f32 %v1048, 0.0
        %v1169 = vmax.f32 %v867, 0.0
        %v1170 = vmax.f32 %v869, 0.0
        %v1171 = vmax.f32 %v1051, 0.0
        %v1172 = vmax.f32 %v873, 0.0
        %v1173 = vmax.f32 %v875, 0.0
        %v1174 = vmax.f32 %v1056, 0.0
        %v1175 = vmax.f32 %v877, 0.0
        %v1176 = vmax.f32 %v879, 0.0
        %v1177 = vmax.f32 %v1059, 0.0
        %v1178 = vmax.f32 %v883, 0.0
        %v1179 = vmax.f32 %v885, 0.0
        %v1180 = vmax.f32 %v1064, 0.0
        %v1181 = vmax.f32 %v887, 0.0
        %v1182 = vmax.f32 %v889, 0.0
        %v1183 = vmax.f32 %v1067, 0.0
        %v1184 = vmax.f32 %v893, 0.0
        %v1185 = vmax.f32 %v895, 0.0
        %v1186 = vmax.f32 %v1072, 0.0
        %v1187 = vmax.f32 %v897, 0.0
        %v1188 = vmax.f32 %v899, 0.0
        %v1189 = vmax.f32 %v1075, 0.0
        %v1190 = vmax.f32 %v903, 0.0
        %v1191 = vmax.f32 %v905, 0.0
        %v1192 = vmax.f32 %v1080, 0.0
        %v1193 = vmax.f32 %v907, 0.0
        %v1194 = vmax.f32 %v909, 0.0
        %v1195 = vmax.f32 %v1083, 0.0
        %v1196 = vmax.f32 %v913, 0.0
        %v1197 = vmax.f32 %v915, 0.0
        %v1198 = vmax.f32 %v1088, 0.0
        %v1199 = vmax.f32 %v917, 0.0
        %v1200 = vmax.f32 %v919, 0.0
        %v1201 = vmax.f32 %v1091, 0.0
        %v1202 = vmax.f32 %v923, 0.0
        %v1203 = vmax.f32 %v925, 0.0
        %v1204 = vmax.f32 %v1096, 0.0
        %v1205 = vmax.f32 %v927, 0.0
        %v1206 = vmax.f32 %v929, 0.0
        %v1207 = vmax.f32 %v1099, 0.0
        %v1208 = vmax.f32 %v933, 0.0
        %v1209 = vmax.f32 %v935, 0.0
        %v1210 = vmax.f32 %v1104, 0.0
        %v1211 = vmax.f32 %v937, 0.0
        %v1212 = vmax.f32 %v939, 0.0
        %v1213 = vmax.f32 %v1107, 0.0
        %v1214 = vmax.f32 %v943, 0.0
        %v1215 = vmax.f32 %v945, 0.0
        %v1216 = vmax.f32 %v1112, 0.0
        %v1217 = vmax.f32 %v947, 0.0
        %v1218 = vmax.f32 %v949, 0.0
        %v1219 = vmax.f32 %v1115, 0.0
        %v1220 = vmax.f32 %v953, 0.0
        %v1221 = vmax.f32 %v955, 0.0
        %v1222 = vmax.f32 %v1120, 0.0
        %v1223 = vmax.f32 %v957, 0.0
        %v1224 = vmax.f32 %v959, 0.0
        %v1225 = vmax.f32 %v1123, 0.0
        %v1226 = vmax.f32 %v963, 0.0
        %v1227 = vmax.f32 %v965, 0.0
        %v1228 = vmax.f32 %v1128, 0.0
        %v1229 = vmax.f32 %v967, 0.0
        %v1230 = vmax.f32 %v969, 0.0
        %v1231 = vmax.f32 %v1131, 0.0
        %v1232 = vmax.f32 %v973, 0.0
        %v1233 = vmax.f32 %v975, 0.0
        %v1234 = vmax.f32 %v1136, 0.0
        %v1235 = vmax.f32 %v977, 0.0
        %v1236 = vmax.f32 %v979, 0.0
        %v1237 = vmax.f32 %v1139, 0.0
        %v1238 = vpack.c.bf16 %v1145, %v1142
        %v1239 = vpack.c.bf16 %v1146, %v1143
        %v1240 = vpack.c.bf16 %v1147, %v1144
        %v1241 = vpack.c.bf16 %v1151, %v1148
        %v1242 = vpack.c.bf16 %v1152, %v1149
        %v1243 = vpack.c.bf16 %v1153, %v1150
        %v1244 = vpack.c.bf16 %v1157, %v1154
        %v1245 = vpack.c.bf16 %v1158, %v1155
        %v1246 = vpack.c.bf16 %v1159, %v1156
        %v1247 = vpack.c.bf16 %v1163, %v1160
        %v1248 = vpack.c.bf16 %v1164, %v1161
        %v1249 = vpack.c.bf16 %v1165, %v1162
        %v1250 = vpack.c.bf16 %v1169, %v1166
        %v1251 = vpack.c.bf16 %v1170, %v1167
        %v1252 = vpack.c.bf16 %v1171, %v1168
        %v1253 = vpack.c.bf16 %v1175, %v1172
        %v1254 = vpack.c.bf16 %v1176, %v1173
        %v1255 = vpack.c.bf16 %v1177, %v1174
        %v1256 = vpack.c.bf16 %v1181, %v1178
        %v1257 = vpack.c.bf16 %v1182, %v1179
        %v1258 = vpack.c.bf16 %v1183, %v1180
        %v1259 = vpack.c.bf16 %v1187, %v1184
        %v1260 = vpack.c.bf16 %v1188, %v1185
        %v1261 = vpack.c.bf16 %v1189, %v1186
        %v1262 = vpack.c.bf16 %v1193, %v1190
        %v1263 = vpack.c.bf16 %v1194, %v1191
        %v1264 = vpack.c.bf16 %v1195, %v1192
        %v1265 = vpack.c.bf16 %v1199, %v1196
        %v1266 = vpack.c.bf16 %v1200, %v1197
        %v1267 = vpack.c.bf16 %v1201, %v1198
        %v1268 = vpack.c.bf16 %v1205, %v1202
        %v1269 = vpack.c.bf16 %v1206, %v1203
        %v1270 = vpack.c.bf16 %v1207, %v1204
        %v1271 = vpack.c.bf16 %v1211, %v1208
        %v1272 = vpack.c.bf16 %v1212, %v1209
        %v1273 = vpack.c.bf16 %v1213, %v1210
        %v1274 = vpack.c.bf16 %v1217, %v1214
        %v1275 = vpack.c.bf16 %v1218, %v1215
        %v1276 = vpack.c.bf16 %v1219, %v1216
        %v1277 = vpack.c.bf16 %v1223, %v1220
        %v1278 = vpack.c.bf16 %v1224, %v1221
        %v1279 = vpack.c.bf16 %v1225, %v1222
        %v1280 = vpack.c.bf16 %v1229, %v1226
        %v1281 = vpack.c.bf16 %v1230, %v1227
        %v1282 = vpack.c.bf16 %v1231, %v1228
        %v1283 = vpack.c.bf16 %v1235, %v1232
        %v1284 = vpack.c.bf16 %v1236, %v1233
        %v1285 = vpack.c.bf16 %v1237, %v1234
        %v1286 = vld [vmem:[#allocation2] sm:$0xff]
        %v1287 = vld [vmem:[#allocation2 + $0x8] sm:$0xf]
        %v1288 = vld [vmem:[#allocation2 + $0xc] sm:$0xff]
        %v1289 = vld [vmem:[#allocation2 + $0x14] sm:$0xf]
        %v1290 = vld [vmem:[#allocation2 + $0x18] sm:$0xff]
        %v1291 = vld [vmem:[#allocation2 + $0x20] sm:$0xf]
        %v1292 = vld [vmem:[#allocation2 + $0x24] sm:$0xff]
        %v1293 = vld [vmem:[#allocation2 + $0x2c] sm:$0xf]
        %v1294 = vld [vmem:[#allocation2 + $0x30] sm:$0xff]
        %v1295 = vld [vmem:[#allocation2 + $0x38] sm:$0xf]
        %v1296 = vld [vmem:[#allocation2 + $0x3c] sm:$0xff]
        %v1297 = vld [vmem:[#allocation2 + $0x44] sm:$0xf]
        %v1298 = vld [vmem:[#allocation2 + $0x48] sm:$0xff]
        %v1299 = vld [vmem:[#allocation2 + $0x50] sm:$0xf]
        %v1300 = vld [vmem:[#allocation2 + $0x54] sm:$0xff]
        %v1301 = vld [vmem:[#allocation2 + $0x5c] sm:$0xf]
        %v1302 = vld [vmem:[#allocation2 + $0x60] sm:$0xff]
        %v1303 = vld [vmem:[#allocation2 + $0x68] sm:$0xf]
        %v1304 = vld [vmem:[#allocation2 + $0x6c] sm:$0xff]
        %v1305 = vld [vmem:[#allocation2 + $0x74] sm:$0xf]
        %v1306 = vld [vmem:[#allocation2 + $0x78] sm:$0xff]
        %v1307 = vld [vmem:[#allocation2 + $0x80] sm:$0xf]
        %v1308 = vld [vmem:[#allocation2 + $0x84] sm:$0xff]
        %v1309 = vld [vmem:[#allocation2 + $0x8c] sm:$0xf]
        %v1310 = vld [vmem:[#allocation2 + $0x90] sm:$0xff]
        %v1311 = vld [vmem:[#allocation2 + $0x98] sm:$0xf]
        %v1312 = vld [vmem:[#allocation2 + $0x9c] sm:$0xff]
        %v1313 = vld [vmem:[#allocation2 + $0xa4] sm:$0xf]
        %v1314 = vld [vmem:[#allocation2 + $0xa8] sm:$0xff]
        %v1315 = vld [vmem:[#allocation2 + $0xb0] sm:$0xf]
        %v1316 = vld [vmem:[#allocation2 + $0xb4] sm:$0xff]
        %v1317 = vld [vmem:[#allocation2 + $0xbc] sm:$0xf]
        %v1318 = vld [vmem:[#allocation2 + $0xc0] sm:$0xff]
        %v1319 = vld [vmem:[#allocation2 + $0xc8] sm:$0xf]
        %v1320 = vld [vmem:[#allocation2 + $0xcc] sm:$0xff]
        %v1321 = vld [vmem:[#allocation2 + $0xd4] sm:$0xf]
        %v1322 = vld [vmem:[#allocation2 + $0xd8] sm:$0xff]
        %v1323 = vld [vmem:[#allocation2 + $0xe0] sm:$0xf]
        %v1324 = vld [vmem:[#allocation2 + $0xe4] sm:$0xff]
        %v1325 = vld [vmem:[#allocation2 + $0xec] sm:$0xf]
        %v1326 = vld [vmem:[#allocation2 + $0xf0] sm:$0xff]
        %v1327 = vld [vmem:[#allocation2 + $0xf8] sm:$0xf]
        %v1328 = vld [vmem:[#allocation2 + $0xfc] sm:$0xff]
        %v1329 = vld [vmem:[#allocation2 + $0x104] sm:$0xf]
        %v1330 = vld [vmem:[#allocation2 + $0x108] sm:$0xff]
        %v1331 = vld [vmem:[#allocation2 + $0x110] sm:$0xf]
        %v1332 = vld [vmem:[#allocation2 + $0x114] sm:$0xff]
        %v1333 = vld [vmem:[#allocation2 + $0x11c] sm:$0xf]
        %v1334 = vld [vmem:[#allocation2 + $0x120] sm:$0xff]
        %v1335 = vld [vmem:[#allocation2 + $0x128] sm:$0xf]
        %v1336 = vld [vmem:[#allocation2 + $0x12c] sm:$0xff]
        %v1337 = vld [vmem:[#allocation2 + $0x134] sm:$0xf]
        %v1338 = vld [vmem:[#allocation2 + $0x138] sm:$0xff]
        %v1339 = vld [vmem:[#allocation2 + $0x140] sm:$0xf]
        %v1340 = vld [vmem:[#allocation2 + $0x144] sm:$0xff]
        %v1341 = vld [vmem:[#allocation2 + $0x14c] sm:$0xf]
        %v1342 = vld [vmem:[#allocation2 + $0x150] sm:$0xff]
        %v1343 = vld [vmem:[#allocation2 + $0x158] sm:$0xf]
        %v1344 = vld [vmem:[#allocation2 + $0x15c] sm:$0xff]
        %v1345 = vld [vmem:[#allocation2 + $0x164] sm:$0xf]
        %v1346 = vld [vmem:[#allocation2 + $0x168] sm:$0xff]
        %v1347 = vld [vmem:[#allocation2 + $0x170] sm:$0xf]
        %v1348 = vld [vmem:[#allocation2 + $0x174] sm:$0xff]
        %v1349 = vld [vmem:[#allocation2 + $0x17c] sm:$0xf]
        %v1350 = vld [vmem:[#allocation2 + $0x180] sm:$0xff]
        %v1351 = vld [vmem:[#allocation2 + $0x188] sm:$0xf]
        %v1352 = vld [vmem:[#allocation2 + $0x18c] sm:$0xff]
        %v1353 = vld [vmem:[#allocation2 + $0x194] sm:$0xf]
        %v1354 = vld [vmem:[#allocation2 + $0x198] sm:$0xff]
        %v1355 = vld [vmem:[#allocation2 + $0x1a0] sm:$0xf]
        %v1356 = vld [vmem:[#allocation2 + $0x1a4] sm:$0xff]
        %v1357 = vld [vmem:[#allocation2 + $0x1ac] sm:$0xf]
        %v1358 = vld [vmem:[#allocation2 + $0x1b0] sm:$0xff]
        %v1359 = vld [vmem:[#allocation2 + $0x1b8] sm:$0xf]
        %v1360 = vld [vmem:[#allocation2 + $0x1bc] sm:$0xff]
        %v1361 = vld [vmem:[#allocation2 + $0x1c4] sm:$0xf]
        %v1362 = vld [vmem:[#allocation2 + $0x1c8] sm:$0xff]
        %v1363 = vld [vmem:[#allocation2 + $0x1d0] sm:$0xf]
        %v1364 = vld [vmem:[#allocation2 + $0x1d4] sm:$0xff]
        %v1365 = vld [vmem:[#allocation2 + $0x1dc] sm:$0xf]
        %v1366 = vld [vmem:[#allocation2 + $0x1e0] sm:$0xff]
        %v1367 = vld [vmem:[#allocation2 + $0x1e8] sm:$0xf]
        %v1368 = vld [vmem:[#allocation2 + $0x1ec] sm:$0xff]
        %v1369 = vld [vmem:[#allocation2 + $0x1f4] sm:$0xf]
        %v1370 = vld [vmem:[#allocation2 + $0x1f8] sm:$0xff]
        %v1371 = vld [vmem:[#allocation2 + $0x200] sm:$0xf]
        %v1372 = vld [vmem:[#allocation2 + $0x204] sm:$0xff]
        %v1373 = vld [vmem:[#allocation2 + $0x20c] sm:$0xf]
        %v1374 = vld [vmem:[#allocation2 + $0x210] sm:$0xff]
        %v1375 = vld [vmem:[#allocation2 + $0x218] sm:$0xf]
        %v1376 = vld [vmem:[#allocation2 + $0x21c] sm:$0xff]
        %v1377 = vld [vmem:[#allocation2 + $0x224] sm:$0xf]
        %v1378 = vld [vmem:[#allocation2 + $0x228] sm:$0xff]
        %v1379 = vld [vmem:[#allocation2 + $0x230] sm:$0xf]
        %v1380 = vld [vmem:[#allocation2 + $0x234] sm:$0xff]
        %v1381 = vld [vmem:[#allocation2 + $0x23c] sm:$0xf]
        %v1382 = vld [vmem:[%s4] sm:$0x7]
        %v1384 = vlaneseq
        %v1385 = vshrl.u32 %v1384, 7
        %v1386 = vsub.s32 0, %v1385
        %v1387 = vrot.slane %v1382, %v1386
        %v1388 = vlaneseq
        %v1389 = vshrl.u32 %v1388, 7
        %v1390 = vsub.s32 1, %v1389
        %v1391 = vrot.slane %v1382, %v1390
        %v1392 = vlaneseq
        %v1393 = vshrl.u32 %v1392, 7
        %v1394 = vsub.s32 2, %v1393
        %v1395 = vrot.slane %v1382, %v1394
        %v1495 = vunpack.c.l.b16 %v1286
        %v1496 = vunpack.c.h.b16 %v1286
        %v1497 = vunpack.c.l.b16 %v1287
        %v1498 = vunpack.c.l.b16 %v1288
        %v1499 = vunpack.c.h.b16 %v1288
        %v1500 = vunpack.c.l.b16 %v1289
        %v1501 = vunpack.c.l.b16 %v1290
        %v1502 = vunpack.c.h.b16 %v1290
        %v1503 = vunpack.c.l.b16 %v1291
        %v1504 = vunpack.c.l.b16 %v1292
        %v1505 = vunpack.c.h.b16 %v1292
        %v1506 = vunpack.c.l.b16 %v1293
        %v1507 = vunpack.c.l.b16 %v1294
        %v1508 = vunpack.c.h.b16 %v1294
        %v1509 = vunpack.c.l.b16 %v1295
        %v1510 = vunpack.c.l.b16 %v1296
        %v1511 = vunpack.c.h.b16 %v1296
        %v1512 = vunpack.c.l.b16 %v1297
        %v1513 = vunpack.c.l.b16 %v1298
        %v1514 = vunpack.c.h.b16 %v1298
        %v1515 = vunpack.c.l.b16 %v1299
        %v1516 = vunpack.c.l.b16 %v1300
        %v1517 = vunpack.c.h.b16 %v1300
        %v1518 = vunpack.c.l.b16 %v1301
        %v1519 = vunpack.c.l.b16 %v1302
        %v1520 = vunpack.c.h.b16 %v1302
        %v1521 = vunpack.c.l.b16 %v1303
        %v1522 = vunpack.c.l.b16 %v1304
        %v1523 = vunpack.c.h.b16 %v1304
        %v1524 = vunpack.c.l.b16 %v1305
        %v1525 = vunpack.c.l.b16 %v1306
        %v1526 = vunpack.c.h.b16 %v1306
        %v1527 = vunpack.c.l.b16 %v1307
        %v1528 = vunpack.c.l.b16 %v1308
        %v1529 = vunpack.c.h.b16 %v1308
        %v1530 = vunpack.c.l.b16 %v1309
        %v1531 = vunpack.c.l.b16 %v1310
        %v1532 = vunpack.c.h.b16 %v1310
        %v1533 = vunpack.c.l.b16 %v1311
        %v1534 = vunpack.c.l.b16 %v1312
        %v1535 = vunpack.c.h.b16 %v1312
        %v1536 = vunpack.c.l.b16 %v1313
        %v1537 = vunpack.c.l.b16 %v1314
        %v1538 = vunpack.c.h.b16 %v1314
        %v1539 = vunpack.c.l.b16 %v1315
        %v1540 = vunpack.c.l.b16 %v1316
        %v1541 = vunpack.c.h.b16 %v1316
        %v1542 = vunpack.c.l.b16 %v1317
        %v1543 = vunpack.c.l.b16 %v1318
        %v1544 = vunpack.c.h.b16 %v1318
        %v1545 = vunpack.c.l.b16 %v1319
        %v1546 = vunpack.c.l.b16 %v1320
        %v1547 = vunpack.c.h.b16 %v1320
        %v1548 = vunpack.c.l.b16 %v1321
        %v1549 = vunpack.c.l.b16 %v1322
        %v1550 = vunpack.c.h.b16 %v1322
        %v1551 = vunpack.c.l.b16 %v1323
        %v1552 = vunpack.c.l.b16 %v1324
        %v1553 = vunpack.c.h.b16 %v1324
        %v1554 = vunpack.c.l.b16 %v1325
        %v1555 = vunpack.c.l.b16 %v1326
        %v1556 = vunpack.c.h.b16 %v1326
        %v1557 = vunpack.c.l.b16 %v1327
        %v1558 = vunpack.c.l.b16 %v1328
        %v1559 = vunpack.c.h.b16 %v1328
        %v1560 = vunpack.c.l.b16 %v1329
        %v1561 = vunpack.c.l.b16 %v1330
        %v1562 = vunpack.c.h.b16 %v1330
        %v1563 = vunpack.c.l.b16 %v1331
        %v1564 = vunpack.c.l.b16 %v1332
        %v1565 = vunpack.c.h.b16 %v1332
        %v1566 = vunpack.c.l.b16 %v1333
        %v1567 = vunpack.c.l.b16 %v1334
        %v1568 = vunpack.c.h.b16 %v1334
        %v1569 = vunpack.c.l.b16 %v1335
        %v1570 = vunpack.c.l.b16 %v1336
        %v1571 = vunpack.c.h.b16 %v1336
        %v1572 = vunpack.c.l.b16 %v1337
        %v1573 = vunpack.c.l.b16 %v1338
        %v1574 = vunpack.c.h.b16 %v1338
        %v1575 = vunpack.c.l.b16 %v1339
        %v1576 = vunpack.c.l.b16 %v1340
        %v1577 = vunpack.c.h.b16 %v1340
        %v1578 = vunpack.c.l.b16 %v1341
        %v1579 = vunpack.c.l.b16 %v1342
        %v1580 = vunpack.c.h.b16 %v1342
        %v1581 = vunpack.c.l.b16 %v1343
        %v1582 = vunpack.c.l.b16 %v1344
        %v1583 = vunpack.c.h.b16 %v1344
        %v1584 = vunpack.c.l.b16 %v1345
        %v1585 = vunpack.c.l.b16 %v1346
        %v1586 = vunpack.c.h.b16 %v1346
        %v1587 = vunpack.c.l.b16 %v1347
        %v1588 = vunpack.c.l.b16 %v1348
        %v1589 = vunpack.c.h.b16 %v1348
        %v1590 = vunpack.c.l.b16 %v1349
        %v1591 = vunpack.c.l.b16 %v1350
        %v1592 = vunpack.c.h.b16 %v1350
        %v1593 = vunpack.c.l.b16 %v1351
        %v1594 = vunpack.c.l.b16 %v1352
        %v1595 = vunpack.c.h.b16 %v1352
        %v1596 = vunpack.c.l.b16 %v1353
        %v1597 = vunpack.c.l.b16 %v1354
        %v1598 = vunpack.c.h.b16 %v1354
        %v1599 = vunpack.c.l.b16 %v1355
        %v1600 = vunpack.c.l.b16 %v1356
        %v1601 = vunpack.c.h.b16 %v1356
        %v1602 = vunpack.c.l.b16 %v1357
        %v1603 = vunpack.c.l.b16 %v1358
        %v1604 = vunpack.c.h.b16 %v1358
        %v1605 = vunpack.c.l.b16 %v1359
        %v1606 = vunpack.c.l.b16 %v1360
        %v1607 = vunpack.c.h.b16 %v1360
        %v1608 = vunpack.c.l.b16 %v1361
        %v1609 = vunpack.c.l.b16 %v1362
        %v1610 = vunpack.c.h.b16 %v1362
        %v1611 = vunpack.c.l.b16 %v1363
        %v1612 = vunpack.c.l.b16 %v1364
        %v1613 = vunpack.c.h.b16 %v1364
        %v1614 = vunpack.c.l.b16 %v1365
        %v1615 = vunpack.c.l.b16 %v1366
        %v1616 = vunpack.c.h.b16 %v1366
        %v1617 = vunpack.c.l.b16 %v1367
        %v1618 = vunpack.c.l.b16 %v1368
        %v1619 = vunpack.c.h.b16 %v1368
        %v1620 = vunpack.c.l.b16 %v1369
        %v1621 = vunpack.c.l.b16 %v1370
        %v1622 = vunpack.c.h.b16 %v1370
        %v1623 = vunpack.c.l.b16 %v1371
        %v1624 = vunpack.c.l.b16 %v1372
        %v1625 = vunpack.c.h.b16 %v1372
        %v1626 = vunpack.c.l.b16 %v1373
        %v1627 = vunpack.c.l.b16 %v1374
        %v1628 = vunpack.c.h.b16 %v1374
        %v1629 = vunpack.c.l.b16 %v1375
        %v1630 = vunpack.c.l.b16 %v1376
        %v1631 = vunpack.c.h.b16 %v1376
        %v1632 = vunpack.c.l.b16 %v1377
        %v1633 = vunpack.c.l.b16 %v1378
        %v1634 = vunpack.c.h.b16 %v1378
        %v1635 = vunpack.c.l.b16 %v1379
        %v1636 = vunpack.c.l.b16 %v1380
        %v1637 = vunpack.c.h.b16 %v1380
        %v1638 = vunpack.c.l.b16 %v1381
        %v1639 = vpack.c.b16 %v1498, %v1495
        %v1640 = vpack.c.b16 %v1499, %v1496
        %v1641 = vpack.c.b16 %v1500, %v1497
        %v1642 = vpack.c.b16 %v1504, %v1501
        %v1643 = vpack.c.b16 %v1505, %v1502
        %v1644 = vpack.c.b16 %v1506, %v1503
        %v1645 = vpack.c.b16 %v1510, %v1507
        %v1646 = vpack.c.b16 %v1511, %v1508
        %v1647 = vpack.c.b16 %v1512, %v1509
        %v1648 = vpack.c.b16 %v1516, %v1513
        %v1649 = vpack.c.b16 %v1517, %v1514
        %v1650 = vpack.c.b16 %v1518, %v1515
        %v1651 = vpack.c.b16 %v1522, %v1519
        %v1652 = vpack.c.b16 %v1523, %v1520
        %v1653 = vpack.c.b16 %v1524, %v1521
        %v1654 = vpack.c.b16 %v1528, %v1525
        %v1655 = vpack.c.b16 %v1529, %v1526
        %v1656 = vpack.c.b16 %v1530, %v1527
        %v1657 = vpack.c.b16 %v1534, %v1531
        %v1658 = vpack.c.b16 %v1535, %v1532
        %v1659 = vpack.c.b16 %v1536, %v1533
        %v1660 = vpack.c.b16 %v1540, %v1537
        %v1661 = vpack.c.b16 %v1541, %v1538
        %v1662 = vpack.c.b16 %v1542, %v1539
        %v1663 = vpack.c.b16 %v1546, %v1543
        %v1664 = vpack.c.b16 %v1547, %v1544
        %v1665 = vpack.c.b16 %v1548, %v1545
        %v1666 = vpack.c.b16 %v1552, %v1549
        %v1667 = vpack.c.b16 %v1553, %v1550
        %v1668 = vpack.c.b16 %v1554, %v1551
        %v1669 = vpack.c.b16 %v1558, %v1555
        %v1670 = vpack.c.b16 %v1559, %v1556
        %v1671 = vpack.c.b16 %v1560, %v1557
        %v1672 = vpack.c.b16 %v1564, %v1561
        %v1673 = vpack.c.b16 %v1565, %v1562
        %v1674 = vpack.c.b16 %v1566, %v1563
        %v1675 = vpack.c.b16 %v1570, %v1567
        %v1676 = vpack.c.b16 %v1571, %v1568
        %v1677 = vpack.c.b16 %v1572, %v1569
        %v1678 = vpack.c.b16 %v1576, %v1573
        %v1679 = vpack.c.b16 %v1577, %v1574
        %v1680 = vpack.c.b16 %v1578, %v1575
        %v1681 = vpack.c.b16 %v1582, %v1579
        %v1682 = vpack.c.b16 %v1583, %v1580
        %v1683 = vpack.c.b16 %v1584, %v1581
        %v1684 = vpack.c.b16 %v1588, %v1585
        %v1685 = vpack.c.b16 %v1589, %v1586
        %v1686 = vpack.c.b16 %v1590, %v1587
        %v1687 = vpack.c.b16 %v1594, %v1591
        %v1688 = vpack.c.b16 %v1595, %v1592
        %v1689 = vpack.c.b16 %v1596, %v1593
        %v1690 = vpack.c.b16 %v1600, %v1597
        %v1691 = vpack.c.b16 %v1601, %v1598
        %v1692 = vpack.c.b16 %v1602, %v1599
        %v1693 = vpack.c.b16 %v1606, %v1603
        %v1694 = vpack.c.b16 %v1607, %v1604
        %v1695 = vpack.c.b16 %v1608, %v1605
        %v1696 = vpack.c.b16 %v1612, %v1609
        %v1697 = vpack.c.b16 %v1613, %v1610
        %v1698 = vpack.c.b16 %v1614, %v1611
        %v1699 = vpack.c.b16 %v1618, %v1615
        %v1700 = vpack.c.b16 %v1619, %v1616
        %v1701 = vpack.c.b16 %v1620, %v1617
        %v1702 = vpack.c.b16 %v1624, %v1621
        %v1703 = vpack.c.b16 %v1625, %v1622
        %v1704 = vpack.c.b16 %v1626, %v1623
        %v1705 = vpack.c.b16 %v1630, %v1627
        %v1706 = vpack.c.b16 %v1631, %v1628
        %v1707 = vpack.c.b16 %v1632, %v1629
        %v1708 = vpack.c.b16 %v1636, %v1633
        %v1709 = vpack.c.b16 %v1637, %v1634
        %v1710 = vpack.c.b16 %v1638, %v1635
        %1783 = vmatprep.subr.bf16.mxu0 %v1640
        %1784 = vmatpush1.bf16.msra.mxu0 %v1639
        %1785 = vmatprep.subr.bf16.mxu0 %v1643
        %1786 = vmatpush1.bf16.msra.mxu0 %v1642
        %1787 = vmatprep.subr.bf16.mxu0 %v1646
        %1788 = vmatpush1.bf16.msra.mxu0 %v1645
        %1789 = vmatprep.subr.bf16.mxu0 %v1649
        %1790 = vmatpush1.bf16.msra.mxu0 %v1648
        %1791 = vmatprep.subr.bf16.mxu0 %v1652
        %1792 = vmatpush1.bf16.msra.mxu0 %v1651
        %1793 = vmatprep.subr.bf16.mxu0 %v1655
        %1794 = vmatpush1.bf16.msra.mxu0 %v1654
        %1795 = vmatprep.subr.bf16.mxu0 %v1658
        %1796 = vmatpush1.bf16.msra.mxu0 %v1657
        %1797 = vmatprep.subr.bf16.mxu0 %v1661
        %1798 = vmatpush1.bf16.msra.mxu0 %v1660
        %1799 = vmatprep.subr.bf16.mxu0 %v1664
        %1800 = vmatpush1.bf16.msra.mxu0 %v1663
        %1801 = vmatprep.subr.bf16.mxu0 %v1667
        %1802 = vmatpush1.bf16.msra.mxu0 %v1666
        %1803 = vmatprep.subr.bf16.mxu0 %v1670
        %1804 = vmatpush1.bf16.msra.mxu0 %v1669
        %1805 = vmatprep.subr.bf16.mxu0 %v1673
        %1806 = vmatpush1.bf16.msra.mxu0 %v1672
        %1807 = vmatprep.subr.bf16.mxu0 %v1676
        %1808 = vmatpush1.bf16.msra.mxu0 %v1675
        %1809 = vmatprep.subr.bf16.mxu0 %v1679
        %1810 = vmatpush1.bf16.msra.mxu0 %v1678
        %1811 = vmatprep.subr.bf16.mxu0 %v1682
        %1812 = vmatpush1.bf16.msra.mxu0 %v1681
        %1813 = vmatprep.subr.bf16.mxu0 %v1685
        %1814 = vmatpush1.bf16.msra.mxu0 %v1684
        %1815 = vmatprep.mubr.bf16.mxu0 %v1239
        %1816 = vmatmul.mubr.bf16.gmra.mrb[0].mxu0 %v1238
        %v1817 = vpop.f32.mrb[0].mxu0
        %v1818 = vadd.f32 %v1387, %v1817
        %v1819 = vpop.f32.mrb[0].mxu0
        %v1820 = vadd.f32 %v1391, %v1819
        %v1821 = vpop.f32.mrb[0].mxu0
        %v1822 = vadd.f32 %v1387, %v1821
        %v1823 = vpop.f32.mrb[0].mxu0
        %v1824 = vadd.f32 %v1391, %v1823
        %1825 = vmatprep.mubr.bf16.mxu0 %v1242
        %1826 = vmatmul.mubr.bf16.gmra.mrb[0].mxu0 %v1241
        %v1827 = vpop.f32.mrb[0].mxu0
        %v1828 = vadd.f32 %v1387, %v1827
        %v1829 = vpop.f32.mrb[0].mxu0
        %v1830 = vadd.f32 %v1391, %v1829
        %v1831 = vpop.f32.mrb[0].mxu0
        %v1832 = vadd.f32 %v1387, %v1831
        %v1833 = vpop.f32.mrb[0].mxu0
        %v1834 = vadd.f32 %v1391, %v1833
        %1835 = vmatprep.mubr.bf16.mxu0 %v1245
        %1836 = vmatmul.mubr.bf16.gmra.mrb[0].mxu0 %v1244
        %v1837 = vpop.f32.mrb[0].mxu0
        %v1838 = vadd.f32 %v1387, %v1837
        %v1839 = vpop.f32.mrb[0].mxu0
        %v1840 = vadd.f32 %v1391, %v1839
        %v1841 = vpop.f32.mrb[0].mxu0
        %v1842 = vadd.f32 %v1387, %v1841
        %v1843 = vpop.f32.mrb[0].mxu0
        %v1844 = vadd.f32 %v1391, %v1843
        %1845 = vmatprep.mubr.bf16.mxu0 %v1248
        %1846 = vmatmul.mubr.bf16.gmra.mrb[0].mxu0 %v1247
        %v1847 = vpop.f32.mrb[0].mxu0
        %v1848 = vadd.f32 %v1387, %v1847
        %v1849 = vpop.f32.mrb[0].mxu0
        %v1850 = vadd.f32 %v1391, %v1849
        %v1851 = vpop.f32.mrb[0].mxu0
        %v1852 = vadd.f32 %v1387, %v1851
        %v1853 = vpop.f32.mrb[0].mxu0
        %v1854 = vadd.f32 %v1391, %v1853
        %1855 = vmatprep.mubr.bf16.mxu0 %v1251
        %1856 = vmatmul.mubr.bf16.gmra.mrb[0].mxu0 %v1250
        %v1857 = vpop.f32.mrb[0].mxu0
        %v1858 = vadd.f32 %v1387, %v1857
        %v1859 = vpop.f32.mrb[0].mxu0
        %v1860 = vadd.f32 %v1391, %v1859
        %v1861 = vpop.f32.mrb[0].mxu0
        %v1862 = vadd.f32 %v1387, %v1861
        %v1863 = vpop.f32.mrb[0].mxu0
        %v1864 = vadd.f32 %v1391, %v1863
        %1865 = vmatprep.mubr.bf16.mxu0 %v1254
        %1866 = vmatmul.mubr.bf16.gmra.mrb[0].mxu0 %v1253
        %v1867 = vpop.f32.mrb[0].mxu0
        %v1868 = vadd.f32 %v1387, %v1867
        %v1869 = vpop.f32.mrb[0].mxu0
        %v1870 = vadd.f32 %v1391, %v1869
        %v1871 = vpop.f32.mrb[0].mxu0
        %v1872 = vadd.f32 %v1387, %v1871
        %v1873 = vpop.f32.mrb[0].mxu0
        %v1874 = vadd.f32 %v1391, %v1873
        %1875 = vmatprep.mubr.bf16.mxu0 %v1257
        %1876 = vmatmul.mubr.bf16.gmra.mrb[0].mxu0 %v1256
        %v1877 = vpop.f32.mrb[0].mxu0
        %v1878 = vadd.f32 %v1387, %v1877
        %v1879 = vpop.f32.mrb[0].mxu0
        %v1880 = vadd.f32 %v1391, %v1879
        %v1881 = vpop.f32.mrb[0].mxu0
        %v1882 = vadd.f32 %v1387, %v1881
        %v1883 = vpop.f32.mrb[0].mxu0
        %v1884 = vadd.f32 %v1391, %v1883
        %1885 = vmatprep.mubr.bf16.mxu0 %v1260
        %1886 = vmatmul.mubr.bf16.gmra.mrb[0].mxu0 %v1259
        %v1887 = vpop.f32.mrb[0].mxu0
        %v1888 = vadd.f32 %v1387, %v1887
        %v1889 = vpop.f32.mrb[0].mxu0
        %v1890 = vadd.f32 %v1391, %v1889
        %v1891 = vpop.f32.mrb[0].mxu0
        %v1892 = vadd.f32 %v1387, %v1891
        %v1893 = vpop.f32.mrb[0].mxu0
        %v1894 = vadd.f32 %v1391, %v1893
        %1895 = vmatprep.mubr.bf16.mxu0 %v1263
        %1896 = vmatmul.mubr.bf16.gmra.mrb[0].mxu0 %v1262
        %v1897 = vpop.f32.mrb[0].mxu0
        %v1898 = vadd.f32 %v1387, %v1897
        %v1899 = vpop.f32.mrb[0].mxu0
        %v1900 = vadd.f32 %v1391, %v1899
        %v1901 = vpop.f32.mrb[0].mxu0
        %v1902 = vadd.f32 %v1387, %v1901
        %v1903 = vpop.f32.mrb[0].mxu0
        %v1904 = vadd.f32 %v1391, %v1903
        %1905 = vmatprep.mubr.bf16.mxu0 %v1266
        %1906 = vmatmul.mubr.bf16.gmra.mrb[0].mxu0 %v1265
        %v1907 = vpop.f32.mrb[0].mxu0
        %v1908 = vadd.f32 %v1387, %v1907
        %v1909 = vpop.f32.mrb[0].mxu0
        %v1910 = vadd.f32 %v1391, %v1909
        %v1911 = vpop.f32.mrb[0].mxu0
        %v1912 = vadd.f32 %v1387, %v1911
        %v1913 = vpop.f32.mrb[0].mxu0
        %v1914 = vadd.f32 %v1391, %v1913
        %1915 = vmatprep.mubr.bf16.mxu0 %v1269
        %1916 = vmatmul.mubr.bf16.gmra.mrb[0].mxu0 %v1268
        %v1917 = vpop.f32.mrb[0].mxu0
        %v1918 = vadd.f32 %v1387, %v1917
        %v1919 = vpop.f32.mrb[0].mxu0
        %v1920 = vadd.f32 %v1391, %v1919
        %v1921 = vpop.f32.mrb[0].mxu0
        %v1922 = vadd.f32 %v1387, %v1921
        %v1923 = vpop.f32.mrb[0].mxu0
        %v1924 = vadd.f32 %v1391, %v1923
        %1925 = vmatprep.mubr.bf16.mxu0 %v1272
        %1926 = vmatmul.mubr.bf16.gmra.mrb[0].mxu0 %v1271
        %v1927 = vpop.f32.mrb[0].mxu0
        %v1928 = vadd.f32 %v1387, %v1927
        %v1929 = vpop.f32.mrb[0].mxu0
        %v1930 = vadd.f32 %v1391, %v1929
        %v1931 = vpop.f32.mrb[0].mxu0
        %v1932 = vadd.f32 %v1387, %v1931
        %v1933 = vpop.f32.mrb[0].mxu0
        %v1934 = vadd.f32 %v1391, %v1933
        %1935 = vmatprep.mubr.bf16.mxu0 %v1275
        %1936 = vmatmul.mubr.bf16.gmra.mrb[0].mxu0 %v1274
        %v1937 = vpop.f32.mrb[0].mxu0
        %v1938 = vadd.f32 %v1387, %v1937
        %v1939 = vpop.f32.mrb[0].mxu0
        %v1940 = vadd.f32 %v1391, %v1939
        %v1941 = vpop.f32.mrb[0].mxu0
        %v1942 = vadd.f32 %v1387, %v1941
        %v1943 = vpop.f32.mrb[0].mxu0
        %v1944 = vadd.f32 %v1391, %v1943
        %1945 = vmatprep.mubr.bf16.mxu0 %v1278
        %1946 = vmatmul.mubr.bf16.gmra.mrb[0].mxu0 %v1277
        %v1947 = vpop.f32.mrb[0].mxu0
        %v1948 = vadd.f32 %v1387, %v1947
        %v1949 = vpop.f32.mrb[0].mxu0
        %v1950 = vadd.f32 %v1391, %v1949
        %v1951 = vpop.f32.mrb[0].mxu0
        %v1952 = vadd.f32 %v1387, %v1951
        %v1953 = vpop.f32.mrb[0].mxu0
        %v1954 = vadd.f32 %v1391, %v1953
        %1955 = vmatprep.mubr.bf16.mxu0 %v1281
        %1956 = vmatmul.mubr.bf16.gmra.mrb[0].mxu0 %v1280
        %v1957 = vpop.f32.mrb[0].mxu0
        %v1958 = vadd.f32 %v1387, %v1957
        %v1959 = vpop.f32.mrb[0].mxu0
        %v1960 = vadd.f32 %v1391, %v1959
        %v1961 = vpop.f32.mrb[0].mxu0
        %v1962 = vadd.f32 %v1387, %v1961
        %v1963 = vpop.f32.mrb[0].mxu0
        %v1964 = vadd.f32 %v1391, %v1963
        %1965 = vmatprep.mubr.bf16.mxu0 %v1284
        %1966 = vmatmul.mubr.bf16.gmra.mrb[0].mxu0 %v1283
        %v1967 = vpop.f32.mrb[0].mxu0
        %v1968 = vadd.f32 %v1387, %v1967
        %v1969 = vpop.f32.mrb[0].mxu0
        %v1970 = vadd.f32 %v1391, %v1969
        %v1971 = vpop.f32.mrb[0].mxu0
        %v1972 = vadd.f32 %v1387, %v1971
        %v1973 = vpop.f32.mrb[0].mxu0
        %v1974 = vadd.f32 %v1391, %v1973
        %1975 = vdwg.mxu0
        %1976 = vmatprep.subr.bf16.mxu0 %v1688
        %1977 = vmatpush1.bf16.msra.mxu0 %v1687
        %1978 = vmatprep.subr.bf16.mxu0 %v1691
        %1979 = vmatpush1.bf16.msra.mxu0 %v1690
        %1980 = vmatprep.subr.bf16.mxu0 %v1694
        %1981 = vmatpush1.bf16.msra.mxu0 %v1693
        %1982 = vmatprep.subr.bf16.mxu0 %v1697
        %1983 = vmatpush1.bf16.msra.mxu0 %v1696
        %1984 = vmatprep.subr.bf16.mxu0 %v1700
        %1985 = vmatpush1.bf16.msra.mxu0 %v1699
        %1986 = vmatprep.subr.bf16.mxu0 %v1703
        %1987 = vmatpush1.bf16.msra.mxu0 %v1702
        %1988 = vmatprep.subr.bf16.mxu0 %v1706
        %1989 = vmatpush1.bf16.msra.mxu0 %v1705
        %1990 = vmatprep.subr.bf16.mxu0 %v1709
        %1991 = vmatpush1.bf16.msra.mxu0 %v1708
        %1992 = vmatprep.subr.bf16.mxu0 0
        %1993 = vmatpush1.bf16.msra.mxu0 0
        %1994 = vmatprep.subr.bf16.mxu0 0
        %1995 = vmatpush1.bf16.msra.mxu0 0
        %1996 = vmatprep.subr.bf16.mxu0 0
        %1997 = vmatpush1.bf16.msra.mxu0 0
        %1998 = vmatprep.subr.bf16.mxu0 0
        %1999 = vmatpush1.bf16.msra.mxu0 0
        %2000 = vmatprep.subr.bf16.mxu0 0
        %2001 = vmatpush1.bf16.msra.mxu0 0
        %2002 = vmatprep.subr.bf16.mxu0 0
        %2003 = vmatpush1.bf16.msra.mxu0 0
        %2004 = vmatprep.subr.bf16.mxu0 0
        %2005 = vmatpush1.bf16.msra.mxu0 0
        %2006 = vmatprep.subr.bf16.mxu0 0
        %2007 = vmatpush1.bf16.msra.mxu0 0
        %2008 = vmatprep.mubr.bf16.mxu0 0
        %2009 = vmatmul.mubr.bf16.gmra.mrb[0].mxu0 %v1240
        %v2010 = vpop.f32.mrb[0].mxu0
        %v2011 = vadd.f32 %v1818, %v2010
        %v2012 = vpop.f32.mrb[0].mxu0
        %v2013 = vadd.f32 %v1820, %v2012
        %v2014 = vpop.f32.mrb[0].mxu0
        %v2015 = vadd.f32 %v1822, %v2014
        %v2016 = vpop.f32.mrb[0].mxu0
        %v2017 = vadd.f32 %v1824, %v2016
        %2018 = vmatprep.mubr.bf16.mxu0 0
        %2019 = vmatmul.mubr.bf16.gmra.mrb[0].mxu0 %v1243
        %v2020 = vpop.f32.mrb[0].mxu0
        %v2021 = vadd.f32 %v1828, %v2020
        %v2022 = vpop.f32.mrb[0].mxu0
        %v2023 = vadd.f32 %v1830, %v2022
        %v2024 = vpop.f32.mrb[0].mxu0
        %v2025 = vadd.f32 %v1832, %v2024
        %v2026 = vpop.f32.mrb[0].mxu0
        %v2027 = vadd.f32 %v1834, %v2026
        %2028 = vmatprep.mubr.bf16.mxu0 0
        %2029 = vmatmul.mubr.bf16.gmra.mrb[0].mxu0 %v1246
        %v2030 = vpop.f32.mrb[0].mxu0
        %v2031 = vadd.f32 %v1838, %v2030
        %v2032 = vpop.f32.mrb[0].mxu0
        %v2033 = vadd.f32 %v1840, %v2032
        %v2034 = vpop.f32.mrb[0].mxu0
        %v2035 = vadd.f32 %v1842, %v2034
        %v2036 = vpop.f32.mrb[0].mxu0
        %v2037 = vadd.f32 %v1844, %v2036
        %2038 = vmatprep.mubr.bf16.mxu0 0
        %2039 = vmatmul.mubr.bf16.gmra.mrb[0].mxu0 %v1249
        %v2040 = vpop.f32.mrb[0].mxu0
        %v2041 = vadd.f32 %v1848, %v2040
        %v2042 = vpop.f32.mrb[0].mxu0
        %v2043 = vadd.f32 %v1850, %v2042
        %v2044 = vpop.f32.mrb[0].mxu0
        %v2045 = vadd.f32 %v1852, %v2044
        %v2046 = vpop.f32.mrb[0].mxu0
        %v2047 = vadd.f32 %v1854, %v2046
        %2048 = vmatprep.mubr.bf16.mxu0 0
        %2049 = vmatmul.mubr.bf16.gmra.mrb[0].mxu0 %v1252
        %v2050 = vpop.f32.mrb[0].mxu0
        %v2051 = vadd.f32 %v1858, %v2050
        %v2052 = vpop.f32.mrb[0].mxu0
        %v2053 = vadd.f32 %v1860, %v2052
        %v2054 = vpop.f32.mrb[0].mxu0
        %v2055 = vadd.f32 %v1862, %v2054
        %v2056 = vpop.f32.mrb[0].mxu0
        %v2057 = vadd.f32 %v1864, %v2056
        %2058 = vmatprep.mubr.bf16.mxu0 0
        %2059 = vmatmul.mubr.bf16.gmra.mrb[0].mxu0 %v1255
        %v2060 = vpop.f32.mrb[0].mxu0
        %v2061 = vadd.f32 %v1868, %v2060
        %v2062 = vpop.f32.mrb[0].mxu0
        %v2063 = vadd.f32 %v1870, %v2062
        %v2064 = vpop.f32.mrb[0].mxu0
        %v2065 = vadd.f32 %v1872, %v2064
        %v2066 = vpop.f32.mrb[0].mxu0
        %v2067 = vadd.f32 %v1874, %v2066
        %2068 = vmatprep.mubr.bf16.mxu0 0
        %2069 = vmatmul.mubr.bf16.gmra.mrb[0].mxu0 %v1258
        %v2070 = vpop.f32.mrb[0].mxu0
        %v2071 = vadd.f32 %v1878, %v2070
        %v2072 = vpop.f32.mrb[0].mxu0
        %v2073 = vadd.f32 %v1880, %v2072
        %v2074 = vpop.f32.mrb[0].mxu0
        %v2075 = vadd.f32 %v1882, %v2074
        %v2076 = vpop.f32.mrb[0].mxu0
        %v2077 = vadd.f32 %v1884, %v2076
        %2078 = vmatprep.mubr.bf16.mxu0 0
        %2079 = vmatmul.mubr.bf16.gmra.mrb[0].mxu0 %v1261
        %v2080 = vpop.f32.mrb[0].mxu0
        %v2081 = vadd.f32 %v1888, %v2080
        %v2082 = vpop.f32.mrb[0].mxu0
        %v2083 = vadd.f32 %v1890, %v2082
        %v2084 = vpop.f32.mrb[0].mxu0
        %v2085 = vadd.f32 %v1892, %v2084
        %v2086 = vpop.f32.mrb[0].mxu0
        %v2087 = vadd.f32 %v1894, %v2086
        %2088 = vmatprep.mubr.bf16.mxu0 0
        %2089 = vmatmul.mubr.bf16.gmra.mrb[0].mxu0 %v1264
        %v2090 = vpop.f32.mrb[0].mxu0
        %v2091 = vadd.f32 %v1898, %v2090
        %v2092 = vpop.f32.mrb[0].mxu0
        %v2093 = vadd.f32 %v1900, %v2092
        %v2094 = vpop.f32.mrb[0].mxu0
        %v2095 = vadd.f32 %v1902, %v2094
        %v2096 = vpop.f32.mrb[0].mxu0
        %v2097 = vadd.f32 %v1904, %v2096
        %2098 = vmatprep.mubr.bf16.mxu0 0
        %2099 = vmatmul.mubr.bf16.gmra.mrb[0].mxu0 %v1267
        %v2100 = vpop.f32.mrb[0].mxu0
        %v2101 = vadd.f32 %v1908, %v2100
        %v2102 = vpop.f32.mrb[0].mxu0
        %v2103 = vadd.f32 %v1910, %v2102
        %v2104 = vpop.f32.mrb[0].mxu0
        %v2105 = vadd.f32 %v1912, %v2104
        %v2106 = vpop.f32.mrb[0].mxu0
        %v2107 = vadd.f32 %v1914, %v2106
        %2108 = vmatprep.mubr.bf16.mxu0 0
        %2109 = vmatmul.mubr.bf16.gmra.mrb[0].mxu0 %v1270
        %v2110 = vpop.f32.mrb[0].mxu0
        %v2111 = vadd.f32 %v1918, %v2110
        %v2112 = vpop.f32.mrb[0].mxu0
        %v2113 = vadd.f32 %v1920, %v2112
        %v2114 = vpop.f32.mrb[0].mxu0
        %v2115 = vadd.f32 %v1922, %v2114
        %v2116 = vpop.f32.mrb[0].mxu0
        %v2117 = vadd.f32 %v1924, %v2116
        %2118 = vmatprep.mubr.bf16.mxu0 0
        %2119 = vmatmul.mubr.bf16.gmra.mrb[0].mxu0 %v1273
        %v2120 = vpop.f32.mrb[0].mxu0
        %v2121 = vadd.f32 %v1928, %v2120
        %v2122 = vpop.f32.mrb[0].mxu0
        %v2123 = vadd.f32 %v1930, %v2122
        %v2124 = vpop.f32.mrb[0].mxu0
        %v2125 = vadd.f32 %v1932, %v2124
        %v2126 = vpop.f32.mrb[0].mxu0
        %v2127 = vadd.f32 %v1934, %v2126
        %2128 = vmatprep.mubr.bf16.mxu0 0
        %2129 = vmatmul.mubr.bf16.gmra.mrb[0].mxu0 %v1276
        %v2130 = vpop.f32.mrb[0].mxu0
        %v2131 = vadd.f32 %v1938, %v2130
        %v2132 = vpop.f32.mrb[0].mxu0
        %v2133 = vadd.f32 %v1940, %v2132
        %v2134 = vpop.f32.mrb[0].mxu0
        %v2135 = vadd.f32 %v1942, %v2134
        %v2136 = vpop.f32.mrb[0].mxu0
        %v2137 = vadd.f32 %v1944, %v2136
        %2138 = vmatprep.mubr.bf16.mxu0 0
        %2139 = vmatmul.mubr.bf16.gmra.mrb[0].mxu0 %v1279
        %v2140 = vpop.f32.mrb[0].mxu0
        %v2141 = vadd.f32 %v1948, %v2140
        %v2142 = vpop.f32.mrb[0].mxu0
        %v2143 = vadd.f32 %v1950, %v2142
        %v2144 = vpop.f32.mrb[0].mxu0
        %v2145 = vadd.f32 %v1952, %v2144
        %v2146 = vpop.f32.mrb[0].mxu0
        %v2147 = vadd.f32 %v1954, %v2146
        %2148 = vmatprep.mubr.bf16.mxu0 0
        %2149 = vmatmul.mubr.bf16.gmra.mrb[0].mxu0 %v1282
        %v2150 = vpop.f32.mrb[0].mxu0
        %v2151 = vadd.f32 %v1958, %v2150
        %v2152 = vpop.f32.mrb[0].mxu0
        %v2153 = vadd.f32 %v1960, %v2152
        %v2154 = vpop.f32.mrb[0].mxu0
        %v2155 = vadd.f32 %v1962, %v2154
        %v2156 = vpop.f32.mrb[0].mxu0
        %v2157 = vadd.f32 %v1964, %v2156
        %2158 = vmatprep.mubr.bf16.mxu0 0
        %2159 = vmatmul.mubr.bf16.gmra.mrb[0].mxu0 %v1285
        %v2160 = vpop.f32.mrb[0].mxu0
        %v2161 = vadd.f32 %v1968, %v2160
        %v2162 = vpop.f32.mrb[0].mxu0
        %v2163 = vadd.f32 %v1970, %v2162
        %v2164 = vpop.f32.mrb[0].mxu0
        %v2165 = vadd.f32 %v1972, %v2164
        %v2166 = vpop.f32.mrb[0].mxu0
        %v2167 = vadd.f32 %v1974, %v2166
        %2168 = vdwg.mxu0
        %2169 = vmatprep.subr.bf16.mxu0 0
        %2170 = vmatpush1.bf16.msra.mxu0 %v1641
        %2171 = vmatprep.subr.bf16.mxu0 0
        %2172 = vmatpush1.bf16.msra.mxu0 %v1644
        %2173 = vmatprep.subr.bf16.mxu0 0
        %2174 = vmatpush1.bf16.msra.mxu0 %v1647
        %2175 = vmatprep.subr.bf16.mxu0 0
        %2176 = vmatpush1.bf16.msra.mxu0 %v1650
        %2177 = vmatprep.subr.bf16.mxu0 0
        %2178 = vmatpush1.bf16.msra.mxu0 %v1653
        %2179 = vmatprep.subr.bf16.mxu0 0
        %2180 = vmatpush1.bf16.msra.mxu0 %v1656
        %2181 = vmatprep.subr.bf16.mxu0 0
        %2182 = vmatpush1.bf16.msra.mxu0 %v1659
        %2183 = vmatprep.subr.bf16.mxu0 0
        %2184 = vmatpush1.bf16.msra.mxu0 %v1662
        %2185 = vmatprep.subr.bf16.mxu0 0
        %2186 = vmatpush1.bf16.msra.mxu0 %v1665
        %2187 = vmatprep.subr.bf16.mxu0 0
        %2188 = vmatpush1.bf16.msra.mxu0 %v1668
        %2189 = vmatprep.subr.bf16.mxu0 0
        %2190 = vmatpush1.bf16.msra.mxu0 %v1671
        %2191 = vmatprep.subr.bf16.mxu0 0
        %2192 = vmatpush1.bf16.msra.mxu0 %v1674
        %2193 = vmatprep.subr.bf16.mxu0 0
        %2194 = vmatpush1.bf16.msra.mxu0 %v1677
        %2195 = vmatprep.subr.bf16.mxu0 0
        %2196 = vmatpush1.bf16.msra.mxu0 %v1680
        %2197 = vmatprep.subr.bf16.mxu0 0
        %2198 = vmatpush1.bf16.msra.mxu0 %v1683
        %2199 = vmatprep.subr.bf16.mxu0 0
        %2200 = vmatpush1.bf16.msra.mxu0 %v1686
        %2201 = vmatprep.mubr.bf16.mxu0 %v1239
        %2202 = vmatmul.mubr.bf16.gmra.mrb[0].mxu0 %v1238
        %v2203 = vpop.f32.mrb[0].mxu0
        %v2204 = vadd.f32 %v1395, %v2203
        %v2205 = vpop.f32.mrb[0].mxu0
        %v2206 = vpop.f32.mrb[0].mxu0
        %v2207 = vadd.f32 %v1395, %v2206
        %v2208 = vpop.f32.mrb[0].mxu0
        %2209 = vmatprep.mubr.bf16.mxu0 %v1242
        %2210 = vmatmul.mubr.bf16.gmra.mrb[0].mxu0 %v1241
        %v2211 = vpop.f32.mrb[0].mxu0
        %v2212 = vadd.f32 %v1395, %v2211
        %v2213 = vpop.f32.mrb[0].mxu0
        %v2214 = vpop.f32.mrb[0].mxu0
        %v2215 = vadd.f32 %v1395, %v2214
        %v2216 = vpop.f32.mrb[0].mxu0
        %2217 = vmatprep.mubr.bf16.mxu0 %v1245
        %2218 = vmatmul.mubr.bf16.gmra.mrb[0].mxu0 %v1244
        %v2219 = vpop.f32.mrb[0].mxu0
        %v2220 = vadd.f32 %v1395, %v2219
        %v2221 = vpop.f32.mrb[0].mxu0
        %v2222 = vpop.f32.mrb[0].mxu0
        %v2223 = vadd.f32 %v1395, %v2222
        %v2224 = vpop.f32.mrb[0].mxu0
        %2225 = vmatprep.mubr.bf16.mxu0 %v1248
        %2226 = vmatmul.mubr.bf16.gmra.mrb[0].mxu0 %v1247
        %v2227 = vpop.f32.mrb[0].mxu0
        %v2228 = vadd.f32 %v1395, %v2227
        %v2229 = vpop.f32.mrb[0].mxu0
        %v2230 = vpop.f32.mrb[0].mxu0
        %v2231 = vadd.f32 %v1395, %v2230
        %v2232 = vpop.f32.mrb[0].mxu0
        %2233 = vmatprep.mubr.bf16.mxu0 %v1251
        %2234 = vmatmul.mubr.bf16.gmra.mrb[0].mxu0 %v1250
        %v2235 = vpop.f32.mrb[0].mxu0
        %v2236 = vadd.f32 %v1395, %v2235
        %v2237 = vpop.f32.mrb[0].mxu0
        %v2238 = vpop.f32.mrb[0].mxu0
        %v2239 = vadd.f32 %v1395, %v2238
        %v2240 = vpop.f32.mrb[0].mxu0
        %2241 = vmatprep.mubr.bf16.mxu0 %v1254
        %2242 = vmatmul.mubr.bf16.gmra.mrb[0].mxu0 %v1253
        %v2243 = vpop.f32.mrb[0].mxu0
        %v2244 = vadd.f32 %v1395, %v2243
        %v2245 = vpop.f32.mrb[0].mxu0
        %v2246 = vpop.f32.mrb[0].mxu0
        %v2247 = vadd.f32 %v1395, %v2246
        %v2248 = vpop.f32.mrb[0].mxu0
        %2249 = vmatprep.mubr.bf16.mxu0 %v1257
        %2250 = vmatmul.mubr.bf16.gmra.mrb[0].mxu0 %v1256
        %v2251 = vpop.f32.mrb[0].mxu0
        %v2252 = vadd.f32 %v1395, %v2251
        %v2253 = vpop.f32.mrb[0].mxu0
        %v2254 = vpop.f32.mrb[0].mxu0
        %v2255 = vadd.f32 %v1395, %v2254
        %v2256 = vpop.f32.mrb[0].mxu0
        %2257 = vmatprep.mubr.bf16.mxu0 %v1260
        %2258 = vmatmul.mubr.bf16.gmra.mrb[0].mxu0 %v1259
        %v2259 = vpop.f32.mrb[0].mxu0
        %v2260 = vadd.f32 %v1395, %v2259
        %v2261 = vpop.f32.mrb[0].mxu0
        %v2262 = vpop.f32.mrb[0].mxu0
        %v2263 = vadd.f32 %v1395, %v2262
        %v2264 = vpop.f32.mrb[0].mxu0
        %2265 = vmatprep.mubr.bf16.mxu0 %v1263
        %2266 = vmatmul.mubr.bf16.gmra.mrb[0].mxu0 %v1262
        %v2267 = vpop.f32.mrb[0].mxu0
        %v2268 = vadd.f32 %v1395, %v2267
        %v2269 = vpop.f32.mrb[0].mxu0
        %v2270 = vpop.f32.mrb[0].mxu0
        %v2271 = vadd.f32 %v1395, %v2270
        %v2272 = vpop.f32.mrb[0].mxu0
        %2273 = vmatprep.mubr.bf16.mxu0 %v1266
        %2274 = vmatmul.mubr.bf16.gmra.mrb[0].mxu0 %v1265
        %v2275 = vpop.f32.mrb[0].mxu0
        %v2276 = vadd.f32 %v1395, %v2275
        %v2277 = vpop.f32.mrb[0].mxu0
        %v2278 = vpop.f32.mrb[0].mxu0
        %v2279 = vadd.f32 %v1395, %v2278
        %v2280 = vpop.f32.mrb[0].mxu0
        %2281 = vmatprep.mubr.bf16.mxu0 %v1269
        %2282 = vmatmul.mubr.bf16.gmra.mrb[0].mxu0 %v1268
        %v2283 = vpop.f32.mrb[0].mxu0
        %v2284 = vadd.f32 %v1395, %v2283
        %v2285 = vpop.f32.mrb[0].mxu0
        %v2286 = vpop.f32.mrb[0].mxu0
        %v2287 = vadd.f32 %v1395, %v2286
        %v2288 = vpop.f32.mrb[0].mxu0
        %2289 = vmatprep.mubr.bf16.mxu0 %v1272
        %2290 = vmatmul.mubr.bf16.gmra.mrb[0].mxu0 %v1271
        %v2291 = vpop.f32.mrb[0].mxu0
        %v2292 = vadd.f32 %v1395, %v2291
        %v2293 = vpop.f32.mrb[0].mxu0
        %v2294 = vpop.f32.mrb[0].mxu0
        %v2295 = vadd.f32 %v1395, %v2294
        %v2296 = vpop.f32.mrb[0].mxu0
        %2297 = vmatprep.mubr.bf16.mxu0 %v1275
        %2298 = vmatmul.mubr.bf16.gmra.mrb[0].mxu0 %v1274
        %v2299 = vpop.f32.mrb[0].mxu0
        %v2300 = vadd.f32 %v1395, %v2299
        %v2301 = vpop.f32.mrb[0].mxu0
        %v2302 = vpop.f32.mrb[0].mxu0
        %v2303 = vadd.f32 %v1395, %v2302
        %v2304 = vpop.f32.mrb[0].mxu0
        %2305 = vmatprep.mubr.bf16.mxu0 %v1278
        %2306 = vmatmul.mubr.bf16.gmra.mrb[0].mxu0 %v1277
        %v2307 = vpop.f32.mrb[0].mxu0
        %v2308 = vadd.f32 %v1395, %v2307
        %v2309 = vpop.f32.mrb[0].mxu0
        %v2310 = vpop.f32.mrb[0].mxu0
        %v2311 = vadd.f32 %v1395, %v2310
        %v2312 = vpop.f32.mrb[0].mxu0
        %2313 = vmatprep.mubr.bf16.mxu0 %v1281
        %2314 = vmatmul.mubr.bf16.gmra.mrb[0].mxu0 %v1280
        %v2315 = vpop.f32.mrb[0].mxu0
        %v2316 = vadd.f32 %v1395, %v2315
        %v2317 = vpop.f32.mrb[0].mxu0
        %v2318 = vpop.f32.mrb[0].mxu0
        %v2319 = vadd.f32 %v1395, %v2318
        %v2320 = vpop.f32.mrb[0].mxu0
        %2321 = vmatprep.mubr.bf16.mxu0 %v1284
        %2322 = vmatmul.mubr.bf16.gmra.mrb[0].mxu0 %v1283
        %v2323 = vpop.f32.mrb[0].mxu0
        %v2324 = vadd.f32 %v1395, %v2323
        %v2325 = vpop.f32.mrb[0].mxu0
        %v2326 = vpop.f32.mrb[0].mxu0
        %v2327 = vadd.f32 %v1395, %v2326
        %v2328 = vpop.f32.mrb[0].mxu0
        %2329 = vdwg.mxu0
        %2330 = vmatprep.subr.bf16.mxu0 0
        %2331 = vmatpush1.bf16.msra.mxu0 %v1689
        %2332 = vmatprep.subr.bf16.mxu0 0
        %2333 = vmatpush1.bf16.msra.mxu0 %v1692
        %2334 = vmatprep.subr.bf16.mxu0 0
        %2335 = vmatpush1.bf16.msra.mxu0 %v1695
        %2336 = vmatprep.subr.bf16.mxu0 0
        %2337 = vmatpush1.bf16.msra.mxu0 %v1698
        %2338 = vmatprep.subr.bf16.mxu0 0
        %2339 = vmatpush1.bf16.msra.mxu0 %v1701
        %2340 = vmatprep.subr.bf16.mxu0 0
        %2341 = vmatpush1.bf16.msra.mxu0 %v1704
        %2342 = vmatprep.subr.bf16.mxu0 0
        %2343 = vmatpush1.bf16.msra.mxu0 %v1707
        %2344 = vmatprep.subr.bf16.mxu0 0
        %2345 = vmatpush1.bf16.msra.mxu0 %v1710
        %2346 = vmatprep.subr.bf16.mxu0 0
        %2347 = vmatpush1.bf16.msra.mxu0 0
        %2348 = vmatprep.subr.bf16.mxu0 0
        %2349 = vmatpush1.bf16.msra.mxu0 0
        %2350 = vmatprep.subr.bf16.mxu0 0
        %2351 = vmatpush1.bf16.msra.mxu0 0
        %2352 = vmatprep.subr.bf16.mxu0 0
        %2353 = vmatpush1.bf16.msra.mxu0 0
        %2354 = vmatprep.subr.bf16.mxu0 0
        %2355 = vmatpush1.bf16.msra.mxu0 0
        %2356 = vmatprep.subr.bf16.mxu0 0
        %2357 = vmatpush1.bf16.msra.mxu0 0
        %2358 = vmatprep.subr.bf16.mxu0 0
        %2359 = vmatpush1.bf16.msra.mxu0 0
        %2360 = vmatprep.subr.bf16.mxu0 0
        %2361 = vmatpush1.bf16.msra.mxu0 0
        %2362 = vmatprep.mubr.bf16.mxu0 0
        %2363 = vmatmul.mubr.bf16.gmra.mrb[0].mxu0 %v1240
        %v2364 = vpop.f32.mrb[0].mxu0
        %v2365 = vadd.f32 %v2204, %v2364
        %v2366 = vpop.f32.mrb[0].mxu0
        %v2367 = vpop.f32.mrb[0].mxu0
        %v2368 = vadd.f32 %v2207, %v2367
        %v2369 = vpop.f32.mrb[0].mxu0
        %2370 = vmatprep.mubr.bf16.mxu0 0
        %2371 = vmatmul.mubr.bf16.gmra.mrb[0].mxu0 %v1243
        %v2372 = vpop.f32.mrb[0].mxu0
        %v2373 = vadd.f32 %v2212, %v2372
        %v2374 = vpop.f32.mrb[0].mxu0
        %v2375 = vpop.f32.mrb[0].mxu0
        %v2376 = vadd.f32 %v2215, %v2375
        %v2377 = vpop.f32.mrb[0].mxu0
        %2378 = vmatprep.mubr.bf16.mxu0 0
        %2379 = vmatmul.mubr.bf16.gmra.mrb[0].mxu0 %v1246
        %v2380 = vpop.f32.mrb[0].mxu0
        %v2381 = vadd.f32 %v2220, %v2380
        %v2382 = vpop.f32.mrb[0].mxu0
        %v2383 = vpop.f32.mrb[0].mxu0
        %v2384 = vadd.f32 %v2223, %v2383
        %v2385 = vpop.f32.mrb[0].mxu0
        %2386 = vmatprep.mubr.bf16.mxu0 0
        %2387 = vmatmul.mubr.bf16.gmra.mrb[0].mxu0 %v1249
        %v2388 = vpop.f32.mrb[0].mxu0
        %v2389 = vadd.f32 %v2228, %v2388
        %v2390 = vpop.f32.mrb[0].mxu0
        %v2391 = vpop.f32.mrb[0].mxu0
        %v2392 = vadd.f32 %v2231, %v2391
        %v2393 = vpop.f32.mrb[0].mxu0
        %2394 = vmatprep.mubr.bf16.mxu0 0
        %2395 = vmatmul.mubr.bf16.gmra.mrb[0].mxu0 %v1252
        %v2396 = vpop.f32.mrb[0].mxu0
        %v2397 = vadd.f32 %v2236, %v2396
        %v2398 = vpop.f32.mrb[0].mxu0
        %v2399 = vpop.f32.mrb[0].mxu0
        %v2400 = vadd.f32 %v2239, %v2399
        %v2401 = vpop.f32.mrb[0].mxu0
        %2402 = vmatprep.mubr.bf16.mxu0 0
        %2403 = vmatmul.mubr.bf16.gmra.mrb[0].mxu0 %v1255
        %v2404 = vpop.f32.mrb[0].mxu0
        %v2405 = vadd.f32 %v2244, %v2404
        %v2406 = vpop.f32.mrb[0].mxu0
        %v2407 = vpop.f32.mrb[0].mxu0
        %v2408 = vadd.f32 %v2247, %v2407
        %v2409 = vpop.f32.mrb[0].mxu0
        %2410 = vmatprep.mubr.bf16.mxu0 0
        %2411 = vmatmul.mubr.bf16.gmra.mrb[0].mxu0 %v1258
        %v2412 = vpop.f32.mrb[0].mxu0
        %v2413 = vadd.f32 %v2252, %v2412
        %v2414 = vpop.f32.mrb[0].mxu0
        %v2415 = vpop.f32.mrb[0].mxu0
        %v2416 = vadd.f32 %v2255, %v2415
        %v2417 = vpop.f32.mrb[0].mxu0
        %2418 = vmatprep.mubr.bf16.mxu0 0
        %2419 = vmatmul.mubr.bf16.gmra.mrb[0].mxu0 %v1261
        %v2420 = vpop.f32.mrb[0].mxu0
        %v2421 = vadd.f32 %v2260, %v2420
        %v2422 = vpop.f32.mrb[0].mxu0
        %v2423 = vpop.f32.mrb[0].mxu0
        %v2424 = vadd.f32 %v2263, %v2423
        %v2425 = vpop.f32.mrb[0].mxu0
        %2426 = vmatprep.mubr.bf16.mxu0 0
        %2427 = vmatmul.mubr.bf16.gmra.mrb[0].mxu0 %v1264
        %v2428 = vpop.f32.mrb[0].mxu0
        %v2429 = vadd.f32 %v2268, %v2428
        %v2430 = vpop.f32.mrb[0].mxu0
        %v2431 = vpop.f32.mrb[0].mxu0
        %v2432 = vadd.f32 %v2271, %v2431
        %v2433 = vpop.f32.mrb[0].mxu0
        %2434 = vmatprep.mubr.bf16.mxu0 0
        %2435 = vmatmul.mubr.bf16.gmra.mrb[0].mxu0 %v1267
        %v2436 = vpop.f32.mrb[0].mxu0
        %v2437 = vadd.f32 %v2276, %v2436
        %v2438 = vpop.f32.mrb[0].mxu0
        %v2439 = vpop.f32.mrb[0].mxu0
        %v2440 = vadd.f32 %v2279, %v2439
        %v2441 = vpop.f32.mrb[0].mxu0
        %2442 = vmatprep.mubr.bf16.mxu0 0
        %2443 = vmatmul.mubr.bf16.gmra.mrb[0].mxu0 %v1270
        %v2444 = vpop.f32.mrb[0].mxu0
        %v2445 = vadd.f32 %v2284, %v2444
        %v2446 = vpop.f32.mrb[0].mxu0
        %v2447 = vpop.f32.mrb[0].mxu0
        %v2448 = vadd.f32 %v2287, %v2447
        %v2449 = vpop.f32.mrb[0].mxu0
        %2450 = vmatprep.mubr.bf16.mxu0 0
        %2451 = vmatmul.mubr.bf16.gmra.mrb[0].mxu0 %v1273
        %v2452 = vpop.f32.mrb[0].mxu0
        %v2453 = vadd.f32 %v2292, %v2452
        %v2454 = vpop.f32.mrb[0].mxu0
        %v2455 = vpop.f32.mrb[0].mxu0
        %v2456 = vadd.f32 %v2295, %v2455
        %v2457 = vpop.f32.mrb[0].mxu0
        %2458 = vmatprep.mubr.bf16.mxu0 0
        %2459 = vmatmul.mubr.bf16.gmra.mrb[0].mxu0 %v1276
        %v2460 = vpop.f32.mrb[0].mxu0
        %v2461 = vadd.f32 %v2300, %v2460
        %v2462 = vpop.f32.mrb[0].mxu0
        %v2463 = vpop.f32.mrb[0].mxu0
        %v2464 = vadd.f32 %v2303, %v2463
        %v2465 = vpop.f32.mrb[0].mxu0
        %2466 = vmatprep.mubr.bf16.mxu0 0
        %2467 = vmatmul.mubr.bf16.gmra.mrb[0].mxu0 %v1279
        %v2468 = vpop.f32.mrb[0].mxu0
        %v2469 = vadd.f32 %v2308, %v2468
        %v2470 = vpop.f32.mrb[0].mxu0
        %v2471 = vpop.f32.mrb[0].mxu0
        %v2472 = vadd.f32 %v2311, %v2471
        %v2473 = vpop.f32.mrb[0].mxu0
        %2474 = vmatprep.mubr.bf16.mxu0 0
        %2475 = vmatmul.mubr.bf16.gmra.mrb[0].mxu0 %v1282
        %v2476 = vpop.f32.mrb[0].mxu0
        %v2477 = vadd.f32 %v2316, %v2476
        %v2478 = vpop.f32.mrb[0].mxu0
        %v2479 = vpop.f32.mrb[0].mxu0
        %v2480 = vadd.f32 %v2319, %v2479
        %v2481 = vpop.f32.mrb[0].mxu0
        %2482 = vmatprep.mubr.bf16.mxu0 0
        %2483 = vmatmul.mubr.bf16.gmra.mrb[0].mxu0 %v1285
        %v2484 = vpop.f32.mrb[0].mxu0
        %v2485 = vadd.f32 %v2324, %v2484
        %v2486 = vpop.f32.mrb[0].mxu0
        %v2487 = vpop.f32.mrb[0].mxu0
        %v2488 = vadd.f32 %v2327, %v2487
        %v2489 = vpop.f32.mrb[0].mxu0
        %2490 = vdwg.mxu0
        %v2491 = vmax.f32 %v2011, 0.0
        %v2492 = vmax.f32 %v2013, 0.0
        %v2493 = vmax.f32 %v2365, 0.0
        %v2494 = vmax.f32 %v2015, 0.0
        %v2495 = vmax.f32 %v2017, 0.0
        %v2496 = vmax.f32 %v2368, 0.0
        %v2497 = vmax.f32 %v2021, 0.0
        %v2498 = vmax.f32 %v2023, 0.0
        %v2499 = vmax.f32 %v2373, 0.0
        %v2500 = vmax.f32 %v2025, 0.0
        %v2501 = vmax.f32 %v2027, 0.0
        %v2502 = vmax.f32 %v2376, 0.0
        %v2503 = vmax.f32 %v2031, 0.0
        %v2504 = vmax.f32 %v2033, 0.0
        %v2505 = vmax.f32 %v2381, 0.0
        %v2506 = vmax.f32 %v2035, 0.0
        %v2507 = vmax.f32 %v2037, 0.0
        %v2508 = vmax.f32 %v2384, 0.0
        %v2509 = vmax.f32 %v2041, 0.0
        %v2510 = vmax.f32 %v2043, 0.0
        %v2511 = vmax.f32 %v2389, 0.0
        %v2512 = vmax.f32 %v2045, 0.0
        %v2513 = vmax.f32 %v2047, 0.0
        %v2514 = vmax.f32 %v2392, 0.0
        %v2515 = vmax.f32 %v2051, 0.0
        %v2516 = vmax.f32 %v2053, 0.0
        %v2517 = vmax.f32 %v2397, 0.0
        %v2518 = vmax.f32 %v2055, 0.0
        %v2519 = vmax.f32 %v2057, 0.0
        %v2520 = vmax.f32 %v2400, 0.0
        %v2521 = vmax.f32 %v2061, 0.0
        %v2522 = vmax.f32 %v2063, 0.0
        %v2523 = vmax.f32 %v2405, 0.0
        %v2524 = vmax.f32 %v2065, 0.0
        %v2525 = vmax.f32 %v2067, 0.0
        %v2526 = vmax.f32 %v2408, 0.0
        %v2527 = vmax.f32 %v2071, 0.0
        %v2528 = vmax.f32 %v2073, 0.0
        %v2529 = vmax.f32 %v2413, 0.0
        %v2530 = vmax.f32 %v2075, 0.0
        %v2531 = vmax.f32 %v2077, 0.0
        %v2532 = vmax.f32 %v2416, 0.0
        %v2533 = vmax.f32 %v2081, 0.0
        %v2534 = vmax.f32 %v2083, 0.0
        %v2535 = vmax.f32 %v2421, 0.0
        %v2536 = vmax.f32 %v2085, 0.0
        %v2537 = vmax.f32 %v2087, 0.0
        %v2538 = vmax.f32 %v2424, 0.0
        %v2539 = vmax.f32 %v2091, 0.0
        %v2540 = vmax.f32 %v2093, 0.0
        %v2541 = vmax.f32 %v2429, 0.0
        %v2542 = vmax.f32 %v2095, 0.0
        %v2543 = vmax.f32 %v2097, 0.0
        %v2544 = vmax.f32 %v2432, 0.0
        %v2545 = vmax.f32 %v2101, 0.0
        %v2546 = vmax.f32 %v2103, 0.0
        %v2547 = vmax.f32 %v2437, 0.0
        %v2548 = vmax.f32 %v2105, 0.0
        %v2549 = vmax.f32 %v2107, 0.0
        %v2550 = vmax.f32 %v2440, 0.0
        %v2551 = vmax.f32 %v2111, 0.0
        %v2552 = vmax.f32 %v2113, 0.0
        %v2553 = vmax.f32 %v2445, 0.0
        %v2554 = vmax.f32 %v2115, 0.0
        %v2555 = vmax.f32 %v2117, 0.0
        %v2556 = vmax.f32 %v2448, 0.0
        %v2557 = vmax.f32 %v2121, 0.0
        %v2558 = vmax.f32 %v2123, 0.0
        %v2559 = vmax.f32 %v2453, 0.0
        %v2560 = vmax.f32 %v2125, 0.0
        %v2561 = vmax.f32 %v2127, 0.0
        %v2562 = vmax.f32 %v2456, 0.0
        %v2563 = vmax.f32 %v2131, 0.0
        %v2564 = vmax.f32 %v2133, 0.0
        %v2565 = vmax.f32 %v2461, 0.0
        %v2566 = vmax.f32 %v2135, 0.0
        %v2567 = vmax.f32 %v2137, 0.0
        %v2568 = vmax.f32 %v2464, 0.0
        %v2569 = vmax.f32 %v2141, 0.0
        %v2570 = vmax.f32 %v2143, 0.0
        %v2571 = vmax.f32 %v2469, 0.0
        %v2572 = vmax.f32 %v2145, 0.0
        %v2573 = vmax.f32 %v2147, 0.0
        %v2574 = vmax.f32 %v2472, 0.0
        %v2575 = vmax.f32 %v2151, 0.0
        %v2576 = vmax.f32 %v2153, 0.0
        %v2577 = vmax.f32 %v2477, 0.0
        %v2578 = vmax.f32 %v2155, 0.0
        %v2579 = vmax.f32 %v2157, 0.0
        %v2580 = vmax.f32 %v2480, 0.0
        %v2581 = vmax.f32 %v2161, 0.0
        %v2582 = vmax.f32 %v2163, 0.0
        %v2583 = vmax.f32 %v2485, 0.0
        %v2584 = vmax.f32 %v2165, 0.0
        %v2585 = vmax.f32 %v2167, 0.0
        %v2586 = vmax.f32 %v2488, 0.0
        %v2587 = vpack.c.bf16 %v2494, %v2491
        %v2588 = vpack.c.bf16 %v2495, %v2492
        %v2589 = vpack.c.bf16 %v2496, %v2493
        %v2590 = vpack.c.bf16 %v2500, %v2497
        %v2591 = vpack.c.bf16 %v2501, %v2498
        %v2592 = vpack.c.bf16 %v2502, %v2499
        %v2593 = vpack.c.bf16 %v2506, %v2503
        %v2594 = vpack.c.bf16 %v2507, %v2504
        %v2595 = vpack.c.bf16 %v2508, %v2505
        %v2596 = vpack.c.bf16 %v2512, %v2509
        %v2597 = vpack.c.bf16 %v2513, %v2510
        %v2598 = vpack.c.bf16 %v2514, %v2511
        %v2599 = vpack.c.bf16 %v2518, %v2515
        %v2600 = vpack.c.bf16 %v2519, %v2516
        %v2601 = vpack.c.bf16 %v2520, %v2517
        %v2602 = vpack.c.bf16 %v2524, %v2521
        %v2603 = vpack.c.bf16 %v2525, %v2522
        %v2604 = vpack.c.bf16 %v2526, %v2523
        %v2605 = vpack.c.bf16 %v2530, %v2527
        %v2606 = vpack.c.bf16 %v2531, %v2528
        %v2607 = vpack.c.bf16 %v2532, %v2529
        %v2608 = vpack.c.bf16 %v2536, %v2533
        %v2609 = vpack.c.bf16 %v2537, %v2534
        %v2610 = vpack.c.bf16 %v2538, %v2535
        %v2611 = vpack.c.bf16 %v2542, %v2539
        %v2612 = vpack.c.bf16 %v2543, %v2540
        %v2613 = vpack.c.bf16 %v2544, %v2541
        %v2614 = vpack.c.bf16 %v2548, %v2545
        %v2615 = vpack.c.bf16 %v2549, %v2546
        %v2616 = vpack.c.bf16 %v2550, %v2547
        %v2617 = vpack.c.bf16 %v2554, %v2551
        %v2618 = vpack.c.bf16 %v2555, %v2552
        %v2619 = vpack.c.bf16 %v2556, %v2553
        %v2620 = vpack.c.bf16 %v2560, %v2557
        %v2621 = vpack.c.bf16 %v2561, %v2558
        %v2622 = vpack.c.bf16 %v2562, %v2559
        %v2623 = vpack.c.bf16 %v2566, %v2563
        %v2624 = vpack.c.bf16 %v2567, %v2564
        %v2625 = vpack.c.bf16 %v2568, %v2565
        %v2626 = vpack.c.bf16 %v2572, %v2569
        %v2627 = vpack.c.bf16 %v2573, %v2570
        %v2628 = vpack.c.bf16 %v2574, %v2571
        %v2629 = vpack.c.bf16 %v2578, %v2575
        %v2630 = vpack.c.bf16 %v2579, %v2576
        %v2631 = vpack.c.bf16 %v2580, %v2577
        %v2632 = vpack.c.bf16 %v2584, %v2581
        %v2633 = vpack.c.bf16 %v2585, %v2582
        %v2634 = vpack.c.bf16 %v2586, %v2583
        %v2635 = vld [vmem:[#allocation5] sm:$0xff]
        %v2636 = vld [vmem:[#allocation5 + $0x8] sm:$0xf]
        %v2637 = vld [vmem:[#allocation5 + $0xc] sm:$0xff]
        %v2638 = vld [vmem:[#allocation5 + $0x14] sm:$0xf]
        %v2639 = vld [vmem:[#allocation5 + $0x18] sm:$0xff]
        %v2640 = vld [vmem:[#allocation5 + $0x20] sm:$0xf]
        %v2641 = vld [vmem:[#allocation5 + $0x24] sm:$0xff]
        %v2642 = vld [vmem:[#allocation5 + $0x2c] sm:$0xf]
        %v2643 = vld [vmem:[#allocation5 + $0x30] sm:$0xff]
        %v2644 = vld [vmem:[#allocation5 + $0x38] sm:$0xf]
        %v2645 = vld [vmem:[#allocation5 + $0x3c] sm:$0xff]
        %v2646 = vld [vmem:[#allocation5 + $0x44] sm:$0xf]
        %v2647 = vld [vmem:[#allocation5 + $0x48] sm:$0xff]
        %v2648 = vld [vmem:[#allocation5 + $0x50] sm:$0xf]
        %v2649 = vld [vmem:[#allocation5 + $0x54] sm:$0xff]
        %v2650 = vld [vmem:[#allocation5 + $0x5c] sm:$0xf]
        %v2651 = vld [vmem:[#allocation5 + $0x60] sm:$0xff]
        %v2652 = vld [vmem:[#allocation5 + $0x68] sm:$0xf]
        %v2653 = vld [vmem:[#allocation5 + $0x6c] sm:$0xff]
        %v2654 = vld [vmem:[#allocation5 + $0x74] sm:$0xf]
        %v2655 = vld [vmem:[#allocation5 + $0x78] sm:$0xff]
        %v2656 = vld [vmem:[#allocation5 + $0x80] sm:$0xf]
        %v2657 = vld [vmem:[#allocation5 + $0x84] sm:$0xff]
        %v2658 = vld [vmem:[#allocation5 + $0x8c] sm:$0xf]
        %v2659 = vld [vmem:[#allocation5 + $0x90] sm:$0xff]
        %v2660 = vld [vmem:[#allocation5 + $0x98] sm:$0xf]
        %v2661 = vld [vmem:[#allocation5 + $0x9c] sm:$0xff]
        %v2662 = vld [vmem:[#allocation5 + $0xa4] sm:$0xf]
        %v2663 = vld [vmem:[#allocation5 + $0xa8] sm:$0xff]
        %v2664 = vld [vmem:[#allocation5 + $0xb0] sm:$0xf]
        %v2665 = vld [vmem:[#allocation5 + $0xb4] sm:$0xff]
        %v2666 = vld [vmem:[#allocation5 + $0xbc] sm:$0xf]
        %v2667 = vld [vmem:[#allocation5 + $0xc0] sm:$0xff]
        %v2668 = vld [vmem:[#allocation5 + $0xc8] sm:$0xf]
        %v2669 = vld [vmem:[#allocation5 + $0xcc] sm:$0xff]
        %v2670 = vld [vmem:[#allocation5 + $0xd4] sm:$0xf]
        %v2671 = vld [vmem:[#allocation5 + $0xd8] sm:$0xff]
        %v2672 = vld [vmem:[#allocation5 + $0xe0] sm:$0xf]
        %v2673 = vld [vmem:[#allocation5 + $0xe4] sm:$0xff]
        %v2674 = vld [vmem:[#allocation5 + $0xec] sm:$0xf]
        %v2675 = vld [vmem:[#allocation5 + $0xf0] sm:$0xff]
        %v2676 = vld [vmem:[#allocation5 + $0xf8] sm:$0xf]
        %v2677 = vld [vmem:[#allocation5 + $0xfc] sm:$0xff]
        %v2678 = vld [vmem:[#allocation5 + $0x104] sm:$0xf]
        %v2679 = vld [vmem:[#allocation5 + $0x108] sm:$0xff]
        %v2680 = vld [vmem:[#allocation5 + $0x110] sm:$0xf]
        %v2681 = vld [vmem:[#allocation5 + $0x114] sm:$0xff]
        %v2682 = vld [vmem:[#allocation5 + $0x11c] sm:$0xf]
        %v2683 = vld [vmem:[#allocation5 + $0x120] sm:$0xff]
        %v2684 = vld [vmem:[#allocation5 + $0x128] sm:$0xf]
        %v2685 = vld [vmem:[#allocation5 + $0x12c] sm:$0xff]
        %v2686 = vld [vmem:[#allocation5 + $0x134] sm:$0xf]
        %v2687 = vld [vmem:[#allocation5 + $0x138] sm:$0xff]
        %v2688 = vld [vmem:[#allocation5 + $0x140] sm:$0xf]
        %v2689 = vld [vmem:[#allocation5 + $0x144] sm:$0xff]
        %v2690 = vld [vmem:[#allocation5 + $0x14c] sm:$0xf]
        %v2691 = vld [vmem:[#allocation5 + $0x150] sm:$0xff]
        %v2692 = vld [vmem:[#allocation5 + $0x158] sm:$0xf]
        %v2693 = vld [vmem:[#allocation5 + $0x15c] sm:$0xff]
        %v2694 = vld [vmem:[#allocation5 + $0x164] sm:$0xf]
        %v2695 = vld [vmem:[#allocation5 + $0x168] sm:$0xff]
        %v2696 = vld [vmem:[#allocation5 + $0x170] sm:$0xf]
        %v2697 = vld [vmem:[#allocation5 + $0x174] sm:$0xff]
        %v2698 = vld [vmem:[#allocation5 + $0x17c] sm:$0xf]
        %v2699 = vld [vmem:[#allocation5 + $0x180] sm:$0xff]
        %v2700 = vld [vmem:[#allocation5 + $0x188] sm:$0xf]
        %v2701 = vld [vmem:[#allocation5 + $0x18c] sm:$0xff]
        %v2702 = vld [vmem:[#allocation5 + $0x194] sm:$0xf]
        %v2703 = vld [vmem:[#allocation5 + $0x198] sm:$0xff]
        %v2704 = vld [vmem:[#allocation5 + $0x1a0] sm:$0xf]
        %v2705 = vld [vmem:[#allocation5 + $0x1a4] sm:$0xff]
        %v2706 = vld [vmem:[#allocation5 + $0x1ac] sm:$0xf]
        %v2707 = vld [vmem:[#allocation5 + $0x1b0] sm:$0xff]
        %v2708 = vld [vmem:[#allocation5 + $0x1b8] sm:$0xf]
        %v2709 = vld [vmem:[#allocation5 + $0x1bc] sm:$0xff]
        %v2710 = vld [vmem:[#allocation5 + $0x1c4] sm:$0xf]
        %v2711 = vld [vmem:[#allocation5 + $0x1c8] sm:$0xff]
        %v2712 = vld [vmem:[#allocation5 + $0x1d0] sm:$0xf]
        %v2713 = vld [vmem:[#allocation5 + $0x1d4] sm:$0xff]
        %v2714 = vld [vmem:[#allocation5 + $0x1dc] sm:$0xf]
        %v2715 = vld [vmem:[#allocation5 + $0x1e0] sm:$0xff]
        %v2716 = vld [vmem:[#allocation5 + $0x1e8] sm:$0xf]
        %v2717 = vld [vmem:[#allocation5 + $0x1ec] sm:$0xff]
        %v2718 = vld [vmem:[#allocation5 + $0x1f4] sm:$0xf]
        %v2719 = vld [vmem:[#allocation5 + $0x1f8] sm:$0xff]
        %v2720 = vld [vmem:[#allocation5 + $0x200] sm:$0xf]
        %v2721 = vld [vmem:[#allocation5 + $0x204] sm:$0xff]
        %v2722 = vld [vmem:[#allocation5 + $0x20c] sm:$0xf]
        %v2723 = vld [vmem:[#allocation5 + $0x210] sm:$0xff]
        %v2724 = vld [vmem:[#allocation5 + $0x218] sm:$0xf]
        %v2725 = vld [vmem:[#allocation5 + $0x21c] sm:$0xff]
        %v2726 = vld [vmem:[#allocation5 + $0x224] sm:$0xf]
        %v2727 = vld [vmem:[#allocation5 + $0x228] sm:$0xff]
        %v2728 = vld [vmem:[#allocation5 + $0x230] sm:$0xf]
        %v2729 = vld [vmem:[#allocation5 + $0x234] sm:$0xff]
        %v2730 = vld [vmem:[#allocation5 + $0x23c] sm:$0xf]
        %v2731 = vld [vmem:[%s6] sm:$0x7]
        %v2733 = vlaneseq
        %v2734 = vshrl.u32 %v2733, 7
        %v2735 = vsub.s32 0, %v2734
        %v2736 = vrot.slane %v2731, %v2735
        %v2737 = vlaneseq
        %v2738 = vshrl.u32 %v2737, 7
        %v2739 = vsub.s32 1, %v2738
        %v2740 = vrot.slane %v2731, %v2739
        %v2741 = vlaneseq
        %v2742 = vshrl.u32 %v2741, 7
        %v2743 = vsub.s32 2, %v2742
        %v2744 = vrot.slane %v2731, %v2743
        %v2844 = vunpack.c.l.b16 %v2635
        %v2845 = vunpack.c.h.b16 %v2635
        %v2846 = vunpack.c.l.b16 %v2636
        %v2847 = vunpack.c.l.b16 %v2637
        %v2848 = vunpack.c.h.b16 %v2637
        %v2849 = vunpack.c.l.b16 %v2638
        %v2850 = vunpack.c.l.b16 %v2639
        %v2851 = vunpack.c.h.b16 %v2639
        %v2852 = vunpack.c.l.b16 %v2640
        %v2853 = vunpack.c.l.b16 %v2641
        %v2854 = vunpack.c.h.b16 %v2641
        %v2855 = vunpack.c.l.b16 %v2642
        %v2856 = vunpack.c.l.b16 %v2643
        %v2857 = vunpack.c.h.b16 %v2643
        %v2858 = vunpack.c.l.b16 %v2644
        %v2859 = vunpack.c.l.b16 %v2645
        %v2860 = vunpack.c.h.b16 %v2645
        %v2861 = vunpack.c.l.b16 %v2646
        %v2862 = vunpack.c.l.b16 %v2647
        %v2863 = vunpack.c.h.b16 %v2647
        %v2864 = vunpack.c.l.b16 %v2648
        %v2865 = vunpack.c.l.b16 %v2649
        %v2866 = vunpack.c.h.b16 %v2649
        %v2867 = vunpack.c.l.b16 %v2650
        %v2868 = vunpack.c.l.b16 %v2651
        %v2869 = vunpack.c.h.b16 %v2651
        %v2870 = vunpack.c.l.b16 %v2652
        %v2871 = vunpack.c.l.b16 %v2653
        %v2872 = vunpack.c.h.b16 %v2653
        %v2873 = vunpack.c.l.b16 %v2654
        %v2874 = vunpack.c.l.b16 %v2655
        %v2875 = vunpack.c.h.b16 %v2655
        %v2876 = vunpack.c.l.b16 %v2656
        %v2877 = vunpack.c.l.b16 %v2657
        %v2878 = vunpack.c.h.b16 %v2657
        %v2879 = vunpack.c.l.b16 %v2658
        %v2880 = vunpack.c.l.b16 %v2659
        %v2881 = vunpack.c.h.b16 %v2659
        %v2882 = vunpack.c.l.b16 %v2660
        %v2883 = vunpack.c.l.b16 %v2661
        %v2884 = vunpack.c.h.b16 %v2661
        %v2885 = vunpack.c.l.b16 %v2662
        %v2886 = vunpack.c.l.b16 %v2663
        %v2887 = vunpack.c.h.b16 %v2663
        %v2888 = vunpack.c.l.b16 %v2664
        %v2889 = vunpack.c.l.b16 %v2665
        %v2890 = vunpack.c.h.b16 %v2665
        %v2891 = vunpack.c.l.b16 %v2666
        %v2892 = vunpack.c.l.b16 %v2667
        %v2893 = vunpack.c.h.b16 %v2667
        %v2894 = vunpack.c.l.b16 %v2668
        %v2895 = vunpack.c.l.b16 %v2669
        %v2896 = vunpack.c.h.b16 %v2669
        %v2897 = vunpack.c.l.b16 %v2670
        %v2898 = vunpack.c.l.b16 %v2671
        %v2899 = vunpack.c.h.b16 %v2671
        %v2900 = vunpack.c.l.b16 %v2672
        %v2901 = vunpack.c.l.b16 %v2673
        %v2902 = vunpack.c.h.b16 %v2673
        %v2903 = vunpack.c.l.b16 %v2674
        %v2904 = vunpack.c.l.b16 %v2675
        %v2905 = vunpack.c.h.b16 %v2675
        %v2906 = vunpack.c.l.b16 %v2676
        %v2907 = vunpack.c.l.b16 %v2677
        %v2908 = vunpack.c.h.b16 %v2677
        %v2909 = vunpack.c.l.b16 %v2678
        %v2910 = vunpack.c.l.b16 %v2679
        %v2911 = vunpack.c.h.b16 %v2679
        %v2912 = vunpack.c.l.b16 %v2680
        %v2913 = vunpack.c.l.b16 %v2681
        %v2914 = vunpack.c.h.b16 %v2681
        %v2915 = vunpack.c.l.b16 %v2682
        %v2916 = vunpack.c.l.b16 %v2683
        %v2917 = vunpack.c.h.b16 %v2683
        %v2918 = vunpack.c.l.b16 %v2684
        %v2919 = vunpack.c.l.b16 %v2685
        %v2920 = vunpack.c.h.b16 %v2685
        %v2921 = vunpack.c.l.b16 %v2686
        %v2922 = vunpack.c.l.b16 %v2687
        %v2923 = vunpack.c.h.b16 %v2687
        %v2924 = vunpack.c.l.b16 %v2688
        %v2925 = vunpack.c.l.b16 %v2689
        %v2926 = vunpack.c.h.b16 %v2689
        %v2927 = vunpack.c.l.b16 %v2690
        %v2928 = vunpack.c.l.b16 %v2691
        %v2929 = vunpack.c.h.b16 %v2691
        %v2930 = vunpack.c.l.b16 %v2692
        %v2931 = vunpack.c.l.b16 %v2693
        %v2932 = vunpack.c.h.b16 %v2693
        %v2933 = vunpack.c.l.b16 %v2694
        %v2934 = vunpack.c.l.b16 %v2695
        %v2935 = vunpack.c.h.b16 %v2695
        %v2936 = vunpack.c.l.b16 %v2696
        %v2937 = vunpack.c.l.b16 %v2697
        %v2938 = vunpack.c.h.b16 %v2697
        %v2939 = vunpack.c.l.b16 %v2698
        %v2940 = vunpack.c.l.b16 %v2699
        %v2941 = vunpack.c.h.b16 %v2699
        %v2942 = vunpack.c.l.b16 %v2700
        %v2943 = vunpack.c.l.b16 %v2701
        %v2944 = vunpack.c.h.b16 %v2701
        %v2945 = vunpack.c.l.b16 %v2702
        %v2946 = vunpack.c.l.b16 %v2703
        %v2947 = vunpack.c.h.b16 %v2703
        %v2948 = vunpack.c.l.b16 %v2704
        %v2949 = vunpack.c.l.b16 %v2705
        %v2950 = vunpack.c.h.b16 %v2705
        %v2951 = vunpack.c.l.b16 %v2706
        %v2952 = vunpack.c.l.b16 %v2707
        %v2953 = vunpack.c.h.b16 %v2707
        %v2954 = vunpack.c.l.b16 %v2708
        %v2955 = vunpack.c.l.b16 %v2709
        %v2956 = vunpack.c.h.b16 %v2709
        %v2957 = vunpack.c.l.b16 %v2710
        %v2958 = vunpack.c.l.b16 %v2711
        %v2959 = vunpack.c.h.b16 %v2711
        %v2960 = vunpack.c.l.b16 %v2712
        %v2961 = vunpack.c.l.b16 %v2713
        %v2962 = vunpack.c.h.b16 %v2713
        %v2963 = vunpack.c.l.b16 %v2714
        %v2964 = vunpack.c.l.b16 %v2715
        %v2965 = vunpack.c.h.b16 %v2715
        %v2966 = vunpack.c.l.b16 %v2716
        %v2967 = vunpack.c.l.b16 %v2717
        %v2968 = vunpack.c.h.b16 %v2717
        %v2969 = vunpack.c.l.b16 %v2718
        %v2970 = vunpack.c.l.b16 %v2719
        %v2971 = vunpack.c.h.b16 %v2719
        %v2972 = vunpack.c.l.b16 %v2720
        %v2973 = vunpack.c.l.b16 %v2721
        %v2974 = vunpack.c.h.b16 %v2721
        %v2975 = vunpack.c.l.b16 %v2722
        %v2976 = vunpack.c.l.b16 %v2723
        %v2977 = vunpack.c.h.b16 %v2723
        %v2978 = vunpack.c.l.b16 %v2724
        %v2979 = vunpack.c.l.b16 %v2725
        %v2980 = vunpack.c.h.b16 %v2725
        %v2981 = vunpack.c.l.b16 %v2726
        %v2982 = vunpack.c.l.b16 %v2727
        %v2983 = vunpack.c.h.b16 %v2727
        %v2984 = vunpack.c.l.b16 %v2728
        %v2985 = vunpack.c.l.b16 %v2729
        %v2986 = vunpack.c.h.b16 %v2729
        %v2987 = vunpack.c.l.b16 %v2730
        %v2988 = vpack.c.b16 %v2847, %v2844
        %v2989 = vpack.c.b16 %v2848, %v2845
        %v2990 = vpack.c.b16 %v2849, %v2846
        %v2991 = vpack.c.b16 %v2853, %v2850
        %v2992 = vpack.c.b16 %v2854, %v2851
        %v2993 = vpack.c.b16 %v2855, %v2852
        %v2994 = vpack.c.b16 %v2859, %v2856
        %v2995 = vpack.c.b16 %v2860, %v2857
        %v2996 = vpack.c.b16 %v2861, %v2858
        %v2997 = vpack.c.b16 %v2865, %v2862
        %v2998 = vpack.c.b16 %v2866, %v2863
        %v2999 = vpack.c.b16 %v2867, %v2864
        %v3000 = vpack.c.b16 %v2871, %v2868
        %v3001 = vpack.c.b16 %v2872, %v2869
        %v3002 = vpack.c.b16 %v2873, %v2870
        %v3003 = vpack.c.b16 %v2877, %v2874
        %v3004 = vpack.c.b16 %v2878, %v2875
        %v3005 = vpack.c.b16 %v2879, %v2876
        %v3006 = vpack.c.b16 %v2883, %v2880
        %v3007 = vpack.c.b16 %v2884, %v2881
        %v3008 = vpack.c.b16 %v2885, %v2882
        %v3009 = vpack.c.b16 %v2889, %v2886
        %v3010 = vpack.c.b16 %v2890, %v2887
        %v3011 = vpack.c.b16 %v2891, %v2888
        %v3012 = vpack.c.b16 %v2895, %v2892
        %v3013 = vpack.c.b16 %v2896, %v2893
        %v3014 = vpack.c.b16 %v2897, %v2894
        %v3015 = vpack.c.b16 %v2901, %v2898
        %v3016 = vpack.c.b16 %v2902, %v2899
        %v3017 = vpack.c.b16 %v2903, %v2900
        %v3018 = vpack.c.b16 %v2907, %v2904
        %v3019 = vpack.c.b16 %v2908, %v2905
        %v3020 = vpack.c.b16 %v2909, %v2906
        %v3021 = vpack.c.b16 %v2913, %v2910
        %v3022 = vpack.c.b16 %v2914, %v2911
        %v3023 = vpack.c.b16 %v2915, %v2912
        %v3024 = vpack.c.b16 %v2919, %v2916
        %v3025 = vpack.c.b16 %v2920, %v2917
        %v3026 = vpack.c.b16 %v2921, %v2918
        %v3027 = vpack.c.b16 %v2925, %v2922
        %v3028 = vpack.c.b16 %v2926, %v2923
        %v3029 = vpack.c.b16 %v2927, %v2924
        %v3030 = vpack.c.b16 %v2931, %v2928
        %v3031 = vpack.c.b16 %v2932, %v2929
        %v3032 = vpack.c.b16 %v2933, %v2930
        %v3033 = vpack.c.b16 %v2937, %v2934
        %v3034 = vpack.c.b16 %v2938, %v2935
        %v3035 = vpack.c.b16 %v2939, %v2936
        %v3036 = vpack.c.b16 %v2943, %v2940
        %v3037 = vpack.c.b16 %v2944, %v2941
        %v3038 = vpack.c.b16 %v2945, %v2942
        %v3039 = vpack.c.b16 %v2949, %v2946
        %v3040 = vpack.c.b16 %v2950, %v2947
        %v3041 = vpack.c.b16 %v2951, %v2948
        %v3042 = vpack.c.b16 %v2955, %v2952
        %v3043 = vpack.c.b16 %v2956, %v2953
        %v3044 = vpack.c.b16 %v2957, %v2954
        %v3045 = vpack.c.b16 %v2961, %v2958
        %v3046 = vpack.c.b16 %v2962, %v2959
        %v3047 = vpack.c.b16 %v2963, %v2960
        %v3048 = vpack.c.b16 %v2967, %v2964
        %v3049 = vpack.c.b16 %v2968, %v2965
        %v3050 = vpack.c.b16 %v2969, %v2966
        %v3051 = vpack.c.b16 %v2973, %v2970
        %v3052 = vpack.c.b16 %v2974, %v2971
        %v3053 = vpack.c.b16 %v2975, %v2972
        %v3054 = vpack.c.b16 %v2979, %v2976
        %v3055 = vpack.c.b16 %v2980, %v2977
        %v3056 = vpack.c.b16 %v2981, %v2978
        %v3057 = vpack.c.b16 %v2985, %v2982
        %v3058 = vpack.c.b16 %v2986, %v2983
        %v3059 = vpack.c.b16 %v2987, %v2984
        %3132 = vmatprep.subr.bf16.mxu0 %v2989
        %3133 = vmatpush1.bf16.msra.mxu0 %v2988
        %3134 = vmatprep.subr.bf16.mxu0 %v2992
        %3135 = vmatpush1.bf16.msra.mxu0 %v2991
        %3136 = vmatprep.subr.bf16.mxu0 %v2995
        %3137 = vmatpush1.bf16.msra.mxu0 %v2994
        %3138 = vmatprep.subr.bf16.mxu0 %v2998
        %3139 = vmatpush1.bf16.msra.mxu0 %v2997
        %3140 = vmatprep.subr.bf16.mxu0 %v3001
        %3141 = vmatpush1.bf16.msra.mxu0 %v3000
        %3142 = vmatprep.subr.bf16.mxu0 %v3004
        %3143 = vmatpush1.bf16.msra.mxu0 %v3003
        %3144 = vmatprep.subr.bf16.mxu0 %v3007
        %3145 = vmatpush1.bf16.msra.mxu0 %v3006
        %3146 = vmatprep.subr.bf16.mxu0 %v3010
        %3147 = vmatpush1.bf16.msra.mxu0 %v3009
        %3148 = vmatprep.subr.bf16.mxu0 %v3013
        %3149 = vmatpush1.bf16.msra.mxu0 %v3012
        %3150 = vmatprep.subr.bf16.mxu0 %v3016
        %3151 = vmatpush1.bf16.msra.mxu0 %v3015
        %3152 = vmatprep.subr.bf16.mxu0 %v3019
        %3153 = vmatpush1.bf16.msra.mxu0 %v3018
        %3154 = vmatprep.subr.bf16.mxu0 %v3022
        %3155 = vmatpush1.bf16.msra.mxu0 %v3021
        %3156 = vmatprep.subr.bf16.mxu0 %v3025
        %3157 = vmatpush1.bf16.msra.mxu0 %v3024
        %3158 = vmatprep.subr.bf16.mxu0 %v3028
        %3159 = vmatpush1.bf16.msra.mxu0 %v3027
        %3160 = vmatprep.subr.bf16.mxu0 %v3031
        %3161 = vmatpush1.bf16.msra.mxu0 %v3030
        %3162 = vmatprep.subr.bf16.mxu0 %v3034
        %3163 = vmatpush1.bf16.msra.mxu0 %v3033
        %3164 = vmatprep.mubr.bf16.mxu0 %v2588
        %3165 = vmatmul.mubr.bf16.gmra.mrb[0].mxu0 %v2587
        %v3166 = vpop.f32.mrb[0].mxu0
        %v3167 = vadd.f32 %v2736, %v3166
        %v3168 = vpop.f32.mrb[0].mxu0
        %v3169 = vadd.f32 %v2740, %v3168
        %v3170 = vpop.f32.mrb[0].mxu0
        %v3171 = vadd.f32 %v2736, %v3170
        %v3172 = vpop.f32.mrb[0].mxu0
        %v3173 = vadd.f32 %v2740, %v3172
        %3174 = vmatprep.mubr.bf16.mxu0 %v2591
        %3175 = vmatmul.mubr.bf16.gmra.mrb[0].mxu0 %v2590
        %v3176 = vpop.f32.mrb[0].mxu0
        %v3177 = vadd.f32 %v2736, %v3176
        %v3178 = vpop.f32.mrb[0].mxu0
        %v3179 = vadd.f32 %v2740, %v3178
        %v3180 = vpop.f32.mrb[0].mxu0
        %v3181 = vadd.f32 %v2736, %v3180
        %v3182 = vpop.f32.mrb[0].mxu0
        %v3183 = vadd.f32 %v2740, %v3182
        %3184 = vmatprep.mubr.bf16.mxu0 %v2594
        %3185 = vmatmul.mubr.bf16.gmra.mrb[0].mxu0 %v2593
        %v3186 = vpop.f32.mrb[0].mxu0
        %v3187 = vadd.f32 %v2736, %v3186
        %v3188 = vpop.f32.mrb[0].mxu0
        %v3189 = vadd.f32 %v2740, %v3188
        %v3190 = vpop.f32.mrb[0].mxu0
        %v3191 = vadd.f32 %v2736, %v3190
        %v3192 = vpop.f32.mrb[0].mxu0
        %v3193 = vadd.f32 %v2740, %v3192
        %3194 = vmatprep.mubr.bf16.mxu0 %v2597
        %3195 = vmatmul.mubr.bf16.gmra.mrb[0].mxu0 %v2596
        %v3196 = vpop.f32.mrb[0].mxu0
        %v3197 = vadd.f32 %v2736, %v3196
        %v3198 = vpop.f32.mrb[0].mxu0
        %v3199 = vadd.f32 %v2740, %v3198
        %v3200 = vpop.f32.mrb[0].mxu0
        %v3201 = vadd.f32 %v2736, %v3200
        %v3202 = vpop.f32.mrb[0].mxu0
        %v3203 = vadd.f32 %v2740, %v3202
        %3204 = vmatprep.mubr.bf16.mxu0 %v2600
        %3205 = vmatmul.mubr.bf16.gmra.mrb[0].mxu0 %v2599
        %v3206 = vpop.f32.mrb[0].mxu0
        %v3207 = vadd.f32 %v2736, %v3206
        %v3208 = vpop.f32.mrb[0].mxu0
        %v3209 = vadd.f32 %v2740, %v3208
        %v3210 = vpop.f32.mrb[0].mxu0
        %v3211 = vadd.f32 %v2736, %v3210
        %v3212 = vpop.f32.mrb[0].mxu0
        %v3213 = vadd.f32 %v2740, %v3212
        %3214 = vmatprep.mubr.bf16.mxu0 %v2603
        %3215 = vmatmul.mubr.bf16.gmra.mrb[0].mxu0 %v2602
        %v3216 = vpop.f32.mrb[0].mxu0
        %v3217 = vadd.f32 %v2736, %v3216
        %v3218 = vpop.f32.mrb[0].mxu0
        %v3219 = vadd.f32 %v2740, %v3218
        %v3220 = vpop.f32.mrb[0].mxu0
        %v3221 = vadd.f32 %v2736, %v3220
        %v3222 = vpop.f32.mrb[0].mxu0
        %v3223 = vadd.f32 %v2740, %v3222
        %3224 = vmatprep.mubr.bf16.mxu0 %v2606
        %3225 = vmatmul.mubr.bf16.gmra.mrb[0].mxu0 %v2605
        %v3226 = vpop.f32.mrb[0].mxu0
        %v3227 = vadd.f32 %v2736, %v3226
        %v3228 = vpop.f32.mrb[0].mxu0
        %v3229 = vadd.f32 %v2740, %v3228
        %v3230 = vpop.f32.mrb[0].mxu0
        %v3231 = vadd.f32 %v2736, %v3230
        %v3232 = vpop.f32.mrb[0].mxu0
        %v3233 = vadd.f32 %v2740, %v3232
        %3234 = vmatprep.mubr.bf16.mxu0 %v2609
        %3235 = vmatmul.mubr.bf16.gmra.mrb[0].mxu0 %v2608
        %v3236 = vpop.f32.mrb[0].mxu0
        %v3237 = vadd.f32 %v2736, %v3236
        %v3238 = vpop.f32.mrb[0].mxu0
        %v3239 = vadd.f32 %v2740, %v3238
        %v3240 = vpop.f32.mrb[0].mxu0
        %v3241 = vadd.f32 %v2736, %v3240
        %v3242 = vpop.f32.mrb[0].mxu0
        %v3243 = vadd.f32 %v2740, %v3242
        %3244 = vmatprep.mubr.bf16.mxu0 %v2612
        %3245 = vmatmul.mubr.bf16.gmra.mrb[0].mxu0 %v2611
        %v3246 = vpop.f32.mrb[0].mxu0
        %v3247 = vadd.f32 %v2736, %v3246
        %v3248 = vpop.f32.mrb[0].mxu0
        %v3249 = vadd.f32 %v2740, %v3248
        %v3250 = vpop.f32.mrb[0].mxu0
        %v3251 = vadd.f32 %v2736, %v3250
        %v3252 = vpop.f32.mrb[0].mxu0
        %v3253 = vadd.f32 %v2740, %v3252
        %3254 = vmatprep.mubr.bf16.mxu0 %v2615
        %3255 = vmatmul.mubr.bf16.gmra.mrb[0].mxu0 %v2614
        %v3256 = vpop.f32.mrb[0].mxu0
        %v3257 = vadd.f32 %v2736, %v3256
        %v3258 = vpop.f32.mrb[0].mxu0
        %v3259 = vadd.f32 %v2740, %v3258
        %v3260 = vpop.f32.mrb[0].mxu0
        %v3261 = vadd.f32 %v2736, %v3260
        %v3262 = vpop.f32.mrb[0].mxu0
        %v3263 = vadd.f32 %v2740, %v3262
        %3264 = vmatprep.mubr.bf16.mxu0 %v2618
        %3265 = vmatmul.mubr.bf16.gmra.mrb[0].mxu0 %v2617
        %v3266 = vpop.f32.mrb[0].mxu0
        %v3267 = vadd.f32 %v2736, %v3266
        %v3268 = vpop.f32.mrb[0].mxu0
        %v3269 = vadd.f32 %v2740, %v3268
        %v3270 = vpop.f32.mrb[0].mxu0
        %v3271 = vadd.f32 %v2736, %v3270
        %v3272 = vpop.f32.mrb[0].mxu0
        %v3273 = vadd.f32 %v2740, %v3272
        %3274 = vmatprep.mubr.bf16.mxu0 %v2621
        %3275 = vmatmul.mubr.bf16.gmra.mrb[0].mxu0 %v2620
        %v3276 = vpop.f32.mrb[0].mxu0
        %v3277 = vadd.f32 %v2736, %v3276
        %v3278 = vpop.f32.mrb[0].mxu0
        %v3279 = vadd.f32 %v2740, %v3278
        %v3280 = vpop.f32.mrb[0].mxu0
        %v3281 = vadd.f32 %v2736, %v3280
        %v3282 = vpop.f32.mrb[0].mxu0
        %v3283 = vadd.f32 %v2740, %v3282
        %3284 = vmatprep.mubr.bf16.mxu0 %v2624
        %3285 = vmatmul.mubr.bf16.gmra.mrb[0].mxu0 %v2623
        %v3286 = vpop.f32.mrb[0].mxu0
        %v3287 = vadd.f32 %v2736, %v3286
        %v3288 = vpop.f32.mrb[0].mxu0
        %v3289 = vadd.f32 %v2740, %v3288
        %v3290 = vpop.f32.mrb[0].mxu0
        %v3291 = vadd.f32 %v2736, %v3290
        %v3292 = vpop.f32.mrb[0].mxu0
        %v3293 = vadd.f32 %v2740, %v3292
        %3294 = vmatprep.mubr.bf16.mxu0 %v2627
        %3295 = vmatmul.mubr.bf16.gmra.mrb[0].mxu0 %v2626
        %v3296 = vpop.f32.mrb[0].mxu0
        %v3297 = vadd.f32 %v2736, %v3296
        %v3298 = vpop.f32.mrb[0].mxu0
        %v3299 = vadd.f32 %v2740, %v3298
        %v3300 = vpop.f32.mrb[0].mxu0
        %v3301 = vadd.f32 %v2736, %v3300
        %v3302 = vpop.f32.mrb[0].mxu0
        %v3303 = vadd.f32 %v2740, %v3302
        %3304 = vmatprep.mubr.bf16.mxu0 %v2630
        %3305 = vmatmul.mubr.bf16.gmra.mrb[0].mxu0 %v2629
        %v3306 = vpop.f32.mrb[0].mxu0
        %v3307 = vadd.f32 %v2736, %v3306
        %v3308 = vpop.f32.mrb[0].mxu0
        %v3309 = vadd.f32 %v2740, %v3308
        %v3310 = vpop.f32.mrb[0].mxu0
        %v3311 = vadd.f32 %v2736, %v3310
        %v3312 = vpop.f32.mrb[0].mxu0
        %v3313 = vadd.f32 %v2740, %v3312
        %3314 = vmatprep.mubr.bf16.mxu0 %v2633
        %3315 = vmatmul.mubr.bf16.gmra.mrb[0].mxu0 %v2632
        %v3316 = vpop.f32.mrb[0].mxu0
        %v3317 = vadd.f32 %v2736, %v3316
        %v3318 = vpop.f32.mrb[0].mxu0
        %v3319 = vadd.f32 %v2740, %v3318
        %v3320 = vpop.f32.mrb[0].mxu0
        %v3321 = vadd.f32 %v2736, %v3320
        %v3322 = vpop.f32.mrb[0].mxu0
        %v3323 = vadd.f32 %v2740, %v3322
        %3324 = vdwg.mxu0
        %3325 = vmatprep.subr.bf16.mxu0 %v3037
        %3326 = vmatpush1.bf16.msra.mxu0 %v3036
        %3327 = vmatprep.subr.bf16.mxu0 %v3040
        %3328 = vmatpush1.bf16.msra.mxu0 %v3039
        %3329 = vmatprep.subr.bf16.mxu0 %v3043
        %3330 = vmatpush1.bf16.msra.mxu0 %v3042
        %3331 = vmatprep.subr.bf16.mxu0 %v3046
        %3332 = vmatpush1.bf16.msra.mxu0 %v3045
        %3333 = vmatprep.subr.bf16.mxu0 %v3049
        %3334 = vmatpush1.bf16.msra.mxu0 %v3048
        %3335 = vmatprep.subr.bf16.mxu0 %v3052
        %3336 = vmatpush1.bf16.msra.mxu0 %v3051
        %3337 = vmatprep.subr.bf16.mxu0 %v3055
        %3338 = vmatpush1.bf16.msra.mxu0 %v3054
        %3339 = vmatprep.subr.bf16.mxu0 %v3058
        %3340 = vmatpush1.bf16.msra.mxu0 %v3057
        %3341 = vmatprep.subr.bf16.mxu0 0
        %3342 = vmatpush1.bf16.msra.mxu0 0
        %3343 = vmatprep.subr.bf16.mxu0 0
        %3344 = vmatpush1.bf16.msra.mxu0 0
        %3345 = vmatprep.subr.bf16.mxu0 0
        %3346 = vmatpush1.bf16.msra.mxu0 0
        %3347 = vmatprep.subr.bf16.mxu0 0
        %3348 = vmatpush1.bf16.msra.mxu0 0
        %3349 = vmatprep.subr.bf16.mxu0 0
        %3350 = vmatpush1.bf16.msra.mxu0 0
        %3351 = vmatprep.subr.bf16.mxu0 0
        %3352 = vmatpush1.bf16.msra.mxu0 0
        %3353 = vmatprep.subr.bf16.mxu0 0
        %3354 = vmatpush1.bf16.msra.mxu0 0
        %3355 = vmatprep.subr.bf16.mxu0 0
        %3356 = vmatpush1.bf16.msra.mxu0 0
        %3357 = vmatprep.mubr.bf16.mxu0 0
        %3358 = vmatmul.mubr.bf16.gmra.mrb[0].mxu0 %v2589
        %v3359 = vpop.f32.mrb[0].mxu0
        %v3360 = vadd.f32 %v3167, %v3359
        %v3361 = vpop.f32.mrb[0].mxu0
        %v3362 = vadd.f32 %v3169, %v3361
        %v3363 = vpop.f32.mrb[0].mxu0
        %v3364 = vadd.f32 %v3171, %v3363
        %v3365 = vpop.f32.mrb[0].mxu0
        %v3366 = vadd.f32 %v3173, %v3365
        %3367 = vmatprep.mubr.bf16.mxu0 0
        %3368 = vmatmul.mubr.bf16.gmra.mrb[0].mxu0 %v2592
        %v3369 = vpop.f32.mrb[0].mxu0
        %v3370 = vadd.f32 %v3177, %v3369
        %v3371 = vpop.f32.mrb[0].mxu0
        %v3372 = vadd.f32 %v3179, %v3371
        %v3373 = vpop.f32.mrb[0].mxu0
        %v3374 = vadd.f32 %v3181, %v3373
        %v3375 = vpop.f32.mrb[0].mxu0
        %v3376 = vadd.f32 %v3183, %v3375
        %3377 = vmatprep.mubr.bf16.mxu0 0
        %3378 = vmatmul.mubr.bf16.gmra.mrb[0].mxu0 %v2595
        %v3379 = vpop.f32.mrb[0].mxu0
        %v3380 = vadd.f32 %v3187, %v3379
        %v3381 = vpop.f32.mrb[0].mxu0
        %v3382 = vadd.f32 %v3189, %v3381
        %v3383 = vpop.f32.mrb[0].mxu0
        %v3384 = vadd.f32 %v3191, %v3383
        %v3385 = vpop.f32.mrb[0].mxu0
        %v3386 = vadd.f32 %v3193, %v3385
        %3387 = vmatprep.mubr.bf16.mxu0 0
        %3388 = vmatmul.mubr.bf16.gmra.mrb[0].mxu0 %v2598
        %v3389 = vpop.f32.mrb[0].mxu0
        %v3390 = vadd.f32 %v3197, %v3389
        %v3391 = vpop.f32.mrb[0].mxu0
        %v3392 = vadd.f32 %v3199, %v3391
        %v3393 = vpop.f32.mrb[0].mxu0
        %v3394 = vadd.f32 %v3201, %v3393
        %v3395 = vpop.f32.mrb[0].mxu0
        %v3396 = vadd.f32 %v3203, %v3395
        %3397 = vmatprep.mubr.bf16.mxu0 0
        %3398 = vmatmul.mubr.bf16.gmra.mrb[0].mxu0 %v2601
        %v3399 = vpop.f32.mrb[0].mxu0
        %v3400 = vadd.f32 %v3207, %v3399
        %v3401 = vpop.f32.mrb[0].mxu0
        %v3402 = vadd.f32 %v3209, %v3401
        %v3403 = vpop.f32.mrb[0].mxu0
        %v3404 = vadd.f32 %v3211, %v3403
        %v3405 = vpop.f32.mrb[0].mxu0
        %v3406 = vadd.f32 %v3213, %v3405
        %3407 = vmatprep.mubr.bf16.mxu0 0
        %3408 = vmatmul.mubr.bf16.gmra.mrb[0].mxu0 %v2604
        %v3409 = vpop.f32.mrb[0].mxu0
        %v3410 = vadd.f32 %v3217, %v3409
        %v3411 = vpop.f32.mrb[0].mxu0
        %v3412 = vadd.f32 %v3219, %v3411
        %v3413 = vpop.f32.mrb[0].mxu0
        %v3414 = vadd.f32 %v3221, %v3413
        %v3415 = vpop.f32.mrb[0].mxu0
        %v3416 = vadd.f32 %v3223, %v3415
        %3417 = vmatprep.mubr.bf16.mxu0 0
        %3418 = vmatmul.mubr.bf16.gmra.mrb[0].mxu0 %v2607
        %v3419 = vpop.f32.mrb[0].mxu0
        %v3420 = vadd.f32 %v3227, %v3419
        %v3421 = vpop.f32.mrb[0].mxu0
        %v3422 = vadd.f32 %v3229, %v3421
        %v3423 = vpop.f32.mrb[0].mxu0
        %v3424 = vadd.f32 %v3231, %v3423
        %v3425 = vpop.f32.mrb[0].mxu0
        %v3426 = vadd.f32 %v3233, %v3425
        %3427 = vmatprep.mubr.bf16.mxu0 0
        %3428 = vmatmul.mubr.bf16.gmra.mrb[0].mxu0 %v2610
        %v3429 = vpop.f32.mrb[0].mxu0
        %v3430 = vadd.f32 %v3237, %v3429
        %v3431 = vpop.f32.mrb[0].mxu0
        %v3432 = vadd.f32 %v3239, %v3431
        %v3433 = vpop.f32.mrb[0].mxu0
        %v3434 = vadd.f32 %v3241, %v3433
        %v3435 = vpop.f32.mrb[0].mxu0
        %v3436 = vadd.f32 %v3243, %v3435
        %3437 = vmatprep.mubr.bf16.mxu0 0
        %3438 = vmatmul.mubr.bf16.gmra.mrb[0].mxu0 %v2613
        %v3439 = vpop.f32.mrb[0].mxu0
        %v3440 = vadd.f32 %v3247, %v3439
        %v3441 = vpop.f32.mrb[0].mxu0
        %v3442 = vadd.f32 %v3249, %v3441
        %v3443 = vpop.f32.mrb[0].mxu0
        %v3444 = vadd.f32 %v3251, %v3443
        %v3445 = vpop.f32.mrb[0].mxu0
        %v3446 = vadd.f32 %v3253, %v3445
        %3447 = vmatprep.mubr.bf16.mxu0 0
        %3448 = vmatmul.mubr.bf16.gmra.mrb[0].mxu0 %v2616
        %v3449 = vpop.f32.mrb[0].mxu0
        %v3450 = vadd.f32 %v3257, %v3449
        %v3451 = vpop.f32.mrb[0].mxu0
        %v3452 = vadd.f32 %v3259, %v3451
        %v3453 = vpop.f32.mrb[0].mxu0
        %v3454 = vadd.f32 %v3261, %v3453
        %v3455 = vpop.f32.mrb[0].mxu0
        %v3456 = vadd.f32 %v3263, %v3455
        %3457 = vmatprep.mubr.bf16.mxu0 0
        %3458 = vmatmul.mubr.bf16.gmra.mrb[0].mxu0 %v2619
        %v3459 = vpop.f32.mrb[0].mxu0
        %v3460 = vadd.f32 %v3267, %v3459
        %v3461 = vpop.f32.mrb[0].mxu0
        %v3462 = vadd.f32 %v3269, %v3461
        %v3463 = vpop.f32.mrb[0].mxu0
        %v3464 = vadd.f32 %v3271, %v3463
        %v3465 = vpop.f32.mrb[0].mxu0
        %v3466 = vadd.f32 %v3273, %v3465
        %3467 = vmatprep.mubr.bf16.mxu0 0
        %3468 = vmatmul.mubr.bf16.gmra.mrb[0].mxu0 %v2622
        %v3469 = vpop.f32.mrb[0].mxu0
        %v3470 = vadd.f32 %v3277, %v3469
        %v3471 = vpop.f32.mrb[0].mxu0
        %v3472 = vadd.f32 %v3279, %v3471
        %v3473 = vpop.f32.mrb[0].mxu0
        %v3474 = vadd.f32 %v3281, %v3473
        %v3475 = vpop.f32.mrb[0].mxu0
        %v3476 = vadd.f32 %v3283, %v3475
        %3477 = vmatprep.mubr.bf16.mxu0 0
        %3478 = vmatmul.mubr.bf16.gmra.mrb[0].mxu0 %v2625
        %v3479 = vpop.f32.mrb[0].mxu0
        %v3480 = vadd.f32 %v3287, %v3479
        %v3481 = vpop.f32.mrb[0].mxu0
        %v3482 = vadd.f32 %v3289, %v3481
        %v3483 = vpop.f32.mrb[0].mxu0
        %v3484 = vadd.f32 %v3291, %v3483
        %v3485 = vpop.f32.mrb[0].mxu0
        %v3486 = vadd.f32 %v3293, %v3485
        %3487 = vmatprep.mubr.bf16.mxu0 0
        %3488 = vmatmul.mubr.bf16.gmra.mrb[0].mxu0 %v2628
        %v3489 = vpop.f32.mrb[0].mxu0
        %v3490 = vadd.f32 %v3297, %v3489
        %v3491 = vpop.f32.mrb[0].mxu0
        %v3492 = vadd.f32 %v3299, %v3491
        %v3493 = vpop.f32.mrb[0].mxu0
        %v3494 = vadd.f32 %v3301, %v3493
        %v3495 = vpop.f32.mrb[0].mxu0
        %v3496 = vadd.f32 %v3303, %v3495
        %3497 = vmatprep.mubr.bf16.mxu0 0
        %3498 = vmatmul.mubr.bf16.gmra.mrb[0].mxu0 %v2631
        %v3499 = vpop.f32.mrb[0].mxu0
        %v3500 = vadd.f32 %v3307, %v3499
        %v3501 = vpop.f32.mrb[0].mxu0
        %v3502 = vadd.f32 %v3309, %v3501
        %v3503 = vpop.f32.mrb[0].mxu0
        %v3504 = vadd.f32 %v3311, %v3503
        %v3505 = vpop.f32.mrb[0].mxu0
        %v3506 = vadd.f32 %v3313, %v3505
        %3507 = vmatprep.mubr.bf16.mxu0 0
        %3508 = vmatmul.mubr.bf16.gmra.mrb[0].mxu0 %v2634
        %v3509 = vpop.f32.mrb[0].mxu0
        %v3510 = vadd.f32 %v3317, %v3509
        %v3511 = vpop.f32.mrb[0].mxu0
        %v3512 = vadd.f32 %v3319, %v3511
        %v3513 = vpop.f32.mrb[0].mxu0
        %v3514 = vadd.f32 %v3321, %v3513
        %v3515 = vpop.f32.mrb[0].mxu0
        %v3516 = vadd.f32 %v3323, %v3515
        %3517 = vdwg.mxu0
        %3518 = vmatprep.subr.bf16.mxu0 0
        %3519 = vmatpush1.bf16.msra.mxu0 %v2990
        %3520 = vmatprep.subr.bf16.mxu0 0
        %3521 = vmatpush1.bf16.msra.mxu0 %v2993
        %3522 = vmatprep.subr.bf16.mxu0 0
        %3523 = vmatpush1.bf16.msra.mxu0 %v2996
        %3524 = vmatprep.subr.bf16.mxu0 0
        %3525 = vmatpush1.bf16.msra.mxu0 %v2999
        %3526 = vmatprep.subr.bf16.mxu0 0
        %3527 = vmatpush1.bf16.msra.mxu0 %v3002
        %3528 = vmatprep.subr.bf16.mxu0 0
        %3529 = vmatpush1.bf16.msra.mxu0 %v3005
        %3530 = vmatprep.subr.bf16.mxu0 0
        %3531 = vmatpush1.bf16.msra.mxu0 %v3008
        %3532 = vmatprep.subr.bf16.mxu0 0
        %3533 = vmatpush1.bf16.msra.mxu0 %v3011
        %3534 = vmatprep.subr.bf16.mxu0 0
        %3535 = vmatpush1.bf16.msra.mxu0 %v3014
        %3536 = vmatprep.subr.bf16.mxu0 0
        %3537 = vmatpush1.bf16.msra.mxu0 %v3017
        %3538 = vmatprep.subr.bf16.mxu0 0
        %3539 = vmatpush1.bf16.msra.mxu0 %v3020
        %3540 = vmatprep.subr.bf16.mxu0 0
        %3541 = vmatpush1.bf16.msra.mxu0 %v3023
        %3542 = vmatprep.subr.bf16.mxu0 0
        %3543 = vmatpush1.bf16.msra.mxu0 %v3026
        %3544 = vmatprep.subr.bf16.mxu0 0
        %3545 = vmatpush1.bf16.msra.mxu0 %v3029
        %3546 = vmatprep.subr.bf16.mxu0 0
        %3547 = vmatpush1.bf16.msra.mxu0 %v3032
        %3548 = vmatprep.subr.bf16.mxu0 0
        %3549 = vmatpush1.bf16.msra.mxu0 %v3035
        %3550 = vmatprep.mubr.bf16.mxu0 %v2588
        %3551 = vmatmul.mubr.bf16.gmra.mrb[0].mxu0 %v2587
        %v3552 = vpop.f32.mrb[0].mxu0
        %v3553 = vadd.f32 %v2744, %v3552
        %v3554 = vpop.f32.mrb[0].mxu0
        %v3555 = vpop.f32.mrb[0].mxu0
        %v3556 = vadd.f32 %v2744, %v3555
        %v3557 = vpop.f32.mrb[0].mxu0
        %3558 = vmatprep.mubr.bf16.mxu0 %v2591
        %3559 = vmatmul.mubr.bf16.gmra.mrb[0].mxu0 %v2590
        %v3560 = vpop.f32.mrb[0].mxu0
        %v3561 = vadd.f32 %v2744, %v3560
        %v3562 = vpop.f32.mrb[0].mxu0
        %v3563 = vpop.f32.mrb[0].mxu0
        %v3564 = vadd.f32 %v2744, %v3563
        %v3565 = vpop.f32.mrb[0].mxu0
        %3566 = vmatprep.mubr.bf16.mxu0 %v2594
        %3567 = vmatmul.mubr.bf16.gmra.mrb[0].mxu0 %v2593
        %v3568 = vpop.f32.mrb[0].mxu0
        %v3569 = vadd.f32 %v2744, %v3568
        %v3570 = vpop.f32.mrb[0].mxu0
        %v3571 = vpop.f32.mrb[0].mxu0
        %v3572 = vadd.f32 %v2744, %v3571
        %v3573 = vpop.f32.mrb[0].mxu0
        %3574 = vmatprep.mubr.bf16.mxu0 %v2597
        %3575 = vmatmul.mubr.bf16.gmra.mrb[0].mxu0 %v2596
        %v3576 = vpop.f32.mrb[0].mxu0
        %v3577 = vadd.f32 %v2744, %v3576
        %v3578 = vpop.f32.mrb[0].mxu0
        %v3579 = vpop.f32.mrb[0].mxu0
        %v3580 = vadd.f32 %v2744, %v3579
        %v3581 = vpop.f32.mrb[0].mxu0
        %3582 = vmatprep.mubr.bf16.mxu0 %v2600
        %3583 = vmatmul.mubr.bf16.gmra.mrb[0].mxu0 %v2599
        %v3584 = vpop.f32.mrb[0].mxu0
        %v3585 = vadd.f32 %v2744, %v3584
        %v3586 = vpop.f32.mrb[0].mxu0
        %v3587 = vpop.f32.mrb[0].mxu0
        %v3588 = vadd.f32 %v2744, %v3587
        %v3589 = vpop.f32.mrb[0].mxu0
        %3590 = vmatprep.mubr.bf16.mxu0 %v2603
        %3591 = vmatmul.mubr.bf16.gmra.mrb[0].mxu0 %v2602
        %v3592 = vpop.f32.mrb[0].mxu0
        %v3593 = vadd.f32 %v2744, %v3592
        %v3594 = vpop.f32.mrb[0].mxu0
        %v3595 = vpop.f32.mrb[0].mxu0
        %v3596 = vadd.f32 %v2744, %v3595
        %v3597 = vpop.f32.mrb[0].mxu0
        %3598 = vmatprep.mubr.bf16.mxu0 %v2606
        %3599 = vmatmul.mubr.bf16.gmra.mrb[0].mxu0 %v2605
        %v3600 = vpop.f32.mrb[0].mxu0
        %v3601 = vadd.f32 %v2744, %v3600
        %v3602 = vpop.f32.mrb[0].mxu0
        %v3603 = vpop.f32.mrb[0].mxu0
        %v3604 = vadd.f32 %v2744, %v3603
        %v3605 = vpop.f32.mrb[0].mxu0
        %3606 = vmatprep.mubr.bf16.mxu0 %v2609
        %3607 = vmatmul.mubr.bf16.gmra.mrb[0].mxu0 %v2608
        %v3608 = vpop.f32.mrb[0].mxu0
        %v3609 = vadd.f32 %v2744, %v3608
        %v3610 = vpop.f32.mrb[0].mxu0
        %v3611 = vpop.f32.mrb[0].mxu0
        %v3612 = vadd.f32 %v2744, %v3611
        %v3613 = vpop.f32.mrb[0].mxu0
        %3614 = vmatprep.mubr.bf16.mxu0 %v2612
        %3615 = vmatmul.mubr.bf16.gmra.mrb[0].mxu0 %v2611
        %v3616 = vpop.f32.mrb[0].mxu0
        %v3617 = vadd.f32 %v2744, %v3616
        %v3618 = vpop.f32.mrb[0].mxu0
        %v3619 = vpop.f32.mrb[0].mxu0
        %v3620 = vadd.f32 %v2744, %v3619
        %v3621 = vpop.f32.mrb[0].mxu0
        %3622 = vmatprep.mubr.bf16.mxu0 %v2615
        %3623 = vmatmul.mubr.bf16.gmra.mrb[0].mxu0 %v2614
        %v3624 = vpop.f32.mrb[0].mxu0
        %v3625 = vadd.f32 %v2744, %v3624
        %v3626 = vpop.f32.mrb[0].mxu0
        %v3627 = vpop.f32.mrb[0].mxu0
        %v3628 = vadd.f32 %v2744, %v3627
        %v3629 = vpop.f32.mrb[0].mxu0
        %3630 = vmatprep.mubr.bf16.mxu0 %v2618
        %3631 = vmatmul.mubr.bf16.gmra.mrb[0].mxu0 %v2617
        %v3632 = vpop.f32.mrb[0].mxu0
        %v3633 = vadd.f32 %v2744, %v3632
        %v3634 = vpop.f32.mrb[0].mxu0
        %v3635 = vpop.f32.mrb[0].mxu0
        %v3636 = vadd.f32 %v2744, %v3635
        %v3637 = vpop.f32.mrb[0].mxu0
        %3638 = vmatprep.mubr.bf16.mxu0 %v2621
        %3639 = vmatmul.mubr.bf16.gmra.mrb[0].mxu0 %v2620
        %v3640 = vpop.f32.mrb[0].mxu0
        %v3641 = vadd.f32 %v2744, %v3640
        %v3642 = vpop.f32.mrb[0].mxu0
        %v3643 = vpop.f32.mrb[0].mxu0
        %v3644 = vadd.f32 %v2744, %v3643
        %v3645 = vpop.f32.mrb[0].mxu0
        %3646 = vmatprep.mubr.bf16.mxu0 %v2624
        %3647 = vmatmul.mubr.bf16.gmra.mrb[0].mxu0 %v2623
        %v3648 = vpop.f32.mrb[0].mxu0
        %v3649 = vadd.f32 %v2744, %v3648
        %v3650 = vpop.f32.mrb[0].mxu0
        %v3651 = vpop.f32.mrb[0].mxu0
        %v3652 = vadd.f32 %v2744, %v3651
        %v3653 = vpop.f32.mrb[0].mxu0
        %3654 = vmatprep.mubr.bf16.mxu0 %v2627
        %3655 = vmatmul.mubr.bf16.gmra.mrb[0].mxu0 %v2626
        %v3656 = vpop.f32.mrb[0].mxu0
        %v3657 = vadd.f32 %v2744, %v3656
        %v3658 = vpop.f32.mrb[0].mxu0
        %v3659 = vpop.f32.mrb[0].mxu0
        %v3660 = vadd.f32 %v2744, %v3659
        %v3661 = vpop.f32.mrb[0].mxu0
        %3662 = vmatprep.mubr.bf16.mxu0 %v2630
        %3663 = vmatmul.mubr.bf16.gmra.mrb[0].mxu0 %v2629
        %v3664 = vpop.f32.mrb[0].mxu0
        %v3665 = vadd.f32 %v2744, %v3664
        %v3666 = vpop.f32.mrb[0].mxu0
        %v3667 = vpop.f32.mrb[0].mxu0
        %v3668 = vadd.f32 %v2744, %v3667
        %v3669 = vpop.f32.mrb[0].mxu0
        %3670 = vmatprep.mubr.bf16.mxu0 %v2633
        %3671 = vmatmul.mubr.bf16.gmra.mrb[0].mxu0 %v2632
        %v3672 = vpop.f32.mrb[0].mxu0
        %v3673 = vadd.f32 %v2744, %v3672
        %v3674 = vpop.f32.mrb[0].mxu0
        %v3675 = vpop.f32.mrb[0].mxu0
        %v3676 = vadd.f32 %v2744, %v3675
        %v3677 = vpop.f32.mrb[0].mxu0
        %3678 = vdwg.mxu0
        %3679 = vmatprep.subr.bf16.mxu0 0
        %3680 = vmatpush1.bf16.msra.mxu0 %v3038
        %3681 = vmatprep.subr.bf16.mxu0 0
        %3682 = vmatpush1.bf16.msra.mxu0 %v3041
        %3683 = vmatprep.subr.bf16.mxu0 0
        %3684 = vmatpush1.bf16.msra.mxu0 %v3044
        %3685 = vmatprep.subr.bf16.mxu0 0
        %3686 = vmatpush1.bf16.msra.mxu0 %v3047
        %3687 = vmatprep.subr.bf16.mxu0 0
        %3688 = vmatpush1.bf16.msra.mxu0 %v3050
        %3689 = vmatprep.subr.bf16.mxu0 0
        %3690 = vmatpush1.bf16.msra.mxu0 %v3053
        %3691 = vmatprep.subr.bf16.mxu0 0
        %3692 = vmatpush1.bf16.msra.mxu0 %v3056
        %3693 = vmatprep.subr.bf16.mxu0 0
        %3694 = vmatpush1.bf16.msra.mxu0 %v3059
        %3695 = vmatprep.subr.bf16.mxu0 0
        %3696 = vmatpush1.bf16.msra.mxu0 0
        %3697 = vmatprep.subr.bf16.mxu0 0
        %3698 = vmatpush1.bf16.msra.mxu0 0
        %3699 = vmatprep.subr.bf16.mxu0 0
        %3700 = vmatpush1.bf16.msra.mxu0 0
        %3701 = vmatprep.subr.bf16.mxu0 0
        %3702 = vmatpush1.bf16.msra.mxu0 0
        %3703 = vmatprep.subr.bf16.mxu0 0
        %3704 = vmatpush1.bf16.msra.mxu0 0
        %3705 = vmatprep.subr.bf16.mxu0 0
        %3706 = vmatpush1.bf16.msra.mxu0 0
        %3707 = vmatprep.subr.bf16.mxu0 0
        %3708 = vmatpush1.bf16.msra.mxu0 0
        %3709 = vmatprep.subr.bf16.mxu0 0
        %3710 = vmatpush1.bf16.msra.mxu0 0
        %3711 = vmatprep.mubr.bf16.mxu0 0
        %3712 = vmatmul.mubr.bf16.gmra.mrb[0].mxu0 %v2589
        %v3713 = vpop.f32.mrb[0].mxu0
        %v3714 = vadd.f32 %v3553, %v3713
        %v3715 = vpop.f32.mrb[0].mxu0
        %v3716 = vpop.f32.mrb[0].mxu0
        %v3717 = vadd.f32 %v3556, %v3716
        %v3718 = vpop.f32.mrb[0].mxu0
        %3719 = vmatprep.mubr.bf16.mxu0 0
        %3720 = vmatmul.mubr.bf16.gmra.mrb[0].mxu0 %v2592
        %v3721 = vpop.f32.mrb[0].mxu0
        %v3722 = vadd.f32 %v3561, %v3721
        %v3723 = vpop.f32.mrb[0].mxu0
        %v3724 = vpop.f32.mrb[0].mxu0
        %v3725 = vadd.f32 %v3564, %v3724
        %v3726 = vpop.f32.mrb[0].mxu0
        %3727 = vmatprep.mubr.bf16.mxu0 0
        %3728 = vmatmul.mubr.bf16.gmra.mrb[0].mxu0 %v2595
        %v3729 = vpop.f32.mrb[0].mxu0
        %v3730 = vadd.f32 %v3569, %v3729
        %v3731 = vpop.f32.mrb[0].mxu0
        %v3732 = vpop.f32.mrb[0].mxu0
        %v3733 = vadd.f32 %v3572, %v3732
        %v3734 = vpop.f32.mrb[0].mxu0
        %3735 = vmatprep.mubr.bf16.mxu0 0
        %3736 = vmatmul.mubr.bf16.gmra.mrb[0].mxu0 %v2598
        %v3737 = vpop.f32.mrb[0].mxu0
        %v3738 = vadd.f32 %v3577, %v3737
        %v3739 = vpop.f32.mrb[0].mxu0
        %v3740 = vpop.f32.mrb[0].mxu0
        %v3741 = vadd.f32 %v3580, %v3740
        %v3742 = vpop.f32.mrb[0].mxu0
        %3743 = vmatprep.mubr.bf16.mxu0 0
        %3744 = vmatmul.mubr.bf16.gmra.mrb[0].mxu0 %v2601
        %v3745 = vpop.f32.mrb[0].mxu0
        %v3746 = vadd.f32 %v3585, %v3745
        %v3747 = vpop.f32.mrb[0].mxu0
        %v3748 = vpop.f32.mrb[0].mxu0
        %v3749 = vadd.f32 %v3588, %v3748
        %v3750 = vpop.f32.mrb[0].mxu0
        %3751 = vmatprep.mubr.bf16.mxu0 0
        %3752 = vmatmul.mubr.bf16.gmra.mrb[0].mxu0 %v2604
        %v3753 = vpop.f32.mrb[0].mxu0
        %v3754 = vadd.f32 %v3593, %v3753
        %v3755 = vpop.f32.mrb[0].mxu0
        %v3756 = vpop.f32.mrb[0].mxu0
        %v3757 = vadd.f32 %v3596, %v3756
        %v3758 = vpop.f32.mrb[0].mxu0
        %3759 = vmatprep.mubr.bf16.mxu0 0
        %3760 = vmatmul.mubr.bf16.gmra.mrb[0].mxu0 %v2607
        %v3761 = vpop.f32.mrb[0].mxu0
        %v3762 = vadd.f32 %v3601, %v3761
        %v3763 = vpop.f32.mrb[0].mxu0
        %v3764 = vpop.f32.mrb[0].mxu0
        %v3765 = vadd.f32 %v3604, %v3764
        %v3766 = vpop.f32.mrb[0].mxu0
        %3767 = vmatprep.mubr.bf16.mxu0 0
        %3768 = vmatmul.mubr.bf16.gmra.mrb[0].mxu0 %v2610
        %v3769 = vpop.f32.mrb[0].mxu0
        %v3770 = vadd.f32 %v3609, %v3769
        %v3771 = vpop.f32.mrb[0].mxu0
        %v3772 = vpop.f32.mrb[0].mxu0
        %v3773 = vadd.f32 %v3612, %v3772
        %v3774 = vpop.f32.mrb[0].mxu0
        %3775 = vmatprep.mubr.bf16.mxu0 0
        %3776 = vmatmul.mubr.bf16.gmra.mrb[0].mxu0 %v2613
        %v3777 = vpop.f32.mrb[0].mxu0
        %v3778 = vadd.f32 %v3617, %v3777
        %v3779 = vpop.f32.mrb[0].mxu0
        %v3780 = vpop.f32.mrb[0].mxu0
        %v3781 = vadd.f32 %v3620, %v3780
        %v3782 = vpop.f32.mrb[0].mxu0
        %3783 = vmatprep.mubr.bf16.mxu0 0
        %3784 = vmatmul.mubr.bf16.gmra.mrb[0].mxu0 %v2616
        %v3785 = vpop.f32.mrb[0].mxu0
        %v3786 = vadd.f32 %v3625, %v3785
        %v3787 = vpop.f32.mrb[0].mxu0
        %v3788 = vpop.f32.mrb[0].mxu0
        %v3789 = vadd.f32 %v3628, %v3788
        %v3790 = vpop.f32.mrb[0].mxu0
        %3791 = vmatprep.mubr.bf16.mxu0 0
        %3792 = vmatmul.mubr.bf16.gmra.mrb[0].mxu0 %v2619
        %v3793 = vpop.f32.mrb[0].mxu0
        %v3794 = vadd.f32 %v3633, %v3793
        %v3795 = vpop.f32.mrb[0].mxu0
        %v3796 = vpop.f32.mrb[0].mxu0
        %v3797 = vadd.f32 %v3636, %v3796
        %v3798 = vpop.f32.mrb[0].mxu0
        %3799 = vmatprep.mubr.bf16.mxu0 0
        %3800 = vmatmul.mubr.bf16.gmra.mrb[0].mxu0 %v2622
        %v3801 = vpop.f32.mrb[0].mxu0
        %v3802 = vadd.f32 %v3641, %v3801
        %v3803 = vpop.f32.mrb[0].mxu0
        %v3804 = vpop.f32.mrb[0].mxu0
        %v3805 = vadd.f32 %v3644, %v3804
        %v3806 = vpop.f32.mrb[0].mxu0
        %3807 = vmatprep.mubr.bf16.mxu0 0
        %3808 = vmatmul.mubr.bf16.gmra.mrb[0].mxu0 %v2625
        %v3809 = vpop.f32.mrb[0].mxu0
        %v3810 = vadd.f32 %v3649, %v3809
        %v3811 = vpop.f32.mrb[0].mxu0
        %v3812 = vpop.f32.mrb[0].mxu0
        %v3813 = vadd.f32 %v3652, %v3812
        %v3814 = vpop.f32.mrb[0].mxu0
        %3815 = vmatprep.mubr.bf16.mxu0 0
        %3816 = vmatmul.mubr.bf16.gmra.mrb[0].mxu0 %v2628
        %v3817 = vpop.f32.mrb[0].mxu0
        %v3818 = vadd.f32 %v3657, %v3817
        %v3819 = vpop.f32.mrb[0].mxu0
        %v3820 = vpop.f32.mrb[0].mxu0
        %v3821 = vadd.f32 %v3660, %v3820
        %v3822 = vpop.f32.mrb[0].mxu0
        %3823 = vmatprep.mubr.bf16.mxu0 0
        %3824 = vmatmul.mubr.bf16.gmra.mrb[0].mxu0 %v2631
        %v3825 = vpop.f32.mrb[0].mxu0
        %v3826 = vadd.f32 %v3665, %v3825
        %v3827 = vpop.f32.mrb[0].mxu0
        %v3828 = vpop.f32.mrb[0].mxu0
        %v3829 = vadd.f32 %v3668, %v3828
        %v3830 = vpop.f32.mrb[0].mxu0
        %3831 = vmatprep.mubr.bf16.mxu0 0
        %3832 = vmatmul.mubr.bf16.gmra.mrb[0].mxu0 %v2634
        %v3833 = vpop.f32.mrb[0].mxu0
        %v3834 = vadd.f32 %v3673, %v3833
        %v3835 = vpop.f32.mrb[0].mxu0
        %v3836 = vpop.f32.mrb[0].mxu0
        %v3837 = vadd.f32 %v3676, %v3836
        %v3838 = vpop.f32.mrb[0].mxu0
        %3839 = vdwg.mxu0
        %v3840 = vmax.f32 %v3360, 0.0
        %v3841 = vmax.f32 %v3362, 0.0
        %v3842 = vmax.f32 %v3714, 0.0
        %v3843 = vmax.f32 %v3364, 0.0
        %v3844 = vmax.f32 %v3366, 0.0
        %v3845 = vmax.f32 %v3717, 0.0
        %v3846 = vmax.f32 %v3370, 0.0
        %v3847 = vmax.f32 %v3372, 0.0
        %v3848 = vmax.f32 %v3722, 0.0
        %v3849 = vmax.f32 %v3374, 0.0
        %v3850 = vmax.f32 %v3376, 0.0
        %v3851 = vmax.f32 %v3725, 0.0
        %v3852 = vmax.f32 %v3380, 0.0
        %v3853 = vmax.f32 %v3382, 0.0
        %v3854 = vmax.f32 %v3730, 0.0
        %v3855 = vmax.f32 %v3384, 0.0
        %v3856 = vmax.f32 %v3386, 0.0
        %v3857 = vmax.f32 %v3733, 0.0
        %v3858 = vmax.f32 %v3390, 0.0
        %v3859 = vmax.f32 %v3392, 0.0
        %v3860 = vmax.f32 %v3738, 0.0
        %v3861 = vmax.f32 %v3394, 0.0
        %v3862 = vmax.f32 %v3396, 0.0
        %v3863 = vmax.f32 %v3741, 0.0
        %v3864 = vmax.f32 %v3400, 0.0
        %v3865 = vmax.f32 %v3402, 0.0
        %v3866 = vmax.f32 %v3746, 0.0
        %v3867 = vmax.f32 %v3404, 0.0
        %v3868 = vmax.f32 %v3406, 0.0
        %v3869 = vmax.f32 %v3749, 0.0
        %v3870 = vmax.f32 %v3410, 0.0
        %v3871 = vmax.f32 %v3412, 0.0
        %v3872 = vmax.f32 %v3754, 0.0
        %v3873 = vmax.f32 %v3414, 0.0
        %v3874 = vmax.f32 %v3416, 0.0
        %v3875 = vmax.f32 %v3757, 0.0
        %v3876 = vmax.f32 %v3420, 0.0
        %v3877 = vmax.f32 %v3422, 0.0
        %v3878 = vmax.f32 %v3762, 0.0
        %v3879 = vmax.f32 %v3424, 0.0
        %v3880 = vmax.f32 %v3426, 0.0
        %v3881 = vmax.f32 %v3765, 0.0
        %v3882 = vmax.f32 %v3430, 0.0
        %v3883 = vmax.f32 %v3432, 0.0
        %v3884 = vmax.f32 %v3770, 0.0
        %v3885 = vmax.f32 %v3434, 0.0
        %v3886 = vmax.f32 %v3436, 0.0
        %v3887 = vmax.f32 %v3773, 0.0
        %v3888 = vmax.f32 %v3440, 0.0
        %v3889 = vmax.f32 %v3442, 0.0
        %v3890 = vmax.f32 %v3778, 0.0
        %v3891 = vmax.f32 %v3444, 0.0
        %v3892 = vmax.f32 %v3446, 0.0
        %v3893 = vmax.f32 %v3781, 0.0
        %v3894 = vmax.f32 %v3450, 0.0
        %v3895 = vmax.f32 %v3452, 0.0
        %v3896 = vmax.f32 %v3786, 0.0
        %v3897 = vmax.f32 %v3454, 0.0
        %v3898 = vmax.f32 %v3456, 0.0
        %v3899 = vmax.f32 %v3789, 0.0
        %v3900 = vmax.f32 %v3460, 0.0
        %v3901 = vmax.f32 %v3462, 0.0
        %v3902 = vmax.f32 %v3794, 0.0
        %v3903 = vmax.f32 %v3464, 0.0
        %v3904 = vmax.f32 %v3466, 0.0
        %v3905 = vmax.f32 %v3797, 0.0
        %v3906 = vmax.f32 %v3470, 0.0
        %v3907 = vmax.f32 %v3472, 0.0
        %v3908 = vmax.f32 %v3802, 0.0
        %v3909 = vmax.f32 %v3474, 0.0
        %v3910 = vmax.f32 %v3476, 0.0
        %v3911 = vmax.f32 %v3805, 0.0
        %v3912 = vmax.f32 %v3480, 0.0
        %v3913 = vmax.f32 %v3482, 0.0
        %v3914 = vmax.f32 %v3810, 0.0
        %v3915 = vmax.f32 %v3484, 0.0
        %v3916 = vmax.f32 %v3486, 0.0
        %v3917 = vmax.f32 %v3813, 0.0
        %v3918 = vmax.f32 %v3490, 0.0
        %v3919 = vmax.f32 %v3492, 0.0
        %v3920 = vmax.f32 %v3818, 0.0
        %v3921 = vmax.f32 %v3494, 0.0
        %v3922 = vmax.f32 %v3496, 0.0
        %v3923 = vmax.f32 %v3821, 0.0
        %v3924 = vmax.f32 %v3500, 0.0
        %v3925 = vmax.f32 %v3502, 0.0
        %v3926 = vmax.f32 %v3826, 0.0
        %v3927 = vmax.f32 %v3504, 0.0
        %v3928 = vmax.f32 %v3506, 0.0
        %v3929 = vmax.f32 %v3829, 0.0
        %v3930 = vmax.f32 %v3510, 0.0
        %v3931 = vmax.f32 %v3512, 0.0
        %v3932 = vmax.f32 %v3834, 0.0
        %v3933 = vmax.f32 %v3514, 0.0
        %v3934 = vmax.f32 %v3516, 0.0
        %v3935 = vmax.f32 %v3837, 0.0
        %v3936 = vpack.c.bf16 %v3843, %v3840
        %v3937 = vpack.c.bf16 %v3844, %v3841
        %v3938 = vpack.c.bf16 %v3845, %v3842
        %v3939 = vpack.c.bf16 %v3849, %v3846
        %v3940 = vpack.c.bf16 %v3850, %v3847
        %v3941 = vpack.c.bf16 %v3851, %v3848
        %v3942 = vpack.c.bf16 %v3855, %v3852
        %v3943 = vpack.c.bf16 %v3856, %v3853
        %v3944 = vpack.c.bf16 %v3857, %v3854
        %v3945 = vpack.c.bf16 %v3861, %v3858
        %v3946 = vpack.c.bf16 %v3862, %v3859
        %v3947 = vpack.c.bf16 %v3863, %v3860
        %v3948 = vpack.c.bf16 %v3867, %v3864
        %v3949 = vpack.c.bf16 %v3868, %v3865
        %v3950 = vpack.c.bf16 %v3869, %v3866
        %v3951 = vpack.c.bf16 %v3873, %v3870
        %v3952 = vpack.c.bf16 %v3874, %v3871
        %v3953 = vpack.c.bf16 %v3875, %v3872
        %v3954 = vpack.c.bf16 %v3879, %v3876
        %v3955 = vpack.c.bf16 %v3880, %v3877
        %v3956 = vpack.c.bf16 %v3881, %v3878
        %v3957 = vpack.c.bf16 %v3885, %v3882
        %v3958 = vpack.c.bf16 %v3886, %v3883
        %v3959 = vpack.c.bf16 %v3887, %v3884
        %v3960 = vpack.c.bf16 %v3891, %v3888
        %v3961 = vpack.c.bf16 %v3892, %v3889
        %v3962 = vpack.c.bf16 %v3893, %v3890
        %v3963 = vpack.c.bf16 %v3897, %v3894
        %v3964 = vpack.c.bf16 %v3898, %v3895
        %v3965 = vpack.c.bf16 %v3899, %v3896
        %v3966 = vpack.c.bf16 %v3903, %v3900
        %v3967 = vpack.c.bf16 %v3904, %v3901
        %v3968 = vpack.c.bf16 %v3905, %v3902
        %v3969 = vpack.c.bf16 %v3909, %v3906
        %v3970 = vpack.c.bf16 %v3910, %v3907
        %v3971 = vpack.c.bf16 %v3911, %v3908
        %v3972 = vpack.c.bf16 %v3915, %v3912
        %v3973 = vpack.c.bf16 %v3916, %v3913
        %v3974 = vpack.c.bf16 %v3917, %v3914
        %v3975 = vpack.c.bf16 %v3921, %v3918
        %v3976 = vpack.c.bf16 %v3922, %v3919
        %v3977 = vpack.c.bf16 %v3923, %v3920
        %v3978 = vpack.c.bf16 %v3927, %v3924
        %v3979 = vpack.c.bf16 %v3928, %v3925
        %v3980 = vpack.c.bf16 %v3929, %v3926
        %v3981 = vpack.c.bf16 %v3933, %v3930
        %v3982 = vpack.c.bf16 %v3934, %v3931
        %v3983 = vpack.c.bf16 %v3935, %v3932
        %v3984 = vld [vmem:[#allocation7] sm:$0xff]
        %v3985 = vld [vmem:[#allocation7 + $0x8] sm:$0xf]
        %v3986 = vld [vmem:[#allocation7 + $0xc] sm:$0xff]
        %v3987 = vld [vmem:[#allocation7 + $0x14] sm:$0xf]
        %v3988 = vld [vmem:[#allocation7 + $0x18] sm:$0xff]
        %v3989 = vld [vmem:[#allocation7 + $0x20] sm:$0xf]
        %v3990 = vld [vmem:[#allocation7 + $0x24] sm:$0xff]
        %v3991 = vld [vmem:[#allocation7 + $0x2c] sm:$0xf]
        %v3992 = vld [vmem:[#allocation7 + $0x30] sm:$0xff]
        %v3993 = vld [vmem:[#allocation7 + $0x38] sm:$0xf]
        %v3994 = vld [vmem:[#allocation7 + $0x3c] sm:$0xff]
        %v3995 = vld [vmem:[#allocation7 + $0x44] sm:$0xf]
        %v3996 = vld [vmem:[#allocation7 + $0x48] sm:$0xff]
        %v3997 = vld [vmem:[#allocation7 + $0x50] sm:$0xf]
        %v3998 = vld [vmem:[#allocation7 + $0x54] sm:$0xff]
        %v3999 = vld [vmem:[#allocation7 + $0x5c] sm:$0xf]
        %v4000 = vld [vmem:[#allocation7 + $0x60] sm:$0xff]
        %v4001 = vld [vmem:[#allocation7 + $0x68] sm:$0xf]
        %v4002 = vld [vmem:[#allocation7 + $0x6c] sm:$0xff]
        %v4003 = vld [vmem:[#allocation7 + $0x74] sm:$0xf]
        %v4004 = vld [vmem:[#allocation7 + $0x78] sm:$0xff]
        %v4005 = vld [vmem:[#allocation7 + $0x80] sm:$0xf]
        %v4006 = vld [vmem:[#allocation7 + $0x84] sm:$0xff]
        %v4007 = vld [vmem:[#allocation7 + $0x8c] sm:$0xf]
        %v4008 = vld [vmem:[#allocation7 + $0x90] sm:$0xff]
        %v4009 = vld [vmem:[#allocation7 + $0x98] sm:$0xf]
        %v4010 = vld [vmem:[#allocation7 + $0x9c] sm:$0xff]
        %v4011 = vld [vmem:[#allocation7 + $0xa4] sm:$0xf]
        %v4012 = vld [vmem:[#allocation7 + $0xa8] sm:$0xff]
        %v4013 = vld [vmem:[#allocation7 + $0xb0] sm:$0xf]
        %v4014 = vld [vmem:[#allocation7 + $0xb4] sm:$0xff]
        %v4015 = vld [vmem:[#allocation7 + $0xbc] sm:$0xf]
        %v4016 = vld [vmem:[#allocation7 + $0xc0] sm:$0xff]
        %v4017 = vld [vmem:[#allocation7 + $0xc8] sm:$0xf]
        %v4018 = vld [vmem:[#allocation7 + $0xcc] sm:$0xff]
        %v4019 = vld [vmem:[#allocation7 + $0xd4] sm:$0xf]
        %v4020 = vld [vmem:[#allocation7 + $0xd8] sm:$0xff]
        %v4021 = vld [vmem:[#allocation7 + $0xe0] sm:$0xf]
        %v4022 = vld [vmem:[#allocation7 + $0xe4] sm:$0xff]
        %v4023 = vld [vmem:[#allocation7 + $0xec] sm:$0xf]
        %v4024 = vld [vmem:[#allocation7 + $0xf0] sm:$0xff]
        %v4025 = vld [vmem:[#allocation7 + $0xf8] sm:$0xf]
        %v4026 = vld [vmem:[#allocation7 + $0xfc] sm:$0xff]
        %v4027 = vld [vmem:[#allocation7 + $0x104] sm:$0xf]
        %v4028 = vld [vmem:[#allocation7 + $0x108] sm:$0xff]
        %v4029 = vld [vmem:[#allocation7 + $0x110] sm:$0xf]
        %v4030 = vld [vmem:[#allocation7 + $0x114] sm:$0xff]
        %v4031 = vld [vmem:[#allocation7 + $0x11c] sm:$0xf]
        %v4032 = vld [vmem:[#allocation7 + $0x120] sm:$0xff]
        %v4033 = vld [vmem:[#allocation7 + $0x128] sm:$0xf]
        %v4034 = vld [vmem:[#allocation7 + $0x12c] sm:$0xff]
        %v4035 = vld [vmem:[#allocation7 + $0x134] sm:$0xf]
        %v4036 = vld [vmem:[#allocation7 + $0x138] sm:$0xff]
        %v4037 = vld [vmem:[#allocation7 + $0x140] sm:$0xf]
        %v4038 = vld [vmem:[#allocation7 + $0x144] sm:$0xff]
        %v4039 = vld [vmem:[#allocation7 + $0x14c] sm:$0xf]
        %v4040 = vld [vmem:[#allocation7 + $0x150] sm:$0xff]
        %v4041 = vld [vmem:[#allocation7 + $0x158] sm:$0xf]
        %v4042 = vld [vmem:[#allocation7 + $0x15c] sm:$0xff]
        %v4043 = vld [vmem:[#allocation7 + $0x164] sm:$0xf]
        %v4044 = vld [vmem:[#allocation7 + $0x168] sm:$0xff]
        %v4045 = vld [vmem:[#allocation7 + $0x170] sm:$0xf]
        %v4046 = vld [vmem:[#allocation7 + $0x174] sm:$0xff]
        %v4047 = vld [vmem:[#allocation7 + $0x17c] sm:$0xf]
        %v4048 = vld [vmem:[#allocation7 + $0x180] sm:$0xff]
        %v4049 = vld [vmem:[#allocation7 + $0x188] sm:$0xf]
        %v4050 = vld [vmem:[#allocation7 + $0x18c] sm:$0xff]
        %v4051 = vld [vmem:[#allocation7 + $0x194] sm:$0xf]
        %v4052 = vld [vmem:[#allocation7 + $0x198] sm:$0xff]
        %v4053 = vld [vmem:[#allocation7 + $0x1a0] sm:$0xf]
        %v4054 = vld [vmem:[#allocation7 + $0x1a4] sm:$0xff]
        %v4055 = vld [vmem:[#allocation7 + $0x1ac] sm:$0xf]
        %v4056 = vld [vmem:[#allocation7 + $0x1b0] sm:$0xff]
        %v4057 = vld [vmem:[#allocation7 + $0x1b8] sm:$0xf]
        %v4058 = vld [vmem:[#allocation7 + $0x1bc] sm:$0xff]
        %v4059 = vld [vmem:[#allocation7 + $0x1c4] sm:$0xf]
        %v4060 = vld [vmem:[#allocation7 + $0x1c8] sm:$0xff]
        %v4061 = vld [vmem:[#allocation7 + $0x1d0] sm:$0xf]
        %v4062 = vld [vmem:[#allocation7 + $0x1d4] sm:$0xff]
        %v4063 = vld [vmem:[#allocation7 + $0x1dc] sm:$0xf]
        %v4064 = vld [vmem:[#allocation7 + $0x1e0] sm:$0xff]
        %v4065 = vld [vmem:[#allocation7 + $0x1e8] sm:$0xf]
        %v4066 = vld [vmem:[#allocation7 + $0x1ec] sm:$0xff]
        %v4067 = vld [vmem:[#allocation7 + $0x1f4] sm:$0xf]
        %v4068 = vld [vmem:[#allocation7 + $0x1f8] sm:$0xff]
        %v4069 = vld [vmem:[#allocation7 + $0x200] sm:$0xf]
        %v4070 = vld [vmem:[#allocation7 + $0x204] sm:$0xff]
        %v4071 = vld [vmem:[#allocation7 + $0x20c] sm:$0xf]
        %v4072 = vld [vmem:[#allocation7 + $0x210] sm:$0xff]
        %v4073 = vld [vmem:[#allocation7 + $0x218] sm:$0xf]
        %v4074 = vld [vmem:[#allocation7 + $0x21c] sm:$0xff]
        %v4075 = vld [vmem:[#allocation7 + $0x224] sm:$0xf]
        %v4076 = vld [vmem:[#allocation7 + $0x228] sm:$0xff]
        %v4077 = vld [vmem:[#allocation7 + $0x230] sm:$0xf]
        %v4078 = vld [vmem:[#allocation7 + $0x234] sm:$0xff]
        %v4079 = vld [vmem:[#allocation7 + $0x23c] sm:$0xf]
        %v4080 = vld [vmem:[%s8] sm:$0x7]
        %v4082 = vlaneseq
        %v4083 = vshrl.u32 %v4082, 7
        %v4084 = vsub.s32 0, %v4083
        %v4085 = vrot.slane %v4080, %v4084
        %v4086 = vlaneseq
        %v4087 = vshrl.u32 %v4086, 7
        %v4088 = vsub.s32 1, %v4087
        %v4089 = vrot.slane %v4080, %v4088
        %v4090 = vlaneseq
        %v4091 = vshrl.u32 %v4090, 7
        %v4092 = vsub.s32 2, %v4091
        %v4093 = vrot.slane %v4080, %v4092
        %v4193 = vunpack.c.l.b16 %v3984
        %v4194 = vunpack.c.h.b16 %v3984
        %v4195 = vunpack.c.l.b16 %v3985
        %v4196 = vunpack.c.l.b16 %v3986
        %v4197 = vunpack.c.h.b16 %v3986
        %v4198 = vunpack.c.l.b16 %v3987
        %v4199 = vunpack.c.l.b16 %v3988
        %v4200 = vunpack.c.h.b16 %v3988
        %v4201 = vunpack.c.l.b16 %v3989
        %v4202 = vunpack.c.l.b16 %v3990
        %v4203 = vunpack.c.h.b16 %v3990
        %v4204 = vunpack.c.l.b16 %v3991
        %v4205 = vunpack.c.l.b16 %v3992
        %v4206 = vunpack.c.h.b16 %v3992
        %v4207 = vunpack.c.l.b16 %v3993
        %v4208 = vunpack.c.l.b16 %v3994
        %v4209 = vunpack.c.h.b16 %v3994
        %v4210 = vunpack.c.l.b16 %v3995
        %v4211 = vunpack.c.l.b16 %v3996
        %v4212 = vunpack.c.h.b16 %v3996
        %v4213 = vunpack.c.l.b16 %v3997
        %v4214 = vunpack.c.l.b16 %v3998
        %v4215 = vunpack.c.h.b16 %v3998
        %v4216 = vunpack.c.l.b16 %v3999
        %v4217 = vunpack.c.l.b16 %v4000
        %v4218 = vunpack.c.h.b16 %v4000
        %v4219 = vunpack.c.l.b16 %v4001
        %v4220 = vunpack.c.l.b16 %v4002
        %v4221 = vunpack.c.h.b16 %v4002
        %v4222 = vunpack.c.l.b16 %v4003
        %v4223 = vunpack.c.l.b16 %v4004
        %v4224 = vunpack.c.h.b16 %v4004
        %v4225 = vunpack.c.l.b16 %v4005
        %v4226 = vunpack.c.l.b16 %v4006
        %v4227 = vunpack.c.h.b16 %v4006
        %v4228 = vunpack.c.l.b16 %v4007
        %v4229 = vunpack.c.l.b16 %v4008
        %v4230 = vunpack.c.h.b16 %v4008
        %v4231 = vunpack.c.l.b16 %v4009
        %v4232 = vunpack.c.l.b16 %v4010
        %v4233 = vunpack.c.h.b16 %v4010
        %v4234 = vunpack.c.l.b16 %v4011
        %v4235 = vunpack.c.l.b16 %v4012
        %v4236 = vunpack.c.h.b16 %v4012
        %v4237 = vunpack.c.l.b16 %v4013
        %v4238 = vunpack.c.l.b16 %v4014
        %v4239 = vunpack.c.h.b16 %v4014
        %v4240 = vunpack.c.l.b16 %v4015
        %v4241 = vunpack.c.l.b16 %v4016
        %v4242 = vunpack.c.h.b16 %v4016
        %v4243 = vunpack.c.l.b16 %v4017
        %v4244 = vunpack.c.l.b16 %v4018
        %v4245 = vunpack.c.h.b16 %v4018
        %v4246 = vunpack.c.l.b16 %v4019
        %v4247 = vunpack.c.l.b16 %v4020
        %v4248 = vunpack.c.h.b16 %v4020
        %v4249 = vunpack.c.l.b16 %v4021
        %v4250 = vunpack.c.l.b16 %v4022
        %v4251 = vunpack.c.h.b16 %v4022
        %v4252 = vunpack.c.l.b16 %v4023
        %v4253 = vunpack.c.l.b16 %v4024
        %v4254 = vunpack.c.h.b16 %v4024
        %v4255 = vunpack.c.l.b16 %v4025
        %v4256 = vunpack.c.l.b16 %v4026
        %v4257 = vunpack.c.h.b16 %v4026
        %v4258 = vunpack.c.l.b16 %v4027
        %v4259 = vunpack.c.l.b16 %v4028
        %v4260 = vunpack.c.h.b16 %v4028
        %v4261 = vunpack.c.l.b16 %v4029
        %v4262 = vunpack.c.l.b16 %v4030
        %v4263 = vunpack.c.h.b16 %v4030
        %v4264 = vunpack.c.l.b16 %v4031
        %v4265 = vunpack.c.l.b16 %v4032
        %v4266 = vunpack.c.h.b16 %v4032
        %v4267 = vunpack.c.l.b16 %v4033
        %v4268 = vunpack.c.l.b16 %v4034
        %v4269 = vunpack.c.h.b16 %v4034
        %v4270 = vunpack.c.l.b16 %v4035
        %v4271 = vunpack.c.l.b16 %v4036
        %v4272 = vunpack.c.h.b16 %v4036
        %v4273 = vunpack.c.l.b16 %v4037
        %v4274 = vunpack.c.l.b16 %v4038
        %v4275 = vunpack.c.h.b16 %v4038
        %v4276 = vunpack.c.l.b16 %v4039
        %v4277 = vunpack.c.l.b16 %v4040
        %v4278 = vunpack.c.h.b16 %v4040
        %v4279 = vunpack.c.l.b16 %v4041
        %v4280 = vunpack.c.l.b16 %v4042
        %v4281 = vunpack.c.h.b16 %v4042
        %v4282 = vunpack.c.l.b16 %v4043
        %v4283 = vunpack.c.l.b16 %v4044
        %v4284 = vunpack.c.h.b16 %v4044
        %v4285 = vunpack.c.l.b16 %v4045
        %v4286 = vunpack.c.l.b16 %v4046
        %v4287 = vunpack.c.h.b16 %v4046
        %v4288 = vunpack.c.l.b16 %v4047
        %v4289 = vunpack.c.l.b16 %v4048
        %v4290 = vunpack.c.h.b16 %v4048
        %v4291 = vunpack.c.l.b16 %v4049
        %v4292 = vunpack.c.l.b16 %v4050
        %v4293 = vunpack.c.h.b16 %v4050
        %v4294 = vunpack.c.l.b16 %v4051
        %v4295 = vunpack.c.l.b16 %v4052
        %v4296 = vunpack.c.h.b16 %v4052
        %v4297 = vunpack.c.l.b16 %v4053
        %v4298 = vunpack.c.l.b16 %v4054
        %v4299 = vunpack.c.h.b16 %v4054
        %v4300 = vunpack.c.l.b16 %v4055
        %v4301 = vunpack.c.l.b16 %v4056
        %v4302 = vunpack.c.h.b16 %v4056
        %v4303 = vunpack.c.l.b16 %v4057
        %v4304 = vunpack.c.l.b16 %v4058
        %v4305 = vunpack.c.h.b16 %v4058
        %v4306 = vunpack.c.l.b16 %v4059
        %v4307 = vunpack.c.l.b16 %v4060
        %v4308 = vunpack.c.h.b16 %v4060
        %v4309 = vunpack.c.l.b16 %v4061
        %v4310 = vunpack.c.l.b16 %v4062
        %v4311 = vunpack.c.h.b16 %v4062
        %v4312 = vunpack.c.l.b16 %v4063
        %v4313 = vunpack.c.l.b16 %v4064
        %v4314 = vunpack.c.h.b16 %v4064
        %v4315 = vunpack.c.l.b16 %v4065
        %v4316 = vunpack.c.l.b16 %v4066
        %v4317 = vunpack.c.h.b16 %v4066
        %v4318 = vunpack.c.l.b16 %v4067
        %v4319 = vunpack.c.l.b16 %v4068
        %v4320 = vunpack.c.h.b16 %v4068
        %v4321 = vunpack.c.l.b16 %v4069
        %v4322 = vunpack.c.l.b16 %v4070
        %v4323 = vunpack.c.h.b16 %v4070
        %v4324 = vunpack.c.l.b16 %v4071
        %v4325 = vunpack.c.l.b16 %v4072
        %v4326 = vunpack.c.h.b16 %v4072
        %v4327 = vunpack.c.l.b16 %v4073
        %v4328 = vunpack.c.l.b16 %v4074
        %v4329 = vunpack.c.h.b16 %v4074
        %v4330 = vunpack.c.l.b16 %v4075
        %v4331 = vunpack.c.l.b16 %v4076
        %v4332 = vunpack.c.h.b16 %v4076
        %v4333 = vunpack.c.l.b16 %v4077
        %v4334 = vunpack.c.l.b16 %v4078
        %v4335 = vunpack.c.h.b16 %v4078
        %v4336 = vunpack.c.l.b16 %v4079
        %v4337 = vpack.c.b16 %v4196, %v4193
        %v4338 = vpack.c.b16 %v4197, %v4194
        %v4339 = vpack.c.b16 %v4198, %v4195
        %v4340 = vpack.c.b16 %v4202, %v4199
        %v4341 = vpack.c.b16 %v4203, %v4200
        %v4342 = vpack.c.b16 %v4204, %v4201
        %v4343 = vpack.c.b16 %v4208, %v4205
        %v4344 = vpack.c.b16 %v4209, %v4206
        %v4345 = vpack.c.b16 %v4210, %v4207
        %v4346 = vpack.c.b16 %v4214, %v4211
        %v4347 = vpack.c.b16 %v4215, %v4212
        %v4348 = vpack.c.b16 %v4216, %v4213
        %v4349 = vpack.c.b16 %v4220, %v4217
        %v4350 = vpack.c.b16 %v4221, %v4218
        %v4351 = vpack.c.b16 %v4222, %v4219
        %v4352 = vpack.c.b16 %v4226, %v4223
        %v4353 = vpack.c.b16 %v4227, %v4224
        %v4354 = vpack.c.b16 %v4228, %v4225
        %v4355 = vpack.c.b16 %v4232, %v4229
        %v4356 = vpack.c.b16 %v4233, %v4230
        %v4357 = vpack.c.b16 %v4234, %v4231
        %v4358 = vpack.c.b16 %v4238, %v4235
        %v4359 = vpack.c.b16 %v4239, %v4236
        %v4360 = vpack.c.b16 %v4240, %v4237
        %v4361 = vpack.c.b16 %v4244, %v4241
        %v4362 = vpack.c.b16 %v4245, %v4242
        %v4363 = vpack.c.b16 %v4246, %v4243
        %v4364 = vpack.c.b16 %v4250, %v4247
        %v4365 = vpack.c.b16 %v4251, %v4248
        %v4366 = vpack.c.b16 %v4252, %v4249
        %v4367 = vpack.c.b16 %v4256, %v4253
        %v4368 = vpack.c.b16 %v4257, %v4254
        %v4369 = vpack.c.b16 %v4258, %v4255
        %v4370 = vpack.c.b16 %v4262, %v4259
        %v4371 = vpack.c.b16 %v4263, %v4260
        %v4372 = vpack.c.b16 %v4264, %v4261
        %v4373 = vpack.c.b16 %v4268, %v4265
        %v4374 = vpack.c.b16 %v4269, %v4266
        %v4375 = vpack.c.b16 %v4270, %v4267
        %v4376 = vpack.c.b16 %v4274, %v4271
        %v4377 = vpack.c.b16 %v4275, %v4272
        %v4378 = vpack.c.b16 %v4276, %v4273
        %v4379 = vpack.c.b16 %v4280, %v4277
        %v4380 = vpack.c.b16 %v4281, %v4278
        %v4381 = vpack.c.b16 %v4282, %v4279
        %v4382 = vpack.c.b16 %v4286, %v4283
        %v4383 = vpack.c.b16 %v4287, %v4284
        %v4384 = vpack.c.b16 %v4288, %v4285
        %v4385 = vpack.c.b16 %v4292, %v4289
        %v4386 = vpack.c.b16 %v4293, %v4290
        %v4387 = vpack.c.b16 %v4294, %v4291
        %v4388 = vpack.c.b16 %v4298, %v4295
        %v4389 = vpack.c.b16 %v4299, %v4296
        %v4390 = vpack.c.b16 %v4300, %v4297
        %v4391 = vpack.c.b16 %v4304, %v4301
        %v4392 = vpack.c.b16 %v4305, %v4302
        %v4393 = vpack.c.b16 %v4306, %v4303
        %v4394 = vpack.c.b16 %v4310, %v4307
        %v4395 = vpack.c.b16 %v4311, %v4308
        %v4396 = vpack.c.b16 %v4312, %v4309
        %v4397 = vpack.c.b16 %v4316, %v4313
        %v4398 = vpack.c.b16 %v4317, %v4314
        %v4399 = vpack.c.b16 %v4318, %v4315
        %v4400 = vpack.c.b16 %v4322, %v4319
        %v4401 = vpack.c.b16 %v4323, %v4320
        %v4402 = vpack.c.b16 %v4324, %v4321
        %v4403 = vpack.c.b16 %v4328, %v4325
        %v4404 = vpack.c.b16 %v4329, %v4326
        %v4405 = vpack.c.b16 %v4330, %v4327
        %v4406 = vpack.c.b16 %v4334, %v4331
        %v4407 = vpack.c.b16 %v4335, %v4332
        %v4408 = vpack.c.b16 %v4336, %v4333
        %4481 = vmatprep.subr.bf16.mxu0 %v4338
        %4482 = vmatpush1.bf16.msra.mxu0 %v4337
        %4483 = vmatprep.subr.bf16.mxu0 %v4341
        %4484 = vmatpush1.bf16.msra.mxu0 %v4340
        %4485 = vmatprep.subr.bf16.mxu0 %v4344
        %4486 = vmatpush1.bf16.msra.mxu0 %v4343
        %4487 = vmatprep.subr.bf16.mxu0 %v4347
        %4488 = vmatpush1.bf16.msra.mxu0 %v4346
        %4489 = vmatprep.subr.bf16.mxu0 %v4350
        %4490 = vmatpush1.bf16.msra.mxu0 %v4349
        %4491 = vmatprep.subr.bf16.mxu0 %v4353
        %4492 = vmatpush1.bf16.msra.mxu0 %v4352
        %4493 = vmatprep.subr.bf16.mxu0 %v4356
        %4494 = vmatpush1.bf16.msra.mxu0 %v4355
        %4495 = vmatprep.subr.bf16.mxu0 %v4359
        %4496 = vmatpush1.bf16.msra.mxu0 %v4358
        %4497 = vmatprep.subr.bf16.mxu0 %v4362
        %4498 = vmatpush1.bf16.msra.mxu0 %v4361
        %4499 = vmatprep.subr.bf16.mxu0 %v4365
        %4500 = vmatpush1.bf16.msra.mxu0 %v4364
        %4501 = vmatprep.subr.bf16.mxu0 %v4368
        %4502 = vmatpush1.bf16.msra.mxu0 %v4367
        %4503 = vmatprep.subr.bf16.mxu0 %v4371
        %4504 = vmatpush1.bf16.msra.mxu0 %v4370
        %4505 = vmatprep.subr.bf16.mxu0 %v4374
        %4506 = vmatpush1.bf16.msra.mxu0 %v4373
        %4507 = vmatprep.subr.bf16.mxu0 %v4377
        %4508 = vmatpush1.bf16.msra.mxu0 %v4376
        %4509 = vmatprep.subr.bf16.mxu0 %v4380
        %4510 = vmatpush1.bf16.msra.mxu0 %v4379
        %4511 = vmatprep.subr.bf16.mxu0 %v4383
        %4512 = vmatpush1.bf16.msra.mxu0 %v4382
        %4513 = vmatprep.mubr.bf16.mxu0 %v3937
        %4514 = vmatmul.mubr.bf16.gmra.mrb[0].mxu0 %v3936
        %v4515 = vpop.f32.mrb[0].mxu0
        %v4516 = vadd.f32 %v4085, %v4515
        %v4517 = vpop.f32.mrb[0].mxu0
        %v4518 = vadd.f32 %v4089, %v4517
        %v4519 = vpop.f32.mrb[0].mxu0
        %v4520 = vadd.f32 %v4085, %v4519
        %v4521 = vpop.f32.mrb[0].mxu0
        %v4522 = vadd.f32 %v4089, %v4521
        %4523 = vmatprep.mubr.bf16.mxu0 %v3940
        %4524 = vmatmul.mubr.bf16.gmra.mrb[0].mxu0 %v3939
        %v4525 = vpop.f32.mrb[0].mxu0
        %v4526 = vadd.f32 %v4085, %v4525
        %v4527 = vpop.f32.mrb[0].mxu0
        %v4528 = vadd.f32 %v4089, %v4527
        %v4529 = vpop.f32.mrb[0].mxu0
        %v4530 = vadd.f32 %v4085, %v4529
        %v4531 = vpop.f32.mrb[0].mxu0
        %v4532 = vadd.f32 %v4089, %v4531
        %4533 = vmatprep.mubr.bf16.mxu0 %v3943
        %4534 = vmatmul.mubr.bf16.gmra.mrb[0].mxu0 %v3942
        %v4535 = vpop.f32.mrb[0].mxu0
        %v4536 = vadd.f32 %v4085, %v4535
        %v4537 = vpop.f32.mrb[0].mxu0
        %v4538 = vadd.f32 %v4089, %v4537
        %v4539 = vpop.f32.mrb[0].mxu0
        %v4540 = vadd.f32 %v4085, %v4539
        %v4541 = vpop.f32.mrb[0].mxu0
        %v4542 = vadd.f32 %v4089, %v4541
        %4543 = vmatprep.mubr.bf16.mxu0 %v3946
        %4544 = vmatmul.mubr.bf16.gmra.mrb[0].mxu0 %v3945
        %v4545 = vpop.f32.mrb[0].mxu0
        %v4546 = vadd.f32 %v4085, %v4545
        %v4547 = vpop.f32.mrb[0].mxu0
        %v4548 = vadd.f32 %v4089, %v4547
        %v4549 = vpop.f32.mrb[0].mxu0
        %v4550 = vadd.f32 %v4085, %v4549
        %v4551 = vpop.f32.mrb[0].mxu0
        %v4552 = vadd.f32 %v4089, %v4551
        %4553 = vmatprep.mubr.bf16.mxu0 %v3949
        %4554 = vmatmul.mubr.bf16.gmra.mrb[0].mxu0 %v3948
        %v4555 = vpop.f32.mrb[0].mxu0
        %v4556 = vadd.f32 %v4085, %v4555
        %v4557 = vpop.f32.mrb[0].mxu0
        %v4558 = vadd.f32 %v4089, %v4557
        %v4559 = vpop.f32.mrb[0].mxu0
        %v4560 = vadd.f32 %v4085, %v4559
        %v4561 = vpop.f32.mrb[0].mxu0
        %v4562 = vadd.f32 %v4089, %v4561
        %4563 = vmatprep.mubr.bf16.mxu0 %v3952
        %4564 = vmatmul.mubr.bf16.gmra.mrb[0].mxu0 %v3951
        %v4565 = vpop.f32.mrb[0].mxu0
        %v4566 = vadd.f32 %v4085, %v4565
        %v4567 = vpop.f32.mrb[0].mxu0
        %v4568 = vadd.f32 %v4089, %v4567
        %v4569 = vpop.f32.mrb[0].mxu0
        %v4570 = vadd.f32 %v4085, %v4569
        %v4571 = vpop.f32.mrb[0].mxu0
        %v4572 = vadd.f32 %v4089, %v4571
        %4573 = vmatprep.mubr.bf16.mxu0 %v3955
        %4574 = vmatmul.mubr.bf16.gmra.mrb[0].mxu0 %v3954
        %v4575 = vpop.f32.mrb[0].mxu0
        %v4576 = vadd.f32 %v4085, %v4575
        %v4577 = vpop.f32.mrb[0].mxu0
        %v4578 = vadd.f32 %v4089, %v4577
        %v4579 = vpop.f32.mrb[0].mxu0
        %v4580 = vadd.f32 %v4085, %v4579
        %v4581 = vpop.f32.mrb[0].mxu0
        %v4582 = vadd.f32 %v4089, %v4581
        %4583 = vmatprep.mubr.bf16.mxu0 %v3958
        %4584 = vmatmul.mubr.bf16.gmra.mrb[0].mxu0 %v3957
        %v4585 = vpop.f32.mrb[0].mxu0
        %v4586 = vadd.f32 %v4085, %v4585
        %v4587 = vpop.f32.mrb[0].mxu0
        %v4588 = vadd.f32 %v4089, %v4587
        %v4589 = vpop.f32.mrb[0].mxu0
        %v4590 = vadd.f32 %v4085, %v4589
        %v4591 = vpop.f32.mrb[0].mxu0
        %v4592 = vadd.f32 %v4089, %v4591
        %4593 = vmatprep.mubr.bf16.mxu0 %v3961
        %4594 = vmatmul.mubr.bf16.gmra.mrb[0].mxu0 %v3960
        %v4595 = vpop.f32.mrb[0].mxu0
        %v4596 = vadd.f32 %v4085, %v4595
        %v4597 = vpop.f32.mrb[0].mxu0
        %v4598 = vadd.f32 %v4089, %v4597
        %v4599 = vpop.f32.mrb[0].mxu0
        %v4600 = vadd.f32 %v4085, %v4599
        %v4601 = vpop.f32.mrb[0].mxu0
        %v4602 = vadd.f32 %v4089, %v4601
        %4603 = vmatprep.mubr.bf16.mxu0 %v3964
        %4604 = vmatmul.mubr.bf16.gmra.mrb[0].mxu0 %v3963
        %v4605 = vpop.f32.mrb[0].mxu0
        %v4606 = vadd.f32 %v4085, %v4605
        %v4607 = vpop.f32.mrb[0].mxu0
        %v4608 = vadd.f32 %v4089, %v4607
        %v4609 = vpop.f32.mrb[0].mxu0
        %v4610 = vadd.f32 %v4085, %v4609
        %v4611 = vpop.f32.mrb[0].mxu0
        %v4612 = vadd.f32 %v4089, %v4611
        %4613 = vmatprep.mubr.bf16.mxu0 %v3967
        %4614 = vmatmul.mubr.bf16.gmra.mrb[0].mxu0 %v3966
        %v4615 = vpop.f32.mrb[0].mxu0
        %v4616 = vadd.f32 %v4085, %v4615
        %v4617 = vpop.f32.mrb[0].mxu0
        %v4618 = vadd.f32 %v4089, %v4617
        %v4619 = vpop.f32.mrb[0].mxu0
        %v4620 = vadd.f32 %v4085, %v4619
        %v4621 = vpop.f32.mrb[0].mxu0
        %v4622 = vadd.f32 %v4089, %v4621
        %4623 = vmatprep.mubr.bf16.mxu0 %v3970
        %4624 = vmatmul.mubr.bf16.gmra.mrb[0].mxu0 %v3969
        %v4625 = vpop.f32.mrb[0].mxu0
        %v4626 = vadd.f32 %v4085, %v4625
        %v4627 = vpop.f32.mrb[0].mxu0
        %v4628 = vadd.f32 %v4089, %v4627
        %v4629 = vpop.f32.mrb[0].mxu0
        %v4630 = vadd.f32 %v4085, %v4629
        %v4631 = vpop.f32.mrb[0].mxu0
        %v4632 = vadd.f32 %v4089, %v4631
        %4633 = vmatprep.mubr.bf16.mxu0 %v3973
        %4634 = vmatmul.mubr.bf16.gmra.mrb[0].mxu0 %v3972
        %v4635 = vpop.f32.mrb[0].mxu0
        %v4636 = vadd.f32 %v4085, %v4635
        %v4637 = vpop.f32.mrb[0].mxu0
        %v4638 = vadd.f32 %v4089, %v4637
        %v4639 = vpop.f32.mrb[0].mxu0
        %v4640 = vadd.f32 %v4085, %v4639
        %v4641 = vpop.f32.mrb[0].mxu0
        %v4642 = vadd.f32 %v4089, %v4641
        %4643 = vmatprep.mubr.bf16.mxu0 %v3976
        %4644 = vmatmul.mubr.bf16.gmra.mrb[0].mxu0 %v3975
        %v4645 = vpop.f32.mrb[0].mxu0
        %v4646 = vadd.f32 %v4085, %v4645
        %v4647 = vpop.f32.mrb[0].mxu0
        %v4648 = vadd.f32 %v4089, %v4647
        %v4649 = vpop.f32.mrb[0].mxu0
        %v4650 = vadd.f32 %v4085, %v4649
        %v4651 = vpop.f32.mrb[0].mxu0
        %v4652 = vadd.f32 %v4089, %v4651
        %4653 = vmatprep.mubr.bf16.mxu0 %v3979
        %4654 = vmatmul.mubr.bf16.gmra.mrb[0].mxu0 %v3978
        %v4655 = vpop.f32.mrb[0].mxu0
        %v4656 = vadd.f32 %v4085, %v4655
        %v4657 = vpop.f32.mrb[0].mxu0
        %v4658 = vadd.f32 %v4089, %v4657
        %v4659 = vpop.f32.mrb[0].mxu0
        %v4660 = vadd.f32 %v4085, %v4659
        %v4661 = vpop.f32.mrb[0].mxu0
        %v4662 = vadd.f32 %v4089, %v4661
        %4663 = vmatprep.mubr.bf16.mxu0 %v3982
        %4664 = vmatmul.mubr.bf16.gmra.mrb[0].mxu0 %v3981
        %v4665 = vpop.f32.mrb[0].mxu0
        %v4666 = vadd.f32 %v4085, %v4665
        %v4667 = vpop.f32.mrb[0].mxu0
        %v4668 = vadd.f32 %v4089, %v4667
        %v4669 = vpop.f32.mrb[0].mxu0
        %v4670 = vadd.f32 %v4085, %v4669
        %v4671 = vpop.f32.mrb[0].mxu0
        %v4672 = vadd.f32 %v4089, %v4671
        %4673 = vdwg.mxu0
        %4674 = vmatprep.subr.bf16.mxu0 %v4386
        %4675 = vmatpush1.bf16.msra.mxu0 %v4385
        %4676 = vmatprep.subr.bf16.mxu0 %v4389
        %4677 = vmatpush1.bf16.msra.mxu0 %v4388
        %4678 = vmatprep.subr.bf16.mxu0 %v4392
        %4679 = vmatpush1.bf16.msra.mxu0 %v4391
        %4680 = vmatprep.subr.bf16.mxu0 %v4395
        %4681 = vmatpush1.bf16.msra.mxu0 %v4394
        %4682 = vmatprep.subr.bf16.mxu0 %v4398
        %4683 = vmatpush1.bf16.msra.mxu0 %v4397
        %4684 = vmatprep.subr.bf16.mxu0 %v4401
        %4685 = vmatpush1.bf16.msra.mxu0 %v4400
        %4686 = vmatprep.subr.bf16.mxu0 %v4404
        %4687 = vmatpush1.bf16.msra.mxu0 %v4403
        %4688 = vmatprep.subr.bf16.mxu0 %v4407
        %4689 = vmatpush1.bf16.msra.mxu0 %v4406
        %4690 = vmatprep.subr.bf16.mxu0 0
        %4691 = vmatpush1.bf16.msra.mxu0 0
        %4692 = vmatprep.subr.bf16.mxu0 0
        %4693 = vmatpush1.bf16.msra.mxu0 0
        %4694 = vmatprep.subr.bf16.mxu0 0
        %4695 = vmatpush1.bf16.msra.mxu0 0
        %4696 = vmatprep.subr.bf16.mxu0 0
        %4697 = vmatpush1.bf16.msra.mxu0 0
        %4698 = vmatprep.subr.bf16.mxu0 0
        %4699 = vmatpush1.bf16.msra.mxu0 0
        %4700 = vmatprep.subr.bf16.mxu0 0
        %4701 = vmatpush1.bf16.msra.mxu0 0
        %4702 = vmatprep.subr.bf16.mxu0 0
        %4703 = vmatpush1.bf16.msra.mxu0 0
        %4704 = vmatprep.subr.bf16.mxu0 0
        %4705 = vmatpush1.bf16.msra.mxu0 0
        %4706 = vmatprep.mubr.bf16.mxu0 0
        %4707 = vmatmul.mubr.bf16.gmra.mrb[0].mxu0 %v3938
        %v4708 = vpop.f32.mrb[0].mxu0
        %v4709 = vadd.f32 %v4516, %v4708
        %v4710 = vpop.f32.mrb[0].mxu0
        %v4711 = vadd.f32 %v4518, %v4710
        %v4712 = vpop.f32.mrb[0].mxu0
        %v4713 = vadd.f32 %v4520, %v4712
        %v4714 = vpop.f32.mrb[0].mxu0
        %v4715 = vadd.f32 %v4522, %v4714
        %4716 = vmatprep.mubr.bf16.mxu0 0
        %4717 = vmatmul.mubr.bf16.gmra.mrb[0].mxu0 %v3941
        %v4718 = vpop.f32.mrb[0].mxu0
        %v4719 = vadd.f32 %v4526, %v4718
        %v4720 = vpop.f32.mrb[0].mxu0
        %v4721 = vadd.f32 %v4528, %v4720
        %v4722 = vpop.f32.mrb[0].mxu0
        %v4723 = vadd.f32 %v4530, %v4722
        %v4724 = vpop.f32.mrb[0].mxu0
        %v4725 = vadd.f32 %v4532, %v4724
        %4726 = vmatprep.mubr.bf16.mxu0 0
        %4727 = vmatmul.mubr.bf16.gmra.mrb[0].mxu0 %v3944
        %v4728 = vpop.f32.mrb[0].mxu0
        %v4729 = vadd.f32 %v4536, %v4728
        %v4730 = vpop.f32.mrb[0].mxu0
        %v4731 = vadd.f32 %v4538, %v4730
        %v4732 = vpop.f32.mrb[0].mxu0
        %v4733 = vadd.f32 %v4540, %v4732
        %v4734 = vpop.f32.mrb[0].mxu0
        %v4735 = vadd.f32 %v4542, %v4734
        %4736 = vmatprep.mubr.bf16.mxu0 0
        %4737 = vmatmul.mubr.bf16.gmra.mrb[0].mxu0 %v3947
        %v4738 = vpop.f32.mrb[0].mxu0
        %v4739 = vadd.f32 %v4546, %v4738
        %v4740 = vpop.f32.mrb[0].mxu0
        %v4741 = vadd.f32 %v4548, %v4740
        %v4742 = vpop.f32.mrb[0].mxu0
        %v4743 = vadd.f32 %v4550, %v4742
        %v4744 = vpop.f32.mrb[0].mxu0
        %v4745 = vadd.f32 %v4552, %v4744
        %4746 = vmatprep.mubr.bf16.mxu0 0
        %4747 = vmatmul.mubr.bf16.gmra.mrb[0].mxu0 %v3950
        %v4748 = vpop.f32.mrb[0].mxu0
        %v4749 = vadd.f32 %v4556, %v4748
        %v4750 = vpop.f32.mrb[0].mxu0
        %v4751 = vadd.f32 %v4558, %v4750
        %v4752 = vpop.f32.mrb[0].mxu0
        %v4753 = vadd.f32 %v4560, %v4752
        %v4754 = vpop.f32.mrb[0].mxu0
        %v4755 = vadd.f32 %v4562, %v4754
        %4756 = vmatprep.mubr.bf16.mxu0 0
        %4757 = vmatmul.mubr.bf16.gmra.mrb[0].mxu0 %v3953
        %v4758 = vpop.f32.mrb[0].mxu0
        %v4759 = vadd.f32 %v4566, %v4758
        %v4760 = vpop.f32.mrb[0].mxu0
        %v4761 = vadd.f32 %v4568, %v4760
        %v4762 = vpop.f32.mrb[0].mxu0
        %v4763 = vadd.f32 %v4570, %v4762
        %v4764 = vpop.f32.mrb[0].mxu0
        %v4765 = vadd.f32 %v4572, %v4764
        %4766 = vmatprep.mubr.bf16.mxu0 0
        %4767 = vmatmul.mubr.bf16.gmra.mrb[0].mxu0 %v3956
        %v4768 = vpop.f32.mrb[0].mxu0
        %v4769 = vadd.f32 %v4576, %v4768
        %v4770 = vpop.f32.mrb[0].mxu0
        %v4771 = vadd.f32 %v4578, %v4770
        %v4772 = vpop.f32.mrb[0].mxu0
        %v4773 = vadd.f32 %v4580, %v4772
        %v4774 = vpop.f32.mrb[0].mxu0
        %v4775 = vadd.f32 %v4582, %v4774
        %4776 = vmatprep.mubr.bf16.mxu0 0
        %4777 = vmatmul.mubr.bf16.gmra.mrb[0].mxu0 %v3959
        %v4778 = vpop.f32.mrb[0].mxu0
        %v4779 = vadd.f32 %v4586, %v4778
        %v4780 = vpop.f32.mrb[0].mxu0
        %v4781 = vadd.f32 %v4588, %v4780
        %v4782 = vpop.f32.mrb[0].mxu0
        %v4783 = vadd.f32 %v4590, %v4782
        %v4784 = vpop.f32.mrb[0].mxu0
        %v4785 = vadd.f32 %v4592, %v4784
        %4786 = vmatprep.mubr.bf16.mxu0 0
        %4787 = vmatmul.mubr.bf16.gmra.mrb[0].mxu0 %v3962
        %v4788 = vpop.f32.mrb[0].mxu0
        %v4789 = vadd.f32 %v4596, %v4788
        %v4790 = vpop.f32.mrb[0].mxu0
        %v4791 = vadd.f32 %v4598, %v4790
        %v4792 = vpop.f32.mrb[0].mxu0
        %v4793 = vadd.f32 %v4600, %v4792
        %v4794 = vpop.f32.mrb[0].mxu0
        %v4795 = vadd.f32 %v4602, %v4794
        %4796 = vmatprep.mubr.bf16.mxu0 0
        %4797 = vmatmul.mubr.bf16.gmra.mrb[0].mxu0 %v3965
        %v4798 = vpop.f32.mrb[0].mxu0
        %v4799 = vadd.f32 %v4606, %v4798
        %v4800 = vpop.f32.mrb[0].mxu0
        %v4801 = vadd.f32 %v4608, %v4800
        %v4802 = vpop.f32.mrb[0].mxu0
        %v4803 = vadd.f32 %v4610, %v4802
        %v4804 = vpop.f32.mrb[0].mxu0
        %v4805 = vadd.f32 %v4612, %v4804
        %4806 = vmatprep.mubr.bf16.mxu0 0
        %4807 = vmatmul.mubr.bf16.gmra.mrb[0].mxu0 %v3968
        %v4808 = vpop.f32.mrb[0].mxu0
        %v4809 = vadd.f32 %v4616, %v4808
        %v4810 = vpop.f32.mrb[0].mxu0
        %v4811 = vadd.f32 %v4618, %v4810
        %v4812 = vpop.f32.mrb[0].mxu0
        %v4813 = vadd.f32 %v4620, %v4812
        %v4814 = vpop.f32.mrb[0].mxu0
        %v4815 = vadd.f32 %v4622, %v4814
        %4816 = vmatprep.mubr.bf16.mxu0 0
        %4817 = vmatmul.mubr.bf16.gmra.mrb[0].mxu0 %v3971
        %v4818 = vpop.f32.mrb[0].mxu0
        %v4819 = vadd.f32 %v4626, %v4818
        %v4820 = vpop.f32.mrb[0].mxu0
        %v4821 = vadd.f32 %v4628, %v4820
        %v4822 = vpop.f32.mrb[0].mxu0
        %v4823 = vadd.f32 %v4630, %v4822
        %v4824 = vpop.f32.mrb[0].mxu0
        %v4825 = vadd.f32 %v4632, %v4824
        %4826 = vmatprep.mubr.bf16.mxu0 0
        %4827 = vmatmul.mubr.bf16.gmra.mrb[0].mxu0 %v3974
        %v4828 = vpop.f32.mrb[0].mxu0
        %v4829 = vadd.f32 %v4636, %v4828
        %v4830 = vpop.f32.mrb[0].mxu0
        %v4831 = vadd.f32 %v4638, %v4830
        %v4832 = vpop.f32.mrb[0].mxu0
        %v4833 = vadd.f32 %v4640, %v4832
        %v4834 = vpop.f32.mrb[0].mxu0
        %v4835 = vadd.f32 %v4642, %v4834
        %4836 = vmatprep.mubr.bf16.mxu0 0
        %4837 = vmatmul.mubr.bf16.gmra.mrb[0].mxu0 %v3977
        %v4838 = vpop.f32.mrb[0].mxu0
        %v4839 = vadd.f32 %v4646, %v4838
        %v4840 = vpop.f32.mrb[0].mxu0
        %v4841 = vadd.f32 %v4648, %v4840
        %v4842 = vpop.f32.mrb[0].mxu0
        %v4843 = vadd.f32 %v4650, %v4842
        %v4844 = vpop.f32.mrb[0].mxu0
        %v4845 = vadd.f32 %v4652, %v4844
        %4846 = vmatprep.mubr.bf16.mxu0 0
        %4847 = vmatmul.mubr.bf16.gmra.mrb[0].mxu0 %v3980
        %v4848 = vpop.f32.mrb[0].mxu0
        %v4849 = vadd.f32 %v4656, %v4848
        %v4850 = vpop.f32.mrb[0].mxu0
        %v4851 = vadd.f32 %v4658, %v4850
        %v4852 = vpop.f32.mrb[0].mxu0
        %v4853 = vadd.f32 %v4660, %v4852
        %v4854 = vpop.f32.mrb[0].mxu0
        %v4855 = vadd.f32 %v4662, %v4854
        %4856 = vmatprep.mubr.bf16.mxu0 0
        %4857 = vmatmul.mubr.bf16.gmra.mrb[0].mxu0 %v3983
        %v4858 = vpop.f32.mrb[0].mxu0
        %v4859 = vadd.f32 %v4666, %v4858
        %v4860 = vpop.f32.mrb[0].mxu0
        %v4861 = vadd.f32 %v4668, %v4860
        %v4862 = vpop.f32.mrb[0].mxu0
        %v4863 = vadd.f32 %v4670, %v4862
        %v4864 = vpop.f32.mrb[0].mxu0
        %v4865 = vadd.f32 %v4672, %v4864
        %4866 = vdwg.mxu0
        %4867 = vmatprep.subr.bf16.mxu0 0
        %4868 = vmatpush1.bf16.msra.mxu0 %v4339
        %4869 = vmatprep.subr.bf16.mxu0 0
        %4870 = vmatpush1.bf16.msra.mxu0 %v4342
        %4871 = vmatprep.subr.bf16.mxu0 0
        %4872 = vmatpush1.bf16.msra.mxu0 %v4345
        %4873 = vmatprep.subr.bf16.mxu0 0
        %4874 = vmatpush1.bf16.msra.mxu0 %v4348
        %4875 = vmatprep.subr.bf16.mxu0 0
        %4876 = vmatpush1.bf16.msra.mxu0 %v4351
        %4877 = vmatprep.subr.bf16.mxu0 0
        %4878 = vmatpush1.bf16.msra.mxu0 %v4354
        %4879 = vmatprep.subr.bf16.mxu0 0
        %4880 = vmatpush1.bf16.msra.mxu0 %v4357
        %4881 = vmatprep.subr.bf16.mxu0 0
        %4882 = vmatpush1.bf16.msra.mxu0 %v4360
        %4883 = vmatprep.subr.bf16.mxu0 0
        %4884 = vmatpush1.bf16.msra.mxu0 %v4363
        %4885 = vmatprep.subr.bf16.mxu0 0
        %4886 = vmatpush1.bf16.msra.mxu0 %v4366
        %4887 = vmatprep.subr.bf16.mxu0 0
        %4888 = vmatpush1.bf16.msra.mxu0 %v4369
        %4889 = vmatprep.subr.bf16.mxu0 0
        %4890 = vmatpush1.bf16.msra.mxu0 %v4372
        %4891 = vmatprep.subr.bf16.mxu0 0
        %4892 = vmatpush1.bf16.msra.mxu0 %v4375
        %4893 = vmatprep.subr.bf16.mxu0 0
        %4894 = vmatpush1.bf16.msra.mxu0 %v4378
        %4895 = vmatprep.subr.bf16.mxu0 0
        %4896 = vmatpush1.bf16.msra.mxu0 %v4381
        %4897 = vmatprep.subr.bf16.mxu0 0
        %4898 = vmatpush1.bf16.msra.mxu0 %v4384
        %4899 = vmatprep.mubr.bf16.mxu0 %v3937
        %4900 = vmatmul.mubr.bf16.gmra.mrb[0].mxu0 %v3936
        %v4901 = vpop.f32.mrb[0].mxu0
        %v4902 = vadd.f32 %v4093, %v4901
        %v4903 = vpop.f32.mrb[0].mxu0
        %v4904 = vpop.f32.mrb[0].mxu0
        %v4905 = vadd.f32 %v4093, %v4904
        %v4906 = vpop.f32.mrb[0].mxu0
        %4907 = vmatprep.mubr.bf16.mxu0 %v3940
        %4908 = vmatmul.mubr.bf16.gmra.mrb[0].mxu0 %v3939
        %v4909 = vpop.f32.mrb[0].mxu0
        %v4910 = vadd.f32 %v4093, %v4909
        %v4911 = vpop.f32.mrb[0].mxu0
        %v4912 = vpop.f32.mrb[0].mxu0
        %v4913 = vadd.f32 %v4093, %v4912
        %v4914 = vpop.f32.mrb[0].mxu0
        %4915 = vmatprep.mubr.bf16.mxu0 %v3943
        %4916 = vmatmul.mubr.bf16.gmra.mrb[0].mxu0 %v3942
        %v4917 = vpop.f32.mrb[0].mxu0
        %v4918 = vadd.f32 %v4093, %v4917
        %v4919 = vpop.f32.mrb[0].mxu0
        %v4920 = vpop.f32.mrb[0].mxu0
        %v4921 = vadd.f32 %v4093, %v4920
        %v4922 = vpop.f32.mrb[0].mxu0
        %4923 = vmatprep.mubr.bf16.mxu0 %v3946
        %4924 = vmatmul.mubr.bf16.gmra.mrb[0].mxu0 %v3945
        %v4925 = vpop.f32.mrb[0].mxu0
        %v4926 = vadd.f32 %v4093, %v4925
        %v4927 = vpop.f32.mrb[0].mxu0
        %v4928 = vpop.f32.mrb[0].mxu0
        %v4929 = vadd.f32 %v4093, %v4928
        %v4930 = vpop.f32.mrb[0].mxu0
        %4931 = vmatprep.mubr.bf16.mxu0 %v3949
        %4932 = vmatmul.mubr.bf16.gmra.mrb[0].mxu0 %v3948
        %v4933 = vpop.f32.mrb[0].mxu0
        %v4934 = vadd.f32 %v4093, %v4933
        %v4935 = vpop.f32.mrb[0].mxu0
        %v4936 = vpop.f32.mrb[0].mxu0
        %v4937 = vadd.f32 %v4093, %v4936
        %v4938 = vpop.f32.mrb[0].mxu0
        %4939 = vmatprep.mubr.bf16.mxu0 %v3952
        %4940 = vmatmul.mubr.bf16.gmra.mrb[0].mxu0 %v3951
        %v4941 = vpop.f32.mrb[0].mxu0
        %v4942 = vadd.f32 %v4093, %v4941
        %v4943 = vpop.f32.mrb[0].mxu0
        %v4944 = vpop.f32.mrb[0].mxu0
        %v4945 = vadd.f32 %v4093, %v4944
        %v4946 = vpop.f32.mrb[0].mxu0
        %4947 = vmatprep.mubr.bf16.mxu0 %v3955
        %4948 = vmatmul.mubr.bf16.gmra.mrb[0].mxu0 %v3954
        %v4949 = vpop.f32.mrb[0].mxu0
        %v4950 = vadd.f32 %v4093, %v4949
        %v4951 = vpop.f32.mrb[0].mxu0
        %v4952 = vpop.f32.mrb[0].mxu0
        %v4953 = vadd.f32 %v4093, %v4952
        %v4954 = vpop.f32.mrb[0].mxu0
        %4955 = vmatprep.mubr.bf16.mxu0 %v3958
        %4956 = vmatmul.mubr.bf16.gmra.mrb[0].mxu0 %v3957
        %v4957 = vpop.f32.mrb[0].mxu0
        %v4958 = vadd.f32 %v4093, %v4957
        %v4959 = vpop.f32.mrb[0].mxu0
        %v4960 = vpop.f32.mrb[0].mxu0
        %v4961 = vadd.f32 %v4093, %v4960
        %v4962 = vpop.f32.mrb[0].mxu0
        %4963 = vmatprep.mubr.bf16.mxu0 %v3961
        %4964 = vmatmul.mubr.bf16.gmra.mrb[0].mxu0 %v3960
        %v4965 = vpop.f32.mrb[0].mxu0
        %v4966 = vadd.f32 %v4093, %v4965
        %v4967 = vpop.f32.mrb[0].mxu0
        %v4968 = vpop.f32.mrb[0].mxu0
        %v4969 = vadd.f32 %v4093, %v4968
        %v4970 = vpop.f32.mrb[0].mxu0
        %4971 = vmatprep.mubr.bf16.mxu0 %v3964
        %4972 = vmatmul.mubr.bf16.gmra.mrb[0].mxu0 %v3963
        %v4973 = vpop.f32.mrb[0].mxu0
        %v4974 = vadd.f32 %v4093, %v4973
        %v4975 = vpop.f32.mrb[0].mxu0
        %v4976 = vpop.f32.mrb[0].mxu0
        %v4977 = vadd.f32 %v4093, %v4976
        %v4978 = vpop.f32.mrb[0].mxu0
        %4979 = vmatprep.mubr.bf16.mxu0 %v3967
        %4980 = vmatmul.mubr.bf16.gmra.mrb[0].mxu0 %v3966
        %v4981 = vpop.f32.mrb[0].mxu0
        %v4982 = vadd.f32 %v4093, %v4981
        %v4983 = vpop.f32.mrb[0].mxu0
        %v4984 = vpop.f32.mrb[0].mxu0
        %v4985 = vadd.f32 %v4093, %v4984
        %v4986 = vpop.f32.mrb[0].mxu0
        %4987 = vmatprep.mubr.bf16.mxu0 %v3970
        %4988 = vmatmul.mubr.bf16.gmra.mrb[0].mxu0 %v3969
        %v4989 = vpop.f32.mrb[0].mxu0
        %v4990 = vadd.f32 %v4093, %v4989
        %v4991 = vpop.f32.mrb[0].mxu0
        %v4992 = vpop.f32.mrb[0].mxu0
        %v4993 = vadd.f32 %v4093, %v4992
        %v4994 = vpop.f32.mrb[0].mxu0
        %4995 = vmatprep.mubr.bf16.mxu0 %v3973
        %4996 = vmatmul.mubr.bf16.gmra.mrb[0].mxu0 %v3972
        %v4997 = vpop.f32.mrb[0].mxu0
        %v4998 = vadd.f32 %v4093, %v4997
        %v4999 = vpop.f32.mrb[0].mxu0
        %v5000 = vpop.f32.mrb[0].mxu0
        %v5001 = vadd.f32 %v4093, %v5000
        %v5002 = vpop.f32.mrb[0].mxu0
        %5003 = vmatprep.mubr.bf16.mxu0 %v3976
        %5004 = vmatmul.mubr.bf16.gmra.mrb[0].mxu0 %v3975
        %v5005 = vpop.f32.mrb[0].mxu0
        %v5006 = vadd.f32 %v4093, %v5005
        %v5007 = vpop.f32.mrb[0].mxu0
        %v5008 = vpop.f32.mrb[0].mxu0
        %v5009 = vadd.f32 %v4093, %v5008
        %v5010 = vpop.f32.mrb[0].mxu0
        %5011 = vmatprep.mubr.bf16.mxu0 %v3979
        %5012 = vmatmul.mubr.bf16.gmra.mrb[0].mxu0 %v3978
        %v5013 = vpop.f32.mrb[0].mxu0
        %v5014 = vadd.f32 %v4093, %v5013
        %v5015 = vpop.f32.mrb[0].mxu0
        %v5016 = vpop.f32.mrb[0].mxu0
        %v5017 = vadd.f32 %v4093, %v5016
        %v5018 = vpop.f32.mrb[0].mxu0
        %5019 = vmatprep.mubr.bf16.mxu0 %v3982
        %5020 = vmatmul.mubr.bf16.gmra.mrb[0].mxu0 %v3981
        %v5021 = vpop.f32.mrb[0].mxu0
        %v5022 = vadd.f32 %v4093, %v5021
        %v5023 = vpop.f32.mrb[0].mxu0
        %v5024 = vpop.f32.mrb[0].mxu0
        %v5025 = vadd.f32 %v4093, %v5024
        %v5026 = vpop.f32.mrb[0].mxu0
        %5027 = vdwg.mxu0
        %5028 = vmatprep.subr.bf16.mxu0 0
        %5029 = vmatpush1.bf16.msra.mxu0 %v4387
        %5030 = vmatprep.subr.bf16.mxu0 0
        %5031 = vmatpush1.bf16.msra.mxu0 %v4390
        %5032 = vmatprep.subr.bf16.mxu0 0
        %5033 = vmatpush1.bf16.msra.mxu0 %v4393
        %5034 = vmatprep.subr.bf16.mxu0 0
        %5035 = vmatpush1.bf16.msra.mxu0 %v4396
        %5036 = vmatprep.subr.bf16.mxu0 0
        %5037 = vmatpush1.bf16.msra.mxu0 %v4399
        %5038 = vmatprep.subr.bf16.mxu0 0
        %5039 = vmatpush1.bf16.msra.mxu0 %v4402
        %5040 = vmatprep.subr.bf16.mxu0 0
        %5041 = vmatpush1.bf16.msra.mxu0 %v4405
        %5042 = vmatprep.subr.bf16.mxu0 0
        %5043 = vmatpush1.bf16.msra.mxu0 %v4408
        %5044 = vmatprep.subr.bf16.mxu0 0
        %5045 = vmatpush1.bf16.msra.mxu0 0
        %5046 = vmatprep.subr.bf16.mxu0 0
        %5047 = vmatpush1.bf16.msra.mxu0 0
        %5048 = vmatprep.subr.bf16.mxu0 0
        %5049 = vmatpush1.bf16.msra.mxu0 0
        %5050 = vmatprep.subr.bf16.mxu0 0
        %5051 = vmatpush1.bf16.msra.mxu0 0
        %5052 = vmatprep.subr.bf16.mxu0 0
        %5053 = vmatpush1.bf16.msra.mxu0 0
        %5054 = vmatprep.subr.bf16.mxu0 0
        %5055 = vmatpush1.bf16.msra.mxu0 0
        %5056 = vmatprep.subr.bf16.mxu0 0
        %5057 = vmatpush1.bf16.msra.mxu0 0
        %5058 = vmatprep.subr.bf16.mxu0 0
        %5059 = vmatpush1.bf16.msra.mxu0 0
        %5060 = vmatprep.mubr.bf16.mxu0 0
        %5061 = vmatmul.mubr.bf16.gmra.mrb[0].mxu0 %v3938
        %v5062 = vpop.f32.mrb[0].mxu0
        %v5063 = vadd.f32 %v4902, %v5062
        %v5064 = vpop.f32.mrb[0].mxu0
        %v5065 = vpop.f32.mrb[0].mxu0
        %v5066 = vadd.f32 %v4905, %v5065
        %v5067 = vpop.f32.mrb[0].mxu0
        %5068 = vmatprep.mubr.bf16.mxu0 0
        %5069 = vmatmul.mubr.bf16.gmra.mrb[0].mxu0 %v3941
        %v5070 = vpop.f32.mrb[0].mxu0
        %v5071 = vadd.f32 %v4910, %v5070
        %v5072 = vpop.f32.mrb[0].mxu0
        %v5073 = vpop.f32.mrb[0].mxu0
        %v5074 = vadd.f32 %v4913, %v5073
        %v5075 = vpop.f32.mrb[0].mxu0
        %5076 = vmatprep.mubr.bf16.mxu0 0
        %5077 = vmatmul.mubr.bf16.gmra.mrb[0].mxu0 %v3944
        %v5078 = vpop.f32.mrb[0].mxu0
        %v5079 = vadd.f32 %v4918, %v5078
        %v5080 = vpop.f32.mrb[0].mxu0
        %v5081 = vpop.f32.mrb[0].mxu0
        %v5082 = vadd.f32 %v4921, %v5081
        %v5083 = vpop.f32.mrb[0].mxu0
        %5084 = vmatprep.mubr.bf16.mxu0 0
        %5085 = vmatmul.mubr.bf16.gmra.mrb[0].mxu0 %v3947
        %v5086 = vpop.f32.mrb[0].mxu0
        %v5087 = vadd.f32 %v4926, %v5086
        %v5088 = vpop.f32.mrb[0].mxu0
        %v5089 = vpop.f32.mrb[0].mxu0
        %v5090 = vadd.f32 %v4929, %v5089
        %v5091 = vpop.f32.mrb[0].mxu0
        %5092 = vmatprep.mubr.bf16.mxu0 0
        %5093 = vmatmul.mubr.bf16.gmra.mrb[0].mxu0 %v3950
        %v5094 = vpop.f32.mrb[0].mxu0
        %v5095 = vadd.f32 %v4934, %v5094
        %v5096 = vpop.f32.mrb[0].mxu0
        %v5097 = vpop.f32.mrb[0].mxu0
        %v5098 = vadd.f32 %v4937, %v5097
        %v5099 = vpop.f32.mrb[0].mxu0
        %5100 = vmatprep.mubr.bf16.mxu0 0
        %5101 = vmatmul.mubr.bf16.gmra.mrb[0].mxu0 %v3953
        %v5102 = vpop.f32.mrb[0].mxu0
        %v5103 = vadd.f32 %v4942, %v5102
        %v5104 = vpop.f32.mrb[0].mxu0
        %v5105 = vpop.f32.mrb[0].mxu0
        %v5106 = vadd.f32 %v4945, %v5105
        %v5107 = vpop.f32.mrb[0].mxu0
        %5108 = vmatprep.mubr.bf16.mxu0 0
        %5109 = vmatmul.mubr.bf16.gmra.mrb[0].mxu0 %v3956
        %v5110 = vpop.f32.mrb[0].mxu0
        %v5111 = vadd.f32 %v4950, %v5110
        %v5112 = vpop.f32.mrb[0].mxu0
        %v5113 = vpop.f32.mrb[0].mxu0
        %v5114 = vadd.f32 %v4953, %v5113
        %v5115 = vpop.f32.mrb[0].mxu0
        %5116 = vmatprep.mubr.bf16.mxu0 0
        %5117 = vmatmul.mubr.bf16.gmra.mrb[0].mxu0 %v3959
        %v5118 = vpop.f32.mrb[0].mxu0
        %v5119 = vadd.f32 %v4958, %v5118
        %v5120 = vpop.f32.mrb[0].mxu0
        %v5121 = vpop.f32.mrb[0].mxu0
        %v5122 = vadd.f32 %v4961, %v5121
        %v5123 = vpop.f32.mrb[0].mxu0
        %5124 = vmatprep.mubr.bf16.mxu0 0
        %5125 = vmatmul.mubr.bf16.gmra.mrb[0].mxu0 %v3962
        %v5126 = vpop.f32.mrb[0].mxu0
        %v5127 = vadd.f32 %v4966, %v5126
        %v5128 = vpop.f32.mrb[0].mxu0
        %v5129 = vpop.f32.mrb[0].mxu0
        %v5130 = vadd.f32 %v4969, %v5129
        %v5131 = vpop.f32.mrb[0].mxu0
        %5132 = vmatprep.mubr.bf16.mxu0 0
        %5133 = vmatmul.mubr.bf16.gmra.mrb[0].mxu0 %v3965
        %v5134 = vpop.f32.mrb[0].mxu0
        %v5135 = vadd.f32 %v4974, %v5134
        %v5136 = vpop.f32.mrb[0].mxu0
        %v5137 = vpop.f32.mrb[0].mxu0
        %v5138 = vadd.f32 %v4977, %v5137
        %v5139 = vpop.f32.mrb[0].mxu0
        %5140 = vmatprep.mubr.bf16.mxu0 0
        %5141 = vmatmul.mubr.bf16.gmra.mrb[0].mxu0 %v3968
        %v5142 = vpop.f32.mrb[0].mxu0
        %v5143 = vadd.f32 %v4982, %v5142
        %v5144 = vpop.f32.mrb[0].mxu0
        %v5145 = vpop.f32.mrb[0].mxu0
        %v5146 = vadd.f32 %v4985, %v5145
        %v5147 = vpop.f32.mrb[0].mxu0
        %5148 = vmatprep.mubr.bf16.mxu0 0
        %5149 = vmatmul.mubr.bf16.gmra.mrb[0].mxu0 %v3971
        %v5150 = vpop.f32.mrb[0].mxu0
        %v5151 = vadd.f32 %v4990, %v5150
        %v5152 = vpop.f32.mrb[0].mxu0
        %v5153 = vpop.f32.mrb[0].mxu0
        %v5154 = vadd.f32 %v4993, %v5153
        %v5155 = vpop.f32.mrb[0].mxu0
        %5156 = vmatprep.mubr.bf16.mxu0 0
        %5157 = vmatmul.mubr.bf16.gmra.mrb[0].mxu0 %v3974
        %v5158 = vpop.f32.mrb[0].mxu0
        %v5159 = vadd.f32 %v4998, %v5158
        %v5160 = vpop.f32.mrb[0].mxu0
        %v5161 = vpop.f32.mrb[0].mxu0
        %v5162 = vadd.f32 %v5001, %v5161
        %v5163 = vpop.f32.mrb[0].mxu0
        %5164 = vmatprep.mubr.bf16.mxu0 0
        %5165 = vmatmul.mubr.bf16.gmra.mrb[0].mxu0 %v3977
        %v5166 = vpop.f32.mrb[0].mxu0
        %v5167 = vadd.f32 %v5006, %v5166
        %v5168 = vpop.f32.mrb[0].mxu0
        %v5169 = vpop.f32.mrb[0].mxu0
        %v5170 = vadd.f32 %v5009, %v5169
        %v5171 = vpop.f32.mrb[0].mxu0
        %5172 = vmatprep.mubr.bf16.mxu0 0
        %5173 = vmatmul.mubr.bf16.gmra.mrb[0].mxu0 %v3980
        %v5174 = vpop.f32.mrb[0].mxu0
        %v5175 = vadd.f32 %v5014, %v5174
        %v5176 = vpop.f32.mrb[0].mxu0
        %v5177 = vpop.f32.mrb[0].mxu0
        %v5178 = vadd.f32 %v5017, %v5177
        %v5179 = vpop.f32.mrb[0].mxu0
        %5180 = vmatprep.mubr.bf16.mxu0 0
        %5181 = vmatmul.mubr.bf16.gmra.mrb[0].mxu0 %v3983
        %v5182 = vpop.f32.mrb[0].mxu0
        %v5183 = vadd.f32 %v5022, %v5182
        %v5184 = vpop.f32.mrb[0].mxu0
        %v5185 = vpop.f32.mrb[0].mxu0
        %v5186 = vadd.f32 %v5025, %v5185
        %v5187 = vpop.f32.mrb[0].mxu0
        %5188 = vdwg.mxu0
        %v5189 = vmax.f32 %v4709, 0.0
        %v5190 = vmax.f32 %v4711, 0.0
        %v5191 = vmax.f32 %v5063, 0.0
        %v5192 = vmax.f32 %v4713, 0.0
        %v5193 = vmax.f32 %v4715, 0.0
        %v5194 = vmax.f32 %v5066, 0.0
        %v5195 = vmax.f32 %v4719, 0.0
        %v5196 = vmax.f32 %v4721, 0.0
        %v5197 = vmax.f32 %v5071, 0.0
        %v5198 = vmax.f32 %v4723, 0.0
        %v5199 = vmax.f32 %v4725, 0.0
        %v5200 = vmax.f32 %v5074, 0.0
        %v5201 = vmax.f32 %v4729, 0.0
        %v5202 = vmax.f32 %v4731, 0.0
        %v5203 = vmax.f32 %v5079, 0.0
        %v5204 = vmax.f32 %v4733, 0.0
        %v5205 = vmax.f32 %v4735, 0.0
        %v5206 = vmax.f32 %v5082, 0.0
        %v5207 = vmax.f32 %v4739, 0.0
        %v5208 = vmax.f32 %v4741, 0.0
        %v5209 = vmax.f32 %v5087, 0.0
        %v5210 = vmax.f32 %v4743, 0.0
        %v5211 = vmax.f32 %v4745, 0.0
        %v5212 = vmax.f32 %v5090, 0.0
        %v5213 = vmax.f32 %v4749, 0.0
        %v5214 = vmax.f32 %v4751, 0.0
        %v5215 = vmax.f32 %v5095, 0.0
        %v5216 = vmax.f32 %v4753, 0.0
        %v5217 = vmax.f32 %v4755, 0.0
        %v5218 = vmax.f32 %v5098, 0.0
        %v5219 = vmax.f32 %v4759, 0.0
        %v5220 = vmax.f32 %v4761, 0.0
        %v5221 = vmax.f32 %v5103, 0.0
        %v5222 = vmax.f32 %v4763, 0.0
        %v5223 = vmax.f32 %v4765, 0.0
        %v5224 = vmax.f32 %v5106, 0.0
        %v5225 = vmax.f32 %v4769, 0.0
        %v5226 = vmax.f32 %v4771, 0.0
        %v5227 = vmax.f32 %v5111, 0.0
        %v5228 = vmax.f32 %v4773, 0.0
        %v5229 = vmax.f32 %v4775, 0.0
        %v5230 = vmax.f32 %v5114, 0.0
        %v5231 = vmax.f32 %v4779, 0.0
        %v5232 = vmax.f32 %v4781, 0.0
        %v5233 = vmax.f32 %v5119, 0.0
        %v5234 = vmax.f32 %v4783, 0.0
        %v5235 = vmax.f32 %v4785, 0.0
        %v5236 = vmax.f32 %v5122, 0.0
        %v5237 = vmax.f32 %v4789, 0.0
        %v5238 = vmax.f32 %v4791, 0.0
        %v5239 = vmax.f32 %v5127, 0.0
        %v5240 = vmax.f32 %v4793, 0.0
        %v5241 = vmax.f32 %v4795, 0.0
        %v5242 = vmax.f32 %v5130, 0.0
        %v5243 = vmax.f32 %v4799, 0.0
        %v5244 = vmax.f32 %v4801, 0.0
        %v5245 = vmax.f32 %v5135, 0.0
        %v5246 = vmax.f32 %v4803, 0.0
        %v5247 = vmax.f32 %v4805, 0.0
        %v5248 = vmax.f32 %v5138, 0.0
        %v5249 = vmax.f32 %v4809, 0.0
        %v5250 = vmax.f32 %v4811, 0.0
        %v5251 = vmax.f32 %v5143, 0.0
        %v5252 = vmax.f32 %v4813, 0.0
        %v5253 = vmax.f32 %v4815, 0.0
        %v5254 = vmax.f32 %v5146, 0.0
        %v5255 = vmax.f32 %v4819, 0.0
        %v5256 = vmax.f32 %v4821, 0.0
        %v5257 = vmax.f32 %v5151, 0.0
        %v5258 = vmax.f32 %v4823, 0.0
        %v5259 = vmax.f32 %v4825, 0.0
        %v5260 = vmax.f32 %v5154, 0.0
        %v5261 = vmax.f32 %v4829, 0.0
        %v5262 = vmax.f32 %v4831, 0.0
        %v5263 = vmax.f32 %v5159, 0.0
        %v5264 = vmax.f32 %v4833, 0.0
        %v5265 = vmax.f32 %v4835, 0.0
        %v5266 = vmax.f32 %v5162, 0.0
        %v5267 = vmax.f32 %v4839, 0.0
        %v5268 = vmax.f32 %v4841, 0.0
        %v5269 = vmax.f32 %v5167, 0.0
        %v5270 = vmax.f32 %v4843, 0.0
        %v5271 = vmax.f32 %v4845, 0.0
        %v5272 = vmax.f32 %v5170, 0.0
        %v5273 = vmax.f32 %v4849, 0.0
        %v5274 = vmax.f32 %v4851, 0.0
        %v5275 = vmax.f32 %v5175, 0.0
        %v5276 = vmax.f32 %v4853, 0.0
        %v5277 = vmax.f32 %v4855, 0.0
        %v5278 = vmax.f32 %v5178, 0.0
        %v5279 = vmax.f32 %v4859, 0.0
        %v5280 = vmax.f32 %v4861, 0.0
        %v5281 = vmax.f32 %v5183, 0.0
        %v5282 = vmax.f32 %v4863, 0.0
        %v5283 = vmax.f32 %v4865, 0.0
        %v5284 = vmax.f32 %v5186, 0.0
        %v5285 = vpack.c.bf16 %v5192, %v5189
        %v5286 = vpack.c.bf16 %v5193, %v5190
        %v5287 = vpack.c.bf16 %v5194, %v5191
        %v5288 = vpack.c.bf16 %v5198, %v5195
        %v5289 = vpack.c.bf16 %v5199, %v5196
        %v5290 = vpack.c.bf16 %v5200, %v5197
        %v5291 = vpack.c.bf16 %v5204, %v5201
        %v5292 = vpack.c.bf16 %v5205, %v5202
        %v5293 = vpack.c.bf16 %v5206, %v5203
        %v5294 = vpack.c.bf16 %v5210, %v5207
        %v5295 = vpack.c.bf16 %v5211, %v5208
        %v5296 = vpack.c.bf16 %v5212, %v5209
        %v5297 = vpack.c.bf16 %v5216, %v5213
        %v5298 = vpack.c.bf16 %v5217, %v5214
        %v5299 = vpack.c.bf16 %v5218, %v5215
        %v5300 = vpack.c.bf16 %v5222, %v5219
        %v5301 = vpack.c.bf16 %v5223, %v5220
        %v5302 = vpack.c.bf16 %v5224, %v5221
        %v5303 = vpack.c.bf16 %v5228, %v5225
        %v5304 = vpack.c.bf16 %v5229, %v5226
        %v5305 = vpack.c.bf16 %v5230, %v5227
        %v5306 = vpack.c.bf16 %v5234, %v5231
        %v5307 = vpack.c.bf16 %v5235, %v5232
        %v5308 = vpack.c.bf16 %v5236, %v5233
        %v5309 = vpack.c.bf16 %v5240, %v5237
        %v5310 = vpack.c.bf16 %v5241, %v5238
        %v5311 = vpack.c.bf16 %v5242, %v5239
        %v5312 = vpack.c.bf16 %v5246, %v5243
        %v5313 = vpack.c.bf16 %v5247, %v5244
        %v5314 = vpack.c.bf16 %v5248, %v5245
        %v5315 = vpack.c.bf16 %v5252, %v5249
        %v5316 = vpack.c.bf16 %v5253, %v5250
        %v5317 = vpack.c.bf16 %v5254, %v5251
        %v5318 = vpack.c.bf16 %v5258, %v5255
        %v5319 = vpack.c.bf16 %v5259, %v5256
        %v5320 = vpack.c.bf16 %v5260, %v5257
        %v5321 = vpack.c.bf16 %v5264, %v5261
        %v5322 = vpack.c.bf16 %v5265, %v5262
        %v5323 = vpack.c.bf16 %v5266, %v5263
        %v5324 = vpack.c.bf16 %v5270, %v5267
        %v5325 = vpack.c.bf16 %v5271, %v5268
        %v5326 = vpack.c.bf16 %v5272, %v5269
        %v5327 = vpack.c.bf16 %v5276, %v5273
        %v5328 = vpack.c.bf16 %v5277, %v5274
        %v5329 = vpack.c.bf16 %v5278, %v5275
        %v5330 = vpack.c.bf16 %v5282, %v5279
        %v5331 = vpack.c.bf16 %v5283, %v5280
        %v5332 = vpack.c.bf16 %v5284, %v5281
        %v5333 = vld [vmem:[#allocation8] sm:$0xff]
        %v5334 = vld [vmem:[#allocation8 + $0x8] sm:$0xf]
        %v5335 = vld [vmem:[#allocation8 + $0xc] sm:$0xff]
        %v5336 = vld [vmem:[#allocation8 + $0x14] sm:$0xf]
        %v5337 = vld [vmem:[#allocation8 + $0x18] sm:$0xff]
        %v5338 = vld [vmem:[#allocation8 + $0x20] sm:$0xf]
        %v5339 = vld [vmem:[#allocation8 + $0x24] sm:$0xff]
        %v5340 = vld [vmem:[#allocation8 + $0x2c] sm:$0xf]
        %v5341 = vld [vmem:[#allocation8 + $0x30] sm:$0xff]
        %v5342 = vld [vmem:[#allocation8 + $0x38] sm:$0xf]
        %v5343 = vld [vmem:[#allocation8 + $0x3c] sm:$0xff]
        %v5344 = vld [vmem:[#allocation8 + $0x44] sm:$0xf]
        %v5345 = vld [vmem:[#allocation8 + $0x48] sm:$0xff]
        %v5346 = vld [vmem:[#allocation8 + $0x50] sm:$0xf]
        %v5347 = vld [vmem:[#allocation8 + $0x54] sm:$0xff]
        %v5348 = vld [vmem:[#allocation8 + $0x5c] sm:$0xf]
        %v5349 = vld [vmem:[#allocation8 + $0x60] sm:$0xff]
        %v5350 = vld [vmem:[#allocation8 + $0x68] sm:$0xf]
        %v5351 = vld [vmem:[#allocation8 + $0x6c] sm:$0xff]
        %v5352 = vld [vmem:[#allocation8 + $0x74] sm:$0xf]
        %v5353 = vld [vmem:[#allocation8 + $0x78] sm:$0xff]
        %v5354 = vld [vmem:[#allocation8 + $0x80] sm:$0xf]
        %v5355 = vld [vmem:[#allocation8 + $0x84] sm:$0xff]
        %v5356 = vld [vmem:[#allocation8 + $0x8c] sm:$0xf]
        %v5357 = vld [vmem:[#allocation8 + $0x90] sm:$0xff]
        %v5358 = vld [vmem:[#allocation8 + $0x98] sm:$0xf]
        %v5359 = vld [vmem:[#allocation8 + $0x9c] sm:$0xff]
        %v5360 = vld [vmem:[#allocation8 + $0xa4] sm:$0xf]
        %v5361 = vld [vmem:[#allocation8 + $0xa8] sm:$0xff]
        %v5362 = vld [vmem:[#allocation8 + $0xb0] sm:$0xf]
        %v5363 = vld [vmem:[#allocation8 + $0xb4] sm:$0xff]
        %v5364 = vld [vmem:[#allocation8 + $0xbc] sm:$0xf]
        %v5365 = vld [vmem:[#allocation8 + $0xc0] sm:$0xff]
        %v5366 = vld [vmem:[#allocation8 + $0xc8] sm:$0xf]
        %v5367 = vld [vmem:[#allocation8 + $0xcc] sm:$0xff]
        %v5368 = vld [vmem:[#allocation8 + $0xd4] sm:$0xf]
        %v5369 = vld [vmem:[#allocation8 + $0xd8] sm:$0xff]
        %v5370 = vld [vmem:[#allocation8 + $0xe0] sm:$0xf]
        %v5371 = vld [vmem:[#allocation8 + $0xe4] sm:$0xff]
        %v5372 = vld [vmem:[#allocation8 + $0xec] sm:$0xf]
        %v5373 = vld [vmem:[#allocation8 + $0xf0] sm:$0xff]
        %v5374 = vld [vmem:[#allocation8 + $0xf8] sm:$0xf]
        %v5375 = vld [vmem:[#allocation8 + $0xfc] sm:$0xff]
        %v5376 = vld [vmem:[#allocation8 + $0x104] sm:$0xf]
        %v5377 = vld [vmem:[#allocation8 + $0x108] sm:$0xff]
        %v5378 = vld [vmem:[#allocation8 + $0x110] sm:$0xf]
        %v5379 = vld [vmem:[#allocation8 + $0x114] sm:$0xff]
        %v5380 = vld [vmem:[#allocation8 + $0x11c] sm:$0xf]
        %v5381 = vld [vmem:[#allocation8 + $0x120] sm:$0xff]
        %v5382 = vld [vmem:[#allocation8 + $0x128] sm:$0xf]
        %v5383 = vld [vmem:[#allocation8 + $0x12c] sm:$0xff]
        %v5384 = vld [vmem:[#allocation8 + $0x134] sm:$0xf]
        %v5385 = vld [vmem:[#allocation8 + $0x138] sm:$0xff]
        %v5386 = vld [vmem:[#allocation8 + $0x140] sm:$0xf]
        %v5387 = vld [vmem:[#allocation8 + $0x144] sm:$0xff]
        %v5388 = vld [vmem:[#allocation8 + $0x14c] sm:$0xf]
        %v5389 = vld [vmem:[#allocation8 + $0x150] sm:$0xff]
        %v5390 = vld [vmem:[#allocation8 + $0x158] sm:$0xf]
        %v5391 = vld [vmem:[#allocation8 + $0x15c] sm:$0xff]
        %v5392 = vld [vmem:[#allocation8 + $0x164] sm:$0xf]
        %v5393 = vld [vmem:[#allocation8 + $0x168] sm:$0xff]
        %v5394 = vld [vmem:[#allocation8 + $0x170] sm:$0xf]
        %v5395 = vld [vmem:[#allocation8 + $0x174] sm:$0xff]
        %v5396 = vld [vmem:[#allocation8 + $0x17c] sm:$0xf]
        %v5397 = vld [vmem:[#allocation8 + $0x180] sm:$0xff]
        %v5398 = vld [vmem:[#allocation8 + $0x188] sm:$0xf]
        %v5399 = vld [vmem:[#allocation8 + $0x18c] sm:$0xff]
        %v5400 = vld [vmem:[#allocation8 + $0x194] sm:$0xf]
        %v5401 = vld [vmem:[#allocation8 + $0x198] sm:$0xff]
        %v5402 = vld [vmem:[#allocation8 + $0x1a0] sm:$0xf]
        %v5403 = vld [vmem:[#allocation8 + $0x1a4] sm:$0xff]
        %v5404 = vld [vmem:[#allocation8 + $0x1ac] sm:$0xf]
        %v5405 = vld [vmem:[#allocation8 + $0x1b0] sm:$0xff]
        %v5406 = vld [vmem:[#allocation8 + $0x1b8] sm:$0xf]
        %v5407 = vld [vmem:[#allocation8 + $0x1bc] sm:$0xff]
        %v5408 = vld [vmem:[#allocation8 + $0x1c4] sm:$0xf]
        %v5409 = vld [vmem:[#allocation8 + $0x1c8] sm:$0xff]
        %v5410 = vld [vmem:[#allocation8 + $0x1d0] sm:$0xf]
        %v5411 = vld [vmem:[#allocation8 + $0x1d4] sm:$0xff]
        %v5412 = vld [vmem:[#allocation8 + $0x1dc] sm:$0xf]
        %v5413 = vld [vmem:[#allocation8 + $0x1e0] sm:$0xff]
        %v5414 = vld [vmem:[#allocation8 + $0x1e8] sm:$0xf]
        %v5415 = vld [vmem:[#allocation8 + $0x1ec] sm:$0xff]
        %v5416 = vld [vmem:[#allocation8 + $0x1f4] sm:$0xf]
        %v5417 = vld [vmem:[#allocation8 + $0x1f8] sm:$0xff]
        %v5418 = vld [vmem:[#allocation8 + $0x200] sm:$0xf]
        %v5419 = vld [vmem:[#allocation8 + $0x204] sm:$0xff]
        %v5420 = vld [vmem:[#allocation8 + $0x20c] sm:$0xf]
        %v5421 = vld [vmem:[#allocation8 + $0x210] sm:$0xff]
        %v5422 = vld [vmem:[#allocation8 + $0x218] sm:$0xf]
        %v5423 = vld [vmem:[#allocation8 + $0x21c] sm:$0xff]
        %v5424 = vld [vmem:[#allocation8 + $0x224] sm:$0xf]
        %v5425 = vld [vmem:[#allocation8 + $0x228] sm:$0xff]
        %v5426 = vld [vmem:[#allocation8 + $0x230] sm:$0xf]
        %v5427 = vld [vmem:[#allocation8 + $0x234] sm:$0xff]
        %v5428 = vld [vmem:[#allocation8 + $0x23c] sm:$0xf]
        %v5429 = vld [vmem:[%s10] sm:$0x7]
        %v5431 = vlaneseq
        %v5432 = vshrl.u32 %v5431, 7
        %v5433 = vsub.s32 0, %v5432
        %v5434 = vrot.slane %v5429, %v5433
        %v5435 = vlaneseq
        %v5436 = vshrl.u32 %v5435, 7
        %v5437 = vsub.s32 1, %v5436
        %v5438 = vrot.slane %v5429, %v5437
        %v5439 = vlaneseq
        %v5440 = vshrl.u32 %v5439, 7
        %v5441 = vsub.s32 2, %v5440
        %v5442 = vrot.slane %v5429, %v5441
        %v5542 = vunpack.c.l.b16 %v5333
        %v5543 = vunpack.c.h.b16 %v5333
        %v5544 = vunpack.c.l.b16 %v5334
        %v5545 = vunpack.c.l.b16 %v5335
        %v5546 = vunpack.c.h.b16 %v5335
        %v5547 = vunpack.c.l.b16 %v5336
        %v5548 = vunpack.c.l.b16 %v5337
        %v5549 = vunpack.c.h.b16 %v5337
        %v5550 = vunpack.c.l.b16 %v5338
        %v5551 = vunpack.c.l.b16 %v5339
        %v5552 = vunpack.c.h.b16 %v5339
        %v5553 = vunpack.c.l.b16 %v5340
        %v5554 = vunpack.c.l.b16 %v5341
        %v5555 = vunpack.c.h.b16 %v5341
        %v5556 = vunpack.c.l.b16 %v5342
        %v5557 = vunpack.c.l.b16 %v5343
        %v5558 = vunpack.c.h.b16 %v5343
        %v5559 = vunpack.c.l.b16 %v5344
        %v5560 = vunpack.c.l.b16 %v5345
        %v5561 = vunpack.c.h.b16 %v5345
        %v5562 = vunpack.c.l.b16 %v5346
        %v5563 = vunpack.c.l.b16 %v5347
        %v5564 = vunpack.c.h.b16 %v5347
        %v5565 = vunpack.c.l.b16 %v5348
        %v5566 = vunpack.c.l.b16 %v5349
        %v5567 = vunpack.c.h.b16 %v5349
        %v5568 = vunpack.c.l.b16 %v5350
        %v5569 = vunpack.c.l.b16 %v5351
        %v5570 = vunpack.c.h.b16 %v5351
        %v5571 = vunpack.c.l.b16 %v5352
        %v5572 = vunpack.c.l.b16 %v5353
        %v5573 = vunpack.c.h.b16 %v5353
        %v5574 = vunpack.c.l.b16 %v5354
        %v5575 = vunpack.c.l.b16 %v5355
        %v5576 = vunpack.c.h.b16 %v5355
        %v5577 = vunpack.c.l.b16 %v5356
        %v5578 = vunpack.c.l.b16 %v5357
        %v5579 = vunpack.c.h.b16 %v5357
        %v5580 = vunpack.c.l.b16 %v5358
        %v5581 = vunpack.c.l.b16 %v5359
        %v5582 = vunpack.c.h.b16 %v5359
        %v5583 = vunpack.c.l.b16 %v5360
        %v5584 = vunpack.c.l.b16 %v5361
        %v5585 = vunpack.c.h.b16 %v5361
        %v5586 = vunpack.c.l.b16 %v5362
        %v5587 = vunpack.c.l.b16 %v5363
        %v5588 = vunpack.c.h.b16 %v5363
        %v5589 = vunpack.c.l.b16 %v5364
        %v5590 = vunpack.c.l.b16 %v5365
        %v5591 = vunpack.c.h.b16 %v5365
        %v5592 = vunpack.c.l.b16 %v5366
        %v5593 = vunpack.c.l.b16 %v5367
        %v5594 = vunpack.c.h.b16 %v5367
        %v5595 = vunpack.c.l.b16 %v5368
        %v5596 = vunpack.c.l.b16 %v5369
        %v5597 = vunpack.c.h.b16 %v5369
        %v5598 = vunpack.c.l.b16 %v5370
        %v5599 = vunpack.c.l.b16 %v5371
        %v5600 = vunpack.c.h.b16 %v5371
        %v5601 = vunpack.c.l.b16 %v5372
        %v5602 = vunpack.c.l.b16 %v5373
        %v5603 = vunpack.c.h.b16 %v5373
        %v5604 = vunpack.c.l.b16 %v5374
        %v5605 = vunpack.c.l.b16 %v5375
        %v5606 = vunpack.c.h.b16 %v5375
        %v5607 = vunpack.c.l.b16 %v5376
        %v5608 = vunpack.c.l.b16 %v5377
        %v5609 = vunpack.c.h.b16 %v5377
        %v5610 = vunpack.c.l.b16 %v5378
        %v5611 = vunpack.c.l.b16 %v5379
        %v5612 = vunpack.c.h.b16 %v5379
        %v5613 = vunpack.c.l.b16 %v5380
        %v5614 = vunpack.c.l.b16 %v5381
        %v5615 = vunpack.c.h.b16 %v5381
        %v5616 = vunpack.c.l.b16 %v5382
        %v5617 = vunpack.c.l.b16 %v5383
        %v5618 = vunpack.c.h.b16 %v5383
        %v5619 = vunpack.c.l.b16 %v5384
        %v5620 = vunpack.c.l.b16 %v5385
        %v5621 = vunpack.c.h.b16 %v5385
        %v5622 = vunpack.c.l.b16 %v5386
        %v5623 = vunpack.c.l.b16 %v5387
        %v5624 = vunpack.c.h.b16 %v5387
        %v5625 = vunpack.c.l.b16 %v5388
        %v5626 = vunpack.c.l.b16 %v5389
        %v5627 = vunpack.c.h.b16 %v5389
        %v5628 = vunpack.c.l.b16 %v5390
        %v5629 = vunpack.c.l.b16 %v5391
        %v5630 = vunpack.c.h.b16 %v5391
        %v5631 = vunpack.c.l.b16 %v5392
        %v5632 = vunpack.c.l.b16 %v5393
        %v5633 = vunpack.c.h.b16 %v5393
        %v5634 = vunpack.c.l.b16 %v5394
        %v5635 = vunpack.c.l.b16 %v5395
        %v5636 = vunpack.c.h.b16 %v5395
        %v5637 = vunpack.c.l.b16 %v5396
        %v5638 = vunpack.c.l.b16 %v5397
        %v5639 = vunpack.c.h.b16 %v5397
        %v5640 = vunpack.c.l.b16 %v5398
        %v5641 = vunpack.c.l.b16 %v5399
        %v5642 = vunpack.c.h.b16 %v5399
        %v5643 = vunpack.c.l.b16 %v5400
        %v5644 = vunpack.c.l.b16 %v5401
        %v5645 = vunpack.c.h.b16 %v5401
        %v5646 = vunpack.c.l.b16 %v5402
        %v5647 = vunpack.c.l.b16 %v5403
        %v5648 = vunpack.c.h.b16 %v5403
        %v5649 = vunpack.c.l.b16 %v5404
        %v5650 = vunpack.c.l.b16 %v5405
        %v5651 = vunpack.c.h.b16 %v5405
        %v5652 = vunpack.c.l.b16 %v5406
        %v5653 = vunpack.c.l.b16 %v5407
        %v5654 = vunpack.c.h.b16 %v5407
        %v5655 = vunpack.c.l.b16 %v5408
        %v5656 = vunpack.c.l.b16 %v5409
        %v5657 = vunpack.c.h.b16 %v5409
        %v5658 = vunpack.c.l.b16 %v5410
        %v5659 = vunpack.c.l.b16 %v5411
        %v5660 = vunpack.c.h.b16 %v5411
        %v5661 = vunpack.c.l.b16 %v5412
        %v5662 = vunpack.c.l.b16 %v5413
        %v5663 = vunpack.c.h.b16 %v5413
        %v5664 = vunpack.c.l.b16 %v5414
        %v5665 = vunpack.c.l.b16 %v5415
        %v5666 = vunpack.c.h.b16 %v5415
        %v5667 = vunpack.c.l.b16 %v5416
        %v5668 = vunpack.c.l.b16 %v5417
        %v5669 = vunpack.c.h.b16 %v5417
        %v5670 = vunpack.c.l.b16 %v5418
        %v5671 = vunpack.c.l.b16 %v5419
        %v5672 = vunpack.c.h.b16 %v5419
        %v5673 = vunpack.c.l.b16 %v5420
        %v5674 = vunpack.c.l.b16 %v5421
        %v5675 = vunpack.c.h.b16 %v5421
        %v5676 = vunpack.c.l.b16 %v5422
        %v5677 = vunpack.c.l.b16 %v5423
        %v5678 = vunpack.c.h.b16 %v5423
        %v5679 = vunpack.c.l.b16 %v5424
        %v5680 = vunpack.c.l.b16 %v5425
        %v5681 = vunpack.c.h.b16 %v5425
        %v5682 = vunpack.c.l.b16 %v5426
        %v5683 = vunpack.c.l.b16 %v5427
        %v5684 = vunpack.c.h.b16 %v5427
        %v5685 = vunpack.c.l.b16 %v5428
        %v5686 = vpack.c.b16 %v5545, %v5542
        %v5687 = vpack.c.b16 %v5546, %v5543
        %v5688 = vpack.c.b16 %v5547, %v5544
        %v5689 = vpack.c.b16 %v5551, %v5548
        %v5690 = vpack.c.b16 %v5552, %v5549
        %v5691 = vpack.c.b16 %v5553, %v5550
        %v5692 = vpack.c.b16 %v5557, %v5554
        %v5693 = vpack.c.b16 %v5558, %v5555
        %v5694 = vpack.c.b16 %v5559, %v5556
        %v5695 = vpack.c.b16 %v5563, %v5560
        %v5696 = vpack.c.b16 %v5564, %v5561
        %v5697 = vpack.c.b16 %v5565, %v5562
        %v5698 = vpack.c.b16 %v5569, %v5566
        %v5699 = vpack.c.b16 %v5570, %v5567
        %v5700 = vpack.c.b16 %v5571, %v5568
        %v5701 = vpack.c.b16 %v5575, %v5572
        %v5702 = vpack.c.b16 %v5576, %v5573
        %v5703 = vpack.c.b16 %v5577, %v5574
        %v5704 = vpack.c.b16 %v5581, %v5578
        %v5705 = vpack.c.b16 %v5582, %v5579
        %v5706 = vpack.c.b16 %v5583, %v5580
        %v5707 = vpack.c.b16 %v5587, %v5584
        %v5708 = vpack.c.b16 %v5588, %v5585
        %v5709 = vpack.c.b16 %v5589, %v5586
        %v5710 = vpack.c.b16 %v5593, %v5590
        %v5711 = vpack.c.b16 %v5594, %v5591
        %v5712 = vpack.c.b16 %v5595, %v5592
        %v5713 = vpack.c.b16 %v5599, %v5596
        %v5714 = vpack.c.b16 %v5600, %v5597
        %v5715 = vpack.c.b16 %v5601, %v5598
        %v5716 = vpack.c.b16 %v5605, %v5602
        %v5717 = vpack.c.b16 %v5606, %v5603
        %v5718 = vpack.c.b16 %v5607, %v5604
        %v5719 = vpack.c.b16 %v5611, %v5608
        %v5720 = vpack.c.b16 %v5612, %v5609
        %v5721 = vpack.c.b16 %v5613, %v5610
        %v5722 = vpack.c.b16 %v5617, %v5614
        %v5723 = vpack.c.b16 %v5618, %v5615
        %v5724 = vpack.c.b16 %v5619, %v5616
        %v5725 = vpack.c.b16 %v5623, %v5620
        %v5726 = vpack.c.b16 %v5624, %v5621
        %v5727 = vpack.c.b16 %v5625, %v5622
        %v5728 = vpack.c.b16 %v5629, %v5626
        %v5729 = vpack.c.b16 %v5630, %v5627
        %v5730 = vpack.c.b16 %v5631, %v5628
        %v5731 = vpack.c.b16 %v5635, %v5632
        %v5732 = vpack.c.b16 %v5636, %v5633
        %v5733 = vpack.c.b16 %v5637, %v5634
        %v5734 = vpack.c.b16 %v5641, %v5638
        %v5735 = vpack.c.b16 %v5642, %v5639
        %v5736 = vpack.c.b16 %v5643, %v5640
        %v5737 = vpack.c.b16 %v5647, %v5644
        %v5738 = vpack.c.b16 %v5648, %v5645
        %v5739 = vpack.c.b16 %v5649, %v5646
        %v5740 = vpack.c.b16 %v5653, %v5650
        %v5741 = vpack.c.b16 %v5654, %v5651
        %v5742 = vpack.c.b16 %v5655, %v5652
        %v5743 = vpack.c.b16 %v5659, %v5656
        %v5744 = vpack.c.b16 %v5660, %v5657
        %v5745 = vpack.c.b16 %v5661, %v5658
        %v5746 = vpack.c.b16 %v5665, %v5662
        %v5747 = vpack.c.b16 %v5666, %v5663
        %v5748 = vpack.c.b16 %v5667, %v5664
        %v5749 = vpack.c.b16 %v5671, %v5668
        %v5750 = vpack.c.b16 %v5672, %v5669
        %v5751 = vpack.c.b16 %v5673, %v5670
        %v5752 = vpack.c.b16 %v5677, %v5674
        %v5753 = vpack.c.b16 %v5678, %v5675
        %v5754 = vpack.c.b16 %v5679, %v5676
        %v5755 = vpack.c.b16 %v5683, %v5680
        %v5756 = vpack.c.b16 %v5684, %v5681
        %v5757 = vpack.c.b16 %v5685, %v5682
        %5830 = vmatprep.subr.bf16.mxu0 %v5687
        %5831 = vmatpush1.bf16.msra.mxu0 %v5686
        %5832 = vmatprep.subr.bf16.mxu0 %v5690
        %5833 = vmatpush1.bf16.msra.mxu0 %v5689
        %5834 = vmatprep.subr.bf16.mxu0 %v5693
        %5835 = vmatpush1.bf16.msra.mxu0 %v5692
        %5836 = vmatprep.subr.bf16.mxu0 %v5696
        %5837 = vmatpush1.bf16.msra.mxu0 %v5695
        %5838 = vmatprep.subr.bf16.mxu0 %v5699
        %5839 = vmatpush1.bf16.msra.mxu0 %v5698
        %5840 = vmatprep.subr.bf16.mxu0 %v5702
        %5841 = vmatpush1.bf16.msra.mxu0 %v5701
        %5842 = vmatprep.subr.bf16.mxu0 %v5705
        %5843 = vmatpush1.bf16.msra.mxu0 %v5704
        %5844 = vmatprep.subr.bf16.mxu0 %v5708
        %5845 = vmatpush1.bf16.msra.mxu0 %v5707
        %5846 = vmatprep.subr.bf16.mxu0 %v5711
        %5847 = vmatpush1.bf16.msra.mxu0 %v5710
        %5848 = vmatprep.subr.bf16.mxu0 %v5714
        %5849 = vmatpush1.bf16.msra.mxu0 %v5713
        %5850 = vmatprep.subr.bf16.mxu0 %v5717
        %5851 = vmatpush1.bf16.msra.mxu0 %v5716
        %5852 = vmatprep.subr.bf16.mxu0 %v5720
        %5853 = vmatpush1.bf16.msra.mxu0 %v5719
        %5854 = vmatprep.subr.bf16.mxu0 %v5723
        %5855 = vmatpush1.bf16.msra.mxu0 %v5722
        %5856 = vmatprep.subr.bf16.mxu0 %v5726
        %5857 = vmatpush1.bf16.msra.mxu0 %v5725
        %5858 = vmatprep.subr.bf16.mxu0 %v5729
        %5859 = vmatpush1.bf16.msra.mxu0 %v5728
        %5860 = vmatprep.subr.bf16.mxu0 %v5732
        %5861 = vmatpush1.bf16.msra.mxu0 %v5731
        %5862 = vmatprep.mubr.bf16.mxu0 %v5286
        %5863 = vmatmul.mubr.bf16.gmra.mrb[0].mxu0 %v5285
        %v5864 = vpop.f32.mrb[0].mxu0
        %v5865 = vadd.f32 %v5434, %v5864
        %v5866 = vpop.f32.mrb[0].mxu0
        %v5867 = vadd.f32 %v5438, %v5866
        %v5868 = vpop.f32.mrb[0].mxu0
        %v5869 = vadd.f32 %v5434, %v5868
        %v5870 = vpop.f32.mrb[0].mxu0
        %v5871 = vadd.f32 %v5438, %v5870
        %5872 = vmatprep.mubr.bf16.mxu0 %v5289
        %5873 = vmatmul.mubr.bf16.gmra.mrb[0].mxu0 %v5288
        %v5874 = vpop.f32.mrb[0].mxu0
        %v5875 = vadd.f32 %v5434, %v5874
        %v5876 = vpop.f32.mrb[0].mxu0
        %v5877 = vadd.f32 %v5438, %v5876
        %v5878 = vpop.f32.mrb[0].mxu0
        %v5879 = vadd.f32 %v5434, %v5878
        %v5880 = vpop.f32.mrb[0].mxu0
        %v5881 = vadd.f32 %v5438, %v5880
        %5882 = vmatprep.mubr.bf16.mxu0 %v5292
        %5883 = vmatmul.mubr.bf16.gmra.mrb[0].mxu0 %v5291
        %v5884 = vpop.f32.mrb[0].mxu0
        %v5885 = vadd.f32 %v5434, %v5884
        %v5886 = vpop.f32.mrb[0].mxu0
        %v5887 = vadd.f32 %v5438, %v5886
        %v5888 = vpop.f32.mrb[0].mxu0
        %v5889 = vadd.f32 %v5434, %v5888
        %v5890 = vpop.f32.mrb[0].mxu0
        %v5891 = vadd.f32 %v5438, %v5890
        %5892 = vmatprep.mubr.bf16.mxu0 %v5295
        %5893 = vmatmul.mubr.bf16.gmra.mrb[0].mxu0 %v5294
        %v5894 = vpop.f32.mrb[0].mxu0
        %v5895 = vadd.f32 %v5434, %v5894
        %v5896 = vpop.f32.mrb[0].mxu0
        %v5897 = vadd.f32 %v5438, %v5896
        %v5898 = vpop.f32.mrb[0].mxu0
        %v5899 = vadd.f32 %v5434, %v5898
        %v5900 = vpop.f32.mrb[0].mxu0
        %v5901 = vadd.f32 %v5438, %v5900
        %5902 = vmatprep.mubr.bf16.mxu0 %v5298
        %5903 = vmatmul.mubr.bf16.gmra.mrb[0].mxu0 %v5297
        %v5904 = vpop.f32.mrb[0].mxu0
        %v5905 = vadd.f32 %v5434, %v5904
        %v5906 = vpop.f32.mrb[0].mxu0
        %v5907 = vadd.f32 %v5438, %v5906
        %v5908 = vpop.f32.mrb[0].mxu0
        %v5909 = vadd.f32 %v5434, %v5908
        %v5910 = vpop.f32.mrb[0].mxu0
        %v5911 = vadd.f32 %v5438, %v5910
        %5912 = vmatprep.mubr.bf16.mxu0 %v5301
        %5913 = vmatmul.mubr.bf16.gmra.mrb[0].mxu0 %v5300
        %v5914 = vpop.f32.mrb[0].mxu0
        %v5915 = vadd.f32 %v5434, %v5914
        %v5916 = vpop.f32.mrb[0].mxu0
        %v5917 = vadd.f32 %v5438, %v5916
        %v5918 = vpop.f32.mrb[0].mxu0
        %v5919 = vadd.f32 %v5434, %v5918
        %v5920 = vpop.f32.mrb[0].mxu0
        %v5921 = vadd.f32 %v5438, %v5920
        %5922 = vmatprep.mubr.bf16.mxu0 %v5304
        %5923 = vmatmul.mubr.bf16.gmra.mrb[0].mxu0 %v5303
        %v5924 = vpop.f32.mrb[0].mxu0
        %v5925 = vadd.f32 %v5434, %v5924
        %v5926 = vpop.f32.mrb[0].mxu0
        %v5927 = vadd.f32 %v5438, %v5926
        %v5928 = vpop.f32.mrb[0].mxu0
        %v5929 = vadd.f32 %v5434, %v5928
        %v5930 = vpop.f32.mrb[0].mxu0
        %v5931 = vadd.f32 %v5438, %v5930
        %5932 = vmatprep.mubr.bf16.mxu0 %v5307
        %5933 = vmatmul.mubr.bf16.gmra.mrb[0].mxu0 %v5306
        %v5934 = vpop.f32.mrb[0].mxu0
        %v5935 = vadd.f32 %v5434, %v5934
        %v5936 = vpop.f32.mrb[0].mxu0
        %v5937 = vadd.f32 %v5438, %v5936
        %v5938 = vpop.f32.mrb[0].mxu0
        %v5939 = vadd.f32 %v5434, %v5938
        %v5940 = vpop.f32.mrb[0].mxu0
        %v5941 = vadd.f32 %v5438, %v5940
        %5942 = vmatprep.mubr.bf16.mxu0 %v5310
        %5943 = vmatmul.mubr.bf16.gmra.mrb[0].mxu0 %v5309
        %v5944 = vpop.f32.mrb[0].mxu0
        %v5945 = vadd.f32 %v5434, %v5944
        %v5946 = vpop.f32.mrb[0].mxu0
        %v5947 = vadd.f32 %v5438, %v5946
        %v5948 = vpop.f32.mrb[0].mxu0
        %v5949 = vadd.f32 %v5434, %v5948
        %v5950 = vpop.f32.mrb[0].mxu0
        %v5951 = vadd.f32 %v5438, %v5950
        %5952 = vmatprep.mubr.bf16.mxu0 %v5313
        %5953 = vmatmul.mubr.bf16.gmra.mrb[0].mxu0 %v5312
        %v5954 = vpop.f32.mrb[0].mxu0
        %v5955 = vadd.f32 %v5434, %v5954
        %v5956 = vpop.f32.mrb[0].mxu0
        %v5957 = vadd.f32 %v5438, %v5956
        %v5958 = vpop.f32.mrb[0].mxu0
        %v5959 = vadd.f32 %v5434, %v5958
        %v5960 = vpop.f32.mrb[0].mxu0
        %v5961 = vadd.f32 %v5438, %v5960
        %5962 = vmatprep.mubr.bf16.mxu0 %v5316
        %5963 = vmatmul.mubr.bf16.gmra.mrb[0].mxu0 %v5315
        %v5964 = vpop.f32.mrb[0].mxu0
        %v5965 = vadd.f32 %v5434, %v5964
        %v5966 = vpop.f32.mrb[0].mxu0
        %v5967 = vadd.f32 %v5438, %v5966
        %v5968 = vpop.f32.mrb[0].mxu0
        %v5969 = vadd.f32 %v5434, %v5968
        %v5970 = vpop.f32.mrb[0].mxu0
        %v5971 = vadd.f32 %v5438, %v5970
        %5972 = vmatprep.mubr.bf16.mxu0 %v5319
        %5973 = vmatmul.mubr.bf16.gmra.mrb[0].mxu0 %v5318
        %v5974 = vpop.f32.mrb[0].mxu0
        %v5975 = vadd.f32 %v5434, %v5974
        %v5976 = vpop.f32.mrb[0].mxu0
        %v5977 = vadd.f32 %v5438, %v5976
        %v5978 = vpop.f32.mrb[0].mxu0
        %v5979 = vadd.f32 %v5434, %v5978
        %v5980 = vpop.f32.mrb[0].mxu0
        %v5981 = vadd.f32 %v5438, %v5980
        %5982 = vmatprep.mubr.bf16.mxu0 %v5322
        %5983 = vmatmul.mubr.bf16.gmra.mrb[0].mxu0 %v5321
        %v5984 = vpop.f32.mrb[0].mxu0
        %v5985 = vadd.f32 %v5434, %v5984
        %v5986 = vpop.f32.mrb[0].mxu0
        %v5987 = vadd.f32 %v5438, %v5986
        %v5988 = vpop.f32.mrb[0].mxu0
        %v5989 = vadd.f32 %v5434, %v5988
        %v5990 = vpop.f32.mrb[0].mxu0
        %v5991 = vadd.f32 %v5438, %v5990
        %5992 = vmatprep.mubr.bf16.mxu0 %v5325
        %5993 = vmatmul.mubr.bf16.gmra.mrb[0].mxu0 %v5324
        %v5994 = vpop.f32.mrb[0].mxu0
        %v5995 = vadd.f32 %v5434, %v5994
        %v5996 = vpop.f32.mrb[0].mxu0
        %v5997 = vadd.f32 %v5438, %v5996
        %v5998 = vpop.f32.mrb[0].mxu0
        %v5999 = vadd.f32 %v5434, %v5998
        %v6000 = vpop.f32.mrb[0].mxu0
        %v6001 = vadd.f32 %v5438, %v6000
        %6002 = vmatprep.mubr.bf16.mxu0 %v5328
        %6003 = vmatmul.mubr.bf16.gmra.mrb[0].mxu0 %v5327
        %v6004 = vpop.f32.mrb[0].mxu0
        %v6005 = vadd.f32 %v5434, %v6004
        %v6006 = vpop.f32.mrb[0].mxu0
        %v6007 = vadd.f32 %v5438, %v6006
        %v6008 = vpop.f32.mrb[0].mxu0
        %v6009 = vadd.f32 %v5434, %v6008
        %v6010 = vpop.f32.mrb[0].mxu0
        %v6011 = vadd.f32 %v5438, %v6010
        %6012 = vmatprep.mubr.bf16.mxu0 %v5331
        %6013 = vmatmul.mubr.bf16.gmra.mrb[0].mxu0 %v5330
        %v6014 = vpop.f32.mrb[0].mxu0
        %v6015 = vadd.f32 %v5434, %v6014
        %v6016 = vpop.f32.mrb[0].mxu0
        %v6017 = vadd.f32 %v5438, %v6016
        %v6018 = vpop.f32.mrb[0].mxu0
        %v6019 = vadd.f32 %v5434, %v6018
        %v6020 = vpop.f32.mrb[0].mxu0
        %v6021 = vadd.f32 %v5438, %v6020
        %6022 = vdwg.mxu0
        %6023 = vmatprep.subr.bf16.mxu0 %v5735
        %6024 = vmatpush1.bf16.msra.mxu0 %v5734
        %6025 = vmatprep.subr.bf16.mxu0 %v5738
        %6026 = vmatpush1.bf16.msra.mxu0 %v5737
        %6027 = vmatprep.subr.bf16.mxu0 %v5741
        %6028 = vmatpush1.bf16.msra.mxu0 %v5740
        %6029 = vmatprep.subr.bf16.mxu0 %v5744
        %6030 = vmatpush1.bf16.msra.mxu0 %v5743
        %6031 = vmatprep.subr.bf16.mxu0 %v5747
        %6032 = vmatpush1.bf16.msra.mxu0 %v5746
        %6033 = vmatprep.subr.bf16.mxu0 %v5750
        %6034 = vmatpush1.bf16.msra.mxu0 %v5749
        %6035 = vmatprep.subr.bf16.mxu0 %v5753
        %6036 = vmatpush1.bf16.msra.mxu0 %v5752
        %6037 = vmatprep.subr.bf16.mxu0 %v5756
        %6038 = vmatpush1.bf16.msra.mxu0 %v5755
        %6039 = vmatprep.subr.bf16.mxu0 0
        %6040 = vmatpush1.bf16.msra.mxu0 0
        %6041 = vmatprep.subr.bf16.mxu0 0
        %6042 = vmatpush1.bf16.msra.mxu0 0
        %6043 = vmatprep.subr.bf16.mxu0 0
        %6044 = vmatpush1.bf16.msra.mxu0 0
        %6045 = vmatprep.subr.bf16.mxu0 0
        %6046 = vmatpush1.bf16.msra.mxu0 0
        %6047 = vmatprep.subr.bf16.mxu0 0
        %6048 = vmatpush1.bf16.msra.mxu0 0
        %6049 = vmatprep.subr.bf16.mxu0 0
        %6050 = vmatpush1.bf16.msra.mxu0 0
        %6051 = vmatprep.subr.bf16.mxu0 0
        %6052 = vmatpush1.bf16.msra.mxu0 0
        %6053 = vmatprep.subr.bf16.mxu0 0
        %6054 = vmatpush1.bf16.msra.mxu0 0
        %6055 = vmatprep.mubr.bf16.mxu0 0
        %6056 = vmatmul.mubr.bf16.gmra.mrb[0].mxu0 %v5287
        %v6057 = vpop.f32.mrb[0].mxu0
        %v6058 = vadd.f32 %v5865, %v6057
        %v6059 = vpop.f32.mrb[0].mxu0
        %v6060 = vadd.f32 %v5867, %v6059
        %v6061 = vpop.f32.mrb[0].mxu0
        %v6062 = vadd.f32 %v5869, %v6061
        %v6063 = vpop.f32.mrb[0].mxu0
        %v6064 = vadd.f32 %v5871, %v6063
        %6065 = vmatprep.mubr.bf16.mxu0 0
        %6066 = vmatmul.mubr.bf16.gmra.mrb[0].mxu0 %v5290
        %v6067 = vpop.f32.mrb[0].mxu0
        %v6068 = vadd.f32 %v5875, %v6067
        %v6069 = vpop.f32.mrb[0].mxu0
        %v6070 = vadd.f32 %v5877, %v6069
        %v6071 = vpop.f32.mrb[0].mxu0
        %v6072 = vadd.f32 %v5879, %v6071
        %v6073 = vpop.f32.mrb[0].mxu0
        %v6074 = vadd.f32 %v5881, %v6073
        %6075 = vmatprep.mubr.bf16.mxu0 0
        %6076 = vmatmul.mubr.bf16.gmra.mrb[0].mxu0 %v5293
        %v6077 = vpop.f32.mrb[0].mxu0
        %v6078 = vadd.f32 %v5885, %v6077
        %v6079 = vpop.f32.mrb[0].mxu0
        %v6080 = vadd.f32 %v5887, %v6079
        %v6081 = vpop.f32.mrb[0].mxu0
        %v6082 = vadd.f32 %v5889, %v6081
        %v6083 = vpop.f32.mrb[0].mxu0
        %v6084 = vadd.f32 %v5891, %v6083
        %6085 = vmatprep.mubr.bf16.mxu0 0
        %6086 = vmatmul.mubr.bf16.gmra.mrb[0].mxu0 %v5296
        %v6087 = vpop.f32.mrb[0].mxu0
        %v6088 = vadd.f32 %v5895, %v6087
        %v6089 = vpop.f32.mrb[0].mxu0
        %v6090 = vadd.f32 %v5897, %v6089
        %v6091 = vpop.f32.mrb[0].mxu0
        %v6092 = vadd.f32 %v5899, %v6091
        %v6093 = vpop.f32.mrb[0].mxu0
        %v6094 = vadd.f32 %v5901, %v6093
        %6095 = vmatprep.mubr.bf16.mxu0 0
        %6096 = vmatmul.mubr.bf16.gmra.mrb[0].mxu0 %v5299
        %v6097 = vpop.f32.mrb[0].mxu0
        %v6098 = vadd.f32 %v5905, %v6097
        %v6099 = vpop.f32.mrb[0].mxu0
        %v6100 = vadd.f32 %v5907, %v6099
        %v6101 = vpop.f32.mrb[0].mxu0
        %v6102 = vadd.f32 %v5909, %v6101
        %v6103 = vpop.f32.mrb[0].mxu0
        %v6104 = vadd.f32 %v5911, %v6103
        %6105 = vmatprep.mubr.bf16.mxu0 0
        %6106 = vmatmul.mubr.bf16.gmra.mrb[0].mxu0 %v5302
        %v6107 = vpop.f32.mrb[0].mxu0
        %v6108 = vadd.f32 %v5915, %v6107
        %v6109 = vpop.f32.mrb[0].mxu0
        %v6110 = vadd.f32 %v5917, %v6109
        %v6111 = vpop.f32.mrb[0].mxu0
        %v6112 = vadd.f32 %v5919, %v6111
        %v6113 = vpop.f32.mrb[0].mxu0
        %v6114 = vadd.f32 %v5921, %v6113
        %6115 = vmatprep.mubr.bf16.mxu0 0
        %6116 = vmatmul.mubr.bf16.gmra.mrb[0].mxu0 %v5305
        %v6117 = vpop.f32.mrb[0].mxu0
        %v6118 = vadd.f32 %v5925, %v6117
        %v6119 = vpop.f32.mrb[0].mxu0
        %v6120 = vadd.f32 %v5927, %v6119
        %v6121 = vpop.f32.mrb[0].mxu0
        %v6122 = vadd.f32 %v5929, %v6121
        %v6123 = vpop.f32.mrb[0].mxu0
        %v6124 = vadd.f32 %v5931, %v6123
        %6125 = vmatprep.mubr.bf16.mxu0 0
        %6126 = vmatmul.mubr.bf16.gmra.mrb[0].mxu0 %v5308
        %v6127 = vpop.f32.mrb[0].mxu0
        %v6128 = vadd.f32 %v5935, %v6127
        %v6129 = vpop.f32.mrb[0].mxu0
        %v6130 = vadd.f32 %v5937, %v6129
        %v6131 = vpop.f32.mrb[0].mxu0
        %v6132 = vadd.f32 %v5939, %v6131
        %v6133 = vpop.f32.mrb[0].mxu0
        %v6134 = vadd.f32 %v5941, %v6133
        %6135 = vmatprep.mubr.bf16.mxu0 0
        %6136 = vmatmul.mubr.bf16.gmra.mrb[0].mxu0 %v5311
        %v6137 = vpop.f32.mrb[0].mxu0
        %v6138 = vadd.f32 %v5945, %v6137
        %v6139 = vpop.f32.mrb[0].mxu0
        %v6140 = vadd.f32 %v5947, %v6139
        %v6141 = vpop.f32.mrb[0].mxu0
        %v6142 = vadd.f32 %v5949, %v6141
        %v6143 = vpop.f32.mrb[0].mxu0
        %v6144 = vadd.f32 %v5951, %v6143
        %6145 = vmatprep.mubr.bf16.mxu0 0
        %6146 = vmatmul.mubr.bf16.gmra.mrb[0].mxu0 %v5314
        %v6147 = vpop.f32.mrb[0].mxu0
        %v6148 = vadd.f32 %v5955, %v6147
        %v6149 = vpop.f32.mrb[0].mxu0
        %v6150 = vadd.f32 %v5957, %v6149
        %v6151 = vpop.f32.mrb[0].mxu0
        %v6152 = vadd.f32 %v5959, %v6151
        %v6153 = vpop.f32.mrb[0].mxu0
        %v6154 = vadd.f32 %v5961, %v6153
        %6155 = vmatprep.mubr.bf16.mxu0 0
        %6156 = vmatmul.mubr.bf16.gmra.mrb[0].mxu0 %v5317
        %v6157 = vpop.f32.mrb[0].mxu0
        %v6158 = vadd.f32 %v5965, %v6157
        %v6159 = vpop.f32.mrb[0].mxu0
        %v6160 = vadd.f32 %v5967, %v6159
        %v6161 = vpop.f32.mrb[0].mxu0
        %v6162 = vadd.f32 %v5969, %v6161
        %v6163 = vpop.f32.mrb[0].mxu0
        %v6164 = vadd.f32 %v5971, %v6163
        %6165 = vmatprep.mubr.bf16.mxu0 0
        %6166 = vmatmul.mubr.bf16.gmra.mrb[0].mxu0 %v5320
        %v6167 = vpop.f32.mrb[0].mxu0
        %v6168 = vadd.f32 %v5975, %v6167
        %v6169 = vpop.f32.mrb[0].mxu0
        %v6170 = vadd.f32 %v5977, %v6169
        %v6171 = vpop.f32.mrb[0].mxu0
        %v6172 = vadd.f32 %v5979, %v6171
        %v6173 = vpop.f32.mrb[0].mxu0
        %v6174 = vadd.f32 %v5981, %v6173
        %6175 = vmatprep.mubr.bf16.mxu0 0
        %6176 = vmatmul.mubr.bf16.gmra.mrb[0].mxu0 %v5323
        %v6177 = vpop.f32.mrb[0].mxu0
        %v6178 = vadd.f32 %v5985, %v6177
        %v6179 = vpop.f32.mrb[0].mxu0
        %v6180 = vadd.f32 %v5987, %v6179
        %v6181 = vpop.f32.mrb[0].mxu0
        %v6182 = vadd.f32 %v5989, %v6181
        %v6183 = vpop.f32.mrb[0].mxu0
        %v6184 = vadd.f32 %v5991, %v6183
        %6185 = vmatprep.mubr.bf16.mxu0 0
        %6186 = vmatmul.mubr.bf16.gmra.mrb[0].mxu0 %v5326
        %v6187 = vpop.f32.mrb[0].mxu0
        %v6188 = vadd.f32 %v5995, %v6187
        %v6189 = vpop.f32.mrb[0].mxu0
        %v6190 = vadd.f32 %v5997, %v6189
        %v6191 = vpop.f32.mrb[0].mxu0
        %v6192 = vadd.f32 %v5999, %v6191
        %v6193 = vpop.f32.mrb[0].mxu0
        %v6194 = vadd.f32 %v6001, %v6193
        %6195 = vmatprep.mubr.bf16.mxu0 0
        %6196 = vmatmul.mubr.bf16.gmra.mrb[0].mxu0 %v5329
        %v6197 = vpop.f32.mrb[0].mxu0
        %v6198 = vadd.f32 %v6005, %v6197
        %v6199 = vpop.f32.mrb[0].mxu0
        %v6200 = vadd.f32 %v6007, %v6199
        %v6201 = vpop.f32.mrb[0].mxu0
        %v6202 = vadd.f32 %v6009, %v6201
        %v6203 = vpop.f32.mrb[0].mxu0
        %v6204 = vadd.f32 %v6011, %v6203
        %6205 = vmatprep.mubr.bf16.mxu0 0
        %6206 = vmatmul.mubr.bf16.gmra.mrb[0].mxu0 %v5332
        %v6207 = vpop.f32.mrb[0].mxu0
        %v6208 = vadd.f32 %v6015, %v6207
        %v6209 = vpop.f32.mrb[0].mxu0
        %v6210 = vadd.f32 %v6017, %v6209
        %v6211 = vpop.f32.mrb[0].mxu0
        %v6212 = vadd.f32 %v6019, %v6211
        %v6213 = vpop.f32.mrb[0].mxu0
        %v6214 = vadd.f32 %v6021, %v6213
        %6215 = vdwg.mxu0
        %6216 = vmatprep.subr.bf16.mxu0 0
        %6217 = vmatpush1.bf16.msra.mxu0 %v5688
        %6218 = vmatprep.subr.bf16.mxu0 0
        %6219 = vmatpush1.bf16.msra.mxu0 %v5691
        %6220 = vmatprep.subr.bf16.mxu0 0
        %6221 = vmatpush1.bf16.msra.mxu0 %v5694
        %6222 = vmatprep.subr.bf16.mxu0 0
        %6223 = vmatpush1.bf16.msra.mxu0 %v5697
        %6224 = vmatprep.subr.bf16.mxu0 0
        %6225 = vmatpush1.bf16.msra.mxu0 %v5700
        %6226 = vmatprep.subr.bf16.mxu0 0
        %6227 = vmatpush1.bf16.msra.mxu0 %v5703
        %6228 = vmatprep.subr.bf16.mxu0 0
        %6229 = vmatpush1.bf16.msra.mxu0 %v5706
        %6230 = vmatprep.subr.bf16.mxu0 0
        %6231 = vmatpush1.bf16.msra.mxu0 %v5709
        %6232 = vmatprep.subr.bf16.mxu0 0
        %6233 = vmatpush1.bf16.msra.mxu0 %v5712
        %6234 = vmatprep.subr.bf16.mxu0 0
        %6235 = vmatpush1.bf16.msra.mxu0 %v5715
        %6236 = vmatprep.subr.bf16.mxu0 0
        %6237 = vmatpush1.bf16.msra.mxu0 %v5718
        %6238 = vmatprep.subr.bf16.mxu0 0
        %6239 = vmatpush1.bf16.msra.mxu0 %v5721
        %6240 = vmatprep.subr.bf16.mxu0 0
        %6241 = vmatpush1.bf16.msra.mxu0 %v5724
        %6242 = vmatprep.subr.bf16.mxu0 0
        %6243 = vmatpush1.bf16.msra.mxu0 %v5727
        %6244 = vmatprep.subr.bf16.mxu0 0
        %6245 = vmatpush1.bf16.msra.mxu0 %v5730
        %6246 = vmatprep.subr.bf16.mxu0 0
        %6247 = vmatpush1.bf16.msra.mxu0 %v5733
        %6248 = vmatprep.mubr.bf16.mxu0 %v5286
        %6249 = vmatmul.mubr.bf16.gmra.mrb[0].mxu0 %v5285
        %v6250 = vpop.f32.mrb[0].mxu0
        %v6251 = vadd.f32 %v5442, %v6250
        %v6252 = vpop.f32.mrb[0].mxu0
        %v6253 = vpop.f32.mrb[0].mxu0
        %v6254 = vadd.f32 %v5442, %v6253
        %v6255 = vpop.f32.mrb[0].mxu0
        %6256 = vmatprep.mubr.bf16.mxu0 %v5289
        %6257 = vmatmul.mubr.bf16.gmra.mrb[0].mxu0 %v5288
        %v6258 = vpop.f32.mrb[0].mxu0
        %v6259 = vadd.f32 %v5442, %v6258
        %v6260 = vpop.f32.mrb[0].mxu0
        %v6261 = vpop.f32.mrb[0].mxu0
        %v6262 = vadd.f32 %v5442, %v6261
        %v6263 = vpop.f32.mrb[0].mxu0
        %6264 = vmatprep.mubr.bf16.mxu0 %v5292
        %6265 = vmatmul.mubr.bf16.gmra.mrb[0].mxu0 %v5291
        %v6266 = vpop.f32.mrb[0].mxu0
        %v6267 = vadd.f32 %v5442, %v6266
        %v6268 = vpop.f32.mrb[0].mxu0
        %v6269 = vpop.f32.mrb[0].mxu0
        %v6270 = vadd.f32 %v5442, %v6269
        %v6271 = vpop.f32.mrb[0].mxu0
        %6272 = vmatprep.mubr.bf16.mxu0 %v5295
        %6273 = vmatmul.mubr.bf16.gmra.mrb[0].mxu0 %v5294
        %v6274 = vpop.f32.mrb[0].mxu0
        %v6275 = vadd.f32 %v5442, %v6274
        %v6276 = vpop.f32.mrb[0].mxu0
        %v6277 = vpop.f32.mrb[0].mxu0
        %v6278 = vadd.f32 %v5442, %v6277
        %v6279 = vpop.f32.mrb[0].mxu0
        %6280 = vmatprep.mubr.bf16.mxu0 %v5298
        %6281 = vmatmul.mubr.bf16.gmra.mrb[0].mxu0 %v5297
        %v6282 = vpop.f32.mrb[0].mxu0
        %v6283 = vadd.f32 %v5442, %v6282
        %v6284 = vpop.f32.mrb[0].mxu0
        %v6285 = vpop.f32.mrb[0].mxu0
        %v6286 = vadd.f32 %v5442, %v6285
        %v6287 = vpop.f32.mrb[0].mxu0
        %6288 = vmatprep.mubr.bf16.mxu0 %v5301
        %6289 = vmatmul.mubr.bf16.gmra.mrb[0].mxu0 %v5300
        %v6290 = vpop.f32.mrb[0].mxu0
        %v6291 = vadd.f32 %v5442, %v6290
        %v6292 = vpop.f32.mrb[0].mxu0
        %v6293 = vpop.f32.mrb[0].mxu0
        %v6294 = vadd.f32 %v5442, %v6293
        %v6295 = vpop.f32.mrb[0].mxu0
        %6296 = vmatprep.mubr.bf16.mxu0 %v5304
        %6297 = vmatmul.mubr.bf16.gmra.mrb[0].mxu0 %v5303
        %v6298 = vpop.f32.mrb[0].mxu0
        %v6299 = vadd.f32 %v5442, %v6298
        %v6300 = vpop.f32.mrb[0].mxu0
        %v6301 = vpop.f32.mrb[0].mxu0
        %v6302 = vadd.f32 %v5442, %v6301
        %v6303 = vpop.f32.mrb[0].mxu0
        %6304 = vmatprep.mubr.bf16.mxu0 %v5307
        %6305 = vmatmul.mubr.bf16.gmra.mrb[0].mxu0 %v5306
        %v6306 = vpop.f32.mrb[0].mxu0
        %v6307 = vadd.f32 %v5442, %v6306
        %v6308 = vpop.f32.mrb[0].mxu0
        %v6309 = vpop.f32.mrb[0].mxu0
        %v6310 = vadd.f32 %v5442, %v6309
        %v6311 = vpop.f32.mrb[0].mxu0
        %6312 = vmatprep.mubr.bf16.mxu0 %v5310
        %6313 = vmatmul.mubr.bf16.gmra.mrb[0].mxu0 %v5309
        %v6314 = vpop.f32.mrb[0].mxu0
        %v6315 = vadd.f32 %v5442, %v6314
        %v6316 = vpop.f32.mrb[0].mxu0
        %v6317 = vpop.f32.mrb[0].mxu0
        %v6318 = vadd.f32 %v5442, %v6317
        %v6319 = vpop.f32.mrb[0].mxu0
        %6320 = vmatprep.mubr.bf16.mxu0 %v5313
        %6321 = vmatmul.mubr.bf16.gmra.mrb[0].mxu0 %v5312
        %v6322 = vpop.f32.mrb[0].mxu0
        %v6323 = vadd.f32 %v5442, %v6322
        %v6324 = vpop.f32.mrb[0].mxu0
        %v6325 = vpop.f32.mrb[0].mxu0
        %v6326 = vadd.f32 %v5442, %v6325
        %v6327 = vpop.f32.mrb[0].mxu0
        %6328 = vmatprep.mubr.bf16.mxu0 %v5316
        %6329 = vmatmul.mubr.bf16.gmra.mrb[0].mxu0 %v5315
        %v6330 = vpop.f32.mrb[0].mxu0
        %v6331 = vadd.f32 %v5442, %v6330
        %v6332 = vpop.f32.mrb[0].mxu0
        %v6333 = vpop.f32.mrb[0].mxu0
        %v6334 = vadd.f32 %v5442, %v6333
        %v6335 = vpop.f32.mrb[0].mxu0
        %6336 = vmatprep.mubr.bf16.mxu0 %v5319
        %6337 = vmatmul.mubr.bf16.gmra.mrb[0].mxu0 %v5318
        %v6338 = vpop.f32.mrb[0].mxu0
        %v6339 = vadd.f32 %v5442, %v6338
        %v6340 = vpop.f32.mrb[0].mxu0
        %v6341 = vpop.f32.mrb[0].mxu0
        %v6342 = vadd.f32 %v5442, %v6341
        %v6343 = vpop.f32.mrb[0].mxu0
        %6344 = vmatprep.mubr.bf16.mxu0 %v5322
        %6345 = vmatmul.mubr.bf16.gmra.mrb[0].mxu0 %v5321
        %v6346 = vpop.f32.mrb[0].mxu0
        %v6347 = vadd.f32 %v5442, %v6346
        %v6348 = vpop.f32.mrb[0].mxu0
        %v6349 = vpop.f32.mrb[0].mxu0
        %v6350 = vadd.f32 %v5442, %v6349
        %v6351 = vpop.f32.mrb[0].mxu0
        %6352 = vmatprep.mubr.bf16.mxu0 %v5325
        %6353 = vmatmul.mubr.bf16.gmra.mrb[0].mxu0 %v5324
        %v6354 = vpop.f32.mrb[0].mxu0
        %v6355 = vadd.f32 %v5442, %v6354
        %v6356 = vpop.f32.mrb[0].mxu0
        %v6357 = vpop.f32.mrb[0].mxu0
        %v6358 = vadd.f32 %v5442, %v6357
        %v6359 = vpop.f32.mrb[0].mxu0
        %6360 = vmatprep.mubr.bf16.mxu0 %v5328
        %6361 = vmatmul.mubr.bf16.gmra.mrb[0].mxu0 %v5327
        %v6362 = vpop.f32.mrb[0].mxu0
        %v6363 = vadd.f32 %v5442, %v6362
        %v6364 = vpop.f32.mrb[0].mxu0
        %v6365 = vpop.f32.mrb[0].mxu0
        %v6366 = vadd.f32 %v5442, %v6365
        %v6367 = vpop.f32.mrb[0].mxu0
        %6368 = vmatprep.mubr.bf16.mxu0 %v5331
        %6369 = vmatmul.mubr.bf16.gmra.mrb[0].mxu0 %v5330
        %v6370 = vpop.f32.mrb[0].mxu0
        %v6371 = vadd.f32 %v5442, %v6370
        %v6372 = vpop.f32.mrb[0].mxu0
        %v6373 = vpop.f32.mrb[0].mxu0
        %v6374 = vadd.f32 %v5442, %v6373
        %v6375 = vpop.f32.mrb[0].mxu0
        %6376 = vdwg.mxu0
        %6377 = vmatprep.subr.bf16.mxu0 0
        %6378 = vmatpush1.bf16.msra.mxu0 %v5736
        %6379 = vmatprep.subr.bf16.mxu0 0
        %6380 = vmatpush1.bf16.msra.mxu0 %v5739
        %6381 = vmatprep.subr.bf16.mxu0 0
        %6382 = vmatpush1.bf16.msra.mxu0 %v5742
        %6383 = vmatprep.subr.bf16.mxu0 0
        %6384 = vmatpush1.bf16.msra.mxu0 %v5745
        %6385 = vmatprep.subr.bf16.mxu0 0
        %6386 = vmatpush1.bf16.msra.mxu0 %v5748
        %6387 = vmatprep.subr.bf16.mxu0 0
        %6388 = vmatpush1.bf16.msra.mxu0 %v5751
        %6389 = vmatprep.subr.bf16.mxu0 0
        %6390 = vmatpush1.bf16.msra.mxu0 %v5754
        %6391 = vmatprep.subr.bf16.mxu0 0
        %6392 = vmatpush1.bf16.msra.mxu0 %v5757
        %6393 = vmatprep.subr.bf16.mxu0 0
        %6394 = vmatpush1.bf16.msra.mxu0 0
        %6395 = vmatprep.subr.bf16.mxu0 0
        %6396 = vmatpush1.bf16.msra.mxu0 0
        %6397 = vmatprep.subr.bf16.mxu0 0
        %6398 = vmatpush1.bf16.msra.mxu0 0
        %6399 = vmatprep.subr.bf16.mxu0 0
        %6400 = vmatpush1.bf16.msra.mxu0 0
        %6401 = vmatprep.subr.bf16.mxu0 0
        %6402 = vmatpush1.bf16.msra.mxu0 0
        %6403 = vmatprep.subr.bf16.mxu0 0
        %6404 = vmatpush1.bf16.msra.mxu0 0
        %6405 = vmatprep.subr.bf16.mxu0 0
        %6406 = vmatpush1.bf16.msra.mxu0 0
        %6407 = vmatprep.subr.bf16.mxu0 0
        %6408 = vmatpush1.bf16.msra.mxu0 0
        %6409 = vmatprep.mubr.bf16.mxu0 0
        %6410 = vmatmul.mubr.bf16.gmra.mrb[0].mxu0 %v5287
        %v6411 = vpop.f32.mrb[0].mxu0
        %v6412 = vadd.f32 %v6251, %v6411
        %v6413 = vpop.f32.mrb[0].mxu0
        %v6414 = vpop.f32.mrb[0].mxu0
        %v6415 = vadd.f32 %v6254, %v6414
        %v6416 = vpop.f32.mrb[0].mxu0
        %6417 = vmatprep.mubr.bf16.mxu0 0
        %6418 = vmatmul.mubr.bf16.gmra.mrb[0].mxu0 %v5290
        %v6419 = vpop.f32.mrb[0].mxu0
        %v6420 = vadd.f32 %v6259, %v6419
        %v6421 = vpop.f32.mrb[0].mxu0
        %v6422 = vpop.f32.mrb[0].mxu0
        %v6423 = vadd.f32 %v6262, %v6422
        %v6424 = vpop.f32.mrb[0].mxu0
        %6425 = vmatprep.mubr.bf16.mxu0 0
        %6426 = vmatmul.mubr.bf16.gmra.mrb[0].mxu0 %v5293
        %v6427 = vpop.f32.mrb[0].mxu0
        %v6428 = vadd.f32 %v6267, %v6427
        %v6429 = vpop.f32.mrb[0].mxu0
        %v6430 = vpop.f32.mrb[0].mxu0
        %v6431 = vadd.f32 %v6270, %v6430
        %v6432 = vpop.f32.mrb[0].mxu0
        %6433 = vmatprep.mubr.bf16.mxu0 0
        %6434 = vmatmul.mubr.bf16.gmra.mrb[0].mxu0 %v5296
        %v6435 = vpop.f32.mrb[0].mxu0
        %v6436 = vadd.f32 %v6275, %v6435
        %v6437 = vpop.f32.mrb[0].mxu0
        %v6438 = vpop.f32.mrb[0].mxu0
        %v6439 = vadd.f32 %v6278, %v6438
        %v6440 = vpop.f32.mrb[0].mxu0
        %6441 = vmatprep.mubr.bf16.mxu0 0
        %6442 = vmatmul.mubr.bf16.gmra.mrb[0].mxu0 %v5299
        %v6443 = vpop.f32.mrb[0].mxu0
        %v6444 = vadd.f32 %v6283, %v6443
        %v6445 = vpop.f32.mrb[0].mxu0
        %v6446 = vpop.f32.mrb[0].mxu0
        %v6447 = vadd.f32 %v6286, %v6446
        %v6448 = vpop.f32.mrb[0].mxu0
        %6449 = vmatprep.mubr.bf16.mxu0 0
        %6450 = vmatmul.mubr.bf16.gmra.mrb[0].mxu0 %v5302
        %v6451 = vpop.f32.mrb[0].mxu0
        %v6452 = vadd.f32 %v6291, %v6451
        %v6453 = vpop.f32.mrb[0].mxu0
        %v6454 = vpop.f32.mrb[0].mxu0
        %v6455 = vadd.f32 %v6294, %v6454
        %v6456 = vpop.f32.mrb[0].mxu0
        %6457 = vmatprep.mubr.bf16.mxu0 0
        %6458 = vmatmul.mubr.bf16.gmra.mrb[0].mxu0 %v5305
        %v6459 = vpop.f32.mrb[0].mxu0
        %v6460 = vadd.f32 %v6299, %v6459
        %v6461 = vpop.f32.mrb[0].mxu0
        %v6462 = vpop.f32.mrb[0].mxu0
        %v6463 = vadd.f32 %v6302, %v6462
        %v6464 = vpop.f32.mrb[0].mxu0
        %6465 = vmatprep.mubr.bf16.mxu0 0
        %6466 = vmatmul.mubr.bf16.gmra.mrb[0].mxu0 %v5308
        %v6467 = vpop.f32.mrb[0].mxu0
        %v6468 = vadd.f32 %v6307, %v6467
        %v6469 = vpop.f32.mrb[0].mxu0
        %v6470 = vpop.f32.mrb[0].mxu0
        %v6471 = vadd.f32 %v6310, %v6470
        %v6472 = vpop.f32.mrb[0].mxu0
        %6473 = vmatprep.mubr.bf16.mxu0 0
        %6474 = vmatmul.mubr.bf16.gmra.mrb[0].mxu0 %v5311
        %v6475 = vpop.f32.mrb[0].mxu0
        %v6476 = vadd.f32 %v6315, %v6475
        %v6477 = vpop.f32.mrb[0].mxu0
        %v6478 = vpop.f32.mrb[0].mxu0
        %v6479 = vadd.f32 %v6318, %v6478
        %v6480 = vpop.f32.mrb[0].mxu0
        %6481 = vmatprep.mubr.bf16.mxu0 0
        %6482 = vmatmul.mubr.bf16.gmra.mrb[0].mxu0 %v5314
        %v6483 = vpop.f32.mrb[0].mxu0
        %v6484 = vadd.f32 %v6323, %v6483
        %v6485 = vpop.f32.mrb[0].mxu0
        %v6486 = vpop.f32.mrb[0].mxu0
        %v6487 = vadd.f32 %v6326, %v6486
        %v6488 = vpop.f32.mrb[0].mxu0
        %6489 = vmatprep.mubr.bf16.mxu0 0
        %6490 = vmatmul.mubr.bf16.gmra.mrb[0].mxu0 %v5317
        %v6491 = vpop.f32.mrb[0].mxu0
        %v6492 = vadd.f32 %v6331, %v6491
        %v6493 = vpop.f32.mrb[0].mxu0
        %v6494 = vpop.f32.mrb[0].mxu0
        %v6495 = vadd.f32 %v6334, %v6494
        %v6496 = vpop.f32.mrb[0].mxu0
        %6497 = vmatprep.mubr.bf16.mxu0 0
        %6498 = vmatmul.mubr.bf16.gmra.mrb[0].mxu0 %v5320
        %v6499 = vpop.f32.mrb[0].mxu0
        %v6500 = vadd.f32 %v6339, %v6499
        %v6501 = vpop.f32.mrb[0].mxu0
        %v6502 = vpop.f32.mrb[0].mxu0
        %v6503 = vadd.f32 %v6342, %v6502
        %v6504 = vpop.f32.mrb[0].mxu0
        %6505 = vmatprep.mubr.bf16.mxu0 0
        %6506 = vmatmul.mubr.bf16.gmra.mrb[0].mxu0 %v5323
        %v6507 = vpop.f32.mrb[0].mxu0
        %v6508 = vadd.f32 %v6347, %v6507
        %v6509 = vpop.f32.mrb[0].mxu0
        %v6510 = vpop.f32.mrb[0].mxu0
        %v6511 = vadd.f32 %v6350, %v6510
        %v6512 = vpop.f32.mrb[0].mxu0
        %6513 = vmatprep.mubr.bf16.mxu0 0
        %6514 = vmatmul.mubr.bf16.gmra.mrb[0].mxu0 %v5326
        %v6515 = vpop.f32.mrb[0].mxu0
        %v6516 = vadd.f32 %v6355, %v6515
        %v6517 = vpop.f32.mrb[0].mxu0
        %v6518 = vpop.f32.mrb[0].mxu0
        %v6519 = vadd.f32 %v6358, %v6518
        %v6520 = vpop.f32.mrb[0].mxu0
        %6521 = vmatprep.mubr.bf16.mxu0 0
        %6522 = vmatmul.mubr.bf16.gmra.mrb[0].mxu0 %v5329
        %v6523 = vpop.f32.mrb[0].mxu0
        %v6524 = vadd.f32 %v6363, %v6523
        %v6525 = vpop.f32.mrb[0].mxu0
        %v6526 = vpop.f32.mrb[0].mxu0
        %v6527 = vadd.f32 %v6366, %v6526
        %v6528 = vpop.f32.mrb[0].mxu0
        %6529 = vmatprep.mubr.bf16.mxu0 0
        %6530 = vmatmul.mubr.bf16.gmra.mrb[0].mxu0 %v5332
        %v6531 = vpop.f32.mrb[0].mxu0
        %v6532 = vadd.f32 %v6371, %v6531
        %v6533 = vpop.f32.mrb[0].mxu0
        %v6534 = vpop.f32.mrb[0].mxu0
        %v6535 = vadd.f32 %v6374, %v6534
        %v6536 = vpop.f32.mrb[0].mxu0
        %6537 = vdwg.mxu0
        %v6538 = vmax.f32 %v6058, 0.0
        %v6539 = vmax.f32 %v6060, 0.0
        %v6540 = vmax.f32 %v6412, 0.0
        %v6541 = vmax.f32 %v6062, 0.0
        %v6542 = vmax.f32 %v6064, 0.0
        %v6543 = vmax.f32 %v6415, 0.0
        %v6544 = vmax.f32 %v6068, 0.0
        %v6545 = vmax.f32 %v6070, 0.0
        %v6546 = vmax.f32 %v6420, 0.0
        %v6547 = vmax.f32 %v6072, 0.0
        %v6548 = vmax.f32 %v6074, 0.0
        %v6549 = vmax.f32 %v6423, 0.0
        %v6550 = vmax.f32 %v6078, 0.0
        %v6551 = vmax.f32 %v6080, 0.0
        %v6552 = vmax.f32 %v6428, 0.0
        %v6553 = vmax.f32 %v6082, 0.0
        %v6554 = vmax.f32 %v6084, 0.0
        %v6555 = vmax.f32 %v6431, 0.0
        %v6556 = vmax.f32 %v6088, 0.0
        %v6557 = vmax.f32 %v6090, 0.0
        %v6558 = vmax.f32 %v6436, 0.0
        %v6559 = vmax.f32 %v6092, 0.0
        %v6560 = vmax.f32 %v6094, 0.0
        %v6561 = vmax.f32 %v6439, 0.0
        %v6562 = vmax.f32 %v6098, 0.0
        %v6563 = vmax.f32 %v6100, 0.0
        %v6564 = vmax.f32 %v6444, 0.0
        %v6565 = vmax.f32 %v6102, 0.0
        %v6566 = vmax.f32 %v6104, 0.0
        %v6567 = vmax.f32 %v6447, 0.0
        %v6568 = vmax.f32 %v6108, 0.0
        %v6569 = vmax.f32 %v6110, 0.0
        %v6570 = vmax.f32 %v6452, 0.0
        %v6571 = vmax.f32 %v6112, 0.0
        %v6572 = vmax.f32 %v6114, 0.0
        %v6573 = vmax.f32 %v6455, 0.0
        %v6574 = vmax.f32 %v6118, 0.0
        %v6575 = vmax.f32 %v6120, 0.0
        %v6576 = vmax.f32 %v6460, 0.0
        %v6577 = vmax.f32 %v6122, 0.0
        %v6578 = vmax.f32 %v6124, 0.0
        %v6579 = vmax.f32 %v6463, 0.0
        %v6580 = vmax.f32 %v6128, 0.0
        %v6581 = vmax.f32 %v6130, 0.0
        %v6582 = vmax.f32 %v6468, 0.0
        %v6583 = vmax.f32 %v6132, 0.0
        %v6584 = vmax.f32 %v6134, 0.0
        %v6585 = vmax.f32 %v6471, 0.0
        %v6586 = vmax.f32 %v6138, 0.0
        %v6587 = vmax.f32 %v6140, 0.0
        %v6588 = vmax.f32 %v6476, 0.0
        %v6589 = vmax.f32 %v6142, 0.0
        %v6590 = vmax.f32 %v6144, 0.0
        %v6591 = vmax.f32 %v6479, 0.0
        %v6592 = vmax.f32 %v6148, 0.0
        %v6593 = vmax.f32 %v6150, 0.0
        %v6594 = vmax.f32 %v6484, 0.0
        %v6595 = vmax.f32 %v6152, 0.0
        %v6596 = vmax.f32 %v6154, 0.0
        %v6597 = vmax.f32 %v6487, 0.0
        %v6598 = vmax.f32 %v6158, 0.0
        %v6599 = vmax.f32 %v6160, 0.0
        %v6600 = vmax.f32 %v6492, 0.0
        %v6601 = vmax.f32 %v6162, 0.0
        %v6602 = vmax.f32 %v6164, 0.0
        %v6603 = vmax.f32 %v6495, 0.0
        %v6604 = vmax.f32 %v6168, 0.0
        %v6605 = vmax.f32 %v6170, 0.0
        %v6606 = vmax.f32 %v6500, 0.0
        %v6607 = vmax.f32 %v6172, 0.0
        %v6608 = vmax.f32 %v6174, 0.0
        %v6609 = vmax.f32 %v6503, 0.0
        %v6610 = vmax.f32 %v6178, 0.0
        %v6611 = vmax.f32 %v6180, 0.0
        %v6612 = vmax.f32 %v6508, 0.0
        %v6613 = vmax.f32 %v6182, 0.0
        %v6614 = vmax.f32 %v6184, 0.0
        %v6615 = vmax.f32 %v6511, 0.0
        %v6616 = vmax.f32 %v6188, 0.0
        %v6617 = vmax.f32 %v6190, 0.0
        %v6618 = vmax.f32 %v6516, 0.0
        %v6619 = vmax.f32 %v6192, 0.0
        %v6620 = vmax.f32 %v6194, 0.0
        %v6621 = vmax.f32 %v6519, 0.0
        %v6622 = vmax.f32 %v6198, 0.0
        %v6623 = vmax.f32 %v6200, 0.0
        %v6624 = vmax.f32 %v6524, 0.0
        %v6625 = vmax.f32 %v6202, 0.0
        %v6626 = vmax.f32 %v6204, 0.0
        %v6627 = vmax.f32 %v6527, 0.0
        %v6628 = vmax.f32 %v6208, 0.0
        %v6629 = vmax.f32 %v6210, 0.0
        %v6630 = vmax.f32 %v6532, 0.0
        %v6631 = vmax.f32 %v6212, 0.0
        %v6632 = vmax.f32 %v6214, 0.0
        %v6633 = vmax.f32 %v6535, 0.0
        %v6634 = vpack.c.bf16 %v6541, %v6538
        %v6635 = vpack.c.bf16 %v6542, %v6539
        %v6636 = vpack.c.bf16 %v6543, %v6540
        %v6637 = vpack.c.bf16 %v6547, %v6544
        %v6638 = vpack.c.bf16 %v6548, %v6545
        %v6639 = vpack.c.bf16 %v6549, %v6546
        %v6640 = vpack.c.bf16 %v6553, %v6550
        %v6641 = vpack.c.bf16 %v6554, %v6551
        %v6642 = vpack.c.bf16 %v6555, %v6552
        %v6643 = vpack.c.bf16 %v6559, %v6556
        %v6644 = vpack.c.bf16 %v6560, %v6557
        %v6645 = vpack.c.bf16 %v6561, %v6558
        %v6646 = vpack.c.bf16 %v6565, %v6562
        %v6647 = vpack.c.bf16 %v6566, %v6563
        %v6648 = vpack.c.bf16 %v6567, %v6564
        %v6649 = vpack.c.bf16 %v6571, %v6568
        %v6650 = vpack.c.bf16 %v6572, %v6569
        %v6651 = vpack.c.bf16 %v6573, %v6570
        %v6652 = vpack.c.bf16 %v6577, %v6574
        %v6653 = vpack.c.bf16 %v6578, %v6575
        %v6654 = vpack.c.bf16 %v6579, %v6576
        %v6655 = vpack.c.bf16 %v6583, %v6580
        %v6656 = vpack.c.bf16 %v6584, %v6581
        %v6657 = vpack.c.bf16 %v6585, %v6582
        %v6658 = vpack.c.bf16 %v6589, %v6586
        %v6659 = vpack.c.bf16 %v6590, %v6587
        %v6660 = vpack.c.bf16 %v6591, %v6588
        %v6661 = vpack.c.bf16 %v6595, %v6592
        %v6662 = vpack.c.bf16 %v6596, %v6593
        %v6663 = vpack.c.bf16 %v6597, %v6594
        %v6664 = vpack.c.bf16 %v6601, %v6598
        %v6665 = vpack.c.bf16 %v6602, %v6599
        %v6666 = vpack.c.bf16 %v6603, %v6600
        %v6667 = vpack.c.bf16 %v6607, %v6604
        %v6668 = vpack.c.bf16 %v6608, %v6605
        %v6669 = vpack.c.bf16 %v6609, %v6606
        %v6670 = vpack.c.bf16 %v6613, %v6610
        %v6671 = vpack.c.bf16 %v6614, %v6611
        %v6672 = vpack.c.bf16 %v6615, %v6612
        %v6673 = vpack.c.bf16 %v6619, %v6616
        %v6674 = vpack.c.bf16 %v6620, %v6617
        %v6675 = vpack.c.bf16 %v6621, %v6618
        %v6676 = vpack.c.bf16 %v6625, %v6622
        %v6677 = vpack.c.bf16 %v6626, %v6623
        %v6678 = vpack.c.bf16 %v6627, %v6624
        %v6679 = vpack.c.bf16 %v6631, %v6628
        %v6680 = vpack.c.bf16 %v6632, %v6629
        %v6681 = vpack.c.bf16 %v6633, %v6630
        %v6682 = vld [vmem:[#allocation10] sm:$0xff]
        %v6683 = vld [vmem:[#allocation10 + $0x8] sm:$0xf]
        %v6684 = vld [vmem:[#allocation10 + $0xc] sm:$0xff]
        %v6685 = vld [vmem:[#allocation10 + $0x14] sm:$0xf]
        %v6686 = vld [vmem:[#allocation10 + $0x18] sm:$0xff]
        %v6687 = vld [vmem:[#allocation10 + $0x20] sm:$0xf]
        %v6688 = vld [vmem:[#allocation10 + $0x24] sm:$0xff]
        %v6689 = vld [vmem:[#allocation10 + $0x2c] sm:$0xf]
        %v6690 = vld [vmem:[#allocation10 + $0x30] sm:$0xff]
        %v6691 = vld [vmem:[#allocation10 + $0x38] sm:$0xf]
        %v6692 = vld [vmem:[#allocation10 + $0x3c] sm:$0xff]
        %v6693 = vld [vmem:[#allocation10 + $0x44] sm:$0xf]
        %v6694 = vld [vmem:[#allocation10 + $0x48] sm:$0xff]
        %v6695 = vld [vmem:[#allocation10 + $0x50] sm:$0xf]
        %v6696 = vld [vmem:[#allocation10 + $0x54] sm:$0xff]
        %v6697 = vld [vmem:[#allocation10 + $0x5c] sm:$0xf]
        %v6698 = vld [vmem:[#allocation10 + $0x60] sm:$0xff]
        %v6699 = vld [vmem:[#allocation10 + $0x68] sm:$0xf]
        %v6700 = vld [vmem:[#allocation10 + $0x6c] sm:$0xff]
        %v6701 = vld [vmem:[#allocation10 + $0x74] sm:$0xf]
        %v6702 = vld [vmem:[#allocation10 + $0x78] sm:$0xff]
        %v6703 = vld [vmem:[#allocation10 + $0x80] sm:$0xf]
        %v6704 = vld [vmem:[#allocation10 + $0x84] sm:$0xff]
        %v6705 = vld [vmem:[#allocation10 + $0x8c] sm:$0xf]
        %v6706 = vld [vmem:[#allocation10 + $0x90] sm:$0xff]
        %v6707 = vld [vmem:[#allocation10 + $0x98] sm:$0xf]
        %v6708 = vld [vmem:[#allocation10 + $0x9c] sm:$0xff]
        %v6709 = vld [vmem:[#allocation10 + $0xa4] sm:$0xf]
        %v6710 = vld [vmem:[#allocation10 + $0xa8] sm:$0xff]
        %v6711 = vld [vmem:[#allocation10 + $0xb0] sm:$0xf]
        %v6712 = vld [vmem:[#allocation10 + $0xb4] sm:$0xff]
        %v6713 = vld [vmem:[#allocation10 + $0xbc] sm:$0xf]
        %v6714 = vld [vmem:[#allocation10 + $0xc0] sm:$0xff]
        %v6715 = vld [vmem:[#allocation10 + $0xc8] sm:$0xf]
        %v6716 = vld [vmem:[#allocation10 + $0xcc] sm:$0xff]
        %v6717 = vld [vmem:[#allocation10 + $0xd4] sm:$0xf]
        %v6718 = vld [vmem:[#allocation10 + $0xd8] sm:$0xff]
        %v6719 = vld [vmem:[#allocation10 + $0xe0] sm:$0xf]
        %v6720 = vld [vmem:[#allocation10 + $0xe4] sm:$0xff]
        %v6721 = vld [vmem:[#allocation10 + $0xec] sm:$0xf]
        %v6722 = vld [vmem:[#allocation10 + $0xf0] sm:$0xff]
        %v6723 = vld [vmem:[#allocation10 + $0xf8] sm:$0xf]
        %v6724 = vld [vmem:[#allocation10 + $0xfc] sm:$0xff]
        %v6725 = vld [vmem:[#allocation10 + $0x104] sm:$0xf]
        %v6726 = vld [vmem:[#allocation10 + $0x108] sm:$0xff]
        %v6727 = vld [vmem:[#allocation10 + $0x110] sm:$0xf]
        %v6728 = vld [vmem:[#allocation10 + $0x114] sm:$0xff]
        %v6729 = vld [vmem:[#allocation10 + $0x11c] sm:$0xf]
        %v6730 = vld [vmem:[#allocation10 + $0x120] sm:$0xff]
        %v6731 = vld [vmem:[#allocation10 + $0x128] sm:$0xf]
        %v6732 = vld [vmem:[#allocation10 + $0x12c] sm:$0xff]
        %v6733 = vld [vmem:[#allocation10 + $0x134] sm:$0xf]
        %v6734 = vld [vmem:[#allocation10 + $0x138] sm:$0xff]
        %v6735 = vld [vmem:[#allocation10 + $0x140] sm:$0xf]
        %v6736 = vld [vmem:[#allocation10 + $0x144] sm:$0xff]
        %v6737 = vld [vmem:[#allocation10 + $0x14c] sm:$0xf]
        %v6738 = vld [vmem:[#allocation10 + $0x150] sm:$0xff]
        %v6739 = vld [vmem:[#allocation10 + $0x158] sm:$0xf]
        %v6740 = vld [vmem:[#allocation10 + $0x15c] sm:$0xff]
        %v6741 = vld [vmem:[#allocation10 + $0x164] sm:$0xf]
        %v6742 = vld [vmem:[#allocation10 + $0x168] sm:$0xff]
        %v6743 = vld [vmem:[#allocation10 + $0x170] sm:$0xf]
        %v6744 = vld [vmem:[#allocation10 + $0x174] sm:$0xff]
        %v6745 = vld [vmem:[#allocation10 + $0x17c] sm:$0xf]
        %v6746 = vld [vmem:[#allocation10 + $0x180] sm:$0xff]
        %v6747 = vld [vmem:[#allocation10 + $0x188] sm:$0xf]
        %v6748 = vld [vmem:[#allocation10 + $0x18c] sm:$0xff]
        %v6749 = vld [vmem:[#allocation10 + $0x194] sm:$0xf]
        %v6750 = vld [vmem:[#allocation10 + $0x198] sm:$0xff]
        %v6751 = vld [vmem:[#allocation10 + $0x1a0] sm:$0xf]
        %v6752 = vld [vmem:[#allocation10 + $0x1a4] sm:$0xff]
        %v6753 = vld [vmem:[#allocation10 + $0x1ac] sm:$0xf]
        %v6754 = vld [vmem:[#allocation10 + $0x1b0] sm:$0xff]
        %v6755 = vld [vmem:[#allocation10 + $0x1b8] sm:$0xf]
        %v6756 = vld [vmem:[#allocation10 + $0x1bc] sm:$0xff]
        %v6757 = vld [vmem:[#allocation10 + $0x1c4] sm:$0xf]
        %v6758 = vld [vmem:[#allocation10 + $0x1c8] sm:$0xff]
        %v6759 = vld [vmem:[#allocation10 + $0x1d0] sm:$0xf]
        %v6760 = vld [vmem:[#allocation10 + $0x1d4] sm:$0xff]
        %v6761 = vld [vmem:[#allocation10 + $0x1dc] sm:$0xf]
        %v6762 = vld [vmem:[#allocation10 + $0x1e0] sm:$0xff]
        %v6763 = vld [vmem:[#allocation10 + $0x1e8] sm:$0xf]
        %v6764 = vld [vmem:[#allocation10 + $0x1ec] sm:$0xff]
        %v6765 = vld [vmem:[#allocation10 + $0x1f4] sm:$0xf]
        %v6766 = vld [vmem:[#allocation10 + $0x1f8] sm:$0xff]
        %v6767 = vld [vmem:[#allocation10 + $0x200] sm:$0xf]
        %v6768 = vld [vmem:[#allocation10 + $0x204] sm:$0xff]
        %v6769 = vld [vmem:[#allocation10 + $0x20c] sm:$0xf]
        %v6770 = vld [vmem:[#allocation10 + $0x210] sm:$0xff]
        %v6771 = vld [vmem:[#allocation10 + $0x218] sm:$0xf]
        %v6772 = vld [vmem:[#allocation10 + $0x21c] sm:$0xff]
        %v6773 = vld [vmem:[#allocation10 + $0x224] sm:$0xf]
        %v6774 = vld [vmem:[#allocation10 + $0x228] sm:$0xff]
        %v6775 = vld [vmem:[#allocation10 + $0x230] sm:$0xf]
        %v6776 = vld [vmem:[#allocation10 + $0x234] sm:$0xff]
        %v6777 = vld [vmem:[#allocation10 + $0x23c] sm:$0xf]
        %v6778 = vld [vmem:[%s12] sm:$0x7]
        %v6780 = vlaneseq
        %v6781 = vshrl.u32 %v6780, 7
        %v6782 = vsub.s32 0, %v6781
        %v6783 = vrot.slane %v6778, %v6782
        %v6784 = vlaneseq
        %v6785 = vshrl.u32 %v6784, 7
        %v6786 = vsub.s32 1, %v6785
        %v6787 = vrot.slane %v6778, %v6786
        %v6788 = vlaneseq
        %v6789 = vshrl.u32 %v6788, 7
        %v6790 = vsub.s32 2, %v6789
        %v6791 = vrot.slane %v6778, %v6790
        %v6891 = vunpack.c.l.b16 %v6682
        %v6892 = vunpack.c.h.b16 %v6682
        %v6893 = vunpack.c.l.b16 %v6683
        %v6894 = vunpack.c.l.b16 %v6684
        %v6895 = vunpack.c.h.b16 %v6684
        %v6896 = vunpack.c.l.b16 %v6685
        %v6897 = vunpack.c.l.b16 %v6686
        %v6898 = vunpack.c.h.b16 %v6686
        %v6899 = vunpack.c.l.b16 %v6687
        %v6900 = vunpack.c.l.b16 %v6688
        %v6901 = vunpack.c.h.b16 %v6688
        %v6902 = vunpack.c.l.b16 %v6689
        %v6903 = vunpack.c.l.b16 %v6690
        %v6904 = vunpack.c.h.b16 %v6690
        %v6905 = vunpack.c.l.b16 %v6691
        %v6906 = vunpack.c.l.b16 %v6692
        %v6907 = vunpack.c.h.b16 %v6692
        %v6908 = vunpack.c.l.b16 %v6693
        %v6909 = vunpack.c.l.b16 %v6694
        %v6910 = vunpack.c.h.b16 %v6694
        %v6911 = vunpack.c.l.b16 %v6695
        %v6912 = vunpack.c.l.b16 %v6696
        %v6913 = vunpack.c.h.b16 %v6696
        %v6914 = vunpack.c.l.b16 %v6697
        %v6915 = vunpack.c.l.b16 %v6698
        %v6916 = vunpack.c.h.b16 %v6698
        %v6917 = vunpack.c.l.b16 %v6699
        %v6918 = vunpack.c.l.b16 %v6700
        %v6919 = vunpack.c.h.b16 %v6700
        %v6920 = vunpack.c.l.b16 %v6701
        %v6921 = vunpack.c.l.b16 %v6702
        %v6922 = vunpack.c.h.b16 %v6702
        %v6923 = vunpack.c.l.b16 %v6703
        %v6924 = vunpack.c.l.b16 %v6704
        %v6925 = vunpack.c.h.b16 %v6704
        %v6926 = vunpack.c.l.b16 %v6705
        %v6927 = vunpack.c.l.b16 %v6706
        %v6928 = vunpack.c.h.b16 %v6706
        %v6929 = vunpack.c.l.b16 %v6707
        %v6930 = vunpack.c.l.b16 %v6708
        %v6931 = vunpack.c.h.b16 %v6708
        %v6932 = vunpack.c.l.b16 %v6709
        %v6933 = vunpack.c.l.b16 %v6710
        %v6934 = vunpack.c.h.b16 %v6710
        %v6935 = vunpack.c.l.b16 %v6711
        %v6936 = vunpack.c.l.b16 %v6712
        %v6937 = vunpack.c.h.b16 %v6712
        %v6938 = vunpack.c.l.b16 %v6713
        %v6939 = vunpack.c.l.b16 %v6714
        %v6940 = vunpack.c.h.b16 %v6714
        %v6941 = vunpack.c.l.b16 %v6715
        %v6942 = vunpack.c.l.b16 %v6716
        %v6943 = vunpack.c.h.b16 %v6716
        %v6944 = vunpack.c.l.b16 %v6717
        %v6945 = vunpack.c.l.b16 %v6718
        %v6946 = vunpack.c.h.b16 %v6718
        %v6947 = vunpack.c.l.b16 %v6719
        %v6948 = vunpack.c.l.b16 %v6720
        %v6949 = vunpack.c.h.b16 %v6720
        %v6950 = vunpack.c.l.b16 %v6721
        %v6951 = vunpack.c.l.b16 %v6722
        %v6952 = vunpack.c.h.b16 %v6722
        %v6953 = vunpack.c.l.b16 %v6723
        %v6954 = vunpack.c.l.b16 %v6724
        %v6955 = vunpack.c.h.b16 %v6724
        %v6956 = vunpack.c.l.b16 %v6725
        %v6957 = vunpack.c.l.b16 %v6726
        %v6958 = vunpack.c.h.b16 %v6726
        %v6959 = vunpack.c.l.b16 %v6727
        %v6960 = vunpack.c.l.b16 %v6728
        %v6961 = vunpack.c.h.b16 %v6728
        %v6962 = vunpack.c.l.b16 %v6729
        %v6963 = vunpack.c.l.b16 %v6730
        %v6964 = vunpack.c.h.b16 %v6730
        %v6965 = vunpack.c.l.b16 %v6731
        %v6966 = vunpack.c.l.b16 %v6732
        %v6967 = vunpack.c.h.b16 %v6732
        %v6968 = vunpack.c.l.b16 %v6733
        %v6969 = vunpack.c.l.b16 %v6734
        %v6970 = vunpack.c.h.b16 %v6734
        %v6971 = vunpack.c.l.b16 %v6735
        %v6972 = vunpack.c.l.b16 %v6736
        %v6973 = vunpack.c.h.b16 %v6736
        %v6974 = vunpack.c.l.b16 %v6737
        %v6975 = vunpack.c.l.b16 %v6738
        %v6976 = vunpack.c.h.b16 %v6738
        %v6977 = vunpack.c.l.b16 %v6739
        %v6978 = vunpack.c.l.b16 %v6740
        %v6979 = vunpack.c.h.b16 %v6740
        %v6980 = vunpack.c.l.b16 %v6741
        %v6981 = vunpack.c.l.b16 %v6742
        %v6982 = vunpack.c.h.b16 %v6742
        %v6983 = vunpack.c.l.b16 %v6743
        %v6984 = vunpack.c.l.b16 %v6744
        %v6985 = vunpack.c.h.b16 %v6744
        %v6986 = vunpack.c.l.b16 %v6745
        %v6987 = vunpack.c.l.b16 %v6746
        %v6988 = vunpack.c.h.b16 %v6746
        %v6989 = vunpack.c.l.b16 %v6747
        %v6990 = vunpack.c.l.b16 %v6748
        %v6991 = vunpack.c.h.b16 %v6748
        %v6992 = vunpack.c.l.b16 %v6749
        %v6993 = vunpack.c.l.b16 %v6750
        %v6994 = vunpack.c.h.b16 %v6750
        %v6995 = vunpack.c.l.b16 %v6751
        %v6996 = vunpack.c.l.b16 %v6752
        %v6997 = vunpack.c.h.b16 %v6752
        %v6998 = vunpack.c.l.b16 %v6753
        %v6999 = vunpack.c.l.b16 %v6754
        %v7000 = vunpack.c.h.b16 %v6754
        %v7001 = vunpack.c.l.b16 %v6755
        %v7002 = vunpack.c.l.b16 %v6756
        %v7003 = vunpack.c.h.b16 %v6756
        %v7004 = vunpack.c.l.b16 %v6757
        %v7005 = vunpack.c.l.b16 %v6758
        %v7006 = vunpack.c.h.b16 %v6758
        %v7007 = vunpack.c.l.b16 %v6759
        %v7008 = vunpack.c.l.b16 %v6760
        %v7009 = vunpack.c.h.b16 %v6760
        %v7010 = vunpack.c.l.b16 %v6761
        %v7011 = vunpack.c.l.b16 %v6762
        %v7012 = vunpack.c.h.b16 %v6762
        %v7013 = vunpack.c.l.b16 %v6763
        %v7014 = vunpack.c.l.b16 %v6764
        %v7015 = vunpack.c.h.b16 %v6764
        %v7016 = vunpack.c.l.b16 %v6765
        %v7017 = vunpack.c.l.b16 %v6766
        %v7018 = vunpack.c.h.b16 %v6766
        %v7019 = vunpack.c.l.b16 %v6767
        %v7020 = vunpack.c.l.b16 %v6768
        %v7021 = vunpack.c.h.b16 %v6768
        %v7022 = vunpack.c.l.b16 %v6769
        %v7023 = vunpack.c.l.b16 %v6770
        %v7024 = vunpack.c.h.b16 %v6770
        %v7025 = vunpack.c.l.b16 %v6771
        %v7026 = vunpack.c.l.b16 %v6772
        %v7027 = vunpack.c.h.b16 %v6772
        %v7028 = vunpack.c.l.b16 %v6773
        %v7029 = vunpack.c.l.b16 %v6774
        %v7030 = vunpack.c.h.b16 %v6774
        %v7031 = vunpack.c.l.b16 %v6775
        %v7032 = vunpack.c.l.b16 %v6776
        %v7033 = vunpack.c.h.b16 %v6776
        %v7034 = vunpack.c.l.b16 %v6777
        %v7035 = vpack.c.b16 %v6894, %v6891
        %v7036 = vpack.c.b16 %v6895, %v6892
        %v7037 = vpack.c.b16 %v6896, %v6893
        %v7038 = vpack.c.b16 %v6900, %v6897
        %v7039 = vpack.c.b16 %v6901, %v6898
        %v7040 = vpack.c.b16 %v6902, %v6899
        %v7041 = vpack.c.b16 %v6906, %v6903
        %v7042 = vpack.c.b16 %v6907, %v6904
        %v7043 = vpack.c.b16 %v6908, %v6905
        %v7044 = vpack.c.b16 %v6912, %v6909
        %v7045 = vpack.c.b16 %v6913, %v6910
        %v7046 = vpack.c.b16 %v6914, %v6911
        %v7047 = vpack.c.b16 %v6918, %v6915
        %v7048 = vpack.c.b16 %v6919, %v6916
        %v7049 = vpack.c.b16 %v6920, %v6917
        %v7050 = vpack.c.b16 %v6924, %v6921
        %v7051 = vpack.c.b16 %v6925, %v6922
        %v7052 = vpack.c.b16 %v6926, %v6923
        %v7053 = vpack.c.b16 %v6930, %v6927
        %v7054 = vpack.c.b16 %v6931, %v6928
        %v7055 = vpack.c.b16 %v6932, %v6929
        %v7056 = vpack.c.b16 %v6936, %v6933
        %v7057 = vpack.c.b16 %v6937, %v6934
        %v7058 = vpack.c.b16 %v6938, %v6935
        %v7059 = vpack.c.b16 %v6942, %v6939
        %v7060 = vpack.c.b16 %v6943, %v6940
        %v7061 = vpack.c.b16 %v6944, %v6941
        %v7062 = vpack.c.b16 %v6948, %v6945
        %v7063 = vpack.c.b16 %v6949, %v6946
        %v7064 = vpack.c.b16 %v6950, %v6947
        %v7065 = vpack.c.b16 %v6954, %v6951
        %v7066 = vpack.c.b16 %v6955, %v6952
        %v7067 = vpack.c.b16 %v6956, %v6953
        %v7068 = vpack.c.b16 %v6960, %v6957
        %v7069 = vpack.c.b16 %v6961, %v6958
        %v7070 = vpack.c.b16 %v6962, %v6959
        %v7071 = vpack.c.b16 %v6966, %v6963
        %v7072 = vpack.c.b16 %v6967, %v6964
        %v7073 = vpack.c.b16 %v6968, %v6965
        %v7074 = vpack.c.b16 %v6972, %v6969
        %v7075 = vpack.c.b16 %v6973, %v6970
        %v7076 = vpack.c.b16 %v6974, %v6971
        %v7077 = vpack.c.b16 %v6978, %v6975
        %v7078 = vpack.c.b16 %v6979, %v6976
        %v7079 = vpack.c.b16 %v6980, %v6977
        %v7080 = vpack.c.b16 %v6984, %v6981
        %v7081 = vpack.c.b16 %v6985, %v6982
        %v7082 = vpack.c.b16 %v6986, %v6983
        %v7083 = vpack.c.b16 %v6990, %v6987
        %v7084 = vpack.c.b16 %v6991, %v6988
        %v7085 = vpack.c.b16 %v6992, %v6989
        %v7086 = vpack.c.b16 %v6996, %v6993
        %v7087 = vpack.c.b16 %v6997, %v6994
        %v7088 = vpack.c.b16 %v6998, %v6995
        %v7089 = vpack.c.b16 %v7002, %v6999
        %v7090 = vpack.c.b16 %v7003, %v7000
        %v7091 = vpack.c.b16 %v7004, %v7001
        %v7092 = vpack.c.b16 %v7008, %v7005
        %v7093 = vpack.c.b16 %v7009, %v7006
        %v7094 = vpack.c.b16 %v7010, %v7007
        %v7095 = vpack.c.b16 %v7014, %v7011
        %v7096 = vpack.c.b16 %v7015, %v7012
        %v7097 = vpack.c.b16 %v7016, %v7013
        %v7098 = vpack.c.b16 %v7020, %v7017
        %v7099 = vpack.c.b16 %v7021, %v7018
        %v7100 = vpack.c.b16 %v7022, %v7019
        %v7101 = vpack.c.b16 %v7026, %v7023
        %v7102 = vpack.c.b16 %v7027, %v7024
        %v7103 = vpack.c.b16 %v7028, %v7025
        %v7104 = vpack.c.b16 %v7032, %v7029
        %v7105 = vpack.c.b16 %v7033, %v7030
        %v7106 = vpack.c.b16 %v7034, %v7031
        %7179 = vmatprep.subr.bf16.mxu0 %v7036
        %7180 = vmatpush1.bf16.msra.mxu0 %v7035
        %7181 = vmatprep.subr.bf16.mxu0 %v7039
        %7182 = vmatpush1.bf16.msra.mxu0 %v7038
        %7183 = vmatprep.subr.bf16.mxu0 %v7042
        %7184 = vmatpush1.bf16.msra.mxu0 %v7041
        %7185 = vmatprep.subr.bf16.mxu0 %v7045
        %7186 = vmatpush1.bf16.msra.mxu0 %v7044
        %7187 = vmatprep.subr.bf16.mxu0 %v7048
        %7188 = vmatpush1.bf16.msra.mxu0 %v7047
        %7189 = vmatprep.subr.bf16.mxu0 %v7051
        %7190 = vmatpush1.bf16.msra.mxu0 %v7050
        %7191 = vmatprep.subr.bf16.mxu0 %v7054
        %7192 = vmatpush1.bf16.msra.mxu0 %v7053
        %7193 = vmatprep.subr.bf16.mxu0 %v7057
        %7194 = vmatpush1.bf16.msra.mxu0 %v7056
        %7195 = vmatprep.subr.bf16.mxu0 %v7060
        %7196 = vmatpush1.bf16.msra.mxu0 %v7059
        %7197 = vmatprep.subr.bf16.mxu0 %v7063
        %7198 = vmatpush1.bf16.msra.mxu0 %v7062
        %7199 = vmatprep.subr.bf16.mxu0 %v7066
        %7200 = vmatpush1.bf16.msra.mxu0 %v7065
        %7201 = vmatprep.subr.bf16.mxu0 %v7069
        %7202 = vmatpush1.bf16.msra.mxu0 %v7068
        %7203 = vmatprep.subr.bf16.mxu0 %v7072
        %7204 = vmatpush1.bf16.msra.mxu0 %v7071
        %7205 = vmatprep.subr.bf16.mxu0 %v7075
        %7206 = vmatpush1.bf16.msra.mxu0 %v7074
        %7207 = vmatprep.subr.bf16.mxu0 %v7078
        %7208 = vmatpush1.bf16.msra.mxu0 %v7077
        %7209 = vmatprep.subr.bf16.mxu0 %v7081
        %7210 = vmatpush1.bf16.msra.mxu0 %v7080
        %7211 = vmatprep.mubr.bf16.mxu0 %v6635
        %7212 = vmatmul.mubr.bf16.gmra.mrb[0].mxu0 %v6634
        %v7213 = vpop.f32.mrb[0].mxu0
        %v7214 = vadd.f32 %v6783, %v7213
        %v7215 = vpop.f32.mrb[0].mxu0
        %v7216 = vadd.f32 %v6787, %v7215
        %v7217 = vpop.f32.mrb[0].mxu0
        %v7218 = vadd.f32 %v6783, %v7217
        %v7219 = vpop.f32.mrb[0].mxu0
        %v7220 = vadd.f32 %v6787, %v7219
        %7221 = vmatprep.mubr.bf16.mxu0 %v6638
        %7222 = vmatmul.mubr.bf16.gmra.mrb[0].mxu0 %v6637
        %v7223 = vpop.f32.mrb[0].mxu0
        %v7224 = vadd.f32 %v6783, %v7223
        %v7225 = vpop.f32.mrb[0].mxu0
        %v7226 = vadd.f32 %v6787, %v7225
        %v7227 = vpop.f32.mrb[0].mxu0
        %v7228 = vadd.f32 %v6783, %v7227
        %v7229 = vpop.f32.mrb[0].mxu0
        %v7230 = vadd.f32 %v6787, %v7229
        %7231 = vmatprep.mubr.bf16.mxu0 %v6641
        %7232 = vmatmul.mubr.bf16.gmra.mrb[0].mxu0 %v6640
        %v7233 = vpop.f32.mrb[0].mxu0
        %v7234 = vadd.f32 %v6783, %v7233
        %v7235 = vpop.f32.mrb[0].mxu0
        %v7236 = vadd.f32 %v6787, %v7235
        %v7237 = vpop.f32.mrb[0].mxu0
        %v7238 = vadd.f32 %v6783, %v7237
        %v7239 = vpop.f32.mrb[0].mxu0
        %v7240 = vadd.f32 %v6787, %v7239
        %7241 = vmatprep.mubr.bf16.mxu0 %v6644
        %7242 = vmatmul.mubr.bf16.gmra.mrb[0].mxu0 %v6643
        %v7243 = vpop.f32.mrb[0].mxu0
        %v7244 = vadd.f32 %v6783, %v7243
        %v7245 = vpop.f32.mrb[0].mxu0
        %v7246 = vadd.f32 %v6787, %v7245
        %v7247 = vpop.f32.mrb[0].mxu0
        %v7248 = vadd.f32 %v6783, %v7247
        %v7249 = vpop.f32.mrb[0].mxu0
        %v7250 = vadd.f32 %v6787, %v7249
        %7251 = vmatprep.mubr.bf16.mxu0 %v6647
        %7252 = vmatmul.mubr.bf16.gmra.mrb[0].mxu0 %v6646
        %v7253 = vpop.f32.mrb[0].mxu0
        %v7254 = vadd.f32 %v6783, %v7253
        %v7255 = vpop.f32.mrb[0].mxu0
        %v7256 = vadd.f32 %v6787, %v7255
        %v7257 = vpop.f32.mrb[0].mxu0
        %v7258 = vadd.f32 %v6783, %v7257
        %v7259 = vpop.f32.mrb[0].mxu0
        %v7260 = vadd.f32 %v6787, %v7259
        %7261 = vmatprep.mubr.bf16.mxu0 %v6650
        %7262 = vmatmul.mubr.bf16.gmra.mrb[0].mxu0 %v6649
        %v7263 = vpop.f32.mrb[0].mxu0
        %v7264 = vadd.f32 %v6783, %v7263
        %v7265 = vpop.f32.mrb[0].mxu0
        %v7266 = vadd.f32 %v6787, %v7265
        %v7267 = vpop.f32.mrb[0].mxu0
        %v7268 = vadd.f32 %v6783, %v7267
        %v7269 = vpop.f32.mrb[0].mxu0
        %v7270 = vadd.f32 %v6787, %v7269
        %7271 = vmatprep.mubr.bf16.mxu0 %v6653
        %7272 = vmatmul.mubr.bf16.gmra.mrb[0].mxu0 %v6652
        %v7273 = vpop.f32.mrb[0].mxu0
        %v7274 = vadd.f32 %v6783, %v7273
        %v7275 = vpop.f32.mrb[0].mxu0
        %v7276 = vadd.f32 %v6787, %v7275
        %v7277 = vpop.f32.mrb[0].mxu0
        %v7278 = vadd.f32 %v6783, %v7277
        %v7279 = vpop.f32.mrb[0].mxu0
        %v7280 = vadd.f32 %v6787, %v7279
        %7281 = vmatprep.mubr.bf16.mxu0 %v6656
        %7282 = vmatmul.mubr.bf16.gmra.mrb[0].mxu0 %v6655
        %v7283 = vpop.f32.mrb[0].mxu0
        %v7284 = vadd.f32 %v6783, %v7283
        %v7285 = vpop.f32.mrb[0].mxu0
        %v7286 = vadd.f32 %v6787, %v7285
        %v7287 = vpop.f32.mrb[0].mxu0
        %v7288 = vadd.f32 %v6783, %v7287
        %v7289 = vpop.f32.mrb[0].mxu0
        %v7290 = vadd.f32 %v6787, %v7289
        %7291 = vmatprep.mubr.bf16.mxu0 %v6659
        %7292 = vmatmul.mubr.bf16.gmra.mrb[0].mxu0 %v6658
        %v7293 = vpop.f32.mrb[0].mxu0
        %v7294 = vadd.f32 %v6783, %v7293
        %v7295 = vpop.f32.mrb[0].mxu0
        %v7296 = vadd.f32 %v6787, %v7295
        %v7297 = vpop.f32.mrb[0].mxu0
        %v7298 = vadd.f32 %v6783, %v7297
        %v7299 = vpop.f32.mrb[0].mxu0
        %v7300 = vadd.f32 %v6787, %v7299
        %7301 = vmatprep.mubr.bf16.mxu0 %v6662
        %7302 = vmatmul.mubr.bf16.gmra.mrb[0].mxu0 %v6661
        %v7303 = vpop.f32.mrb[0].mxu0
        %v7304 = vadd.f32 %v6783, %v7303
        %v7305 = vpop.f32.mrb[0].mxu0
        %v7306 = vadd.f32 %v6787, %v7305
        %v7307 = vpop.f32.mrb[0].mxu0
        %v7308 = vadd.f32 %v6783, %v7307
        %v7309 = vpop.f32.mrb[0].mxu0
        %v7310 = vadd.f32 %v6787, %v7309
        %7311 = vmatprep.mubr.bf16.mxu0 %v6665
        %7312 = vmatmul.mubr.bf16.gmra.mrb[0].mxu0 %v6664
        %v7313 = vpop.f32.mrb[0].mxu0
        %v7314 = vadd.f32 %v6783, %v7313
        %v7315 = vpop.f32.mrb[0].mxu0
        %v7316 = vadd.f32 %v6787, %v7315
        %v7317 = vpop.f32.mrb[0].mxu0
        %v7318 = vadd.f32 %v6783, %v7317
        %v7319 = vpop.f32.mrb[0].mxu0
        %v7320 = vadd.f32 %v6787, %v7319
        %7321 = vmatprep.mubr.bf16.mxu0 %v6668
        %7322 = vmatmul.mubr.bf16.gmra.mrb[0].mxu0 %v6667
        %v7323 = vpop.f32.mrb[0].mxu0
        %v7324 = vadd.f32 %v6783, %v7323
        %v7325 = vpop.f32.mrb[0].mxu0
        %v7326 = vadd.f32 %v6787, %v7325
        %v7327 = vpop.f32.mrb[0].mxu0
        %v7328 = vadd.f32 %v6783, %v7327
        %v7329 = vpop.f32.mrb[0].mxu0
        %v7330 = vadd.f32 %v6787, %v7329
        %7331 = vmatprep.mubr.bf16.mxu0 %v6671
        %7332 = vmatmul.mubr.bf16.gmra.mrb[0].mxu0 %v6670
        %v7333 = vpop.f32.mrb[0].mxu0
        %v7334 = vadd.f32 %v6783, %v7333
        %v7335 = vpop.f32.mrb[0].mxu0
        %v7336 = vadd.f32 %v6787, %v7335
        %v7337 = vpop.f32.mrb[0].mxu0
        %v7338 = vadd.f32 %v6783, %v7337
        %v7339 = vpop.f32.mrb[0].mxu0
        %v7340 = vadd.f32 %v6787, %v7339
        %7341 = vmatprep.mubr.bf16.mxu0 %v6674
        %7342 = vmatmul.mubr.bf16.gmra.mrb[0].mxu0 %v6673
        %v7343 = vpop.f32.mrb[0].mxu0
        %v7344 = vadd.f32 %v6783, %v7343
        %v7345 = vpop.f32.mrb[0].mxu0
        %v7346 = vadd.f32 %v6787, %v7345
        %v7347 = vpop.f32.mrb[0].mxu0
        %v7348 = vadd.f32 %v6783, %v7347
        %v7349 = vpop.f32.mrb[0].mxu0
        %v7350 = vadd.f32 %v6787, %v7349
        %7351 = vmatprep.mubr.bf16.mxu0 %v6677
        %7352 = vmatmul.mubr.bf16.gmra.mrb[0].mxu0 %v6676
        %v7353 = vpop.f32.mrb[0].mxu0
        %v7354 = vadd.f32 %v6783, %v7353
        %v7355 = vpop.f32.mrb[0].mxu0
        %v7356 = vadd.f32 %v6787, %v7355
        %v7357 = vpop.f32.mrb[0].mxu0
        %v7358 = vadd.f32 %v6783, %v7357
        %v7359 = vpop.f32.mrb[0].mxu0
        %v7360 = vadd.f32 %v6787, %v7359
        %7361 = vmatprep.mubr.bf16.mxu0 %v6680
        %7362 = vmatmul.mubr.bf16.gmra.mrb[0].mxu0 %v6679
        %v7363 = vpop.f32.mrb[0].mxu0
        %v7364 = vadd.f32 %v6783, %v7363
        %v7365 = vpop.f32.mrb[0].mxu0
        %v7366 = vadd.f32 %v6787, %v7365
        %v7367 = vpop.f32.mrb[0].mxu0
        %v7368 = vadd.f32 %v6783, %v7367
        %v7369 = vpop.f32.mrb[0].mxu0
        %v7370 = vadd.f32 %v6787, %v7369
        %7371 = vdwg.mxu0
        %7372 = vmatprep.subr.bf16.mxu0 %v7084
        %7373 = vmatpush1.bf16.msra.mxu0 %v7083
        %7374 = vmatprep.subr.bf16.mxu0 %v7087
        %7375 = vmatpush1.bf16.msra.mxu0 %v7086
        %7376 = vmatprep.subr.bf16.mxu0 %v7090
        %7377 = vmatpush1.bf16.msra.mxu0 %v7089
        %7378 = vmatprep.subr.bf16.mxu0 %v7093
        %7379 = vmatpush1.bf16.msra.mxu0 %v7092
        %7380 = vmatprep.subr.bf16.mxu0 %v7096
        %7381 = vmatpush1.bf16.msra.mxu0 %v7095
        %7382 = vmatprep.subr.bf16.mxu0 %v7099
        %7383 = vmatpush1.bf16.msra.mxu0 %v7098
        %7384 = vmatprep.subr.bf16.mxu0 %v7102
        %7385 = vmatpush1.bf16.msra.mxu0 %v7101
        %7386 = vmatprep.subr.bf16.mxu0 %v7105
        %7387 = vmatpush1.bf16.msra.mxu0 %v7104
        %7388 = vmatprep.subr.bf16.mxu0 0
        %7389 = vmatpush1.bf16.msra.mxu0 0
        %7390 = vmatprep.subr.bf16.mxu0 0
        %7391 = vmatpush1.bf16.msra.mxu0 0
        %7392 = vmatprep.subr.bf16.mxu0 0
        %7393 = vmatpush1.bf16.msra.mxu0 0
        %7394 = vmatprep.subr.bf16.mxu0 0
        %7395 = vmatpush1.bf16.msra.mxu0 0
        %7396 = vmatprep.subr.bf16.mxu0 0
        %7397 = vmatpush1.bf16.msra.mxu0 0
        %7398 = vmatprep.subr.bf16.mxu0 0
        %7399 = vmatpush1.bf16.msra.mxu0 0
        %7400 = vmatprep.subr.bf16.mxu0 0
        %7401 = vmatpush1.bf16.msra.mxu0 0
        %7402 = vmatprep.subr.bf16.mxu0 0
        %7403 = vmatpush1.bf16.msra.mxu0 0
        %7404 = vmatprep.mubr.bf16.mxu0 0
        %7405 = vmatmul.mubr.bf16.gmra.mrb[0].mxu0 %v6636
        %v7406 = vpop.f32.mrb[0].mxu0
        %v7407 = vadd.f32 %v7214, %v7406
        %v7408 = vpop.f32.mrb[0].mxu0
        %v7409 = vadd.f32 %v7216, %v7408
        %v7410 = vpop.f32.mrb[0].mxu0
        %v7411 = vadd.f32 %v7218, %v7410
        %v7412 = vpop.f32.mrb[0].mxu0
        %v7413 = vadd.f32 %v7220, %v7412
        %7414 = vmatprep.mubr.bf16.mxu0 0
        %7415 = vmatmul.mubr.bf16.gmra.mrb[0].mxu0 %v6639
        %v7416 = vpop.f32.mrb[0].mxu0
        %v7417 = vadd.f32 %v7224, %v7416
        %v7418 = vpop.f32.mrb[0].mxu0
        %v7419 = vadd.f32 %v7226, %v7418
        %v7420 = vpop.f32.mrb[0].mxu0
        %v7421 = vadd.f32 %v7228, %v7420
        %v7422 = vpop.f32.mrb[0].mxu0
        %v7423 = vadd.f32 %v7230, %v7422
        %7424 = vmatprep.mubr.bf16.mxu0 0
        %7425 = vmatmul.mubr.bf16.gmra.mrb[0].mxu0 %v6642
        %v7426 = vpop.f32.mrb[0].mxu0
        %v7427 = vadd.f32 %v7234, %v7426
        %v7428 = vpop.f32.mrb[0].mxu0
        %v7429 = vadd.f32 %v7236, %v7428
        %v7430 = vpop.f32.mrb[0].mxu0
        %v7431 = vadd.f32 %v7238, %v7430
        %v7432 = vpop.f32.mrb[0].mxu0
        %v7433 = vadd.f32 %v7240, %v7432
        %7434 = vmatprep.mubr.bf16.mxu0 0
        %7435 = vmatmul.mubr.bf16.gmra.mrb[0].mxu0 %v6645
        %v7436 = vpop.f32.mrb[0].mxu0
        %v7437 = vadd.f32 %v7244, %v7436
        %v7438 = vpop.f32.mrb[0].mxu0
        %v7439 = vadd.f32 %v7246, %v7438
        %v7440 = vpop.f32.mrb[0].mxu0
        %v7441 = vadd.f32 %v7248, %v7440
        %v7442 = vpop.f32.mrb[0].mxu0
        %v7443 = vadd.f32 %v7250, %v7442
        %7444 = vmatprep.mubr.bf16.mxu0 0
        %7445 = vmatmul.mubr.bf16.gmra.mrb[0].mxu0 %v6648
        %v7446 = vpop.f32.mrb[0].mxu0
        %v7447 = vadd.f32 %v7254, %v7446
        %v7448 = vpop.f32.mrb[0].mxu0
        %v7449 = vadd.f32 %v7256, %v7448
        %v7450 = vpop.f32.mrb[0].mxu0
        %v7451 = vadd.f32 %v7258, %v7450
        %v7452 = vpop.f32.mrb[0].mxu0
        %v7453 = vadd.f32 %v7260, %v7452
        %7454 = vmatprep.mubr.bf16.mxu0 0
        %7455 = vmatmul.mubr.bf16.gmra.mrb[0].mxu0 %v6651
        %v7456 = vpop.f32.mrb[0].mxu0
        %v7457 = vadd.f32 %v7264, %v7456
        %v7458 = vpop.f32.mrb[0].mxu0
        %v7459 = vadd.f32 %v7266, %v7458
        %v7460 = vpop.f32.mrb[0].mxu0
        %v7461 = vadd.f32 %v7268, %v7460
        %v7462 = vpop.f32.mrb[0].mxu0
        %v7463 = vadd.f32 %v7270, %v7462
        %7464 = vmatprep.mubr.bf16.mxu0 0
        %7465 = vmatmul.mubr.bf16.gmra.mrb[0].mxu0 %v6654
        %v7466 = vpop.f32.mrb[0].mxu0
        %v7467 = vadd.f32 %v7274, %v7466
        %v7468 = vpop.f32.mrb[0].mxu0
        %v7469 = vadd.f32 %v7276, %v7468
        %v7470 = vpop.f32.mrb[0].mxu0
        %v7471 = vadd.f32 %v7278, %v7470
        %v7472 = vpop.f32.mrb[0].mxu0
        %v7473 = vadd.f32 %v7280, %v7472
        %7474 = vmatprep.mubr.bf16.mxu0 0
        %7475 = vmatmul.mubr.bf16.gmra.mrb[0].mxu0 %v6657
        %v7476 = vpop.f32.mrb[0].mxu0
        %v7477 = vadd.f32 %v7284, %v7476
        %v7478 = vpop.f32.mrb[0].mxu0
        %v7479 = vadd.f32 %v7286, %v7478
        %v7480 = vpop.f32.mrb[0].mxu0
        %v7481 = vadd.f32 %v7288, %v7480
        %v7482 = vpop.f32.mrb[0].mxu0
        %v7483 = vadd.f32 %v7290, %v7482
        %7484 = vmatprep.mubr.bf16.mxu0 0
        %7485 = vmatmul.mubr.bf16.gmra.mrb[0].mxu0 %v6660
        %v7486 = vpop.f32.mrb[0].mxu0
        %v7487 = vadd.f32 %v7294, %v7486
        %v7488 = vpop.f32.mrb[0].mxu0
        %v7489 = vadd.f32 %v7296, %v7488
        %v7490 = vpop.f32.mrb[0].mxu0
        %v7491 = vadd.f32 %v7298, %v7490
        %v7492 = vpop.f32.mrb[0].mxu0
        %v7493 = vadd.f32 %v7300, %v7492
        %7494 = vmatprep.mubr.bf16.mxu0 0
        %7495 = vmatmul.mubr.bf16.gmra.mrb[0].mxu0 %v6663
        %v7496 = vpop.f32.mrb[0].mxu0
        %v7497 = vadd.f32 %v7304, %v7496
        %v7498 = vpop.f32.mrb[0].mxu0
        %v7499 = vadd.f32 %v7306, %v7498
        %v7500 = vpop.f32.mrb[0].mxu0
        %v7501 = vadd.f32 %v7308, %v7500
        %v7502 = vpop.f32.mrb[0].mxu0
        %v7503 = vadd.f32 %v7310, %v7502
        %7504 = vmatprep.mubr.bf16.mxu0 0
        %7505 = vmatmul.mubr.bf16.gmra.mrb[0].mxu0 %v6666
        %v7506 = vpop.f32.mrb[0].mxu0
        %v7507 = vadd.f32 %v7314, %v7506
        %v7508 = vpop.f32.mrb[0].mxu0
        %v7509 = vadd.f32 %v7316, %v7508
        %v7510 = vpop.f32.mrb[0].mxu0
        %v7511 = vadd.f32 %v7318, %v7510
        %v7512 = vpop.f32.mrb[0].mxu0
        %v7513 = vadd.f32 %v7320, %v7512
        %7514 = vmatprep.mubr.bf16.mxu0 0
        %7515 = vmatmul.mubr.bf16.gmra.mrb[0].mxu0 %v6669
        %v7516 = vpop.f32.mrb[0].mxu0
        %v7517 = vadd.f32 %v7324, %v7516
        %v7518 = vpop.f32.mrb[0].mxu0
        %v7519 = vadd.f32 %v7326, %v7518
        %v7520 = vpop.f32.mrb[0].mxu0
        %v7521 = vadd.f32 %v7328, %v7520
        %v7522 = vpop.f32.mrb[0].mxu0
        %v7523 = vadd.f32 %v7330, %v7522
        %7524 = vmatprep.mubr.bf16.mxu0 0
        %7525 = vmatmul.mubr.bf16.gmra.mrb[0].mxu0 %v6672
        %v7526 = vpop.f32.mrb[0].mxu0
        %v7527 = vadd.f32 %v7334, %v7526
        %v7528 = vpop.f32.mrb[0].mxu0
        %v7529 = vadd.f32 %v7336, %v7528
        %v7530 = vpop.f32.mrb[0].mxu0
        %v7531 = vadd.f32 %v7338, %v7530
        %v7532 = vpop.f32.mrb[0].mxu0
        %v7533 = vadd.f32 %v7340, %v7532
        %7534 = vmatprep.mubr.bf16.mxu0 0
        %7535 = vmatmul.mubr.bf16.gmra.mrb[0].mxu0 %v6675
        %v7536 = vpop.f32.mrb[0].mxu0
        %v7537 = vadd.f32 %v7344, %v7536
        %v7538 = vpop.f32.mrb[0].mxu0
        %v7539 = vadd.f32 %v7346, %v7538
        %v7540 = vpop.f32.mrb[0].mxu0
        %v7541 = vadd.f32 %v7348, %v7540
        %v7542 = vpop.f32.mrb[0].mxu0
        %v7543 = vadd.f32 %v7350, %v7542
        %7544 = vmatprep.mubr.bf16.mxu0 0
        %7545 = vmatmul.mubr.bf16.gmra.mrb[0].mxu0 %v6678
        %v7546 = vpop.f32.mrb[0].mxu0
        %v7547 = vadd.f32 %v7354, %v7546
        %v7548 = vpop.f32.mrb[0].mxu0
        %v7549 = vadd.f32 %v7356, %v7548
        %v7550 = vpop.f32.mrb[0].mxu0
        %v7551 = vadd.f32 %v7358, %v7550
        %v7552 = vpop.f32.mrb[0].mxu0
        %v7553 = vadd.f32 %v7360, %v7552
        %7554 = vmatprep.mubr.bf16.mxu0 0
        %7555 = vmatmul.mubr.bf16.gmra.mrb[0].mxu0 %v6681
        %v7556 = vpop.f32.mrb[0].mxu0
        %v7557 = vadd.f32 %v7364, %v7556
        %v7558 = vpop.f32.mrb[0].mxu0
        %v7559 = vadd.f32 %v7366, %v7558
        %v7560 = vpop.f32.mrb[0].mxu0
        %v7561 = vadd.f32 %v7368, %v7560
        %v7562 = vpop.f32.mrb[0].mxu0
        %v7563 = vadd.f32 %v7370, %v7562
        %7564 = vdwg.mxu0
        %7565 = vmatprep.subr.bf16.mxu0 0
        %7566 = vmatpush1.bf16.msra.mxu0 %v7037
        %7567 = vmatprep.subr.bf16.mxu0 0
        %7568 = vmatpush1.bf16.msra.mxu0 %v7040
        %7569 = vmatprep.subr.bf16.mxu0 0
        %7570 = vmatpush1.bf16.msra.mxu0 %v7043
        %7571 = vmatprep.subr.bf16.mxu0 0
        %7572 = vmatpush1.bf16.msra.mxu0 %v7046
        %7573 = vmatprep.subr.bf16.mxu0 0
        %7574 = vmatpush1.bf16.msra.mxu0 %v7049
        %7575 = vmatprep.subr.bf16.mxu0 0
        %7576 = vmatpush1.bf16.msra.mxu0 %v7052
        %7577 = vmatprep.subr.bf16.mxu0 0
        %7578 = vmatpush1.bf16.msra.mxu0 %v7055
        %7579 = vmatprep.subr.bf16.mxu0 0
        %7580 = vmatpush1.bf16.msra.mxu0 %v7058
        %7581 = vmatprep.subr.bf16.mxu0 0
        %7582 = vmatpush1.bf16.msra.mxu0 %v7061
        %7583 = vmatprep.subr.bf16.mxu0 0
        %7584 = vmatpush1.bf16.msra.mxu0 %v7064
        %7585 = vmatprep.subr.bf16.mxu0 0
        %7586 = vmatpush1.bf16.msra.mxu0 %v7067
        %7587 = vmatprep.subr.bf16.mxu0 0
        %7588 = vmatpush1.bf16.msra.mxu0 %v7070
        %7589 = vmatprep.subr.bf16.mxu0 0
        %7590 = vmatpush1.bf16.msra.mxu0 %v7073
        %7591 = vmatprep.subr.bf16.mxu0 0
        %7592 = vmatpush1.bf16.msra.mxu0 %v7076
        %7593 = vmatprep.subr.bf16.mxu0 0
        %7594 = vmatpush1.bf16.msra.mxu0 %v7079
        %7595 = vmatprep.subr.bf16.mxu0 0
        %7596 = vmatpush1.bf16.msra.mxu0 %v7082
        %7597 = vmatprep.mubr.bf16.mxu0 %v6635
        %7598 = vmatmul.mubr.bf16.gmra.mrb[0].mxu0 %v6634
        %v7599 = vpop.f32.mrb[0].mxu0
        %v7600 = vadd.f32 %v6791, %v7599
        %v7601 = vpop.f32.mrb[0].mxu0
        %v7602 = vpop.f32.mrb[0].mxu0
        %v7603 = vadd.f32 %v6791, %v7602
        %v7604 = vpop.f32.mrb[0].mxu0
        %7605 = vmatprep.mubr.bf16.mxu0 %v6638
        %7606 = vmatmul.mubr.bf16.gmra.mrb[0].mxu0 %v6637
        %v7607 = vpop.f32.mrb[0].mxu0
        %v7608 = vadd.f32 %v6791, %v7607
        %v7609 = vpop.f32.mrb[0].mxu0
        %v7610 = vpop.f32.mrb[0].mxu0
        %v7611 = vadd.f32 %v6791, %v7610
        %v7612 = vpop.f32.mrb[0].mxu0
        %7613 = vmatprep.mubr.bf16.mxu0 %v6641
        %7614 = vmatmul.mubr.bf16.gmra.mrb[0].mxu0 %v6640
        %v7615 = vpop.f32.mrb[0].mxu0
        %v7616 = vadd.f32 %v6791, %v7615
        %v7617 = vpop.f32.mrb[0].mxu0
        %v7618 = vpop.f32.mrb[0].mxu0
        %v7619 = vadd.f32 %v6791, %v7618
        %v7620 = vpop.f32.mrb[0].mxu0
        %7621 = vmatprep.mubr.bf16.mxu0 %v6644
        %7622 = vmatmul.mubr.bf16.gmra.mrb[0].mxu0 %v6643
        %v7623 = vpop.f32.mrb[0].mxu0
        %v7624 = vadd.f32 %v6791, %v7623
        %v7625 = vpop.f32.mrb[0].mxu0
        %v7626 = vpop.f32.mrb[0].mxu0
        %v7627 = vadd.f32 %v6791, %v7626
        %v7628 = vpop.f32.mrb[0].mxu0
        %7629 = vmatprep.mubr.bf16.mxu0 %v6647
        %7630 = vmatmul.mubr.bf16.gmra.mrb[0].mxu0 %v6646
        %v7631 = vpop.f32.mrb[0].mxu0
        %v7632 = vadd.f32 %v6791, %v7631
        %v7633 = vpop.f32.mrb[0].mxu0
        %v7634 = vpop.f32.mrb[0].mxu0
        %v7635 = vadd.f32 %v6791, %v7634
        %v7636 = vpop.f32.mrb[0].mxu0
        %7637 = vmatprep.mubr.bf16.mxu0 %v6650
        %7638 = vmatmul.mubr.bf16.gmra.mrb[0].mxu0 %v6649
        %v7639 = vpop.f32.mrb[0].mxu0
        %v7640 = vadd.f32 %v6791, %v7639
        %v7641 = vpop.f32.mrb[0].mxu0
        %v7642 = vpop.f32.mrb[0].mxu0
        %v7643 = vadd.f32 %v6791, %v7642
        %v7644 = vpop.f32.mrb[0].mxu0
        %7645 = vmatprep.mubr.bf16.mxu0 %v6653
        %7646 = vmatmul.mubr.bf16.gmra.mrb[0].mxu0 %v6652
        %v7647 = vpop.f32.mrb[0].mxu0
        %v7648 = vadd.f32 %v6791, %v7647
        %v7649 = vpop.f32.mrb[0].mxu0
        %v7650 = vpop.f32.mrb[0].mxu0
        %v7651 = vadd.f32 %v6791, %v7650
        %v7652 = vpop.f32.mrb[0].mxu0
        %7653 = vmatprep.mubr.bf16.mxu0 %v6656
        %7654 = vmatmul.mubr.bf16.gmra.mrb[0].mxu0 %v6655
        %v7655 = vpop.f32.mrb[0].mxu0
        %v7656 = vadd.f32 %v6791, %v7655
        %v7657 = vpop.f32.mrb[0].mxu0
        %v7658 = vpop.f32.mrb[0].mxu0
        %v7659 = vadd.f32 %v6791, %v7658
        %v7660 = vpop.f32.mrb[0].mxu0
        %7661 = vmatprep.mubr.bf16.mxu0 %v6659
        %7662 = vmatmul.mubr.bf16.gmra.mrb[0].mxu0 %v6658
        %v7663 = vpop.f32.mrb[0].mxu0
        %v7664 = vadd.f32 %v6791, %v7663
        %v7665 = vpop.f32.mrb[0].mxu0
        %v7666 = vpop.f32.mrb[0].mxu0
        %v7667 = vadd.f32 %v6791, %v7666
        %v7668 = vpop.f32.mrb[0].mxu0
        %7669 = vmatprep.mubr.bf16.mxu0 %v6662
        %7670 = vmatmul.mubr.bf16.gmra.mrb[0].mxu0 %v6661
        %v7671 = vpop.f32.mrb[0].mxu0
        %v7672 = vadd.f32 %v6791, %v7671
        %v7673 = vpop.f32.mrb[0].mxu0
        %v7674 = vpop.f32.mrb[0].mxu0
        %v7675 = vadd.f32 %v6791, %v7674
        %v7676 = vpop.f32.mrb[0].mxu0
        %7677 = vmatprep.mubr.bf16.mxu0 %v6665
        %7678 = vmatmul.mubr.bf16.gmra.mrb[0].mxu0 %v6664
        %v7679 = vpop.f32.mrb[0].mxu0
        %v7680 = vadd.f32 %v6791, %v7679
        %v7681 = vpop.f32.mrb[0].mxu0
        %v7682 = vpop.f32.mrb[0].mxu0
        %v7683 = vadd.f32 %v6791, %v7682
        %v7684 = vpop.f32.mrb[0].mxu0
        %7685 = vmatprep.mubr.bf16.mxu0 %v6668
        %7686 = vmatmul.mubr.bf16.gmra.mrb[0].mxu0 %v6667
        %v7687 = vpop.f32.mrb[0].mxu0
        %v7688 = vadd.f32 %v6791, %v7687
        %v7689 = vpop.f32.mrb[0].mxu0
        %v7690 = vpop.f32.mrb[0].mxu0
        %v7691 = vadd.f32 %v6791, %v7690
        %v7692 = vpop.f32.mrb[0].mxu0
        %7693 = vmatprep.mubr.bf16.mxu0 %v6671
        %7694 = vmatmul.mubr.bf16.gmra.mrb[0].mxu0 %v6670
        %v7695 = vpop.f32.mrb[0].mxu0
        %v7696 = vadd.f32 %v6791, %v7695
        %v7697 = vpop.f32.mrb[0].mxu0
        %v7698 = vpop.f32.mrb[0].mxu0
        %v7699 = vadd.f32 %v6791, %v7698
        %v7700 = vpop.f32.mrb[0].mxu0
        %7701 = vmatprep.mubr.bf16.mxu0 %v6674
        %7702 = vmatmul.mubr.bf16.gmra.mrb[0].mxu0 %v6673
        %v7703 = vpop.f32.mrb[0].mxu0
        %v7704 = vadd.f32 %v6791, %v7703
        %v7705 = vpop.f32.mrb[0].mxu0
        %v7706 = vpop.f32.mrb[0].mxu0
        %v7707 = vadd.f32 %v6791, %v7706
        %v7708 = vpop.f32.mrb[0].mxu0
        %7709 = vmatprep.mubr.bf16.mxu0 %v6677
        %7710 = vmatmul.mubr.bf16.gmra.mrb[0].mxu0 %v6676
        %v7711 = vpop.f32.mrb[0].mxu0
        %v7712 = vadd.f32 %v6791, %v7711
        %v7713 = vpop.f32.mrb[0].mxu0
        %v7714 = vpop.f32.mrb[0].mxu0
        %v7715 = vadd.f32 %v6791, %v7714
        %v7716 = vpop.f32.mrb[0].mxu0
        %7717 = vmatprep.mubr.bf16.mxu0 %v6680
        %7718 = vmatmul.mubr.bf16.gmra.mrb[0].mxu0 %v6679
        %v7719 = vpop.f32.mrb[0].mxu0
        %v7720 = vadd.f32 %v6791, %v7719
        %v7721 = vpop.f32.mrb[0].mxu0
        %v7722 = vpop.f32.mrb[0].mxu0
        %v7723 = vadd.f32 %v6791, %v7722
        %v7724 = vpop.f32.mrb[0].mxu0
        %7725 = vdwg.mxu0
        %7726 = vmatprep.subr.bf16.mxu0 0
        %7727 = vmatpush1.bf16.msra.mxu0 %v7085
        %7728 = vmatprep.subr.bf16.mxu0 0
        %7729 = vmatpush1.bf16.msra.mxu0 %v7088
        %7730 = vmatprep.subr.bf16.mxu0 0
        %7731 = vmatpush1.bf16.msra.mxu0 %v7091
        %7732 = vmatprep.subr.bf16.mxu0 0
        %7733 = vmatpush1.bf16.msra.mxu0 %v7094
        %7734 = vmatprep.subr.bf16.mxu0 0
        %7735 = vmatpush1.bf16.msra.mxu0 %v7097
        %7736 = vmatprep.subr.bf16.mxu0 0
        %7737 = vmatpush1.bf16.msra.mxu0 %v7100
        %7738 = vmatprep.subr.bf16.mxu0 0
        %7739 = vmatpush1.bf16.msra.mxu0 %v7103
        %7740 = vmatprep.subr.bf16.mxu0 0
        %7741 = vmatpush1.bf16.msra.mxu0 %v7106
        %7742 = vmatprep.subr.bf16.mxu0 0
        %7743 = vmatpush1.bf16.msra.mxu0 0
        %7744 = vmatprep.subr.bf16.mxu0 0
        %7745 = vmatpush1.bf16.msra.mxu0 0
        %7746 = vmatprep.subr.bf16.mxu0 0
        %7747 = vmatpush1.bf16.msra.mxu0 0
        %7748 = vmatprep.subr.bf16.mxu0 0
        %7749 = vmatpush1.bf16.msra.mxu0 0
        %7750 = vmatprep.subr.bf16.mxu0 0
        %7751 = vmatpush1.bf16.msra.mxu0 0
        %7752 = vmatprep.subr.bf16.mxu0 0
        %7753 = vmatpush1.bf16.msra.mxu0 0
        %7754 = vmatprep.subr.bf16.mxu0 0
        %7755 = vmatpush1.bf16.msra.mxu0 0
        %7756 = vmatprep.subr.bf16.mxu0 0
        %7757 = vmatpush1.bf16.msra.mxu0 0
        %7758 = vmatprep.mubr.bf16.mxu0 0
        %7759 = vmatmul.mubr.bf16.gmra.mrb[0].mxu0 %v6636
        %v7760 = vpop.f32.mrb[0].mxu0
        %v7761 = vadd.f32 %v7600, %v7760
        %v7762 = vpop.f32.mrb[0].mxu0
        %v7763 = vpop.f32.mrb[0].mxu0
        %v7764 = vadd.f32 %v7603, %v7763
        %v7765 = vpop.f32.mrb[0].mxu0
        %7766 = vmatprep.mubr.bf16.mxu0 0
        %7767 = vmatmul.mubr.bf16.gmra.mrb[0].mxu0 %v6639
        %v7768 = vpop.f32.mrb[0].mxu0
        %v7769 = vadd.f32 %v7608, %v7768
        %v7770 = vpop.f32.mrb[0].mxu0
        %v7771 = vpop.f32.mrb[0].mxu0
        %v7772 = vadd.f32 %v7611, %v7771
        %v7773 = vpop.f32.mrb[0].mxu0
        %7774 = vmatprep.mubr.bf16.mxu0 0
        %7775 = vmatmul.mubr.bf16.gmra.mrb[0].mxu0 %v6642
        %v7776 = vpop.f32.mrb[0].mxu0
        %v7777 = vadd.f32 %v7616, %v7776
        %v7778 = vpop.f32.mrb[0].mxu0
        %v7779 = vpop.f32.mrb[0].mxu0
        %v7780 = vadd.f32 %v7619, %v7779
        %v7781 = vpop.f32.mrb[0].mxu0
        %7782 = vmatprep.mubr.bf16.mxu0 0
        %7783 = vmatmul.mubr.bf16.gmra.mrb[0].mxu0 %v6645
        %v7784 = vpop.f32.mrb[0].mxu0
        %v7785 = vadd.f32 %v7624, %v7784
        %v7786 = vpop.f32.mrb[0].mxu0
        %v7787 = vpop.f32.mrb[0].mxu0
        %v7788 = vadd.f32 %v7627, %v7787
        %v7789 = vpop.f32.mrb[0].mxu0
        %7790 = vmatprep.mubr.bf16.mxu0 0
        %7791 = vmatmul.mubr.bf16.gmra.mrb[0].mxu0 %v6648
        %v7792 = vpop.f32.mrb[0].mxu0
        %v7793 = vadd.f32 %v7632, %v7792
        %v7794 = vpop.f32.mrb[0].mxu0
        %v7795 = vpop.f32.mrb[0].mxu0
        %v7796 = vadd.f32 %v7635, %v7795
        %v7797 = vpop.f32.mrb[0].mxu0
        %7798 = vmatprep.mubr.bf16.mxu0 0
        %7799 = vmatmul.mubr.bf16.gmra.mrb[0].mxu0 %v6651
        %v7800 = vpop.f32.mrb[0].mxu0
        %v7801 = vadd.f32 %v7640, %v7800
        %v7802 = vpop.f32.mrb[0].mxu0
        %v7803 = vpop.f32.mrb[0].mxu0
        %v7804 = vadd.f32 %v7643, %v7803
        %v7805 = vpop.f32.mrb[0].mxu0
        %7806 = vmatprep.mubr.bf16.mxu0 0
        %7807 = vmatmul.mubr.bf16.gmra.mrb[0].mxu0 %v6654
        %v7808 = vpop.f32.mrb[0].mxu0
        %v7809 = vadd.f32 %v7648, %v7808
        %v7810 = vpop.f32.mrb[0].mxu0
        %v7811 = vpop.f32.mrb[0].mxu0
        %v7812 = vadd.f32 %v7651, %v7811
        %v7813 = vpop.f32.mrb[0].mxu0
        %7814 = vmatprep.mubr.bf16.mxu0 0
        %7815 = vmatmul.mubr.bf16.gmra.mrb[0].mxu0 %v6657
        %v7816 = vpop.f32.mrb[0].mxu0
        %v7817 = vadd.f32 %v7656, %v7816
        %v7818 = vpop.f32.mrb[0].mxu0
        %v7819 = vpop.f32.mrb[0].mxu0
        %v7820 = vadd.f32 %v7659, %v7819
        %v7821 = vpop.f32.mrb[0].mxu0
        %7822 = vmatprep.mubr.bf16.mxu0 0
        %7823 = vmatmul.mubr.bf16.gmra.mrb[0].mxu0 %v6660
        %v7824 = vpop.f32.mrb[0].mxu0
        %v7825 = vadd.f32 %v7664, %v7824
        %v7826 = vpop.f32.mrb[0].mxu0
        %v7827 = vpop.f32.mrb[0].mxu0
        %v7828 = vadd.f32 %v7667, %v7827
        %v7829 = vpop.f32.mrb[0].mxu0
        %7830 = vmatprep.mubr.bf16.mxu0 0
        %7831 = vmatmul.mubr.bf16.gmra.mrb[0].mxu0 %v6663
        %v7832 = vpop.f32.mrb[0].mxu0
        %v7833 = vadd.f32 %v7672, %v7832
        %v7834 = vpop.f32.mrb[0].mxu0
        %v7835 = vpop.f32.mrb[0].mxu0
        %v7836 = vadd.f32 %v7675, %v7835
        %v7837 = vpop.f32.mrb[0].mxu0
        %7838 = vmatprep.mubr.bf16.mxu0 0
        %7839 = vmatmul.mubr.bf16.gmra.mrb[0].mxu0 %v6666
        %v7840 = vpop.f32.mrb[0].mxu0
        %v7841 = vadd.f32 %v7680, %v7840
        %v7842 = vpop.f32.mrb[0].mxu0
        %v7843 = vpop.f32.mrb[0].mxu0
        %v7844 = vadd.f32 %v7683, %v7843
        %v7845 = vpop.f32.mrb[0].mxu0
        %7846 = vmatprep.mubr.bf16.mxu0 0
        %7847 = vmatmul.mubr.bf16.gmra.mrb[0].mxu0 %v6669
        %v7848 = vpop.f32.mrb[0].mxu0
        %v7849 = vadd.f32 %v7688, %v7848
        %v7850 = vpop.f32.mrb[0].mxu0
        %v7851 = vpop.f32.mrb[0].mxu0
        %v7852 = vadd.f32 %v7691, %v7851
        %v7853 = vpop.f32.mrb[0].mxu0
        %7854 = vmatprep.mubr.bf16.mxu0 0
        %7855 = vmatmul.mubr.bf16.gmra.mrb[0].mxu0 %v6672
        %v7856 = vpop.f32.mrb[0].mxu0
        %v7857 = vadd.f32 %v7696, %v7856
        %v7858 = vpop.f32.mrb[0].mxu0
        %v7859 = vpop.f32.mrb[0].mxu0
        %v7860 = vadd.f32 %v7699, %v7859
        %v7861 = vpop.f32.mrb[0].mxu0
        %7862 = vmatprep.mubr.bf16.mxu0 0
        %7863 = vmatmul.mubr.bf16.gmra.mrb[0].mxu0 %v6675
        %v7864 = vpop.f32.mrb[0].mxu0
        %v7865 = vadd.f32 %v7704, %v7864
        %v7866 = vpop.f32.mrb[0].mxu0
        %v7867 = vpop.f32.mrb[0].mxu0
        %v7868 = vadd.f32 %v7707, %v7867
        %v7869 = vpop.f32.mrb[0].mxu0
        %7870 = vmatprep.mubr.bf16.mxu0 0
        %7871 = vmatmul.mubr.bf16.gmra.mrb[0].mxu0 %v6678
        %v7872 = vpop.f32.mrb[0].mxu0
        %v7873 = vadd.f32 %v7712, %v7872
        %v7874 = vpop.f32.mrb[0].mxu0
        %v7875 = vpop.f32.mrb[0].mxu0
        %v7876 = vadd.f32 %v7715, %v7875
        %v7877 = vpop.f32.mrb[0].mxu0
        %7878 = vmatprep.mubr.bf16.mxu0 0
        %7879 = vmatmul.mubr.bf16.gmra.mrb[0].mxu0 %v6681
        %v7880 = vpop.f32.mrb[0].mxu0
        %v7881 = vadd.f32 %v7720, %v7880
        %v7882 = vpop.f32.mrb[0].mxu0
        %v7883 = vpop.f32.mrb[0].mxu0
        %v7884 = vadd.f32 %v7723, %v7883
        %v7885 = vpop.f32.mrb[0].mxu0
        %7886 = vdwg.mxu0
        %v7887 = vmax.f32 %v7407, 0.0
        %v7888 = vmax.f32 %v7409, 0.0
        %v7889 = vmax.f32 %v7761, 0.0
        %v7890 = vmax.f32 %v7411, 0.0
        %v7891 = vmax.f32 %v7413, 0.0
        %v7892 = vmax.f32 %v7764, 0.0
        %v7893 = vmax.f32 %v7417, 0.0
        %v7894 = vmax.f32 %v7419, 0.0
        %v7895 = vmax.f32 %v7769, 0.0
        %v7896 = vmax.f32 %v7421, 0.0
        %v7897 = vmax.f32 %v7423, 0.0
        %v7898 = vmax.f32 %v7772, 0.0
        %v7899 = vmax.f32 %v7427, 0.0
        %v7900 = vmax.f32 %v7429, 0.0
        %v7901 = vmax.f32 %v7777, 0.0
        %v7902 = vmax.f32 %v7431, 0.0
        %v7903 = vmax.f32 %v7433, 0.0
        %v7904 = vmax.f32 %v7780, 0.0
        %v7905 = vmax.f32 %v7437, 0.0
        %v7906 = vmax.f32 %v7439, 0.0
        %v7907 = vmax.f32 %v7785, 0.0
        %v7908 = vmax.f32 %v7441, 0.0
        %v7909 = vmax.f32 %v7443, 0.0
        %v7910 = vmax.f32 %v7788, 0.0
        %v7911 = vmax.f32 %v7447, 0.0
        %v7912 = vmax.f32 %v7449, 0.0
        %v7913 = vmax.f32 %v7793, 0.0
        %v7914 = vmax.f32 %v7451, 0.0
        %v7915 = vmax.f32 %v7453, 0.0
        %v7916 = vmax.f32 %v7796, 0.0
        %v7917 = vmax.f32 %v7457, 0.0
        %v7918 = vmax.f32 %v7459, 0.0
        %v7919 = vmax.f32 %v7801, 0.0
        %v7920 = vmax.f32 %v7461, 0.0
        %v7921 = vmax.f32 %v7463, 0.0
        %v7922 = vmax.f32 %v7804, 0.0
        %v7923 = vmax.f32 %v7467, 0.0
        %v7924 = vmax.f32 %v7469, 0.0
        %v7925 = vmax.f32 %v7809, 0.0
        %v7926 = vmax.f32 %v7471, 0.0
        %v7927 = vmax.f32 %v7473, 0.0
        %v7928 = vmax.f32 %v7812, 0.0
        %v7929 = vmax.f32 %v7477, 0.0
        %v7930 = vmax.f32 %v7479, 0.0
        %v7931 = vmax.f32 %v7817, 0.0
        %v7932 = vmax.f32 %v7481, 0.0
        %v7933 = vmax.f32 %v7483, 0.0
        %v7934 = vmax.f32 %v7820, 0.0
        %v7935 = vmax.f32 %v7487, 0.0
        %v7936 = vmax.f32 %v7489, 0.0
        %v7937 = vmax.f32 %v7825, 0.0
        %v7938 = vmax.f32 %v7491, 0.0
        %v7939 = vmax.f32 %v7493, 0.0
        %v7940 = vmax.f32 %v7828, 0.0
        %v7941 = vmax.f32 %v7497, 0.0
        %v7942 = vmax.f32 %v7499, 0.0
        %v7943 = vmax.f32 %v7833, 0.0
        %v7944 = vmax.f32 %v7501, 0.0
        %v7945 = vmax.f32 %v7503, 0.0
        %v7946 = vmax.f32 %v7836, 0.0
        %v7947 = vmax.f32 %v7507, 0.0
        %v7948 = vmax.f32 %v7509, 0.0
        %v7949 = vmax.f32 %v7841, 0.0
        %v7950 = vmax.f32 %v7511, 0.0
        %v7951 = vmax.f32 %v7513, 0.0
        %v7952 = vmax.f32 %v7844, 0.0
        %v7953 = vmax.f32 %v7517, 0.0
        %v7954 = vmax.f32 %v7519, 0.0
        %v7955 = vmax.f32 %v7849, 0.0
        %v7956 = vmax.f32 %v7521, 0.0
        %v7957 = vmax.f32 %v7523, 0.0
        %v7958 = vmax.f32 %v7852, 0.0
        %v7959 = vmax.f32 %v7527, 0.0
        %v7960 = vmax.f32 %v7529, 0.0
        %v7961 = vmax.f32 %v7857, 0.0
        %v7962 = vmax.f32 %v7531, 0.0
        %v7963 = vmax.f32 %v7533, 0.0
        %v7964 = vmax.f32 %v7860, 0.0
        %v7965 = vmax.f32 %v7537, 0.0
        %v7966 = vmax.f32 %v7539, 0.0
        %v7967 = vmax.f32 %v7865, 0.0
        %v7968 = vmax.f32 %v7541, 0.0
        %v7969 = vmax.f32 %v7543, 0.0
        %v7970 = vmax.f32 %v7868, 0.0
        %v7971 = vmax.f32 %v7547, 0.0
        %v7972 = vmax.f32 %v7549, 0.0
        %v7973 = vmax.f32 %v7873, 0.0
        %v7974 = vmax.f32 %v7551, 0.0
        %v7975 = vmax.f32 %v7553, 0.0
        %v7976 = vmax.f32 %v7876, 0.0
        %v7977 = vmax.f32 %v7557, 0.0
        %v7978 = vmax.f32 %v7559, 0.0
        %v7979 = vmax.f32 %v7881, 0.0
        %v7980 = vmax.f32 %v7561, 0.0
        %v7981 = vmax.f32 %v7563, 0.0
        %v7982 = vmax.f32 %v7884, 0.0
        %v7983 = vpack.c.bf16 %v7890, %v7887
        %v7984 = vpack.c.bf16 %v7891, %v7888
        %v7985 = vpack.c.bf16 %v7892, %v7889
        %v7986 = vpack.c.bf16 %v7896, %v7893
        %v7987 = vpack.c.bf16 %v7897, %v7894
        %v7988 = vpack.c.bf16 %v7898, %v7895
        %v7989 = vpack.c.bf16 %v7902, %v7899
        %v7990 = vpack.c.bf16 %v7903, %v7900
        %v7991 = vpack.c.bf16 %v7904, %v7901
        %v7992 = vpack.c.bf16 %v7908, %v7905
        %v7993 = vpack.c.bf16 %v7909, %v7906
        %v7994 = vpack.c.bf16 %v7910, %v7907
        %v7995 = vpack.c.bf16 %v7914, %v7911
        %v7996 = vpack.c.bf16 %v7915, %v7912
        %v7997 = vpack.c.bf16 %v7916, %v7913
        %v7998 = vpack.c.bf16 %v7920, %v7917
        %v7999 = vpack.c.bf16 %v7921, %v7918
        %v8000 = vpack.c.bf16 %v7922, %v7919
        %v8001 = vpack.c.bf16 %v7926, %v7923
        %v8002 = vpack.c.bf16 %v7927, %v7924
        %v8003 = vpack.c.bf16 %v7928, %v7925
        %v8004 = vpack.c.bf16 %v7932, %v7929
        %v8005 = vpack.c.bf16 %v7933, %v7930
        %v8006 = vpack.c.bf16 %v7934, %v7931
        %v8007 = vpack.c.bf16 %v7938, %v7935
        %v8008 = vpack.c.bf16 %v7939, %v7936
        %v8009 = vpack.c.bf16 %v7940, %v7937
        %v8010 = vpack.c.bf16 %v7944, %v7941
        %v8011 = vpack.c.bf16 %v7945, %v7942
        %v8012 = vpack.c.bf16 %v7946, %v7943
        %v8013 = vpack.c.bf16 %v7950, %v7947
        %v8014 = vpack.c.bf16 %v7951, %v7948
        %v8015 = vpack.c.bf16 %v7952, %v7949
        %v8016 = vpack.c.bf16 %v7956, %v7953
        %v8017 = vpack.c.bf16 %v7957, %v7954
        %v8018 = vpack.c.bf16 %v7958, %v7955
        %v8019 = vpack.c.bf16 %v7962, %v7959
        %v8020 = vpack.c.bf16 %v7963, %v7960
        %v8021 = vpack.c.bf16 %v7964, %v7961
        %v8022 = vpack.c.bf16 %v7968, %v7965
        %v8023 = vpack.c.bf16 %v7969, %v7966
        %v8024 = vpack.c.bf16 %v7970, %v7967
        %v8025 = vpack.c.bf16 %v7974, %v7971
        %v8026 = vpack.c.bf16 %v7975, %v7972
        %v8027 = vpack.c.bf16 %v7976, %v7973
        %v8028 = vpack.c.bf16 %v7980, %v7977
        %v8029 = vpack.c.bf16 %v7981, %v7978
        %v8030 = vpack.c.bf16 %v7982, %v7979
        %v8031 = vld [vmem:[%s13] sm:$0xf]
        %v8032 = vld [vmem:[%s13 + $0x4] sm:$0xf]
        %v8033 = vld [vmem:[%s13 + $0x8] sm:$0xf]
        %v8034 = vld [vmem:[%s13 + $0xc] sm:$0xf]
        %v8035 = vld [vmem:[%s13 + $0x10] sm:$0xf]
        %v8036 = vld [vmem:[%s13 + $0x14] sm:$0xf]
        %v8037 = vld [vmem:[%s13 + $0x18] sm:$0xf]
        %v8038 = vld [vmem:[%s13 + $0x1c] sm:$0xf]
        %v8039 = vld [vmem:[%s13 + $0x20] sm:$0xf]
        %v8040 = vld [vmem:[%s13 + $0x24] sm:$0xf]
        %v8041 = vld [vmem:[%s13 + $0x28] sm:$0xf]
        %v8042 = vld [vmem:[%s13 + $0x2c] sm:$0xf]
        %v8043 = vld [vmem:[%s13 + $0x30] sm:$0xf]
        %v8044 = vld [vmem:[%s13 + $0x34] sm:$0xf]
        %v8045 = vld [vmem:[%s13 + $0x38] sm:$0xf]
        %v8046 = vld [vmem:[%s13 + $0x3c] sm:$0xf]
        %v8047 = vld [vmem:[%s13 + $0x40] sm:$0xf]
        %v8048 = vld [vmem:[%s13 + $0x44] sm:$0xf]
        %v8049 = vld [vmem:[%s13 + $0x48] sm:$0xf]
        %v8050 = vld [vmem:[%s13 + $0x4c] sm:$0xf]
        %v8051 = vld [vmem:[%s13 + $0x50] sm:$0xf]
        %v8052 = vld [vmem:[%s13 + $0x54] sm:$0xf]
        %v8053 = vld [vmem:[%s13 + $0x58] sm:$0xf]
        %v8054 = vld [vmem:[%s13 + $0x5c] sm:$0xf]
        %v8055 = vld [vmem:[%s13 + $0x60] sm:$0xf]
        %v8056 = vld [vmem:[%s13 + $0x64] sm:$0xf]
        %v8057 = vld [vmem:[%s13 + $0x68] sm:$0xf]
        %v8058 = vld [vmem:[%s13 + $0x6c] sm:$0xf]
        %v8059 = vld [vmem:[%s13 + $0x70] sm:$0xf]
        %v8060 = vld [vmem:[%s13 + $0x74] sm:$0xf]
        %v8061 = vld [vmem:[%s13 + $0x78] sm:$0xf]
        %v8062 = vld [vmem:[%s13 + $0x7c] sm:$0xf]
        %v8063 = vld [vmem:[%s13 + $0x80] sm:$0xf]
        %v8064 = vld [vmem:[%s13 + $0x84] sm:$0xf]
        %v8065 = vld [vmem:[%s13 + $0x88] sm:$0xf]
        %v8066 = vld [vmem:[%s13 + $0x8c] sm:$0xf]
        %v8067 = vld [vmem:[%s13 + $0x90] sm:$0xf]
        %v8068 = vld [vmem:[%s13 + $0x94] sm:$0xf]
        %v8069 = vld [vmem:[%s13 + $0x98] sm:$0xf]
        %v8070 = vld [vmem:[%s13 + $0x9c] sm:$0xf]
        %v8071 = vld [vmem:[%s13 + $0xa0] sm:$0xf]
        %v8072 = vld [vmem:[%s13 + $0xa4] sm:$0xf]
        %v8073 = vld [vmem:[%s13 + $0xa8] sm:$0xf]
        %v8074 = vld [vmem:[%s13 + $0xac] sm:$0xf]
        %v8075 = vld [vmem:[%s13 + $0xb0] sm:$0xf]
        %v8076 = vld [vmem:[%s13 + $0xb4] sm:$0xf]
        %v8077 = vld [vmem:[%s13 + $0xb8] sm:$0xf]
        %v8078 = vld [vmem:[%s13 + $0xbc] sm:$0xf]
        %v8079 = vld [vmem:[%s14] sm:$0x1]
        %v8081 = vlaneseq
        %v8082 = vshrl.u32 %v8081, 7
        %v8083 = vsub.s32 0, %v8082
        %v8084 = vrot.slane %v8079, %v8083
        %v8134 = vunpack.c.l.b16 %v8031
        %v8135 = vunpack.c.l.b16 %v8032
        %v8136 = vunpack.c.l.b16 %v8033
        %v8137 = vunpack.c.l.b16 %v8034
        %v8138 = vunpack.c.l.b16 %v8035
        %v8139 = vunpack.c.l.b16 %v8036
        %v8140 = vunpack.c.l.b16 %v8037
        %v8141 = vunpack.c.l.b16 %v8038
        %v8142 = vunpack.c.l.b16 %v8039
        %v8143 = vunpack.c.l.b16 %v8040
        %v8144 = vunpack.c.l.b16 %v8041
        %v8145 = vunpack.c.l.b16 %v8042
        %v8146 = vunpack.c.l.b16 %v8043
        %v8147 = vunpack.c.l.b16 %v8044
        %v8148 = vunpack.c.l.b16 %v8045
        %v8149 = vunpack.c.l.b16 %v8046
        %v8150 = vunpack.c.l.b16 %v8047
        %v8151 = vunpack.c.l.b16 %v8048
        %v8152 = vunpack.c.l.b16 %v8049
        %v8153 = vunpack.c.l.b16 %v8050
        %v8154 = vunpack.c.l.b16 %v8051
        %v8155 = vunpack.c.l.b16 %v8052
        %v8156 = vunpack.c.l.b16 %v8053
        %v8157 = vunpack.c.l.b16 %v8054
        %v8158 = vunpack.c.l.b16 %v8055
        %v8159 = vunpack.c.l.b16 %v8056
        %v8160 = vunpack.c.l.b16 %v8057
        %v8161 = vunpack.c.l.b16 %v8058
        %v8162 = vunpack.c.l.b16 %v8059
        %v8163 = vunpack.c.l.b16 %v8060
        %v8164 = vunpack.c.l.b16 %v8061
        %v8165 = vunpack.c.l.b16 %v8062
        %v8166 = vunpack.c.l.b16 %v8063
        %v8167 = vunpack.c.l.b16 %v8064
        %v8168 = vunpack.c.l.b16 %v8065
        %v8169 = vunpack.c.l.b16 %v8066
        %v8170 = vunpack.c.l.b16 %v8067
        %v8171 = vunpack.c.l.b16 %v8068
        %v8172 = vunpack.c.l.b16 %v8069
        %v8173 = vunpack.c.l.b16 %v8070
        %v8174 = vunpack.c.l.b16 %v8071
        %v8175 = vunpack.c.l.b16 %v8072
        %v8176 = vunpack.c.l.b16 %v8073
        %v8177 = vunpack.c.l.b16 %v8074
        %v8178 = vunpack.c.l.b16 %v8075
        %v8179 = vunpack.c.l.b16 %v8076
        %v8180 = vunpack.c.l.b16 %v8077
        %v8181 = vunpack.c.l.b16 %v8078
        %v8182 = vpack.c.b16 %v8135, %v8134
        %v8183 = vpack.c.b16 %v8137, %v8136
        %v8184 = vpack.c.b16 %v8139, %v8138
        %v8185 = vpack.c.b16 %v8141, %v8140
        %v8186 = vpack.c.b16 %v8143, %v8142
        %v8187 = vpack.c.b16 %v8145, %v8144
        %v8188 = vpack.c.b16 %v8147, %v8146
        %v8189 = vpack.c.b16 %v8149, %v8148
        %v8190 = vpack.c.b16 %v8151, %v8150
        %v8191 = vpack.c.b16 %v8153, %v8152
        %v8192 = vpack.c.b16 %v8155, %v8154
        %v8193 = vpack.c.b16 %v8157, %v8156
        %v8194 = vpack.c.b16 %v8159, %v8158
        %v8195 = vpack.c.b16 %v8161, %v8160
        %v8196 = vpack.c.b16 %v8163, %v8162
        %v8197 = vpack.c.b16 %v8165, %v8164
        %v8198 = vpack.c.b16 %v8167, %v8166
        %v8199 = vpack.c.b16 %v8169, %v8168
        %v8200 = vpack.c.b16 %v8171, %v8170
        %v8201 = vpack.c.b16 %v8173, %v8172
        %v8202 = vpack.c.b16 %v8175, %v8174
        %v8203 = vpack.c.b16 %v8177, %v8176
        %v8204 = vpack.c.b16 %v8179, %v8178
        %v8205 = vpack.c.b16 %v8181, %v8180
        %8230 = vmatprep.subr.bf16.mxu0 0
        %8231 = vmatpush1.bf16.msra.mxu0 %v8182
        %8232 = vmatprep.subr.bf16.mxu0 0
        %8233 = vmatpush1.bf16.msra.mxu0 %v8183
        %8234 = vmatprep.subr.bf16.mxu0 0
        %8235 = vmatpush1.bf16.msra.mxu0 %v8184
        %8236 = vmatprep.subr.bf16.mxu0 0
        %8237 = vmatpush1.bf16.msra.mxu0 %v8185
        %8238 = vmatprep.subr.bf16.mxu0 0
        %8239 = vmatpush1.bf16.msra.mxu0 %v8186
        %8240 = vmatprep.subr.bf16.mxu0 0
        %8241 = vmatpush1.bf16.msra.mxu0 %v8187
        %8242 = vmatprep.subr.bf16.mxu0 0
        %8243 = vmatpush1.bf16.msra.mxu0 %v8188
        %8244 = vmatprep.subr.bf16.mxu0 0
        %8245 = vmatpush1.bf16.msra.mxu0 %v8189
        %8246 = vmatprep.subr.bf16.mxu0 0
        %8247 = vmatpush1.bf16.msra.mxu0 %v8190
        %8248 = vmatprep.subr.bf16.mxu0 0
        %8249 = vmatpush1.bf16.msra.mxu0 %v8191
        %8250 = vmatprep.subr.bf16.mxu0 0
        %8251 = vmatpush1.bf16.msra.mxu0 %v8192
        %8252 = vmatprep.subr.bf16.mxu0 0
        %8253 = vmatpush1.bf16.msra.mxu0 %v8193
        %8254 = vmatprep.subr.bf16.mxu0 0
        %8255 = vmatpush1.bf16.msra.mxu0 %v8194
        %8256 = vmatprep.subr.bf16.mxu0 0
        %8257 = vmatpush1.bf16.msra.mxu0 %v8195
        %8258 = vmatprep.subr.bf16.mxu0 0
        %8259 = vmatpush1.bf16.msra.mxu0 %v8196
        %8260 = vmatprep.subr.bf16.mxu0 0
        %8261 = vmatpush1.bf16.msra.mxu0 %v8197
        %8262 = vmatprep.mubr.bf16.mxu0 %v7984
        %8263 = vmatmul.mubr.bf16.gmra.mrb[0].mxu0 %v7983
        %v8264 = vpop.f32.mrb[0].mxu0
        %v8265 = vadd.f32 %v8084, %v8264
        %v8266 = vpop.f32.mrb[0].mxu0
        %v8267 = vpop.f32.mrb[0].mxu0
        %v8268 = vadd.f32 %v8084, %v8267
        %v8269 = vpop.f32.mrb[0].mxu0
        %8270 = vmatprep.mubr.bf16.mxu0 %v7987
        %8271 = vmatmul.mubr.bf16.gmra.mrb[0].mxu0 %v7986
        %v8272 = vpop.f32.mrb[0].mxu0
        %v8273 = vadd.f32 %v8084, %v8272
        %v8274 = vpop.f32.mrb[0].mxu0
        %v8275 = vpop.f32.mrb[0].mxu0
        %v8276 = vadd.f32 %v8084, %v8275
        %v8277 = vpop.f32.mrb[0].mxu0
        %8278 = vmatprep.mubr.bf16.mxu0 %v7990
        %8279 = vmatmul.mubr.bf16.gmra.mrb[0].mxu0 %v7989
        %v8280 = vpop.f32.mrb[0].mxu0
        %v8281 = vadd.f32 %v8084, %v8280
        %v8282 = vpop.f32.mrb[0].mxu0
        %v8283 = vpop.f32.mrb[0].mxu0
        %v8284 = vadd.f32 %v8084, %v8283
        %v8285 = vpop.f32.mrb[0].mxu0
        %8286 = vmatprep.mubr.bf16.mxu0 %v7993
        %8287 = vmatmul.mubr.bf16.gmra.mrb[0].mxu0 %v7992
        %v8288 = vpop.f32.mrb[0].mxu0
        %v8289 = vadd.f32 %v8084, %v8288
        %v8290 = vpop.f32.mrb[0].mxu0
        %v8291 = vpop.f32.mrb[0].mxu0
        %v8292 = vadd.f32 %v8084, %v8291
        %v8293 = vpop.f32.mrb[0].mxu0
        %8294 = vmatprep.mubr.bf16.mxu0 %v7996
        %8295 = vmatmul.mubr.bf16.gmra.mrb[0].mxu0 %v7995
        %v8296 = vpop.f32.mrb[0].mxu0
        %v8297 = vadd.f32 %v8084, %v8296
        %v8298 = vpop.f32.mrb[0].mxu0
        %v8299 = vpop.f32.mrb[0].mxu0
        %v8300 = vadd.f32 %v8084, %v8299
        %v8301 = vpop.f32.mrb[0].mxu0
        %8302 = vmatprep.mubr.bf16.mxu0 %v7999
        %8303 = vmatmul.mubr.bf16.gmra.mrb[0].mxu0 %v7998
        %v8304 = vpop.f32.mrb[0].mxu0
        %v8305 = vadd.f32 %v8084, %v8304
        %v8306 = vpop.f32.mrb[0].mxu0
        %v8307 = vpop.f32.mrb[0].mxu0
        %v8308 = vadd.f32 %v8084, %v8307
        %v8309 = vpop.f32.mrb[0].mxu0
        %8310 = vmatprep.mubr.bf16.mxu0 %v8002
        %8311 = vmatmul.mubr.bf16.gmra.mrb[0].mxu0 %v8001
        %v8312 = vpop.f32.mrb[0].mxu0
        %v8313 = vadd.f32 %v8084, %v8312
        %v8314 = vpop.f32.mrb[0].mxu0
        %v8315 = vpop.f32.mrb[0].mxu0
        %v8316 = vadd.f32 %v8084, %v8315
        %v8317 = vpop.f32.mrb[0].mxu0
        %8318 = vmatprep.mubr.bf16.mxu0 %v8005
        %8319 = vmatmul.mubr.bf16.gmra.mrb[0].mxu0 %v8004
        %v8320 = vpop.f32.mrb[0].mxu0
        %v8321 = vadd.f32 %v8084, %v8320
        %v8322 = vpop.f32.mrb[0].mxu0
        %v8323 = vpop.f32.mrb[0].mxu0
        %v8324 = vadd.f32 %v8084, %v8323
        %v8325 = vpop.f32.mrb[0].mxu0
        %8326 = vmatprep.mubr.bf16.mxu0 %v8008
        %8327 = vmatmul.mubr.bf16.gmra.mrb[0].mxu0 %v8007
        %v8328 = vpop.f32.mrb[0].mxu0
        %v8329 = vadd.f32 %v8084, %v8328
        %v8330 = vpop.f32.mrb[0].mxu0
        %v8331 = vpop.f32.mrb[0].mxu0
        %v8332 = vadd.f32 %v8084, %v8331
        %v8333 = vpop.f32.mrb[0].mxu0
        %8334 = vmatprep.mubr.bf16.mxu0 %v8011
        %8335 = vmatmul.mubr.bf16.gmra.mrb[0].mxu0 %v8010
        %v8336 = vpop.f32.mrb[0].mxu0
        %v8337 = vadd.f32 %v8084, %v8336
        %v8338 = vpop.f32.mrb[0].mxu0
        %v8339 = vpop.f32.mrb[0].mxu0
        %v8340 = vadd.f32 %v8084, %v8339
        %v8341 = vpop.f32.mrb[0].mxu0
        %8342 = vmatprep.mubr.bf16.mxu0 %v8014
        %8343 = vmatmul.mubr.bf16.gmra.mrb[0].mxu0 %v8013
        %v8344 = vpop.f32.mrb[0].mxu0
        %v8345 = vadd.f32 %v8084, %v8344
        %v8346 = vpop.f32.mrb[0].mxu0
        %v8347 = vpop.f32.mrb[0].mxu0
        %v8348 = vadd.f32 %v8084, %v8347
        %v8349 = vpop.f32.mrb[0].mxu0
        %8350 = vmatprep.mubr.bf16.mxu0 %v8017
        %8351 = vmatmul.mubr.bf16.gmra.mrb[0].mxu0 %v8016
        %v8352 = vpop.f32.mrb[0].mxu0
        %v8353 = vadd.f32 %v8084, %v8352
        %v8354 = vpop.f32.mrb[0].mxu0
        %v8355 = vpop.f32.mrb[0].mxu0
        %v8356 = vadd.f32 %v8084, %v8355
        %v8357 = vpop.f32.mrb[0].mxu0
        %8358 = vmatprep.mubr.bf16.mxu0 %v8020
        %8359 = vmatmul.mubr.bf16.gmra.mrb[0].mxu0 %v8019
        %v8360 = vpop.f32.mrb[0].mxu0
        %v8361 = vadd.f32 %v8084, %v8360
        %v8362 = vpop.f32.mrb[0].mxu0
        %v8363 = vpop.f32.mrb[0].mxu0
        %v8364 = vadd.f32 %v8084, %v8363
        %v8365 = vpop.f32.mrb[0].mxu0
        %8366 = vmatprep.mubr.bf16.mxu0 %v8023
        %8367 = vmatmul.mubr.bf16.gmra.mrb[0].mxu0 %v8022
        %v8368 = vpop.f32.mrb[0].mxu0
        %v8369 = vadd.f32 %v8084, %v8368
        %v8370 = vpop.f32.mrb[0].mxu0
        %v8371 = vpop.f32.mrb[0].mxu0
        %v8372 = vadd.f32 %v8084, %v8371
        %v8373 = vpop.f32.mrb[0].mxu0
        %8374 = vmatprep.mubr.bf16.mxu0 %v8026
        %8375 = vmatmul.mubr.bf16.gmra.mrb[0].mxu0 %v8025
        %v8376 = vpop.f32.mrb[0].mxu0
        %v8377 = vadd.f32 %v8084, %v8376
        %v8378 = vpop.f32.mrb[0].mxu0
        %v8379 = vpop.f32.mrb[0].mxu0
        %v8380 = vadd.f32 %v8084, %v8379
        %v8381 = vpop.f32.mrb[0].mxu0
        %8382 = vmatprep.mubr.bf16.mxu0 %v8029
        %8383 = vmatmul.mubr.bf16.gmra.mrb[0].mxu0 %v8028
        %v8384 = vpop.f32.mrb[0].mxu0
        %v8385 = vadd.f32 %v8084, %v8384
        %v8386 = vpop.f32.mrb[0].mxu0
        %v8387 = vpop.f32.mrb[0].mxu0
        %v8388 = vadd.f32 %v8084, %v8387
        %v8389 = vpop.f32.mrb[0].mxu0
        %8390 = vdwg.mxu0
        %8391 = vmatprep.subr.bf16.mxu0 0
        %8392 = vmatpush1.bf16.msra.mxu0 %v8198
        %8393 = vmatprep.subr.bf16.mxu0 0
        %8394 = vmatpush1.bf16.msra.mxu0 %v8199
        %8395 = vmatprep.subr.bf16.mxu0 0
        %8396 = vmatpush1.bf16.msra.mxu0 %v8200
        %8397 = vmatprep.subr.bf16.mxu0 0
        %8398 = vmatpush1.bf16.msra.mxu0 %v8201
        %8399 = vmatprep.subr.bf16.mxu0 0
        %8400 = vmatpush1.bf16.msra.mxu0 %v8202
        %8401 = vmatprep.subr.bf16.mxu0 0
        %8402 = vmatpush1.bf16.msra.mxu0 %v8203
        %8403 = vmatprep.subr.bf16.mxu0 0
        %8404 = vmatpush1.bf16.msra.mxu0 %v8204
        %8405 = vmatprep.subr.bf16.mxu0 0
        %8406 = vmatpush1.bf16.msra.mxu0 %v8205
        %8407 = vmatprep.subr.bf16.mxu0 0
        %8408 = vmatpush1.bf16.msra.mxu0 0
        %8409 = vmatprep.subr.bf16.mxu0 0
        %8410 = vmatpush1.bf16.msra.mxu0 0
        %8411 = vmatprep.subr.bf16.mxu0 0
        %8412 = vmatpush1.bf16.msra.mxu0 0
        %8413 = vmatprep.subr.bf16.mxu0 0
        %8414 = vmatpush1.bf16.msra.mxu0 0
        %8415 = vmatprep.subr.bf16.mxu0 0
        %8416 = vmatpush1.bf16.msra.mxu0 0
        %8417 = vmatprep.subr.bf16.mxu0 0
        %8418 = vmatpush1.bf16.msra.mxu0 0
        %8419 = vmatprep.subr.bf16.mxu0 0
        %8420 = vmatpush1.bf16.msra.mxu0 0
        %8421 = vmatprep.subr.bf16.mxu0 0
        %8422 = vmatpush1.bf16.msra.mxu0 0
        %8423 = vmatprep.mubr.bf16.mxu0 0
        %8424 = vmatmul.mubr.bf16.gmra.mrb[0].mxu0 %v7985
        %v8425 = vpop.f32.mrb[0].mxu0
        %v8426 = vadd.f32 %v8265, %v8425
        %v8427 = vpop.f32.mrb[0].mxu0
        %v8428 = vpop.f32.mrb[0].mxu0
        %v8429 = vadd.f32 %v8268, %v8428
        %v8430 = vpop.f32.mrb[0].mxu0
        %8431 = vmatprep.mubr.bf16.mxu0 0
        %8432 = vmatmul.mubr.bf16.gmra.mrb[0].mxu0 %v7988
        %v8433 = vpop.f32.mrb[0].mxu0
        %v8434 = vadd.f32 %v8273, %v8433
        %v8435 = vpop.f32.mrb[0].mxu0
        %v8436 = vpop.f32.mrb[0].mxu0
        %v8437 = vadd.f32 %v8276, %v8436
        %v8438 = vpop.f32.mrb[0].mxu0
        %8439 = vmatprep.mubr.bf16.mxu0 0
        %8440 = vmatmul.mubr.bf16.gmra.mrb[0].mxu0 %v7991
        %v8441 = vpop.f32.mrb[0].mxu0
        %v8442 = vadd.f32 %v8281, %v8441
        %v8443 = vpop.f32.mrb[0].mxu0
        %v8444 = vpop.f32.mrb[0].mxu0
        %v8445 = vadd.f32 %v8284, %v8444
        %v8446 = vpop.f32.mrb[0].mxu0
        %8447 = vmatprep.mubr.bf16.mxu0 0
        %8448 = vmatmul.mubr.bf16.gmra.mrb[0].mxu0 %v7994
        %v8449 = vpop.f32.mrb[0].mxu0
        %v8450 = vadd.f32 %v8289, %v8449
        %v8451 = vpop.f32.mrb[0].mxu0
        %v8452 = vpop.f32.mrb[0].mxu0
        %v8453 = vadd.f32 %v8292, %v8452
        %v8454 = vpop.f32.mrb[0].mxu0
        %8455 = vmatprep.mubr.bf16.mxu0 0
        %8456 = vmatmul.mubr.bf16.gmra.mrb[0].mxu0 %v7997
        %v8457 = vpop.f32.mrb[0].mxu0
        %v8458 = vadd.f32 %v8297, %v8457
        %v8459 = vpop.f32.mrb[0].mxu0
        %v8460 = vpop.f32.mrb[0].mxu0
        %v8461 = vadd.f32 %v8300, %v8460
        %v8462 = vpop.f32.mrb[0].mxu0
        %8463 = vmatprep.mubr.bf16.mxu0 0
        %8464 = vmatmul.mubr.bf16.gmra.mrb[0].mxu0 %v8000
        %v8465 = vpop.f32.mrb[0].mxu0
        %v8466 = vadd.f32 %v8305, %v8465
        %v8467 = vpop.f32.mrb[0].mxu0
        %v8468 = vpop.f32.mrb[0].mxu0
        %v8469 = vadd.f32 %v8308, %v8468
        %v8470 = vpop.f32.mrb[0].mxu0
        %8471 = vmatprep.mubr.bf16.mxu0 0
        %8472 = vmatmul.mubr.bf16.gmra.mrb[0].mxu0 %v8003
        %v8473 = vpop.f32.mrb[0].mxu0
        %v8474 = vadd.f32 %v8313, %v8473
        %v8475 = vpop.f32.mrb[0].mxu0
        %v8476 = vpop.f32.mrb[0].mxu0
        %v8477 = vadd.f32 %v8316, %v8476
        %v8478 = vpop.f32.mrb[0].mxu0
        %8479 = vmatprep.mubr.bf16.mxu0 0
        %8480 = vmatmul.mubr.bf16.gmra.mrb[0].mxu0 %v8006
        %v8481 = vpop.f32.mrb[0].mxu0
        %v8482 = vadd.f32 %v8321, %v8481
        %v8483 = vpop.f32.mrb[0].mxu0
        %v8484 = vpop.f32.mrb[0].mxu0
        %v8485 = vadd.f32 %v8324, %v8484
        %v8486 = vpop.f32.mrb[0].mxu0
        %8487 = vmatprep.mubr.bf16.mxu0 0
        %8488 = vmatmul.mubr.bf16.gmra.mrb[0].mxu0 %v8009
        %v8489 = vpop.f32.mrb[0].mxu0
        %v8490 = vadd.f32 %v8329, %v8489
        %v8491 = vpop.f32.mrb[0].mxu0
        %v8492 = vpop.f32.mrb[0].mxu0
        %v8493 = vadd.f32 %v8332, %v8492
        %v8494 = vpop.f32.mrb[0].mxu0
        %8495 = vmatprep.mubr.bf16.mxu0 0
        %8496 = vmatmul.mubr.bf16.gmra.mrb[0].mxu0 %v8012
        %v8497 = vpop.f32.mrb[0].mxu0
        %v8498 = vadd.f32 %v8337, %v8497
        %v8499 = vpop.f32.mrb[0].mxu0
        %v8500 = vpop.f32.mrb[0].mxu0
        %v8501 = vadd.f32 %v8340, %v8500
        %v8502 = vpop.f32.mrb[0].mxu0
        %8503 = vmatprep.mubr.bf16.mxu0 0
        %8504 = vmatmul.mubr.bf16.gmra.mrb[0].mxu0 %v8015
        %v8505 = vpop.f32.mrb[0].mxu0
        %v8506 = vadd.f32 %v8345, %v8505
        %v8507 = vpop.f32.mrb[0].mxu0
        %v8508 = vpop.f32.mrb[0].mxu0
        %v8509 = vadd.f32 %v8348, %v8508
        %v8510 = vpop.f32.mrb[0].mxu0
        %8511 = vmatprep.mubr.bf16.mxu0 0
        %8512 = vmatmul.mubr.bf16.gmra.mrb[0].mxu0 %v8018
        %v8513 = vpop.f32.mrb[0].mxu0
        %v8514 = vadd.f32 %v8353, %v8513
        %v8515 = vpop.f32.mrb[0].mxu0
        %v8516 = vpop.f32.mrb[0].mxu0
        %v8517 = vadd.f32 %v8356, %v8516
        %v8518 = vpop.f32.mrb[0].mxu0
        %8519 = vmatprep.mubr.bf16.mxu0 0
        %8520 = vmatmul.mubr.bf16.gmra.mrb[0].mxu0 %v8021
        %v8521 = vpop.f32.mrb[0].mxu0
        %v8522 = vadd.f32 %v8361, %v8521
        %v8523 = vpop.f32.mrb[0].mxu0
        %v8524 = vpop.f32.mrb[0].mxu0
        %v8525 = vadd.f32 %v8364, %v8524
        %v8526 = vpop.f32.mrb[0].mxu0
        %8527 = vmatprep.mubr.bf16.mxu0 0
        %8528 = vmatmul.mubr.bf16.gmra.mrb[0].mxu0 %v8024
        %v8529 = vpop.f32.mrb[0].mxu0
        %v8530 = vadd.f32 %v8369, %v8529
        %v8531 = vpop.f32.mrb[0].mxu0
        %v8532 = vpop.f32.mrb[0].mxu0
        %v8533 = vadd.f32 %v8372, %v8532
        %v8534 = vpop.f32.mrb[0].mxu0
        %8535 = vmatprep.mubr.bf16.mxu0 0
        %8536 = vmatmul.mubr.bf16.gmra.mrb[0].mxu0 %v8027
        %v8537 = vpop.f32.mrb[0].mxu0
        %v8538 = vadd.f32 %v8377, %v8537
        %v8539 = vpop.f32.mrb[0].mxu0
        %v8540 = vpop.f32.mrb[0].mxu0
        %v8541 = vadd.f32 %v8380, %v8540
        %v8542 = vpop.f32.mrb[0].mxu0
        %8543 = vmatprep.mubr.bf16.mxu0 0
        %8544 = vmatmul.mubr.bf16.gmra.mrb[0].mxu0 %v8030
        %v8545 = vpop.f32.mrb[0].mxu0
        %v8546 = vadd.f32 %v8385, %v8545
        %v8547 = vpop.f32.mrb[0].mxu0
        %v8548 = vpop.f32.mrb[0].mxu0
        %v8549 = vadd.f32 %v8388, %v8548
        %v8550 = vpop.f32.mrb[0].mxu0
        %8551 = vdwg.mxu0
        %v8552 = vsub.f32 0.0, %v8426
        %v8553 = vsub.f32 0.0, %v8429
        %v8554 = vsub.f32 0.0, %v8434
        %v8555 = vsub.f32 0.0, %v8437
        %v8556 = vsub.f32 0.0, %v8442
        %v8557 = vsub.f32 0.0, %v8445
        %v8558 = vsub.f32 0.0, %v8450
        %v8559 = vsub.f32 0.0, %v8453
        %v8560 = vsub.f32 0.0, %v8458
        %v8561 = vsub.f32 0.0, %v8461
        %v8562 = vsub.f32 0.0, %v8466
        %v8563 = vsub.f32 0.0, %v8469
        %v8564 = vsub.f32 0.0, %v8474
        %v8565 = vsub.f32 0.0, %v8477
        %v8566 = vsub.f32 0.0, %v8482
        %v8567 = vsub.f32 0.0, %v8485
        %v8568 = vsub.f32 0.0, %v8490
        %v8569 = vsub.f32 0.0, %v8493
        %v8570 = vsub.f32 0.0, %v8498
        %v8571 = vsub.f32 0.0, %v8501
        %v8572 = vsub.f32 0.0, %v8506
        %v8573 = vsub.f32 0.0, %v8509
        %v8574 = vsub.f32 0.0, %v8514
        %v8575 = vsub.f32 0.0, %v8517
        %v8576 = vsub.f32 0.0, %v8522
        %v8577 = vsub.f32 0.0, %v8525
        %v8578 = vsub.f32 0.0, %v8530
        %v8579 = vsub.f32 0.0, %v8533
        %v8580 = vsub.f32 0.0, %v8538
        %v8581 = vsub.f32 0.0, %v8541
        %v8582 = vsub.f32 0.0, %v8546
        %v8583 = vsub.f32 0.0, %v8549
        %v8584 = vmul.f32 %v8552, 1.442695
        %v8585 = vpow.pop %v8584
        %v8586 = vmul.f32 %v8553, 1.442695
        %v8587 = vpow.pop %v8586
        %v8588 = vmul.f32 %v8554, 1.442695
        %v8589 = vpow.pop %v8588
        %v8590 = vmul.f32 %v8555, 1.442695
        %v8591 = vpow.pop %v8590
        %v8592 = vmul.f32 %v8556, 1.442695
        %v8593 = vpow.pop %v8592
        %v8594 = vmul.f32 %v8557, 1.442695
        %v8595 = vpow.pop %v8594
        %v8596 = vmul.f32 %v8558, 1.442695
        %v8597 = vpow.pop %v8596
        %v8598 = vmul.f32 %v8559, 1.442695
        %v8599 = vpow.pop %v8598
        %v8600 = vmul.f32 %v8560, 1.442695
        %v8601 = vpow.pop %v8600
        %v8602 = vmul.f32 %v8561, 1.442695
        %v8603 = vpow.pop %v8602
        %v8604 = vmul.f32 %v8562, 1.442695
        %v8605 = vpow.pop %v8604
        %v8606 = vmul.f32 %v8563, 1.442695
        %v8607 = vpow.pop %v8606
        %v8608 = vmul.f32 %v8564, 1.442695
        %v8609 = vpow.pop %v8608
        %v8610 = vmul.f32 %v8565, 1.442695
        %v8611 = vpow.pop %v8610
        %v8612 = vmul.f32 %v8566, 1.442695
        %v8613 = vpow.pop %v8612
        %v8614 = vmul.f32 %v8567, 1.442695
        %v8615 = vpow.pop %v8614
        %v8616 = vmul.f32 %v8568, 1.442695
        %v8617 = vpow.pop %v8616
        %v8618 = vmul.f32 %v8569, 1.442695
        %v8619 = vpow.pop %v8618
        %v8620 = vmul.f32 %v8570, 1.442695
        %v8621 = vpow.pop %v8620
        %v8622 = vmul.f32 %v8571, 1.442695
        %v8623 = vpow.pop %v8622
        %v8624 = vmul.f32 %v8572, 1.442695
        %v8625 = vpow.pop %v8624
        %v8626 = vmul.f32 %v8573, 1.442695
        %v8627 = vpow.pop %v8626
        %v8628 = vmul.f32 %v8574, 1.442695
        %v8629 = vpow.pop %v8628
        %v8630 = vmul.f32 %v8575, 1.442695
        %v8631 = vpow.pop %v8630
        %v8632 = vmul.f32 %v8576, 1.442695
        %v8633 = vpow.pop %v8632
        %v8634 = vmul.f32 %v8577, 1.442695
        %v8635 = vpow.pop %v8634
        %v8636 = vmul.f32 %v8578, 1.442695
        %v8637 = vpow.pop %v8636
        %v8638 = vmul.f32 %v8579, 1.442695
        %v8639 = vpow.pop %v8638
        %v8640 = vmul.f32 %v8580, 1.442695
        %v8641 = vpow.pop %v8640
        %v8642 = vmul.f32 %v8581, 1.442695
        %v8643 = vpow.pop %v8642
        %v8644 = vmul.f32 %v8582, 1.442695
        %v8645 = vpow.pop %v8644
        %v8646 = vmul.f32 %v8583, 1.442695
        %v8647 = vpow.pop %v8646
        %v8648 = vadd.f32 %v8585, 1.0
        %v8649 = vadd.f32 %v8587, 1.0
        %v8650 = vadd.f32 %v8589, 1.0
        %v8651 = vadd.f32 %v8591, 1.0
        %v8652 = vadd.f32 %v8593, 1.0
        %v8653 = vadd.f32 %v8595, 1.0
        %v8654 = vadd.f32 %v8597, 1.0
        %v8655 = vadd.f32 %v8599, 1.0
        %v8656 = vadd.f32 %v8601, 1.0
        %v8657 = vadd.f32 %v8603, 1.0
        %v8658 = vadd.f32 %v8605, 1.0
        %v8659 = vadd.f32 %v8607, 1.0
        %v8660 = vadd.f32 %v8609, 1.0
        %v8661 = vadd.f32 %v8611, 1.0
        %v8662 = vadd.f32 %v8613, 1.0
        %v8663 = vadd.f32 %v8615, 1.0
        %v8664 = vadd.f32 %v8617, 1.0
        %v8665 = vadd.f32 %v8619, 1.0
        %v8666 = vadd.f32 %v8621, 1.0
        %v8667 = vadd.f32 %v8623, 1.0
        %v8668 = vadd.f32 %v8625, 1.0
        %v8669 = vadd.f32 %v8627, 1.0
        %v8670 = vadd.f32 %v8629, 1.0
        %v8671 = vadd.f32 %v8631, 1.0
        %v8672 = vadd.f32 %v8633, 1.0
        %v8673 = vadd.f32 %v8635, 1.0
        %v8674 = vadd.f32 %v8637, 1.0
        %v8675 = vadd.f32 %v8639, 1.0
        %v8676 = vadd.f32 %v8641, 1.0
        %v8677 = vadd.f32 %v8643, 1.0
        %v8678 = vadd.f32 %v8645, 1.0
        %v8679 = vadd.f32 %v8647, 1.0
        %v8680 = vrcp.pop %v8648
        %v8681 = vmul.f32 1.0, %v8680
        %v8682 = vrcp.pop %v8649
        %v8683 = vmul.f32 1.0, %v8682
        %v8684 = vrcp.pop %v8650
        %v8685 = vmul.f32 1.0, %v8684
        %v8686 = vrcp.pop %v8651
        %v8687 = vmul.f32 1.0, %v8686
        %v8688 = vrcp.pop %v8652
        %v8689 = vmul.f32 1.0, %v8688
        %v8690 = vrcp.pop %v8653
        %v8691 = vmul.f32 1.0, %v8690
        %v8692 = vrcp.pop %v8654
        %v8693 = vmul.f32 1.0, %v8692
        %v8694 = vrcp.pop %v8655
        %v8695 = vmul.f32 1.0, %v8694
        %v8696 = vrcp.pop %v8656
        %v8697 = vmul.f32 1.0, %v8696
        %v8698 = vrcp.pop %v8657
        %v8699 = vmul.f32 1.0, %v8698
        %v8700 = vrcp.pop %v8658
        %v8701 = vmul.f32 1.0, %v8700
        %v8702 = vrcp.pop %v8659
        %v8703 = vmul.f32 1.0, %v8702
        %v8704 = vrcp.pop %v8660
        %v8705 = vmul.f32 1.0, %v8704
        %v8706 = vrcp.pop %v8661
        %v8707 = vmul.f32 1.0, %v8706
        %v8708 = vrcp.pop %v8662
        %v8709 = vmul.f32 1.0, %v8708
        %v8710 = vrcp.pop %v8663
        %v8711 = vmul.f32 1.0, %v8710
        %v8712 = vrcp.pop %v8664
        %v8713 = vmul.f32 1.0, %v8712
        %v8714 = vrcp.pop %v8665
        %v8715 = vmul.f32 1.0, %v8714
        %v8716 = vrcp.pop %v8666
        %v8717 = vmul.f32 1.0, %v8716
        %v8718 = vrcp.pop %v8667
        %v8719 = vmul.f32 1.0, %v8718
        %v8720 = vrcp.pop %v8668
        %v8721 = vmul.f32 1.0, %v8720
        %v8722 = vrcp.pop %v8669
        %v8723 = vmul.f32 1.0, %v8722
        %v8724 = vrcp.pop %v8670
        %v8725 = vmul.f32 1.0, %v8724
        %v8726 = vrcp.pop %v8671
        %v8727 = vmul.f32 1.0, %v8726
        %v8728 = vrcp.pop %v8672
        %v8729 = vmul.f32 1.0, %v8728
        %v8730 = vrcp.pop %v8673
        %v8731 = vmul.f32 1.0, %v8730
        %v8732 = vrcp.pop %v8674
        %v8733 = vmul.f32 1.0, %v8732
        %v8734 = vrcp.pop %v8675
        %v8735 = vmul.f32 1.0, %v8734
        %v8736 = vrcp.pop %v8676
        %v8737 = vmul.f32 1.0, %v8736
        %v8738 = vrcp.pop %v8677
        %v8739 = vmul.f32 1.0, %v8738
        %v8740 = vrcp.pop %v8678
        %v8741 = vmul.f32 1.0, %v8740
        %v8742 = vrcp.pop %v8679
        %v8743 = vmul.f32 1.0, %v8742
        %8744 = vst [vmem:[%s561] sm:$0xff] %v8681
        %8745 = vst [vmem:[%s561 + $0x8] sm:$0xff] %v8683
        %8746 = vst [vmem:[%s561 + $0x10] sm:$0xff] %v8685
        %8747 = vst [vmem:[%s561 + $0x18] sm:$0xff] %v8687
        %8748 = vst [vmem:[%s561 + $0x20] sm:$0xff] %v8689
        %8749 = vst [vmem:[%s561 + $0x28] sm:$0xff] %v8691
        %8750 = vst [vmem:[%s561 + $0x30] sm:$0xff] %v8693
        %8751 = vst [vmem:[%s561 + $0x38] sm:$0xff] %v8695
        %8752 = vst [vmem:[%s561 + $0x40] sm:$0xff] %v8697
        %8753 = vst [vmem:[%s561 + $0x48] sm:$0xff] %v8699
        %8754 = vst [vmem:[%s561 + $0x50] sm:$0xff] %v8701
        %8755 = vst [vmem:[%s561 + $0x58] sm:$0xff] %v8703
        %8756 = vst [vmem:[%s561 + $0x60] sm:$0xff] %v8705
        %8757 = vst [vmem:[%s561 + $0x68] sm:$0xff] %v8707
        %8758 = vst [vmem:[%s561 + $0x70] sm:$0xff] %v8709
        %8759 = vst [vmem:[%s561 + $0x78] sm:$0xff] %v8711
        %8760 = vst [vmem:[%s561 + $0x80] sm:$0xff] %v8713
        %8761 = vst [vmem:[%s561 + $0x88] sm:$0xff] %v8715
        %8762 = vst [vmem:[%s561 + $0x90] sm:$0xff] %v8717
        %8763 = vst [vmem:[%s561 + $0x98] sm:$0xff] %v8719
        %8764 = vst [vmem:[%s561 + $0xa0] sm:$0xff] %v8721
        %8765 = vst [vmem:[%s561 + $0xa8] sm:$0xff] %v8723
        %8766 = vst [vmem:[%s561 + $0xb0] sm:$0xff] %v8725
        %8767 = vst [vmem:[%s561 + $0xb8] sm:$0xff] %v8727
        %8768 = vst [vmem:[%s561 + $0xc0] sm:$0xff] %v8729
        %8769 = vst [vmem:[%s561 + $0xc8] sm:$0xff] %v8731
        %8770 = vst [vmem:[%s561 + $0xd0] sm:$0xff] %v8733
        %8771 = vst [vmem:[%s561 + $0xd8] sm:$0xff] %v8735
        %8772 = vst [vmem:[%s561 + $0xe0] sm:$0xff] %v8737
        %8773 = vst [vmem:[%s561 + $0xe8] sm:$0xff] %v8739
        %8774 = vst [vmem:[%s561 + $0xf0] sm:$0xff] %v8741
        %8775 = vst [vmem:[%s561 + $0xf8] sm:$0xff] %v8743
        %s8776 = sand.u32 %s360, 1
        %s8777 = scalar_lea.sflag [#allocation4], %s8776
        %s8778 = sand.u32 %s360, 1
        %s8779 = smul.addr %s8778, 256
        %s8780 = scalar_lea.vmem [#allocation11], %s8779
        // Predicated region
        $region101: #{tpu_custom_call.1} parent=79 // pred_check
          %p8781 = pneg %p370
        $region102: #{tpu_custom_call.1} parent=79 // pred_check_branch
          %8783 = sbr.rel (%p8781) target = $region104
        $region103: #{tpu_custom_call.1} parent=79 // pred_region
          %s8784 = smul.u32 32, %s32
          %s8786 = ssub.s32 4096, 4096
          %8787 = vsyncadd %s8777, %s8786
          %s8788 = smul.addr %s8784, 128
          %s8789 = scalar_lea.hbm %s15, %s8788
          %s8790 = sshll.u32 %s8780, 4
          %s8791 = int_to_ptr.vmem [resolvable:$true] %s8790
          %8796 = dma.vmem_to_hbm [thread:$0]  %s8791, 4096, %s8789, %s8777, 128, 128, 8
        $region104: #{tpu_custom_call.1} parent=79 // pred_fallthru
          _
      $region80: #{tpu_custom_call.1} parent=5 // pred_fallthru
        _
      %p8797 = scmp.le.s32.totalorder 2, %s27
      // Predicated region
      $region105: #{tpu_custom_call.1} parent=5 // pred_check
        %p8798 = pneg %p8797
      $region106: #{tpu_custom_call.1} parent=5 // pred_check_branch
        %8800 = sbr.rel (%p8798) target = $region108
      $region107: #{tpu_custom_call.1} parent=5 // pred_region
        %s8801 = ssub.s32 %s27, 2
        // Predicated region
        $region109: #{tpu_custom_call.1} parent=107 // pred_check
          %p8802 = pneg %p376
        $region110: #{tpu_custom_call.1} parent=107 // pred_check_branch
          %8804 = sbr.rel (%p8802) target = $region112
        $region111: #{tpu_custom_call.1} parent=107 // pred_region
          %s8805 = sand.u32 %s361, 1
          %s8806 = scalar_lea.sflag [#allocation4], %s8805
          %s8807 = sand.u32 %s361, 1
          %s8808 = smul.addr %s8807, 256
          %s8809 = scalar_lea.vmem [#allocation11], %s8808
          %8810 = dma.done %s8806, 4096
        $region112: #{tpu_custom_call.1} parent=107 // pred_fallthru
          _
      $region108: #{tpu_custom_call.1} parent=5 // pred_fallthru
        _
    $region6: #{tpu_custom_call.1} parent=1 // loop_footer
      %s31 = sadd.s32 1, %s27
    $region7: #{tpu_custom_call.1} parent=1 // loop_footer_branch
      %26 = sbr.rel target = $region3
    $region8: #{tpu_custom_call.1} parent=1 // loop_exit
      _
    %8811 = vsyncpa [#allocation3], 1
    %s8812 = scalar_lea.sflag [#allocation3], 1
    %8813 = vsyncpa %s8812, 1
    %8814 = vsyncpa [#allocation6], 1
    %8815 = vsyncpa [#allocation9], 1
    %8816 = vsyncpa [#allocation4], 1
    %s8817 = scalar_lea.sflag [#allocation4], 1
    %8818 = vsyncpa %s8817, 1

</llo_original>
